<compile_context>
chip_gen: v5e
topology: v5e:2x2
jax: 0.10.0
libtpu: 0.0.40
codegen_flags: <defaults>
</compile_context>

<pallas_src>
import functools

import jax
import jax.numpy as jnp
from jax import lax
from jax.experimental import pallas as pl
from jax.experimental.pallas import tpu as pltpu

EPS = 1e-5
DW_CHUNK = 16   # channels per depthwise-conv chunk (bounds vreg live ranges)


def _silu(x):
    return x * jax.nn.sigmoid(x)


def _bn_cols(x, gamma, beta):
    """Training-mode BatchNorm on (C, pixels) columns, one-pass statistics."""
    inv_n = 1.0 / x.shape[1]
    mean = jnp.sum(x, axis=1, keepdims=True) * inv_n
    mean_sq = jnp.sum(x * x, axis=1, keepdims=True) * inv_n
    var = jnp.maximum(mean_sq - mean * mean, 0.0)
    return (x - mean) * lax.rsqrt(var + EPS) * gamma + beta


def _pixel_coords(n_pix, H, W):
    """Per-lane (h, w) coordinates for the flattened (N*H*W) pixel/lane axis."""
    pix = lax.broadcasted_iota(jnp.int32, (1, n_pix), 1)
    hw = H * W
    if (hw & (hw - 1)) == 0 and (W & (W - 1)) == 0:   # power-of-two fast path
        w_idx = pix & (W - 1)
        h_idx = (pix & (hw - 1)) >> (W.bit_length() - 1)
    else:
        hw_idx = pix % hw
        w_idx = hw_idx % W
        h_idx = hw_idx // W
    return h_idx, w_idx


def _tap_mask(h_idx, w_idx, oh, ow, H, W):
    """Validity mask for conv tap offset (oh, ow); None if always valid."""
    conds = []
    if oh < 0:
        conds.append(h_idx >= -oh)
    elif oh > 0:
        conds.append(h_idx < H - oh)
    if ow < 0:
        conds.append(w_idx >= -ow)
    elif ow > 0:
        conds.append(w_idx < W - ow)
    if not conds:
        return None
    m = conds[0]
    for c in conds[1:]:
        m = m & c
    return m


def mbconv_kernel(x_ref, w_exp_ref, g0_ref, b0_ref, w_dw_ref, g1_ref, b1_ref,
                  w1_ref, bb1_ref, w2_ref, bb2_ref, w_proj_ref, g2_ref, b2_ref,
                  w_sp_ref,                      # SMEM: (2, 49) spatial 7x7 taps
                  out_ref, *, N, H, W):
    Cin, P = x_ref.shape
    Cmid = w_exp_ref.shape[0]
    Cout = w_proj_ref.shape[0]
    HW = H * W

    h_idx, w_idx = _pixel_coords(P, H, W)

    # Precompute (1, P) border masks once for all 7x7 offsets (the 9 depthwise
    # offsets are a subset); reused by both tap loops.
    masks = {(oh, ow): _tap_mask(h_idx, w_idx, oh, ow, H, W)
             for oh in range(-3, 4) for ow in range(-3, 4)}

    def shifted(val, oh, ow):
        """Lane i of the result holds val[:, i + oh*W + ow] (wrap is masked later)."""
        s = oh * W + ow
        return val if s == 0 else pltpu.roll(val, shift=(-s) % P, axis=1)

    # ---- expand_conv (1x1) + bn0 + SiLU  (single MXU matmul) ----------------
    h0 = jnp.dot(w_exp_ref[...], x_ref[...], preferred_element_type=jnp.float32)
    h0 = _silu(_bn_cols(h0, g0_ref[...], b0_ref[...]))           # (Cmid, P)

    # ---- depthwise 3x3 conv, stride 1, pad 1: in-register lane rolls --------
    # Channel-chunked so per-chunk {src, tap, acc} fits comfortably in vregs.
    w_dw = w_dw_ref[...]                                         # (Cmid, 9)
    dw_chunks = []
    for c0 in range(0, Cmid, DW_CHUNK):
        c1 = min(c0 + DW_CHUNK, Cmid)
        hc = h0[c0:c1]
        wc = w_dw[c0:c1]
        acc = jnp.zeros_like(hc)
        for kh in range(3):
            for kw in range(3):
                oh, ow = kh - 1, kw - 1
                tap = shifted(hc, oh, ow)
                m = masks[(oh, ow)]
                if m is not None:
                    tap = jnp.where(m, tap, 0.0)
                k = kh * 3 + kw
                acc = acc + tap * wc[:, k:k + 1]
        dw_chunks.append(acc)
    h1 = jnp.concatenate(dw_chunks, axis=0) if len(dw_chunks) > 1 else dw_chunks[0]

    # ---- bn1 + SiLU ----------------------------------------------------------
    h1 = _silu(_bn_cols(h1, g1_ref[...], b1_ref[...]))           # (Cmid, P)

    # ---- CBAM channel attention (one batched MLP over [avg | max] x batch) --
    lane2n = lax.broadcasted_iota(jnp.int32, (1, 2 * N), 1)
    pooled = jnp.zeros((Cmid, 2 * N), jnp.float32)               # (Cmid, 2N)
    for n in range(N):
        sl = h1[:, n * HW:(n + 1) * HW]
        pooled = pooled + jnp.where(lane2n == n,
                                    jnp.mean(sl, axis=1, keepdims=True), 0.0)
        pooled = pooled + jnp.where(lane2n == N + n,
                                    jnp.max(sl, axis=1, keepdims=True), 0.0)
    hidden = jnp.maximum(
        jnp.dot(w1_ref[...], pooled, preferred_element_type=jnp.float32)
        + bb1_ref[...], 0.0)                                     # (Cred, 2N)
    att = (jnp.dot(w2_ref[...], hidden, preferred_element_type=jnp.float32)
           + bb2_ref[...])                                       # (Cmid, 2N)
    ch_att = jax.nn.sigmoid(att[:, :N] + att[:, N:])             # (Cmid, N)

    # Apply per-sample channel attention with one masked multiply.
    if (HW & (HW - 1)) == 0:
        samp = lax.broadcasted_iota(jnp.int32, (1, P), 1) >> (HW.bit_length() - 1)
    else:
        samp = lax.broadcasted_iota(jnp.int32, (1, P), 1) // HW
    att_pix = ch_att[:, 0:1]
    for n in range(1, N):
        att_pix = jnp.where(samp >= n, ch_att[:, n:n + 1], att_pix)
    h1 = h1 * att_pix

    # ---- CBAM spatial attention: 7x7 conv on [mean_c, max_c], pad 3 ---------
    avg_sp = jnp.mean(h1, axis=0, keepdims=True)                 # (1, P)
    max_sp = jnp.max(h1, axis=0, keepdims=True)                  # (1, P)
    sp = jnp.zeros((1, P), jnp.float32)
    for kh in range(7):
        for kw in range(7):
            oh, ow = kh - 3, kw - 3
            k = kh * 7 + kw
            contrib = (shifted(avg_sp, oh, ow) * w_sp_ref[0, k]
                       + shifted(max_sp, oh, ow) * w_sp_ref[1, k])
            m = masks[(oh, ow)]
            if m is not None:
                contrib = jnp.where(m, contrib, 0.0)
            sp = sp + contrib
    h1 = h1 * jax.nn.sigmoid(sp)

    # ---- project_conv (1x1) + bn2 (+ residual) -------------------------------
    h2 = jnp.dot(w_proj_ref[...], h1, preferred_element_type=jnp.float32)
    h2 = _bn_cols(h2, g2_ref[...], b2_ref[...])                  # (Cout, P)
    if Cin == Cout:          # stride == 1 in this script -> use_residual
        h2 = h2 + x_ref[...]   # re-read the input here; nothing kept live mid-kernel
    out_ref[...] = h2          # one lane-dense (Cout, N*H*W) store


def init_params(key, c_in, c_out, expand_ratio=6, reduction=16):
    c_mid = c_in * expand_ratio
    assert c_mid > reduction
    c_red = c_mid // reduction
    ks = jax.random.split(key, 8)

    def rnd(k, shape, scale=0.1):
        return scale * jax.random.normal(k, shape, dtype=jnp.float32)

    return dict(
        w_exp=rnd(ks[0], (c_mid, c_in)),          # expand_conv weight (Cmid, Cin)
        g0=jnp.ones((c_mid, 1), jnp.float32),
        b0=jnp.zeros((c_mid, 1), jnp.float32),
        w_dw=rnd(ks[1], (c_mid, 9)),              # depthwise 3x3 weight (Cmid, kh*kw)
        g1=jnp.ones((c_mid, 1), jnp.float32),
        b1=jnp.zeros((c_mid, 1), jnp.float32),
        w1=rnd(ks[2], (c_red, c_mid)),            # CBAM MLP Linear1 weight (out, in)
        bb1=rnd(ks[3], (c_red, 1)),
        w2=rnd(ks[4], (c_mid, c_red)),            # CBAM MLP Linear2 weight (out, in)
        bb2=rnd(ks[5], (c_mid, 1)),
        w_proj=rnd(ks[6], (c_out, c_mid)),        # project_conv weight (Cout, Cmid)
        g2=jnp.ones((c_out, 1), jnp.float32),
        b2=jnp.zeros((c_out, 1), jnp.float32),
        w_sp=rnd(ks[7], (2, 49)),                 # CBAM spatial 7x7 conv (2 in-ch, 49 taps)
    )


def mbconv_forward(x_nchw, params):
    N, Cin, H, W = x_nchw.shape
    Cmid = params["w_exp"].shape[0]
    Cout = params["w_proj"].shape[0]
    c_red = params["w1"].shape[0]
    P = N * H * W

    # Channel-major columns (C, N*H*W): a tiny XLA transpose outside the kernel
    # keeps every in-kernel load/store lane-dense with no in-kernel gather.
    x_cols = x_nchw.astype(jnp.float32).transpose(1, 0, 2, 3).reshape(Cin, P)

    vmem = pl.BlockSpec(memory_space=pltpu.MemorySpace.VMEM)
    smem = pl.BlockSpec(memory_space=pltpu.MemorySpace.SMEM)

    cost = pl.CostEstimate(
        flops=2 * P * (Cin * Cmid + 9 * Cmid + Cmid * Cout + 2 * 49)
              + 2 * (2 * N) * 2 * Cmid * c_red,
        transcendentals=2 * Cmid * P + P + Cmid * N,
        bytes_accessed=4 * (Cin * P + Cout * P
                            + sum(int(v.size) for v in params.values())),
    )

    kernel = functools.partial(mbconv_kernel, N=N, H=H, W=W)
    out_cols = pl.pallas_call(
        kernel,
        out_shape=jax.ShapeDtypeStruct((Cout, P), jnp.float32),
        in_specs=[vmem] * 14 + [smem],
        out_specs=vmem,
        cost_estimate=cost,
    )(x_cols, params["w_exp"], params["g0"], params["b0"], params["w_dw"],
      params["g1"], params["b1"], params["w1"], params["bb1"],
      params["w2"], params["bb2"], params["w_proj"], params["g2"],
      params["b2"], params["w_sp"])
    return out_cols.reshape(Cout, N, H, W).transpose(1, 0, 2, 3)   # NCHW out


def mbconv_reference(x_nchw, params):
    """Pure-JAX (f32) reference of MBConvBlock.forward."""
    N, Cin, H, W = x_nchw.shape
    Cmid = params["w_exp"].shape[0]
    Cout = params["w_proj"].shape[0]

    def bn(x, gamma, beta):
        mean = jnp.mean(x, axis=(0, 2, 3), keepdims=True)
        var = jnp.mean(jnp.square(x - mean), axis=(0, 2, 3), keepdims=True)
        return ((x - mean) * lax.rsqrt(var + EPS)
                * gamma.reshape(1, -1, 1, 1) + beta.reshape(1, -1, 1, 1))

    def silu(x):
        return x * jax.nn.sigmoid(x)

    h = jnp.einsum("mc,nchw->nmhw", params["w_exp"], x_nchw,
                   precision=lax.Precision.HIGHEST)
    h = silu(bn(h, params["g0"], params["b0"]))

    w_dw = params["w_dw"].reshape(Cmid, 1, 3, 3)
    h = lax.conv_general_dilated(h, w_dw, (1, 1), ((1, 1), (1, 1)),
                                 dimension_numbers=("NCHW", "OIHW", "NCHW"),
                                 feature_group_count=Cmid,
                                 precision=lax.Precision.HIGHEST)
    h = silu(bn(h, params["g1"], params["b1"]))

    avg_c = jnp.mean(h, axis=(2, 3))
    max_c = jnp.max(h, axis=(2, 3))

    def mlp(v):
        hid = jnp.maximum(v @ params["w1"].T + params["bb1"].reshape(1, -1), 0.0)
        return hid @ params["w2"].T + params["bb2"].reshape(1, -1)

    ch_att = jax.nn.sigmoid(mlp(avg_c) + mlp(max_c))
    h = h * ch_att[:, :, None, None]

    sp_in = jnp.concatenate([jnp.mean(h, axis=1, keepdims=True),
                             jnp.max(h, axis=1, keepdims=True)], axis=1)
    w_sp = params["w_sp"].reshape(1, 2, 7, 7)
    sp = lax.conv_general_dilated(sp_in, w_sp, (1, 1), ((3, 3), (3, 3)),
                                  dimension_numbers=("NCHW", "OIHW", "NCHW"),
                                  precision=lax.Precision.HIGHEST)
    h = h * jax.nn.sigmoid(sp)

    out = jnp.einsum("om,nmhw->nohw", params["w_proj"], h,
                     precision=lax.Precision.HIGHEST)
    out = bn(out, params["g2"], params["b2"])
    if Cin == Cout:
        out = out + x_nchw
    return out


if __name__ == "__main__":
    key = jax.random.PRNGKey(0)
    kx, kp = jax.random.split(key)

    # MBConvBlock(in_channels=8, out_channels=8, kernel=3, stride=1, pad=1,
    #             expand_ratio=6, reduction=16) -> mid_channels=48, use_residual=True
    N, Cin, H, W = 2, 8, 16, 16
    Cout = 8
    x = jax.random.normal(kx, (N, Cin, H, W), dtype=jnp.float32)
    params = init_params(kp, Cin, Cout)

    y = mbconv_forward(x, params)
    jax.block_until_ready(y)
    assert y.shape == (N, Cout, H, W)
    assert bool(jnp.all(jnp.isfinite(y)))

    # Correctness check against a pure-JAX (XLA) reference of the module.
    y_ref = mbconv_reference(x, params)
    err = float(jnp.max(jnp.abs(y - y_ref)))
    assert err < 2e-2, f"kernel/reference mismatch: max abs err = {err}"
    print("KERNEL_OK")
</pallas_src>

<mosaic_0001>
module attributes {stable_mosaic.version = 11 : i64} {
  func.func @mbconv_kernel(%arg0: memref<8x512xf32, #tpu.memory_space<vmem>>, %arg1: memref<48x8xf32, #tpu.memory_space<vmem>>, %arg2: memref<48x1xf32, #tpu.memory_space<vmem>>, %arg3: memref<48x1xf32, #tpu.memory_space<vmem>>, %arg4: memref<48x9xf32, #tpu.memory_space<vmem>>, %arg5: memref<48x1xf32, #tpu.memory_space<vmem>>, %arg6: memref<48x1xf32, #tpu.memory_space<vmem>>, %arg7: memref<3x48xf32, #tpu.memory_space<vmem>>, %arg8: memref<3x1xf32, #tpu.memory_space<vmem>>, %arg9: memref<48x3xf32, #tpu.memory_space<vmem>>, %arg10: memref<48x1xf32, #tpu.memory_space<vmem>>, %arg11: memref<8x48xf32, #tpu.memory_space<vmem>>, %arg12: memref<8x1xf32, #tpu.memory_space<vmem>>, %arg13: memref<8x1xf32, #tpu.memory_space<vmem>>, %arg14: memref<2x49xf32, #tpu.memory_space<smem>>, %arg15: memref<8x512xf32, #tpu.memory_space<vmem>>) attributes {dimension_semantics = [], scalar_prefetch = 0 : i64, scratch_operands = 0 : i64, tpu.core_type = #tpu.core_type<tc>} {
    %0 = tpu.iota {dimensions = array<i32: 1>} : vector<1x512xi32>
    %c15_i32 = arith.constant 15 : i32
    %1 = vector.broadcast %c15_i32 : i32 to vector<1x512xi32>
    %2 = arith.andi %0, %1 : vector<1x512xi32>
    %c255_i32 = arith.constant 255 : i32
    %3 = vector.broadcast %c255_i32 : i32 to vector<1x512xi32>
    %4 = arith.andi %0, %3 : vector<1x512xi32>
    %c4_i32 = arith.constant 4 : i32
    %5 = vector.broadcast %c4_i32 : i32 to vector<1x512xi32>
    %6 = arith.shrsi %4, %5 : vector<1x512xi32>
    %c3_i32 = arith.constant 3 : i32
    %7 = vector.broadcast %c3_i32 : i32 to vector<1x512xi32>
    %8 = arith.cmpi sge, %6, %7 : vector<1x512xi32>
    %c3_i32_0 = arith.constant 3 : i32
    %9 = vector.broadcast %c3_i32_0 : i32 to vector<1x512xi32>
    %10 = arith.cmpi sge, %2, %9 : vector<1x512xi32>
    %11 = arith.andi %8, %10 : vector<1x512xi1>
    %c3_i32_1 = arith.constant 3 : i32
    %12 = vector.broadcast %c3_i32_1 : i32 to vector<1x512xi32>
    %13 = arith.cmpi sge, %6, %12 : vector<1x512xi32>
    %c2_i32 = arith.constant 2 : i32
    %14 = vector.broadcast %c2_i32 : i32 to vector<1x512xi32>
    %15 = arith.cmpi sge, %2, %14 : vector<1x512xi32>
    %16 = arith.andi %13, %15 : vector<1x512xi1>
    %c3_i32_2 = arith.constant 3 : i32
    %17 = vector.broadcast %c3_i32_2 : i32 to vector<1x512xi32>
    %18 = arith.cmpi sge, %6, %17 : vector<1x512xi32>
    %c1_i32 = arith.constant 1 : i32
    %19 = vector.broadcast %c1_i32 : i32 to vector<1x512xi32>
    %20 = arith.cmpi sge, %2, %19 : vector<1x512xi32>
    %21 = arith.andi %18, %20 : vector<1x512xi1>
    %c3_i32_3 = arith.constant 3 : i32
    %22 = vector.broadcast %c3_i32_3 : i32 to vector<1x512xi32>
    %23 = arith.cmpi sge, %6, %22 : vector<1x512xi32>
    %c3_i32_4 = arith.constant 3 : i32
    %24 = vector.broadcast %c3_i32_4 : i32 to vector<1x512xi32>
    %25 = arith.cmpi sge, %6, %24 : vector<1x512xi32>
    %c15_i32_5 = arith.constant 15 : i32
    %26 = vector.broadcast %c15_i32_5 : i32 to vector<1x512xi32>
    %27 = arith.cmpi slt, %2, %26 : vector<1x512xi32>
    %28 = arith.andi %25, %27 : vector<1x512xi1>
    %c3_i32_6 = arith.constant 3 : i32
    %29 = vector.broadcast %c3_i32_6 : i32 to vector<1x512xi32>
    %30 = arith.cmpi sge, %6, %29 : vector<1x512xi32>
    %c14_i32 = arith.constant 14 : i32
    %31 = vector.broadcast %c14_i32 : i32 to vector<1x512xi32>
    %32 = arith.cmpi slt, %2, %31 : vector<1x512xi32>
    %33 = arith.andi %30, %32 : vector<1x512xi1>
    %c3_i32_7 = arith.constant 3 : i32
    %34 = vector.broadcast %c3_i32_7 : i32 to vector<1x512xi32>
    %35 = arith.cmpi sge, %6, %34 : vector<1x512xi32>
    %c13_i32 = arith.constant 13 : i32
    %36 = vector.broadcast %c13_i32 : i32 to vector<1x512xi32>
    %37 = arith.cmpi slt, %2, %36 : vector<1x512xi32>
    %38 = arith.andi %35, %37 : vector<1x512xi1>
    %c2_i32_8 = arith.constant 2 : i32
    %39 = vector.broadcast %c2_i32_8 : i32 to vector<1x512xi32>
    %40 = arith.cmpi sge, %6, %39 : vector<1x512xi32>
    %c3_i32_9 = arith.constant 3 : i32
    %41 = vector.broadcast %c3_i32_9 : i32 to vector<1x512xi32>
    %42 = arith.cmpi sge, %2, %41 : vector<1x512xi32>
    %43 = arith.andi %40, %42 : vector<1x512xi1>
    %c2_i32_10 = arith.constant 2 : i32
    %44 = vector.broadcast %c2_i32_10 : i32 to vector<1x512xi32>
    %45 = arith.cmpi sge, %6, %44 : vector<1x512xi32>
    %c2_i32_11 = arith.constant 2 : i32
    %46 = vector.broadcast %c2_i32_11 : i32 to vector<1x512xi32>
    %47 = arith.cmpi sge, %2, %46 : vector<1x512xi32>
    %48 = arith.andi %45, %47 : vector<1x512xi1>
    %c2_i32_12 = arith.constant 2 : i32
    %49 = vector.broadcast %c2_i32_12 : i32 to vector<1x512xi32>
    %50 = arith.cmpi sge, %6, %49 : vector<1x512xi32>
    %c1_i32_13 = arith.constant 1 : i32
    %51 = vector.broadcast %c1_i32_13 : i32 to vector<1x512xi32>
    %52 = arith.cmpi sge, %2, %51 : vector<1x512xi32>
    %53 = arith.andi %50, %52 : vector<1x512xi1>
    %c2_i32_14 = arith.constant 2 : i32
    %54 = vector.broadcast %c2_i32_14 : i32 to vector<1x512xi32>
    %55 = arith.cmpi sge, %6, %54 : vector<1x512xi32>
    %c2_i32_15 = arith.constant 2 : i32
    %56 = vector.broadcast %c2_i32_15 : i32 to vector<1x512xi32>
    %57 = arith.cmpi sge, %6, %56 : vector<1x512xi32>
    %c15_i32_16 = arith.constant 15 : i32
    %58 = vector.broadcast %c15_i32_16 : i32 to vector<1x512xi32>
    %59 = arith.cmpi slt, %2, %58 : vector<1x512xi32>
    %60 = arith.andi %57, %59 : vector<1x512xi1>
    %c2_i32_17 = arith.constant 2 : i32
    %61 = vector.broadcast %c2_i32_17 : i32 to vector<1x512xi32>
    %62 = arith.cmpi sge, %6, %61 : vector<1x512xi32>
    %c14_i32_18 = arith.constant 14 : i32
    %63 = vector.broadcast %c14_i32_18 : i32 to vector<1x512xi32>
    %64 = arith.cmpi slt, %2, %63 : vector<1x512xi32>
    %65 = arith.andi %62, %64 : vector<1x512xi1>
    %c2_i32_19 = arith.constant 2 : i32
    %66 = vector.broadcast %c2_i32_19 : i32 to vector<1x512xi32>
    %67 = arith.cmpi sge, %6, %66 : vector<1x512xi32>
    %c13_i32_20 = arith.constant 13 : i32
    %68 = vector.broadcast %c13_i32_20 : i32 to vector<1x512xi32>
    %69 = arith.cmpi slt, %2, %68 : vector<1x512xi32>
    %70 = arith.andi %67, %69 : vector<1x512xi1>
    %c1_i32_21 = arith.constant 1 : i32
    %71 = vector.broadcast %c1_i32_21 : i32 to vector<1x512xi32>
    %72 = arith.cmpi sge, %6, %71 : vector<1x512xi32>
    %c3_i32_22 = arith.constant 3 : i32
    %73 = vector.broadcast %c3_i32_22 : i32 to vector<1x512xi32>
    %74 = arith.cmpi sge, %2, %73 : vector<1x512xi32>
    %75 = arith.andi %72, %74 : vector<1x512xi1>
    %c1_i32_23 = arith.constant 1 : i32
    %76 = vector.broadcast %c1_i32_23 : i32 to vector<1x512xi32>
    %77 = arith.cmpi sge, %6, %76 : vector<1x512xi32>
    %c2_i32_24 = arith.constant 2 : i32
    %78 = vector.broadcast %c2_i32_24 : i32 to vector<1x512xi32>
    %79 = arith.cmpi sge, %2, %78 : vector<1x512xi32>
    %80 = arith.andi %77, %79 : vector<1x512xi1>
    %c1_i32_25 = arith.constant 1 : i32
    %81 = vector.broadcast %c1_i32_25 : i32 to vector<1x512xi32>
    %82 = arith.cmpi sge, %6, %81 : vector<1x512xi32>
    %c1_i32_26 = arith.constant 1 : i32
    %83 = vector.broadcast %c1_i32_26 : i32 to vector<1x512xi32>
    %84 = arith.cmpi sge, %2, %83 : vector<1x512xi32>
    %85 = arith.andi %82, %84 : vector<1x512xi1>
    %c1_i32_27 = arith.constant 1 : i32
    %86 = vector.broadcast %c1_i32_27 : i32 to vector<1x512xi32>
    %87 = arith.cmpi sge, %6, %86 : vector<1x512xi32>
    %c1_i32_28 = arith.constant 1 : i32
    %88 = vector.broadcast %c1_i32_28 : i32 to vector<1x512xi32>
    %89 = arith.cmpi sge, %6, %88 : vector<1x512xi32>
    %c15_i32_29 = arith.constant 15 : i32
    %90 = vector.broadcast %c15_i32_29 : i32 to vector<1x512xi32>
    %91 = arith.cmpi slt, %2, %90 : vector<1x512xi32>
    %92 = arith.andi %89, %91 : vector<1x512xi1>
    %c1_i32_30 = arith.constant 1 : i32
    %93 = vector.broadcast %c1_i32_30 : i32 to vector<1x512xi32>
    %94 = arith.cmpi sge, %6, %93 : vector<1x512xi32>
    %c14_i32_31 = arith.constant 14 : i32
    %95 = vector.broadcast %c14_i32_31 : i32 to vector<1x512xi32>
    %96 = arith.cmpi slt, %2, %95 : vector<1x512xi32>
    %97 = arith.andi %94, %96 : vector<1x512xi1>
    %c1_i32_32 = arith.constant 1 : i32
    %98 = vector.broadcast %c1_i32_32 : i32 to vector<1x512xi32>
    %99 = arith.cmpi sge, %6, %98 : vector<1x512xi32>
    %c13_i32_33 = arith.constant 13 : i32
    %100 = vector.broadcast %c13_i32_33 : i32 to vector<1x512xi32>
    %101 = arith.cmpi slt, %2, %100 : vector<1x512xi32>
    %102 = arith.andi %99, %101 : vector<1x512xi1>
    %c3_i32_34 = arith.constant 3 : i32
    %103 = vector.broadcast %c3_i32_34 : i32 to vector<1x512xi32>
    %104 = arith.cmpi sge, %2, %103 : vector<1x512xi32>
    %c2_i32_35 = arith.constant 2 : i32
    %105 = vector.broadcast %c2_i32_35 : i32 to vector<1x512xi32>
    %106 = arith.cmpi sge, %2, %105 : vector<1x512xi32>
    %c1_i32_36 = arith.constant 1 : i32
    %107 = vector.broadcast %c1_i32_36 : i32 to vector<1x512xi32>
    %108 = arith.cmpi sge, %2, %107 : vector<1x512xi32>
    %c15_i32_37 = arith.constant 15 : i32
    %109 = vector.broadcast %c15_i32_37 : i32 to vector<1x512xi32>
    %110 = arith.cmpi slt, %2, %109 : vector<1x512xi32>
    %c14_i32_38 = arith.constant 14 : i32
    %111 = vector.broadcast %c14_i32_38 : i32 to vector<1x512xi32>
    %112 = arith.cmpi slt, %2, %111 : vector<1x512xi32>
    %c13_i32_39 = arith.constant 13 : i32
    %113 = vector.broadcast %c13_i32_39 : i32 to vector<1x512xi32>
    %114 = arith.cmpi slt, %2, %113 : vector<1x512xi32>
    %c15_i32_40 = arith.constant 15 : i32
    %115 = vector.broadcast %c15_i32_40 : i32 to vector<1x512xi32>
    %116 = arith.cmpi slt, %6, %115 : vector<1x512xi32>
    %c3_i32_41 = arith.constant 3 : i32
    %117 = vector.broadcast %c3_i32_41 : i32 to vector<1x512xi32>
    %118 = arith.cmpi sge, %2, %117 : vector<1x512xi32>
    %119 = arith.andi %116, %118 : vector<1x512xi1>
    %c15_i32_42 = arith.constant 15 : i32
    %120 = vector.broadcast %c15_i32_42 : i32 to vector<1x512xi32>
    %121 = arith.cmpi slt, %6, %120 : vector<1x512xi32>
    %c2_i32_43 = arith.constant 2 : i32
    %122 = vector.broadcast %c2_i32_43 : i32 to vector<1x512xi32>
    %123 = arith.cmpi sge, %2, %122 : vector<1x512xi32>
    %124 = arith.andi %121, %123 : vector<1x512xi1>
    %c15_i32_44 = arith.constant 15 : i32
    %125 = vector.broadcast %c15_i32_44 : i32 to vector<1x512xi32>
    %126 = arith.cmpi slt, %6, %125 : vector<1x512xi32>
    %c1_i32_45 = arith.constant 1 : i32
    %127 = vector.broadcast %c1_i32_45 : i32 to vector<1x512xi32>
    %128 = arith.cmpi sge, %2, %127 : vector<1x512xi32>
    %129 = arith.andi %126, %128 : vector<1x512xi1>
    %c15_i32_46 = arith.constant 15 : i32
    %130 = vector.broadcast %c15_i32_46 : i32 to vector<1x512xi32>
    %131 = arith.cmpi slt, %6, %130 : vector<1x512xi32>
    %c15_i32_47 = arith.constant 15 : i32
    %132 = vector.broadcast %c15_i32_47 : i32 to vector<1x512xi32>
    %133 = arith.cmpi slt, %6, %132 : vector<1x512xi32>
    %c15_i32_48 = arith.constant 15 : i32
    %134 = vector.broadcast %c15_i32_48 : i32 to vector<1x512xi32>
    %135 = arith.cmpi slt, %2, %134 : vector<1x512xi32>
    %136 = arith.andi %133, %135 : vector<1x512xi1>
    %c15_i32_49 = arith.constant 15 : i32
    %137 = vector.broadcast %c15_i32_49 : i32 to vector<1x512xi32>
    %138 = arith.cmpi slt, %6, %137 : vector<1x512xi32>
    %c14_i32_50 = arith.constant 14 : i32
    %139 = vector.broadcast %c14_i32_50 : i32 to vector<1x512xi32>
    %140 = arith.cmpi slt, %2, %139 : vector<1x512xi32>
    %141 = arith.andi %138, %140 : vector<1x512xi1>
    %c15_i32_51 = arith.constant 15 : i32
    %142 = vector.broadcast %c15_i32_51 : i32 to vector<1x512xi32>
    %143 = arith.cmpi slt, %6, %142 : vector<1x512xi32>
    %c13_i32_52 = arith.constant 13 : i32
    %144 = vector.broadcast %c13_i32_52 : i32 to vector<1x512xi32>
    %145 = arith.cmpi slt, %2, %144 : vector<1x512xi32>
    %146 = arith.andi %143, %145 : vector<1x512xi1>
    %c14_i32_53 = arith.constant 14 : i32
    %147 = vector.broadcast %c14_i32_53 : i32 to vector<1x512xi32>
    %148 = arith.cmpi slt, %6, %147 : vector<1x512xi32>
    %c3_i32_54 = arith.constant 3 : i32
    %149 = vector.broadcast %c3_i32_54 : i32 to vector<1x512xi32>
    %150 = arith.cmpi sge, %2, %149 : vector<1x512xi32>
    %151 = arith.andi %148, %150 : vector<1x512xi1>
    %c14_i32_55 = arith.constant 14 : i32
    %152 = vector.broadcast %c14_i32_55 : i32 to vector<1x512xi32>
    %153 = arith.cmpi slt, %6, %152 : vector<1x512xi32>
    %c2_i32_56 = arith.constant 2 : i32
    %154 = vector.broadcast %c2_i32_56 : i32 to vector<1x512xi32>
    %155 = arith.cmpi sge, %2, %154 : vector<1x512xi32>
    %156 = arith.andi %153, %155 : vector<1x512xi1>
    %c14_i32_57 = arith.constant 14 : i32
    %157 = vector.broadcast %c14_i32_57 : i32 to vector<1x512xi32>
    %158 = arith.cmpi slt, %6, %157 : vector<1x512xi32>
    %c1_i32_58 = arith.constant 1 : i32
    %159 = vector.broadcast %c1_i32_58 : i32 to vector<1x512xi32>
    %160 = arith.cmpi sge, %2, %159 : vector<1x512xi32>
    %161 = arith.andi %158, %160 : vector<1x512xi1>
    %c14_i32_59 = arith.constant 14 : i32
    %162 = vector.broadcast %c14_i32_59 : i32 to vector<1x512xi32>
    %163 = arith.cmpi slt, %6, %162 : vector<1x512xi32>
    %c14_i32_60 = arith.constant 14 : i32
    %164 = vector.broadcast %c14_i32_60 : i32 to vector<1x512xi32>
    %165 = arith.cmpi slt, %6, %164 : vector<1x512xi32>
    %c15_i32_61 = arith.constant 15 : i32
    %166 = vector.broadcast %c15_i32_61 : i32 to vector<1x512xi32>
    %167 = arith.cmpi slt, %2, %166 : vector<1x512xi32>
    %168 = arith.andi %165, %167 : vector<1x512xi1>
    %c14_i32_62 = arith.constant 14 : i32
    %169 = vector.broadcast %c14_i32_62 : i32 to vector<1x512xi32>
    %170 = arith.cmpi slt, %6, %169 : vector<1x512xi32>
    %c14_i32_63 = arith.constant 14 : i32
    %171 = vector.broadcast %c14_i32_63 : i32 to vector<1x512xi32>
    %172 = arith.cmpi slt, %2, %171 : vector<1x512xi32>
    %173 = arith.andi %170, %172 : vector<1x512xi1>
    %c14_i32_64 = arith.constant 14 : i32
    %174 = vector.broadcast %c14_i32_64 : i32 to vector<1x512xi32>
    %175 = arith.cmpi slt, %6, %174 : vector<1x512xi32>
    %c13_i32_65 = arith.constant 13 : i32
    %176 = vector.broadcast %c13_i32_65 : i32 to vector<1x512xi32>
    %177 = arith.cmpi slt, %2, %176 : vector<1x512xi32>
    %178 = arith.andi %175, %177 : vector<1x512xi1>
    %c13_i32_66 = arith.constant 13 : i32
    %179 = vector.broadcast %c13_i32_66 : i32 to vector<1x512xi32>
    %180 = arith.cmpi slt, %6, %179 : vector<1x512xi32>
    %c3_i32_67 = arith.constant 3 : i32
    %181 = vector.broadcast %c3_i32_67 : i32 to vector<1x512xi32>
    %182 = arith.cmpi sge, %2, %181 : vector<1x512xi32>
    %183 = arith.andi %180, %182 : vector<1x512xi1>
    %c13_i32_68 = arith.constant 13 : i32
    %184 = vector.broadcast %c13_i32_68 : i32 to vector<1x512xi32>
    %185 = arith.cmpi slt, %6, %184 : vector<1x512xi32>
    %c2_i32_69 = arith.constant 2 : i32
    %186 = vector.broadcast %c2_i32_69 : i32 to vector<1x512xi32>
    %187 = arith.cmpi sge, %2, %186 : vector<1x512xi32>
    %188 = arith.andi %185, %187 : vector<1x512xi1>
    %c13_i32_70 = arith.constant 13 : i32
    %189 = vector.broadcast %c13_i32_70 : i32 to vector<1x512xi32>
    %190 = arith.cmpi slt, %6, %189 : vector<1x512xi32>
    %c1_i32_71 = arith.constant 1 : i32
    %191 = vector.broadcast %c1_i32_71 : i32 to vector<1x512xi32>
    %192 = arith.cmpi sge, %2, %191 : vector<1x512xi32>
    %193 = arith.andi %190, %192 : vector<1x512xi1>
    %c13_i32_72 = arith.constant 13 : i32
    %194 = vector.broadcast %c13_i32_72 : i32 to vector<1x512xi32>
    %195 = arith.cmpi slt, %6, %194 : vector<1x512xi32>
    %c13_i32_73 = arith.constant 13 : i32
    %196 = vector.broadcast %c13_i32_73 : i32 to vector<1x512xi32>
    %197 = arith.cmpi slt, %6, %196 : vector<1x512xi32>
    %c15_i32_74 = arith.constant 15 : i32
    %198 = vector.broadcast %c15_i32_74 : i32 to vector<1x512xi32>
    %199 = arith.cmpi slt, %2, %198 : vector<1x512xi32>
    %200 = arith.andi %197, %199 : vector<1x512xi1>
    %c13_i32_75 = arith.constant 13 : i32
    %201 = vector.broadcast %c13_i32_75 : i32 to vector<1x512xi32>
    %202 = arith.cmpi slt, %6, %201 : vector<1x512xi32>
    %c14_i32_76 = arith.constant 14 : i32
    %203 = vector.broadcast %c14_i32_76 : i32 to vector<1x512xi32>
    %204 = arith.cmpi slt, %2, %203 : vector<1x512xi32>
    %205 = arith.andi %202, %204 : vector<1x512xi1>
    %c13_i32_77 = arith.constant 13 : i32
    %206 = vector.broadcast %c13_i32_77 : i32 to vector<1x512xi32>
    %207 = arith.cmpi slt, %6, %206 : vector<1x512xi32>
    %c13_i32_78 = arith.constant 13 : i32
    %208 = vector.broadcast %c13_i32_78 : i32 to vector<1x512xi32>
    %209 = arith.cmpi slt, %2, %208 : vector<1x512xi32>
    %210 = arith.andi %207, %209 : vector<1x512xi1>
    %c0 = arith.constant 0 : index
    %c0_79 = arith.constant 0 : index
    %211 = vector.load %arg1[%c0, %c0_79] : memref<48x8xf32, #tpu.memory_space<vmem>>, vector<48x8xf32>
    %c0_80 = arith.constant 0 : index
    %c0_81 = arith.constant 0 : index
    %212 = vector.load %arg0[%c0_80, %c0_81] : memref<8x512xf32, #tpu.memory_space<vmem>>, vector<8x512xf32>
    %cst = arith.constant dense<0.000000e+00> : vector<48x512xf32>
    %213 = tpu.matmul %211, %212, %cst {dimension_numbers = #tpu.dot_dimension_numbers<[1], [0], [0], [1], [0, 0, 1, 1], [], []>} : vector<48x8xf32>, vector<8x512xf32>, vector<48x512xf32> -> vector<48x512xf32>
    %c0_82 = arith.constant 0 : index
    %c0_83 = arith.constant 0 : index
    %214 = vector.load %arg2[%c0_82, %c0_83] : memref<48x1xf32, #tpu.memory_space<vmem>>, vector<48x1xf32>
    %c0_84 = arith.constant 0 : index
    %c0_85 = arith.constant 0 : index
    %215 = vector.load %arg3[%c0_84, %c0_85] : memref<48x1xf32, #tpu.memory_space<vmem>>, vector<48x1xf32>
    %cst_86 = arith.constant dense<0.000000e+00> : vector<48xf32>
    %216 = vector.multi_reduction <add>, %213, %cst_86 [1] : vector<48x512xf32> to vector<48xf32>
    %217 = vector.shape_cast %216 : vector<48xf32> to vector<48x1xf32>
    %cst_87 = arith.constant 0.001953125 : f32
    %218 = vector.broadcast %cst_87 : f32 to vector<48x1xf32>
    %219 = arith.mulf %217, %218 : vector<48x1xf32>
    %220 = arith.mulf %213, %213 : vector<48x512xf32>
    %cst_88 = arith.constant dense<0.000000e+00> : vector<48xf32>
    %221 = vector.multi_reduction <add>, %220, %cst_88 [1] : vector<48x512xf32> to vector<48xf32>
    %222 = vector.shape_cast %221 : vector<48xf32> to vector<48x1xf32>
    %cst_89 = arith.constant 0.001953125 : f32
    %223 = vector.broadcast %cst_89 : f32 to vector<48x1xf32>
    %224 = arith.mulf %222, %223 : vector<48x1xf32>
    %225 = arith.mulf %219, %219 : vector<48x1xf32>
    %226 = arith.subf %224, %225 : vector<48x1xf32>
    %cst_90 = arith.constant 0.000000e+00 : f32
    %227 = vector.broadcast %cst_90 : f32 to vector<48x1xf32>
    %228 = arith.maximumf %226, %227 : vector<48x1xf32>
    %229 = vector.broadcast %219 : vector<48x1xf32> to vector<48x512xf32>
    %230 = arith.subf %213, %229 : vector<48x512xf32>
    %cst_91 = arith.constant 9.99999974E-6 : f32
    %231 = vector.broadcast %cst_91 : f32 to vector<48x1xf32>
    %232 = arith.addf %228, %231 : vector<48x1xf32>
    %233 = math.rsqrt %232 : vector<48x1xf32>
    %234 = vector.broadcast %233 : vector<48x1xf32> to vector<48x512xf32>
    %235 = arith.mulf %230, %234 : vector<48x512xf32>
    %236 = vector.broadcast %214 : vector<48x1xf32> to vector<48x512xf32>
    %237 = arith.mulf %235, %236 : vector<48x512xf32>
    %238 = vector.broadcast %215 : vector<48x1xf32> to vector<48x512xf32>
    %239 = arith.addf %237, %238 : vector<48x512xf32>
    %240 = arith.negf %239 : vector<48x512xf32>
    %241 = math.exp %240 : vector<48x512xf32>
    %cst_92 = arith.constant 1.000000e+00 : f32
    %242 = vector.broadcast %cst_92 : f32 to vector<48x512xf32>
    %243 = arith.addf %242, %241 : vector<48x512xf32>
    %244 = arith.divf %242, %243 : vector<48x512xf32>
    %245 = arith.mulf %239, %244 : vector<48x512xf32>
    %c0_93 = arith.constant 0 : index
    %c0_94 = arith.constant 0 : index
    %246 = vector.load %arg4[%c0_93, %c0_94] : memref<48x9xf32, #tpu.memory_space<vmem>>, vector<48x9xf32>
    %247 = vector.extract_strided_slice %245 {offsets = [0, 0], sizes = [16, 512], strides = [1, 1]} : vector<48x512xf32> to vector<16x512xf32>
    %248 = vector.extract_strided_slice %246 {offsets = [0, 0], sizes = [16, 9], strides = [1, 1]} : vector<48x9xf32> to vector<16x9xf32>
    %cst_95 = arith.constant 0.000000e+00 : f32
    %249 = vector.broadcast %cst_95 : f32 to vector<16x512xf32>
    %c17_i32 = arith.constant 17 : i32
    %250 = tpu.dynamic_rotate %247 by %c17_i32 dim 1 : vector<16x512xf32>, i32 -> vector<16x512xf32>
    %cst_96 = arith.constant 0.000000e+00 : f32
    %251 = vector.shape_cast %85 : vector<1x512xi1> to vector<1x512xi1>
    %252 = vector.broadcast %251 : vector<1x512xi1> to vector<16x512xi1>
    %253 = vector.broadcast %cst_96 : f32 to vector<16x512xf32>
    %254 = arith.select %252, %250, %253 : vector<16x512xi1>, vector<16x512xf32>
    %255 = vector.extract_strided_slice %248 {offsets = [0, 0], sizes = [16, 1], strides = [1, 1]} : vector<16x9xf32> to vector<16x1xf32>
    %256 = vector.broadcast %255 : vector<16x1xf32> to vector<16x512xf32>
    %257 = arith.mulf %254, %256 : vector<16x512xf32>
    %258 = arith.addf %249, %257 : vector<16x512xf32>
    %c16_i32 = arith.constant 16 : i32
    %259 = tpu.dynamic_rotate %247 by %c16_i32 dim 1 : vector<16x512xf32>, i32 -> vector<16x512xf32>
    %cst_97 = arith.constant 0.000000e+00 : f32
    %260 = vector.shape_cast %87 : vector<1x512xi1> to vector<1x512xi1>
    %261 = vector.broadcast %260 : vector<1x512xi1> to vector<16x512xi1>
    %262 = vector.broadcast %cst_97 : f32 to vector<16x512xf32>
    %263 = arith.select %261, %259, %262 : vector<16x512xi1>, vector<16x512xf32>
    %264 = vector.extract_strided_slice %248 {offsets = [0, 1], sizes = [16, 1], strides = [1, 1]} : vector<16x9xf32> to vector<16x1xf32>
    %265 = vector.broadcast %264 : vector<16x1xf32> to vector<16x512xf32>
    %266 = arith.mulf %263, %265 : vector<16x512xf32>
    %267 = arith.addf %258, %266 : vector<16x512xf32>
    %c15_i32_98 = arith.constant 15 : i32
    %268 = tpu.dynamic_rotate %247 by %c15_i32_98 dim 1 : vector<16x512xf32>, i32 -> vector<16x512xf32>
    %cst_99 = arith.constant 0.000000e+00 : f32
    %269 = vector.shape_cast %92 : vector<1x512xi1> to vector<1x512xi1>
    %270 = vector.broadcast %269 : vector<1x512xi1> to vector<16x512xi1>
    %271 = vector.broadcast %cst_99 : f32 to vector<16x512xf32>
    %272 = arith.select %270, %268, %271 : vector<16x512xi1>, vector<16x512xf32>
    %273 = vector.extract_strided_slice %248 {offsets = [0, 2], sizes = [16, 1], strides = [1, 1]} : vector<16x9xf32> to vector<16x1xf32>
    %274 = vector.broadcast %273 : vector<16x1xf32> to vector<16x512xf32>
    %275 = arith.mulf %272, %274 : vector<16x512xf32>
    %276 = arith.addf %267, %275 : vector<16x512xf32>
    %c1_i32_100 = arith.constant 1 : i32
    %277 = tpu.dynamic_rotate %247 by %c1_i32_100 dim 1 : vector<16x512xf32>, i32 -> vector<16x512xf32>
    %cst_101 = arith.constant 0.000000e+00 : f32
    %278 = vector.shape_cast %108 : vector<1x512xi1> to vector<1x512xi1>
    %279 = vector.broadcast %278 : vector<1x512xi1> to vector<16x512xi1>
    %280 = vector.broadcast %cst_101 : f32 to vector<16x512xf32>
    %281 = arith.select %279, %277, %280 : vector<16x512xi1>, vector<16x512xf32>
    %282 = vector.extract_strided_slice %248 {offsets = [0, 3], sizes = [16, 1], strides = [1, 1]} : vector<16x9xf32> to vector<16x1xf32>
    %283 = vector.broadcast %282 : vector<16x1xf32> to vector<16x512xf32>
    %284 = arith.mulf %281, %283 : vector<16x512xf32>
    %285 = arith.addf %276, %284 : vector<16x512xf32>
    %286 = vector.extract_strided_slice %248 {offsets = [0, 4], sizes = [16, 1], strides = [1, 1]} : vector<16x9xf32> to vector<16x1xf32>
    %287 = vector.broadcast %286 : vector<16x1xf32> to vector<16x512xf32>
    %288 = arith.mulf %247, %287 : vector<16x512xf32>
    %289 = arith.addf %285, %288 : vector<16x512xf32>
    %c511_i32 = arith.constant 511 : i32
    %290 = tpu.dynamic_rotate %247 by %c511_i32 dim 1 : vector<16x512xf32>, i32 -> vector<16x512xf32>
    %cst_102 = arith.constant 0.000000e+00 : f32
    %291 = vector.shape_cast %110 : vector<1x512xi1> to vector<1x512xi1>
    %292 = vector.broadcast %291 : vector<1x512xi1> to vector<16x512xi1>
    %293 = vector.broadcast %cst_102 : f32 to vector<16x512xf32>
    %294 = arith.select %292, %290, %293 : vector<16x512xi1>, vector<16x512xf32>
    %295 = vector.extract_strided_slice %248 {offsets = [0, 5], sizes = [16, 1], strides = [1, 1]} : vector<16x9xf32> to vector<16x1xf32>
    %296 = vector.broadcast %295 : vector<16x1xf32> to vector<16x512xf32>
    %297 = arith.mulf %294, %296 : vector<16x512xf32>
    %298 = arith.addf %289, %297 : vector<16x512xf32>
    %c497_i32 = arith.constant 497 : i32
    %299 = tpu.dynamic_rotate %247 by %c497_i32 dim 1 : vector<16x512xf32>, i32 -> vector<16x512xf32>
    %cst_103 = arith.constant 0.000000e+00 : f32
    %300 = vector.shape_cast %129 : vector<1x512xi1> to vector<1x512xi1>
    %301 = vector.broadcast %300 : vector<1x512xi1> to vector<16x512xi1>
    %302 = vector.broadcast %cst_103 : f32 to vector<16x512xf32>
    %303 = arith.select %301, %299, %302 : vector<16x512xi1>, vector<16x512xf32>
    %304 = vector.extract_strided_slice %248 {offsets = [0, 6], sizes = [16, 1], strides = [1, 1]} : vector<16x9xf32> to vector<16x1xf32>
    %305 = vector.broadcast %304 : vector<16x1xf32> to vector<16x512xf32>
    %306 = arith.mulf %303, %305 : vector<16x512xf32>
    %307 = arith.addf %298, %306 : vector<16x512xf32>
    %c496_i32 = arith.constant 496 : i32
    %308 = tpu.dynamic_rotate %247 by %c496_i32 dim 1 : vector<16x512xf32>, i32 -> vector<16x512xf32>
    %cst_104 = arith.constant 0.000000e+00 : f32
    %309 = vector.shape_cast %131 : vector<1x512xi1> to vector<1x512xi1>
    %310 = vector.broadcast %309 : vector<1x512xi1> to vector<16x512xi1>
    %311 = vector.broadcast %cst_104 : f32 to vector<16x512xf32>
    %312 = arith.select %310, %308, %311 : vector<16x512xi1>, vector<16x512xf32>
    %313 = vector.extract_strided_slice %248 {offsets = [0, 7], sizes = [16, 1], strides = [1, 1]} : vector<16x9xf32> to vector<16x1xf32>
    %314 = vector.broadcast %313 : vector<16x1xf32> to vector<16x512xf32>
    %315 = arith.mulf %312, %314 : vector<16x512xf32>
    %316 = arith.addf %307, %315 : vector<16x512xf32>
    %c495_i32 = arith.constant 495 : i32
    %317 = tpu.dynamic_rotate %247 by %c495_i32 dim 1 : vector<16x512xf32>, i32 -> vector<16x512xf32>
    %cst_105 = arith.constant 0.000000e+00 : f32
    %318 = vector.shape_cast %136 : vector<1x512xi1> to vector<1x512xi1>
    %319 = vector.broadcast %318 : vector<1x512xi1> to vector<16x512xi1>
    %320 = vector.broadcast %cst_105 : f32 to vector<16x512xf32>
    %321 = arith.select %319, %317, %320 : vector<16x512xi1>, vector<16x512xf32>
    %322 = vector.extract_strided_slice %248 {offsets = [0, 8], sizes = [16, 1], strides = [1, 1]} : vector<16x9xf32> to vector<16x1xf32>
    %323 = vector.broadcast %322 : vector<16x1xf32> to vector<16x512xf32>
    %324 = arith.mulf %321, %323 : vector<16x512xf32>
    %325 = arith.addf %316, %324 : vector<16x512xf32>
    %326 = vector.extract_strided_slice %245 {offsets = [16, 0], sizes = [16, 512], strides = [1, 1]} : vector<48x512xf32> to vector<16x512xf32>
    %327 = vector.extract_strided_slice %246 {offsets = [16, 0], sizes = [16, 9], strides = [1, 1]} : vector<48x9xf32> to vector<16x9xf32>
    %cst_106 = arith.constant 0.000000e+00 : f32
    %328 = vector.broadcast %cst_106 : f32 to vector<16x512xf32>
    %c17_i32_107 = arith.constant 17 : i32
    %329 = tpu.dynamic_rotate %326 by %c17_i32_107 dim 1 : vector<16x512xf32>, i32 -> vector<16x512xf32>
    %cst_108 = arith.constant 0.000000e+00 : f32
    %330 = vector.shape_cast %85 : vector<1x512xi1> to vector<1x512xi1>
    %331 = vector.broadcast %330 : vector<1x512xi1> to vector<16x512xi1>
    %332 = vector.broadcast %cst_108 : f32 to vector<16x512xf32>
    %333 = arith.select %331, %329, %332 : vector<16x512xi1>, vector<16x512xf32>
    %334 = vector.extract_strided_slice %327 {offsets = [0, 0], sizes = [16, 1], strides = [1, 1]} : vector<16x9xf32> to vector<16x1xf32>
    %335 = vector.broadcast %334 : vector<16x1xf32> to vector<16x512xf32>
    %336 = arith.mulf %333, %335 : vector<16x512xf32>
    %337 = arith.addf %328, %336 : vector<16x512xf32>
    %c16_i32_109 = arith.constant 16 : i32
    %338 = tpu.dynamic_rotate %326 by %c16_i32_109 dim 1 : vector<16x512xf32>, i32 -> vector<16x512xf32>
    %cst_110 = arith.constant 0.000000e+00 : f32
    %339 = vector.shape_cast %87 : vector<1x512xi1> to vector<1x512xi1>
    %340 = vector.broadcast %339 : vector<1x512xi1> to vector<16x512xi1>
    %341 = vector.broadcast %cst_110 : f32 to vector<16x512xf32>
    %342 = arith.select %340, %338, %341 : vector<16x512xi1>, vector<16x512xf32>
    %343 = vector.extract_strided_slice %327 {offsets = [0, 1], sizes = [16, 1], strides = [1, 1]} : vector<16x9xf32> to vector<16x1xf32>
    %344 = vector.broadcast %343 : vector<16x1xf32> to vector<16x512xf32>
    %345 = arith.mulf %342, %344 : vector<16x512xf32>
    %346 = arith.addf %337, %345 : vector<16x512xf32>
    %c15_i32_111 = arith.constant 15 : i32
    %347 = tpu.dynamic_rotate %326 by %c15_i32_111 dim 1 : vector<16x512xf32>, i32 -> vector<16x512xf32>
    %cst_112 = arith.constant 0.000000e+00 : f32
    %348 = vector.shape_cast %92 : vector<1x512xi1> to vector<1x512xi1>
    %349 = vector.broadcast %348 : vector<1x512xi1> to vector<16x512xi1>
    %350 = vector.broadcast %cst_112 : f32 to vector<16x512xf32>
    %351 = arith.select %349, %347, %350 : vector<16x512xi1>, vector<16x512xf32>
    %352 = vector.extract_strided_slice %327 {offsets = [0, 2], sizes = [16, 1], strides = [1, 1]} : vector<16x9xf32> to vector<16x1xf32>
    %353 = vector.broadcast %352 : vector<16x1xf32> to vector<16x512xf32>
    %354 = arith.mulf %351, %353 : vector<16x512xf32>
    %355 = arith.addf %346, %354 : vector<16x512xf32>
    %c1_i32_113 = arith.constant 1 : i32
    %356 = tpu.dynamic_rotate %326 by %c1_i32_113 dim 1 : vector<16x512xf32>, i32 -> vector<16x512xf32>
    %cst_114 = arith.constant 0.000000e+00 : f32
    %357 = vector.shape_cast %108 : vector<1x512xi1> to vector<1x512xi1>
    %358 = vector.broadcast %357 : vector<1x512xi1> to vector<16x512xi1>
    %359 = vector.broadcast %cst_114 : f32 to vector<16x512xf32>
    %360 = arith.select %358, %356, %359 : vector<16x512xi1>, vector<16x512xf32>
    %361 = vector.extract_strided_slice %327 {offsets = [0, 3], sizes = [16, 1], strides = [1, 1]} : vector<16x9xf32> to vector<16x1xf32>
    %362 = vector.broadcast %361 : vector<16x1xf32> to vector<16x512xf32>
    %363 = arith.mulf %360, %362 : vector<16x512xf32>
    %364 = arith.addf %355, %363 : vector<16x512xf32>
    %365 = vector.extract_strided_slice %327 {offsets = [0, 4], sizes = [16, 1], strides = [1, 1]} : vector<16x9xf32> to vector<16x1xf32>
    %366 = vector.broadcast %365 : vector<16x1xf32> to vector<16x512xf32>
    %367 = arith.mulf %326, %366 : vector<16x512xf32>
    %368 = arith.addf %364, %367 : vector<16x512xf32>
    %c511_i32_115 = arith.constant 511 : i32
    %369 = tpu.dynamic_rotate %326 by %c511_i32_115 dim 1 : vector<16x512xf32>, i32 -> vector<16x512xf32>
    %cst_116 = arith.constant 0.000000e+00 : f32
    %370 = vector.shape_cast %110 : vector<1x512xi1> to vector<1x512xi1>
    %371 = vector.broadcast %370 : vector<1x512xi1> to vector<16x512xi1>
    %372 = vector.broadcast %cst_116 : f32 to vector<16x512xf32>
    %373 = arith.select %371, %369, %372 : vector<16x512xi1>, vector<16x512xf32>
    %374 = vector.extract_strided_slice %327 {offsets = [0, 5], sizes = [16, 1], strides = [1, 1]} : vector<16x9xf32> to vector<16x1xf32>
    %375 = vector.broadcast %374 : vector<16x1xf32> to vector<16x512xf32>
    %376 = arith.mulf %373, %375 : vector<16x512xf32>
    %377 = arith.addf %368, %376 : vector<16x512xf32>
    %c497_i32_117 = arith.constant 497 : i32
    %378 = tpu.dynamic_rotate %326 by %c497_i32_117 dim 1 : vector<16x512xf32>, i32 -> vector<16x512xf32>
    %cst_118 = arith.constant 0.000000e+00 : f32
    %379 = vector.shape_cast %129 : vector<1x512xi1> to vector<1x512xi1>
    %380 = vector.broadcast %379 : vector<1x512xi1> to vector<16x512xi1>
    %381 = vector.broadcast %cst_118 : f32 to vector<16x512xf32>
    %382 = arith.select %380, %378, %381 : vector<16x512xi1>, vector<16x512xf32>
    %383 = vector.extract_strided_slice %327 {offsets = [0, 6], sizes = [16, 1], strides = [1, 1]} : vector<16x9xf32> to vector<16x1xf32>
    %384 = vector.broadcast %383 : vector<16x1xf32> to vector<16x512xf32>
    %385 = arith.mulf %382, %384 : vector<16x512xf32>
    %386 = arith.addf %377, %385 : vector<16x512xf32>
    %c496_i32_119 = arith.constant 496 : i32
    %387 = tpu.dynamic_rotate %326 by %c496_i32_119 dim 1 : vector<16x512xf32>, i32 -> vector<16x512xf32>
    %cst_120 = arith.constant 0.000000e+00 : f32
    %388 = vector.shape_cast %131 : vector<1x512xi1> to vector<1x512xi1>
    %389 = vector.broadcast %388 : vector<1x512xi1> to vector<16x512xi1>
    %390 = vector.broadcast %cst_120 : f32 to vector<16x512xf32>
    %391 = arith.select %389, %387, %390 : vector<16x512xi1>, vector<16x512xf32>
    %392 = vector.extract_strided_slice %327 {offsets = [0, 7], sizes = [16, 1], strides = [1, 1]} : vector<16x9xf32> to vector<16x1xf32>
    %393 = vector.broadcast %392 : vector<16x1xf32> to vector<16x512xf32>
    %394 = arith.mulf %391, %393 : vector<16x512xf32>
    %395 = arith.addf %386, %394 : vector<16x512xf32>
    %c495_i32_121 = arith.constant 495 : i32
    %396 = tpu.dynamic_rotate %326 by %c495_i32_121 dim 1 : vector<16x512xf32>, i32 -> vector<16x512xf32>
    %cst_122 = arith.constant 0.000000e+00 : f32
    %397 = vector.shape_cast %136 : vector<1x512xi1> to vector<1x512xi1>
    %398 = vector.broadcast %397 : vector<1x512xi1> to vector<16x512xi1>
    %399 = vector.broadcast %cst_122 : f32 to vector<16x512xf32>
    %400 = arith.select %398, %396, %399 : vector<16x512xi1>, vector<16x512xf32>
    %401 = vector.extract_strided_slice %327 {offsets = [0, 8], sizes = [16, 1], strides = [1, 1]} : vector<16x9xf32> to vector<16x1xf32>
    %402 = vector.broadcast %401 : vector<16x1xf32> to vector<16x512xf32>
    %403 = arith.mulf %400, %402 : vector<16x512xf32>
    %404 = arith.addf %395, %403 : vector<16x512xf32>
    %405 = vector.extract_strided_slice %245 {offsets = [32, 0], sizes = [16, 512], strides = [1, 1]} : vector<48x512xf32> to vector<16x512xf32>
    %406 = vector.extract_strided_slice %246 {offsets = [32, 0], sizes = [16, 9], strides = [1, 1]} : vector<48x9xf32> to vector<16x9xf32>
    %cst_123 = arith.constant 0.000000e+00 : f32
    %407 = vector.broadcast %cst_123 : f32 to vector<16x512xf32>
    %c17_i32_124 = arith.constant 17 : i32
    %408 = tpu.dynamic_rotate %405 by %c17_i32_124 dim 1 : vector<16x512xf32>, i32 -> vector<16x512xf32>
    %cst_125 = arith.constant 0.000000e+00 : f32
    %409 = vector.shape_cast %85 : vector<1x512xi1> to vector<1x512xi1>
    %410 = vector.broadcast %409 : vector<1x512xi1> to vector<16x512xi1>
    %411 = vector.broadcast %cst_125 : f32 to vector<16x512xf32>
    %412 = arith.select %410, %408, %411 : vector<16x512xi1>, vector<16x512xf32>
    %413 = vector.extract_strided_slice %406 {offsets = [0, 0], sizes = [16, 1], strides = [1, 1]} : vector<16x9xf32> to vector<16x1xf32>
    %414 = vector.broadcast %413 : vector<16x1xf32> to vector<16x512xf32>
    %415 = arith.mulf %412, %414 : vector<16x512xf32>
    %416 = arith.addf %407, %415 : vector<16x512xf32>
    %c16_i32_126 = arith.constant 16 : i32
    %417 = tpu.dynamic_rotate %405 by %c16_i32_126 dim 1 : vector<16x512xf32>, i32 -> vector<16x512xf32>
    %cst_127 = arith.constant 0.000000e+00 : f32
    %418 = vector.shape_cast %87 : vector<1x512xi1> to vector<1x512xi1>
    %419 = vector.broadcast %418 : vector<1x512xi1> to vector<16x512xi1>
    %420 = vector.broadcast %cst_127 : f32 to vector<16x512xf32>
    %421 = arith.select %419, %417, %420 : vector<16x512xi1>, vector<16x512xf32>
    %422 = vector.extract_strided_slice %406 {offsets = [0, 1], sizes = [16, 1], strides = [1, 1]} : vector<16x9xf32> to vector<16x1xf32>
    %423 = vector.broadcast %422 : vector<16x1xf32> to vector<16x512xf32>
    %424 = arith.mulf %421, %423 : vector<16x512xf32>
    %425 = arith.addf %416, %424 : vector<16x512xf32>
    %c15_i32_128 = arith.constant 15 : i32
    %426 = tpu.dynamic_rotate %405 by %c15_i32_128 dim 1 : vector<16x512xf32>, i32 -> vector<16x512xf32>
    %cst_129 = arith.constant 0.000000e+00 : f32
    %427 = vector.shape_cast %92 : vector<1x512xi1> to vector<1x512xi1>
    %428 = vector.broadcast %427 : vector<1x512xi1> to vector<16x512xi1>
    %429 = vector.broadcast %cst_129 : f32 to vector<16x512xf32>
    %430 = arith.select %428, %426, %429 : vector<16x512xi1>, vector<16x512xf32>
    %431 = vector.extract_strided_slice %406 {offsets = [0, 2], sizes = [16, 1], strides = [1, 1]} : vector<16x9xf32> to vector<16x1xf32>
    %432 = vector.broadcast %431 : vector<16x1xf32> to vector<16x512xf32>
    %433 = arith.mulf %430, %432 : vector<16x512xf32>
    %434 = arith.addf %425, %433 : vector<16x512xf32>
    %c1_i32_130 = arith.constant 1 : i32
    %435 = tpu.dynamic_rotate %405 by %c1_i32_130 dim 1 : vector<16x512xf32>, i32 -> vector<16x512xf32>
    %cst_131 = arith.constant 0.000000e+00 : f32
    %436 = vector.shape_cast %108 : vector<1x512xi1> to vector<1x512xi1>
    %437 = vector.broadcast %436 : vector<1x512xi1> to vector<16x512xi1>
    %438 = vector.broadcast %cst_131 : f32 to vector<16x512xf32>
    %439 = arith.select %437, %435, %438 : vector<16x512xi1>, vector<16x512xf32>
    %440 = vector.extract_strided_slice %406 {offsets = [0, 3], sizes = [16, 1], strides = [1, 1]} : vector<16x9xf32> to vector<16x1xf32>
    %441 = vector.broadcast %440 : vector<16x1xf32> to vector<16x512xf32>
    %442 = arith.mulf %439, %441 : vector<16x512xf32>
    %443 = arith.addf %434, %442 : vector<16x512xf32>
    %444 = vector.extract_strided_slice %406 {offsets = [0, 4], sizes = [16, 1], strides = [1, 1]} : vector<16x9xf32> to vector<16x1xf32>
    %445 = vector.broadcast %444 : vector<16x1xf32> to vector<16x512xf32>
    %446 = arith.mulf %405, %445 : vector<16x512xf32>
    %447 = arith.addf %443, %446 : vector<16x512xf32>
    %c511_i32_132 = arith.constant 511 : i32
    %448 = tpu.dynamic_rotate %405 by %c511_i32_132 dim 1 : vector<16x512xf32>, i32 -> vector<16x512xf32>
    %cst_133 = arith.constant 0.000000e+00 : f32
    %449 = vector.shape_cast %110 : vector<1x512xi1> to vector<1x512xi1>
    %450 = vector.broadcast %449 : vector<1x512xi1> to vector<16x512xi1>
    %451 = vector.broadcast %cst_133 : f32 to vector<16x512xf32>
    %452 = arith.select %450, %448, %451 : vector<16x512xi1>, vector<16x512xf32>
    %453 = vector.extract_strided_slice %406 {offsets = [0, 5], sizes = [16, 1], strides = [1, 1]} : vector<16x9xf32> to vector<16x1xf32>
    %454 = vector.broadcast %453 : vector<16x1xf32> to vector<16x512xf32>
    %455 = arith.mulf %452, %454 : vector<16x512xf32>
    %456 = arith.addf %447, %455 : vector<16x512xf32>
    %c497_i32_134 = arith.constant 497 : i32
    %457 = tpu.dynamic_rotate %405 by %c497_i32_134 dim 1 : vector<16x512xf32>, i32 -> vector<16x512xf32>
    %cst_135 = arith.constant 0.000000e+00 : f32
    %458 = vector.shape_cast %129 : vector<1x512xi1> to vector<1x512xi1>
    %459 = vector.broadcast %458 : vector<1x512xi1> to vector<16x512xi1>
    %460 = vector.broadcast %cst_135 : f32 to vector<16x512xf32>
    %461 = arith.select %459, %457, %460 : vector<16x512xi1>, vector<16x512xf32>
    %462 = vector.extract_strided_slice %406 {offsets = [0, 6], sizes = [16, 1], strides = [1, 1]} : vector<16x9xf32> to vector<16x1xf32>
    %463 = vector.broadcast %462 : vector<16x1xf32> to vector<16x512xf32>
    %464 = arith.mulf %461, %463 : vector<16x512xf32>
    %465 = arith.addf %456, %464 : vector<16x512xf32>
    %c496_i32_136 = arith.constant 496 : i32
    %466 = tpu.dynamic_rotate %405 by %c496_i32_136 dim 1 : vector<16x512xf32>, i32 -> vector<16x512xf32>
    %cst_137 = arith.constant 0.000000e+00 : f32
    %467 = vector.shape_cast %131 : vector<1x512xi1> to vector<1x512xi1>
    %468 = vector.broadcast %467 : vector<1x512xi1> to vector<16x512xi1>
    %469 = vector.broadcast %cst_137 : f32 to vector<16x512xf32>
    %470 = arith.select %468, %466, %469 : vector<16x512xi1>, vector<16x512xf32>
    %471 = vector.extract_strided_slice %406 {offsets = [0, 7], sizes = [16, 1], strides = [1, 1]} : vector<16x9xf32> to vector<16x1xf32>
    %472 = vector.broadcast %471 : vector<16x1xf32> to vector<16x512xf32>
    %473 = arith.mulf %470, %472 : vector<16x512xf32>
    %474 = arith.addf %465, %473 : vector<16x512xf32>
    %c495_i32_138 = arith.constant 495 : i32
    %475 = tpu.dynamic_rotate %405 by %c495_i32_138 dim 1 : vector<16x512xf32>, i32 -> vector<16x512xf32>
    %cst_139 = arith.constant 0.000000e+00 : f32
    %476 = vector.shape_cast %136 : vector<1x512xi1> to vector<1x512xi1>
    %477 = vector.broadcast %476 : vector<1x512xi1> to vector<16x512xi1>
    %478 = vector.broadcast %cst_139 : f32 to vector<16x512xf32>
    %479 = arith.select %477, %475, %478 : vector<16x512xi1>, vector<16x512xf32>
    %480 = vector.extract_strided_slice %406 {offsets = [0, 8], sizes = [16, 1], strides = [1, 1]} : vector<16x9xf32> to vector<16x1xf32>
    %481 = vector.broadcast %480 : vector<16x1xf32> to vector<16x512xf32>
    %482 = arith.mulf %479, %481 : vector<16x512xf32>
    %483 = arith.addf %474, %482 : vector<16x512xf32>
    %484 = tpu.concatenate %325, %404, %483 in 0 : vector<16x512xf32>, vector<16x512xf32>, vector<16x512xf32> -> vector<48x512xf32>
    %c0_140 = arith.constant 0 : index
    %c0_141 = arith.constant 0 : index
    %485 = vector.load %arg5[%c0_140, %c0_141] : memref<48x1xf32, #tpu.memory_space<vmem>>, vector<48x1xf32>
    %c0_142 = arith.constant 0 : index
    %c0_143 = arith.constant 0 : index
    %486 = vector.load %arg6[%c0_142, %c0_143] : memref<48x1xf32, #tpu.memory_space<vmem>>, vector<48x1xf32>
    %cst_144 = arith.constant dense<0.000000e+00> : vector<48xf32>
    %487 = vector.multi_reduction <add>, %484, %cst_144 [1] : vector<48x512xf32> to vector<48xf32>
    %488 = vector.shape_cast %487 : vector<48xf32> to vector<48x1xf32>
    %cst_145 = arith.constant 0.001953125 : f32
    %489 = vector.broadcast %cst_145 : f32 to vector<48x1xf32>
    %490 = arith.mulf %488, %489 : vector<48x1xf32>
    %491 = arith.mulf %484, %484 : vector<48x512xf32>
    %cst_146 = arith.constant dense<0.000000e+00> : vector<48xf32>
    %492 = vector.multi_reduction <add>, %491, %cst_146 [1] : vector<48x512xf32> to vector<48xf32>
    %493 = vector.shape_cast %492 : vector<48xf32> to vector<48x1xf32>
    %cst_147 = arith.constant 0.001953125 : f32
    %494 = vector.broadcast %cst_147 : f32 to vector<48x1xf32>
    %495 = arith.mulf %493, %494 : vector<48x1xf32>
    %496 = arith.mulf %490, %490 : vector<48x1xf32>
    %497 = arith.subf %495, %496 : vector<48x1xf32>
    %cst_148 = arith.constant 0.000000e+00 : f32
    %498 = vector.broadcast %cst_148 : f32 to vector<48x1xf32>
    %499 = arith.maximumf %497, %498 : vector<48x1xf32>
    %500 = vector.broadcast %490 : vector<48x1xf32> to vector<48x512xf32>
    %501 = arith.subf %484, %500 : vector<48x512xf32>
    %cst_149 = arith.constant 9.99999974E-6 : f32
    %502 = vector.broadcast %cst_149 : f32 to vector<48x1xf32>
    %503 = arith.addf %499, %502 : vector<48x1xf32>
    %504 = math.rsqrt %503 : vector<48x1xf32>
    %505 = vector.broadcast %504 : vector<48x1xf32> to vector<48x512xf32>
    %506 = arith.mulf %501, %505 : vector<48x512xf32>
    %507 = vector.broadcast %485 : vector<48x1xf32> to vector<48x512xf32>
    %508 = arith.mulf %506, %507 : vector<48x512xf32>
    %509 = vector.broadcast %486 : vector<48x1xf32> to vector<48x512xf32>
    %510 = arith.addf %508, %509 : vector<48x512xf32>
    %511 = arith.negf %510 : vector<48x512xf32>
    %512 = math.exp %511 : vector<48x512xf32>
    %cst_150 = arith.constant 1.000000e+00 : f32
    %513 = vector.broadcast %cst_150 : f32 to vector<48x512xf32>
    %514 = arith.addf %513, %512 : vector<48x512xf32>
    %515 = arith.divf %513, %514 : vector<48x512xf32>
    %516 = arith.mulf %510, %515 : vector<48x512xf32>
    %517 = tpu.iota {dimensions = array<i32: 1>} : vector<1x4xi32>
    %cst_151 = arith.constant 0.000000e+00 : f32
    %518 = vector.broadcast %cst_151 : f32 to vector<48x4xf32>
    %519 = vector.extract_strided_slice %516 {offsets = [0, 0], sizes = [48, 256], strides = [1, 1]} : vector<48x512xf32> to vector<48x256xf32>
    %c0_i32 = arith.constant 0 : i32
    %520 = vector.broadcast %c0_i32 : i32 to vector<1x4xi32>
    %521 = arith.cmpi eq, %517, %520 : vector<1x4xi32>
    %cst_152 = arith.constant dense<0.000000e+00> : vector<48xf32>
    %522 = vector.multi_reduction <add>, %519, %cst_152 [1] : vector<48x256xf32> to vector<48xf32>
    %523 = vector.shape_cast %522 : vector<48xf32> to vector<48x1xf32>
    %cst_153 = arith.constant 2.560000e+02 : f32
    %524 = vector.broadcast %cst_153 : f32 to vector<48x1xf32>
    %525 = arith.divf %523, %524 : vector<48x1xf32>
    %cst_154 = arith.constant 0.000000e+00 : f32
    %526 = vector.shape_cast %521 : vector<1x4xi1> to vector<1x4xi1>
    %527 = vector.broadcast %526 : vector<1x4xi1> to vector<48x4xi1>
    %528 = vector.shape_cast %525 : vector<48x1xf32> to vector<48x1xf32>
    %529 = vector.broadcast %528 : vector<48x1xf32> to vector<48x4xf32>
    %530 = vector.broadcast %cst_154 : f32 to vector<48x4xf32>
    %531 = arith.select %527, %529, %530 : vector<48x4xi1>, vector<48x4xf32>
    %532 = arith.addf %518, %531 : vector<48x4xf32>
    %c2_i32_155 = arith.constant 2 : i32
    %533 = vector.broadcast %c2_i32_155 : i32 to vector<1x4xi32>
    %534 = arith.cmpi eq, %517, %533 : vector<1x4xi32>
    %cst_156 = arith.constant dense<0xFF800000> : vector<48xf32>
    %535 = vector.multi_reduction <maximumf>, %519, %cst_156 [1] : vector<48x256xf32> to vector<48xf32>
    %536 = vector.shape_cast %535 : vector<48xf32> to vector<48x1xf32>
    %cst_157 = arith.constant 0.000000e+00 : f32
    %537 = vector.shape_cast %534 : vector<1x4xi1> to vector<1x4xi1>
    %538 = vector.broadcast %537 : vector<1x4xi1> to vector<48x4xi1>
    %539 = vector.shape_cast %536 : vector<48x1xf32> to vector<48x1xf32>
    %540 = vector.broadcast %539 : vector<48x1xf32> to vector<48x4xf32>
    %541 = vector.broadcast %cst_157 : f32 to vector<48x4xf32>
    %542 = arith.select %538, %540, %541 : vector<48x4xi1>, vector<48x4xf32>
    %543 = arith.addf %532, %542 : vector<48x4xf32>
    %544 = vector.extract_strided_slice %516 {offsets = [0, 256], sizes = [48, 256], strides = [1, 1]} : vector<48x512xf32> to vector<48x256xf32>
    %c1_i32_158 = arith.constant 1 : i32
    %545 = vector.broadcast %c1_i32_158 : i32 to vector<1x4xi32>
    %546 = arith.cmpi eq, %517, %545 : vector<1x4xi32>
    %cst_159 = arith.constant dense<0.000000e+00> : vector<48xf32>
    %547 = vector.multi_reduction <add>, %544, %cst_159 [1] : vector<48x256xf32> to vector<48xf32>
    %548 = vector.shape_cast %547 : vector<48xf32> to vector<48x1xf32>
    %cst_160 = arith.constant 2.560000e+02 : f32
    %549 = vector.broadcast %cst_160 : f32 to vector<48x1xf32>
    %550 = arith.divf %548, %549 : vector<48x1xf32>
    %cst_161 = arith.constant 0.000000e+00 : f32
    %551 = vector.shape_cast %546 : vector<1x4xi1> to vector<1x4xi1>
    %552 = vector.broadcast %551 : vector<1x4xi1> to vector<48x4xi1>
    %553 = vector.shape_cast %550 : vector<48x1xf32> to vector<48x1xf32>
    %554 = vector.broadcast %553 : vector<48x1xf32> to vector<48x4xf32>
    %555 = vector.broadcast %cst_161 : f32 to vector<48x4xf32>
    %556 = arith.select %552, %554, %555 : vector<48x4xi1>, vector<48x4xf32>
    %557 = arith.addf %543, %556 : vector<48x4xf32>
    %c3_i32_162 = arith.constant 3 : i32
    %558 = vector.broadcast %c3_i32_162 : i32 to vector<1x4xi32>
    %559 = arith.cmpi eq, %517, %558 : vector<1x4xi32>
    %cst_163 = arith.constant dense<0xFF800000> : vector<48xf32>
    %560 = vector.multi_reduction <maximumf>, %544, %cst_163 [1] : vector<48x256xf32> to vector<48xf32>
    %561 = vector.shape_cast %560 : vector<48xf32> to vector<48x1xf32>
    %cst_164 = arith.constant 0.000000e+00 : f32
    %562 = vector.shape_cast %559 : vector<1x4xi1> to vector<1x4xi1>
    %563 = vector.broadcast %562 : vector<1x4xi1> to vector<48x4xi1>
    %564 = vector.shape_cast %561 : vector<48x1xf32> to vector<48x1xf32>
    %565 = vector.broadcast %564 : vector<48x1xf32> to vector<48x4xf32>
    %566 = vector.broadcast %cst_164 : f32 to vector<48x4xf32>
    %567 = arith.select %563, %565, %566 : vector<48x4xi1>, vector<48x4xf32>
    %568 = arith.addf %557, %567 : vector<48x4xf32>
    %c0_165 = arith.constant 0 : index
    %c0_166 = arith.constant 0 : index
    %569 = vector.load %arg7[%c0_165, %c0_166] : memref<3x48xf32, #tpu.memory_space<vmem>>, vector<3x48xf32>
    %cst_167 = arith.constant dense<0.000000e+00> : vector<3x4xf32>
    %570 = tpu.matmul %569, %568, %cst_167 {dimension_numbers = #tpu.dot_dimension_numbers<[1], [0], [0], [1], [0, 0, 1, 1], [], []>} : vector<3x48xf32>, vector<48x4xf32>, vector<3x4xf32> -> vector<3x4xf32>
    %c0_168 = arith.constant 0 : index
    %c0_169 = arith.constant 0 : index
    %571 = vector.load %arg8[%c0_168, %c0_169] : memref<3x1xf32, #tpu.memory_space<vmem>>, vector<3x1xf32>
    %572 = vector.broadcast %571 : vector<3x1xf32> to vector<3x4xf32>
    %573 = arith.addf %570, %572 : vector<3x4xf32>
    %cst_170 = arith.constant 0.000000e+00 : f32
    %574 = vector.broadcast %cst_170 : f32 to vector<3x4xf32>
    %575 = arith.maximumf %573, %574 : vector<3x4xf32>
    %c0_171 = arith.constant 0 : index
    %c0_172 = arith.constant 0 : index
    %576 = vector.load %arg9[%c0_171, %c0_172] : memref<48x3xf32, #tpu.memory_space<vmem>>, vector<48x3xf32>
    %cst_173 = arith.constant dense<0.000000e+00> : vector<48x4xf32>
    %577 = tpu.matmul %576, %575, %cst_173 {dimension_numbers = #tpu.dot_dimension_numbers<[1], [0], [0], [1], [0, 0, 1, 1], [], []>} : vector<48x3xf32>, vector<3x4xf32>, vector<48x4xf32> -> vector<48x4xf32>
    %c0_174 = arith.constant 0 : index
    %c0_175 = arith.constant 0 : index
    %578 = vector.load %arg10[%c0_174, %c0_175] : memref<48x1xf32, #tpu.memory_space<vmem>>, vector<48x1xf32>
    %579 = vector.broadcast %578 : vector<48x1xf32> to vector<48x4xf32>
    %580 = arith.addf %577, %579 : vector<48x4xf32>
    %581 = vector.extract_strided_slice %580 {offsets = [0, 0], sizes = [48, 2], strides = [1, 1]} : vector<48x4xf32> to vector<48x2xf32>
    %582 = vector.extract_strided_slice %580 {offsets = [0, 2], sizes = [48, 2], strides = [1, 1]} : vector<48x4xf32> to vector<48x2xf32>
    %583 = arith.addf %581, %582 : vector<48x2xf32>
    %584 = arith.negf %583 : vector<48x2xf32>
    %585 = math.exp %584 : vector<48x2xf32>
    %cst_176 = arith.constant 1.000000e+00 : f32
    %586 = vector.broadcast %cst_176 : f32 to vector<48x2xf32>
    %587 = arith.addf %586, %585 : vector<48x2xf32>
    %588 = arith.divf %586, %587 : vector<48x2xf32>
    %589 = tpu.iota {dimensions = array<i32: 1>} : vector<1x512xi32>
    %c8_i32 = arith.constant 8 : i32
    %590 = vector.broadcast %c8_i32 : i32 to vector<1x512xi32>
    %591 = arith.shrsi %589, %590 : vector<1x512xi32>
    %592 = vector.extract_strided_slice %588 {offsets = [0, 0], sizes = [48, 1], strides = [1, 1]} : vector<48x2xf32> to vector<48x1xf32>
    %c1_i32_177 = arith.constant 1 : i32
    %593 = vector.broadcast %c1_i32_177 : i32 to vector<1x512xi32>
    %594 = arith.cmpi sge, %591, %593 : vector<1x512xi32>
    %595 = vector.extract_strided_slice %588 {offsets = [0, 1], sizes = [48, 1], strides = [1, 1]} : vector<48x2xf32> to vector<48x1xf32>
    %596 = vector.shape_cast %594 : vector<1x512xi1> to vector<1x512xi1>
    %597 = vector.broadcast %596 : vector<1x512xi1> to vector<48x512xi1>
    %598 = vector.shape_cast %595 : vector<48x1xf32> to vector<48x1xf32>
    %599 = vector.broadcast %598 : vector<48x1xf32> to vector<48x512xf32>
    %600 = vector.shape_cast %592 : vector<48x1xf32> to vector<48x1xf32>
    %601 = vector.broadcast %600 : vector<48x1xf32> to vector<48x512xf32>
    %602 = arith.select %597, %599, %601 : vector<48x512xi1>, vector<48x512xf32>
    %603 = arith.mulf %516, %602 : vector<48x512xf32>
    %cst_178 = arith.constant dense<0.000000e+00> : vector<512xf32>
    %604 = vector.multi_reduction <add>, %603, %cst_178 [0] : vector<48x512xf32> to vector<512xf32>
    %605 = vector.shape_cast %604 : vector<512xf32> to vector<1x512xf32>
    %cst_179 = arith.constant 4.800000e+01 : f32
    %606 = vector.broadcast %cst_179 : f32 to vector<1x512xf32>
    %607 = arith.divf %605, %606 : vector<1x512xf32>
    %cst_180 = arith.constant dense<0xFF800000> : vector<512xf32>
    %608 = vector.multi_reduction <maximumf>, %603, %cst_180 [0] : vector<48x512xf32> to vector<512xf32>
    %609 = vector.shape_cast %608 : vector<512xf32> to vector<1x512xf32>
    %cst_181 = arith.constant 0.000000e+00 : f32
    %610 = vector.broadcast %cst_181 : f32 to vector<1x512xf32>
    %c51_i32 = arith.constant 51 : i32
    %611 = tpu.dynamic_rotate %607 by %c51_i32 dim 1 : vector<1x512xf32>, i32 -> vector<1x512xf32>
    %c0_182 = arith.constant 0 : index
    %c0_183 = arith.constant 0 : index
    %612 = memref.load %arg14[%c0_182, %c0_183] : memref<2x49xf32, #tpu.memory_space<smem>>
    %613 = vector.broadcast %612 : f32 to vector<1x512xf32>
    %614 = arith.mulf %611, %613 : vector<1x512xf32>
    %c51_i32_184 = arith.constant 51 : i32
    %615 = tpu.dynamic_rotate %609 by %c51_i32_184 dim 1 : vector<1x512xf32>, i32 -> vector<1x512xf32>
    %c1 = arith.constant 1 : index
    %c0_185 = arith.constant 0 : index
    %616 = memref.load %arg14[%c1, %c0_185] : memref<2x49xf32, #tpu.memory_space<smem>>
    %617 = vector.broadcast %616 : f32 to vector<1x512xf32>
    %618 = arith.mulf %615, %617 : vector<1x512xf32>
    %619 = arith.addf %614, %618 : vector<1x512xf32>
    %cst_186 = arith.constant 0.000000e+00 : f32
    %620 = vector.broadcast %cst_186 : f32 to vector<1x512xf32>
    %621 = arith.select %11, %619, %620 : vector<1x512xi1>, vector<1x512xf32>
    %622 = arith.addf %610, %621 : vector<1x512xf32>
    %c50_i32 = arith.constant 50 : i32
    %623 = tpu.dynamic_rotate %607 by %c50_i32 dim 1 : vector<1x512xf32>, i32 -> vector<1x512xf32>
    %c0_187 = arith.constant 0 : index
    %c1_188 = arith.constant 1 : index
    %624 = memref.load %arg14[%c0_187, %c1_188] : memref<2x49xf32, #tpu.memory_space<smem>>
    %625 = vector.broadcast %624 : f32 to vector<1x512xf32>
    %626 = arith.mulf %623, %625 : vector<1x512xf32>
    %c50_i32_189 = arith.constant 50 : i32
    %627 = tpu.dynamic_rotate %609 by %c50_i32_189 dim 1 : vector<1x512xf32>, i32 -> vector<1x512xf32>
    %c1_190 = arith.constant 1 : index
    %c1_191 = arith.constant 1 : index
    %628 = memref.load %arg14[%c1_190, %c1_191] : memref<2x49xf32, #tpu.memory_space<smem>>
    %629 = vector.broadcast %628 : f32 to vector<1x512xf32>
    %630 = arith.mulf %627, %629 : vector<1x512xf32>
    %631 = arith.addf %626, %630 : vector<1x512xf32>
    %cst_192 = arith.constant 0.000000e+00 : f32
    %632 = vector.broadcast %cst_192 : f32 to vector<1x512xf32>
    %633 = arith.select %16, %631, %632 : vector<1x512xi1>, vector<1x512xf32>
    %634 = arith.addf %622, %633 : vector<1x512xf32>
    %c49_i32 = arith.constant 49 : i32
    %635 = tpu.dynamic_rotate %607 by %c49_i32 dim 1 : vector<1x512xf32>, i32 -> vector<1x512xf32>
    %c0_193 = arith.constant 0 : index
    %c2 = arith.constant 2 : index
    %636 = memref.load %arg14[%c0_193, %c2] : memref<2x49xf32, #tpu.memory_space<smem>>
    %637 = vector.broadcast %636 : f32 to vector<1x512xf32>
    %638 = arith.mulf %635, %637 : vector<1x512xf32>
    %c49_i32_194 = arith.constant 49 : i32
    %639 = tpu.dynamic_rotate %609 by %c49_i32_194 dim 1 : vector<1x512xf32>, i32 -> vector<1x512xf32>
    %c1_195 = arith.constant 1 : index
    %c2_196 = arith.constant 2 : index
    %640 = memref.load %arg14[%c1_195, %c2_196] : memref<2x49xf32, #tpu.memory_space<smem>>
    %641 = vector.broadcast %640 : f32 to vector<1x512xf32>
    %642 = arith.mulf %639, %641 : vector<1x512xf32>
    %643 = arith.addf %638, %642 : vector<1x512xf32>
    %cst_197 = arith.constant 0.000000e+00 : f32
    %644 = vector.broadcast %cst_197 : f32 to vector<1x512xf32>
    %645 = arith.select %21, %643, %644 : vector<1x512xi1>, vector<1x512xf32>
    %646 = arith.addf %634, %645 : vector<1x512xf32>
    %c48_i32 = arith.constant 48 : i32
    %647 = tpu.dynamic_rotate %607 by %c48_i32 dim 1 : vector<1x512xf32>, i32 -> vector<1x512xf32>
    %c0_198 = arith.constant 0 : index
    %c3 = arith.constant 3 : index
    %648 = memref.load %arg14[%c0_198, %c3] : memref<2x49xf32, #tpu.memory_space<smem>>
    %649 = vector.broadcast %648 : f32 to vector<1x512xf32>
    %650 = arith.mulf %647, %649 : vector<1x512xf32>
    %c48_i32_199 = arith.constant 48 : i32
    %651 = tpu.dynamic_rotate %609 by %c48_i32_199 dim 1 : vector<1x512xf32>, i32 -> vector<1x512xf32>
    %c1_200 = arith.constant 1 : index
    %c3_201 = arith.constant 3 : index
    %652 = memref.load %arg14[%c1_200, %c3_201] : memref<2x49xf32, #tpu.memory_space<smem>>
    %653 = vector.broadcast %652 : f32 to vector<1x512xf32>
    %654 = arith.mulf %651, %653 : vector<1x512xf32>
    %655 = arith.addf %650, %654 : vector<1x512xf32>
    %cst_202 = arith.constant 0.000000e+00 : f32
    %656 = vector.broadcast %cst_202 : f32 to vector<1x512xf32>
    %657 = arith.select %23, %655, %656 : vector<1x512xi1>, vector<1x512xf32>
    %658 = arith.addf %646, %657 : vector<1x512xf32>
    %c47_i32 = arith.constant 47 : i32
    %659 = tpu.dynamic_rotate %607 by %c47_i32 dim 1 : vector<1x512xf32>, i32 -> vector<1x512xf32>
    %c0_203 = arith.constant 0 : index
    %c4 = arith.constant 4 : index
    %660 = memref.load %arg14[%c0_203, %c4] : memref<2x49xf32, #tpu.memory_space<smem>>
    %661 = vector.broadcast %660 : f32 to vector<1x512xf32>
    %662 = arith.mulf %659, %661 : vector<1x512xf32>
    %c47_i32_204 = arith.constant 47 : i32
    %663 = tpu.dynamic_rotate %609 by %c47_i32_204 dim 1 : vector<1x512xf32>, i32 -> vector<1x512xf32>
    %c1_205 = arith.constant 1 : index
    %c4_206 = arith.constant 4 : index
    %664 = memref.load %arg14[%c1_205, %c4_206] : memref<2x49xf32, #tpu.memory_space<smem>>
    %665 = vector.broadcast %664 : f32 to vector<1x512xf32>
    %666 = arith.mulf %663, %665 : vector<1x512xf32>
    %667 = arith.addf %662, %666 : vector<1x512xf32>
    %cst_207 = arith.constant 0.000000e+00 : f32
    %668 = vector.broadcast %cst_207 : f32 to vector<1x512xf32>
    %669 = arith.select %28, %667, %668 : vector<1x512xi1>, vector<1x512xf32>
    %670 = arith.addf %658, %669 : vector<1x512xf32>
    %c46_i32 = arith.constant 46 : i32
    %671 = tpu.dynamic_rotate %607 by %c46_i32 dim 1 : vector<1x512xf32>, i32 -> vector<1x512xf32>
    %c0_208 = arith.constant 0 : index
    %c5 = arith.constant 5 : index
    %672 = memref.load %arg14[%c0_208, %c5] : memref<2x49xf32, #tpu.memory_space<smem>>
    %673 = vector.broadcast %672 : f32 to vector<1x512xf32>
    %674 = arith.mulf %671, %673 : vector<1x512xf32>
    %c46_i32_209 = arith.constant 46 : i32
    %675 = tpu.dynamic_rotate %609 by %c46_i32_209 dim 1 : vector<1x512xf32>, i32 -> vector<1x512xf32>
    %c1_210 = arith.constant 1 : index
    %c5_211 = arith.constant 5 : index
    %676 = memref.load %arg14[%c1_210, %c5_211] : memref<2x49xf32, #tpu.memory_space<smem>>
    %677 = vector.broadcast %676 : f32 to vector<1x512xf32>
    %678 = arith.mulf %675, %677 : vector<1x512xf32>
    %679 = arith.addf %674, %678 : vector<1x512xf32>
    %cst_212 = arith.constant 0.000000e+00 : f32
    %680 = vector.broadcast %cst_212 : f32 to vector<1x512xf32>
    %681 = arith.select %33, %679, %680 : vector<1x512xi1>, vector<1x512xf32>
    %682 = arith.addf %670, %681 : vector<1x512xf32>
    %c45_i32 = arith.constant 45 : i32
    %683 = tpu.dynamic_rotate %607 by %c45_i32 dim 1 : vector<1x512xf32>, i32 -> vector<1x512xf32>
    %c0_213 = arith.constant 0 : index
    %c6 = arith.constant 6 : index
    %684 = memref.load %arg14[%c0_213, %c6] : memref<2x49xf32, #tpu.memory_space<smem>>
    %685 = vector.broadcast %684 : f32 to vector<1x512xf32>
    %686 = arith.mulf %683, %685 : vector<1x512xf32>
    %c45_i32_214 = arith.constant 45 : i32
    %687 = tpu.dynamic_rotate %609 by %c45_i32_214 dim 1 : vector<1x512xf32>, i32 -> vector<1x512xf32>
    %c1_215 = arith.constant 1 : index
    %c6_216 = arith.constant 6 : index
    %688 = memref.load %arg14[%c1_215, %c6_216] : memref<2x49xf32, #tpu.memory_space<smem>>
    %689 = vector.broadcast %688 : f32 to vector<1x512xf32>
    %690 = arith.mulf %687, %689 : vector<1x512xf32>
    %691 = arith.addf %686, %690 : vector<1x512xf32>
    %cst_217 = arith.constant 0.000000e+00 : f32
    %692 = vector.broadcast %cst_217 : f32 to vector<1x512xf32>
    %693 = arith.select %38, %691, %692 : vector<1x512xi1>, vector<1x512xf32>
    %694 = arith.addf %682, %693 : vector<1x512xf32>
    %c35_i32 = arith.constant 35 : i32
    %695 = tpu.dynamic_rotate %607 by %c35_i32 dim 1 : vector<1x512xf32>, i32 -> vector<1x512xf32>
    %c0_218 = arith.constant 0 : index
    %c7 = arith.constant 7 : index
    %696 = memref.load %arg14[%c0_218, %c7] : memref<2x49xf32, #tpu.memory_space<smem>>
    %697 = vector.broadcast %696 : f32 to vector<1x512xf32>
    %698 = arith.mulf %695, %697 : vector<1x512xf32>
    %c35_i32_219 = arith.constant 35 : i32
    %699 = tpu.dynamic_rotate %609 by %c35_i32_219 dim 1 : vector<1x512xf32>, i32 -> vector<1x512xf32>
    %c1_220 = arith.constant 1 : index
    %c7_221 = arith.constant 7 : index
    %700 = memref.load %arg14[%c1_220, %c7_221] : memref<2x49xf32, #tpu.memory_space<smem>>
    %701 = vector.broadcast %700 : f32 to vector<1x512xf32>
    %702 = arith.mulf %699, %701 : vector<1x512xf32>
    %703 = arith.addf %698, %702 : vector<1x512xf32>
    %cst_222 = arith.constant 0.000000e+00 : f32
    %704 = vector.broadcast %cst_222 : f32 to vector<1x512xf32>
    %705 = arith.select %43, %703, %704 : vector<1x512xi1>, vector<1x512xf32>
    %706 = arith.addf %694, %705 : vector<1x512xf32>
    %c34_i32 = arith.constant 34 : i32
    %707 = tpu.dynamic_rotate %607 by %c34_i32 dim 1 : vector<1x512xf32>, i32 -> vector<1x512xf32>
    %c0_223 = arith.constant 0 : index
    %c8 = arith.constant 8 : index
    %708 = memref.load %arg14[%c0_223, %c8] : memref<2x49xf32, #tpu.memory_space<smem>>
    %709 = vector.broadcast %708 : f32 to vector<1x512xf32>
    %710 = arith.mulf %707, %709 : vector<1x512xf32>
    %c34_i32_224 = arith.constant 34 : i32
    %711 = tpu.dynamic_rotate %609 by %c34_i32_224 dim 1 : vector<1x512xf32>, i32 -> vector<1x512xf32>
    %c1_225 = arith.constant 1 : index
    %c8_226 = arith.constant 8 : index
    %712 = memref.load %arg14[%c1_225, %c8_226] : memref<2x49xf32, #tpu.memory_space<smem>>
    %713 = vector.broadcast %712 : f32 to vector<1x512xf32>
    %714 = arith.mulf %711, %713 : vector<1x512xf32>
    %715 = arith.addf %710, %714 : vector<1x512xf32>
    %cst_227 = arith.constant 0.000000e+00 : f32
    %716 = vector.broadcast %cst_227 : f32 to vector<1x512xf32>
    %717 = arith.select %48, %715, %716 : vector<1x512xi1>, vector<1x512xf32>
    %718 = arith.addf %706, %717 : vector<1x512xf32>
    %c33_i32 = arith.constant 33 : i32
    %719 = tpu.dynamic_rotate %607 by %c33_i32 dim 1 : vector<1x512xf32>, i32 -> vector<1x512xf32>
    %c0_228 = arith.constant 0 : index
    %c9 = arith.constant 9 : index
    %720 = memref.load %arg14[%c0_228, %c9] : memref<2x49xf32, #tpu.memory_space<smem>>
    %721 = vector.broadcast %720 : f32 to vector<1x512xf32>
    %722 = arith.mulf %719, %721 : vector<1x512xf32>
    %c33_i32_229 = arith.constant 33 : i32
    %723 = tpu.dynamic_rotate %609 by %c33_i32_229 dim 1 : vector<1x512xf32>, i32 -> vector<1x512xf32>
    %c1_230 = arith.constant 1 : index
    %c9_231 = arith.constant 9 : index
    %724 = memref.load %arg14[%c1_230, %c9_231] : memref<2x49xf32, #tpu.memory_space<smem>>
    %725 = vector.broadcast %724 : f32 to vector<1x512xf32>
    %726 = arith.mulf %723, %725 : vector<1x512xf32>
    %727 = arith.addf %722, %726 : vector<1x512xf32>
    %cst_232 = arith.constant 0.000000e+00 : f32
    %728 = vector.broadcast %cst_232 : f32 to vector<1x512xf32>
    %729 = arith.select %53, %727, %728 : vector<1x512xi1>, vector<1x512xf32>
    %730 = arith.addf %718, %729 : vector<1x512xf32>
    %c32_i32 = arith.constant 32 : i32
    %731 = tpu.dynamic_rotate %607 by %c32_i32 dim 1 : vector<1x512xf32>, i32 -> vector<1x512xf32>
    %c0_233 = arith.constant 0 : index
    %c10 = arith.constant 10 : index
    %732 = memref.load %arg14[%c0_233, %c10] : memref<2x49xf32, #tpu.memory_space<smem>>
    %733 = vector.broadcast %732 : f32 to vector<1x512xf32>
    %734 = arith.mulf %731, %733 : vector<1x512xf32>
    %c32_i32_234 = arith.constant 32 : i32
    %735 = tpu.dynamic_rotate %609 by %c32_i32_234 dim 1 : vector<1x512xf32>, i32 -> vector<1x512xf32>
    %c1_235 = arith.constant 1 : index
    %c10_236 = arith.constant 10 : index
    %736 = memref.load %arg14[%c1_235, %c10_236] : memref<2x49xf32, #tpu.memory_space<smem>>
    %737 = vector.broadcast %736 : f32 to vector<1x512xf32>
    %738 = arith.mulf %735, %737 : vector<1x512xf32>
    %739 = arith.addf %734, %738 : vector<1x512xf32>
    %cst_237 = arith.constant 0.000000e+00 : f32
    %740 = vector.broadcast %cst_237 : f32 to vector<1x512xf32>
    %741 = arith.select %55, %739, %740 : vector<1x512xi1>, vector<1x512xf32>
    %742 = arith.addf %730, %741 : vector<1x512xf32>
    %c31_i32 = arith.constant 31 : i32
    %743 = tpu.dynamic_rotate %607 by %c31_i32 dim 1 : vector<1x512xf32>, i32 -> vector<1x512xf32>
    %c0_238 = arith.constant 0 : index
    %c11 = arith.constant 11 : index
    %744 = memref.load %arg14[%c0_238, %c11] : memref<2x49xf32, #tpu.memory_space<smem>>
    %745 = vector.broadcast %744 : f32 to vector<1x512xf32>
    %746 = arith.mulf %743, %745 : vector<1x512xf32>
    %c31_i32_239 = arith.constant 31 : i32
    %747 = tpu.dynamic_rotate %609 by %c31_i32_239 dim 1 : vector<1x512xf32>, i32 -> vector<1x512xf32>
    %c1_240 = arith.constant 1 : index
    %c11_241 = arith.constant 11 : index
    %748 = memref.load %arg14[%c1_240, %c11_241] : memref<2x49xf32, #tpu.memory_space<smem>>
    %749 = vector.broadcast %748 : f32 to vector<1x512xf32>
    %750 = arith.mulf %747, %749 : vector<1x512xf32>
    %751 = arith.addf %746, %750 : vector<1x512xf32>
    %cst_242 = arith.constant 0.000000e+00 : f32
    %752 = vector.broadcast %cst_242 : f32 to vector<1x512xf32>
    %753 = arith.select %60, %751, %752 : vector<1x512xi1>, vector<1x512xf32>
    %754 = arith.addf %742, %753 : vector<1x512xf32>
    %c30_i32 = arith.constant 30 : i32
    %755 = tpu.dynamic_rotate %607 by %c30_i32 dim 1 : vector<1x512xf32>, i32 -> vector<1x512xf32>
    %c0_243 = arith.constant 0 : index
    %c12 = arith.constant 12 : index
    %756 = memref.load %arg14[%c0_243, %c12] : memref<2x49xf32, #tpu.memory_space<smem>>
    %757 = vector.broadcast %756 : f32 to vector<1x512xf32>
    %758 = arith.mulf %755, %757 : vector<1x512xf32>
    %c30_i32_244 = arith.constant 30 : i32
    %759 = tpu.dynamic_rotate %609 by %c30_i32_244 dim 1 : vector<1x512xf32>, i32 -> vector<1x512xf32>
    %c1_245 = arith.constant 1 : index
    %c12_246 = arith.constant 12 : index
    %760 = memref.load %arg14[%c1_245, %c12_246] : memref<2x49xf32, #tpu.memory_space<smem>>
    %761 = vector.broadcast %760 : f32 to vector<1x512xf32>
    %762 = arith.mulf %759, %761 : vector<1x512xf32>
    %763 = arith.addf %758, %762 : vector<1x512xf32>
    %cst_247 = arith.constant 0.000000e+00 : f32
    %764 = vector.broadcast %cst_247 : f32 to vector<1x512xf32>
    %765 = arith.select %65, %763, %764 : vector<1x512xi1>, vector<1x512xf32>
    %766 = arith.addf %754, %765 : vector<1x512xf32>
    %c29_i32 = arith.constant 29 : i32
    %767 = tpu.dynamic_rotate %607 by %c29_i32 dim 1 : vector<1x512xf32>, i32 -> vector<1x512xf32>
    %c0_248 = arith.constant 0 : index
    %c13 = arith.constant 13 : index
    %768 = memref.load %arg14[%c0_248, %c13] : memref<2x49xf32, #tpu.memory_space<smem>>
    %769 = vector.broadcast %768 : f32 to vector<1x512xf32>
    %770 = arith.mulf %767, %769 : vector<1x512xf32>
    %c29_i32_249 = arith.constant 29 : i32
    %771 = tpu.dynamic_rotate %609 by %c29_i32_249 dim 1 : vector<1x512xf32>, i32 -> vector<1x512xf32>
    %c1_250 = arith.constant 1 : index
    %c13_251 = arith.constant 13 : index
    %772 = memref.load %arg14[%c1_250, %c13_251] : memref<2x49xf32, #tpu.memory_space<smem>>
    %773 = vector.broadcast %772 : f32 to vector<1x512xf32>
    %774 = arith.mulf %771, %773 : vector<1x512xf32>
    %775 = arith.addf %770, %774 : vector<1x512xf32>
    %cst_252 = arith.constant 0.000000e+00 : f32
    %776 = vector.broadcast %cst_252 : f32 to vector<1x512xf32>
    %777 = arith.select %70, %775, %776 : vector<1x512xi1>, vector<1x512xf32>
    %778 = arith.addf %766, %777 : vector<1x512xf32>
    %c19_i32 = arith.constant 19 : i32
    %779 = tpu.dynamic_rotate %607 by %c19_i32 dim 1 : vector<1x512xf32>, i32 -> vector<1x512xf32>
    %c0_253 = arith.constant 0 : index
    %c14 = arith.constant 14 : index
    %780 = memref.load %arg14[%c0_253, %c14] : memref<2x49xf32, #tpu.memory_space<smem>>
    %781 = vector.broadcast %780 : f32 to vector<1x512xf32>
    %782 = arith.mulf %779, %781 : vector<1x512xf32>
    %c19_i32_254 = arith.constant 19 : i32
    %783 = tpu.dynamic_rotate %609 by %c19_i32_254 dim 1 : vector<1x512xf32>, i32 -> vector<1x512xf32>
    %c1_255 = arith.constant 1 : index
    %c14_256 = arith.constant 14 : index
    %784 = memref.load %arg14[%c1_255, %c14_256] : memref<2x49xf32, #tpu.memory_space<smem>>
    %785 = vector.broadcast %784 : f32 to vector<1x512xf32>
    %786 = arith.mulf %783, %785 : vector<1x512xf32>
    %787 = arith.addf %782, %786 : vector<1x512xf32>
    %cst_257 = arith.constant 0.000000e+00 : f32
    %788 = vector.broadcast %cst_257 : f32 to vector<1x512xf32>
    %789 = arith.select %75, %787, %788 : vector<1x512xi1>, vector<1x512xf32>
    %790 = arith.addf %778, %789 : vector<1x512xf32>
    %c18_i32 = arith.constant 18 : i32
    %791 = tpu.dynamic_rotate %607 by %c18_i32 dim 1 : vector<1x512xf32>, i32 -> vector<1x512xf32>
    %c0_258 = arith.constant 0 : index
    %c15 = arith.constant 15 : index
    %792 = memref.load %arg14[%c0_258, %c15] : memref<2x49xf32, #tpu.memory_space<smem>>
    %793 = vector.broadcast %792 : f32 to vector<1x512xf32>
    %794 = arith.mulf %791, %793 : vector<1x512xf32>
    %c18_i32_259 = arith.constant 18 : i32
    %795 = tpu.dynamic_rotate %609 by %c18_i32_259 dim 1 : vector<1x512xf32>, i32 -> vector<1x512xf32>
    %c1_260 = arith.constant 1 : index
    %c15_261 = arith.constant 15 : index
    %796 = memref.load %arg14[%c1_260, %c15_261] : memref<2x49xf32, #tpu.memory_space<smem>>
    %797 = vector.broadcast %796 : f32 to vector<1x512xf32>
    %798 = arith.mulf %795, %797 : vector<1x512xf32>
    %799 = arith.addf %794, %798 : vector<1x512xf32>
    %cst_262 = arith.constant 0.000000e+00 : f32
    %800 = vector.broadcast %cst_262 : f32 to vector<1x512xf32>
    %801 = arith.select %80, %799, %800 : vector<1x512xi1>, vector<1x512xf32>
    %802 = arith.addf %790, %801 : vector<1x512xf32>
    %c17_i32_263 = arith.constant 17 : i32
    %803 = tpu.dynamic_rotate %607 by %c17_i32_263 dim 1 : vector<1x512xf32>, i32 -> vector<1x512xf32>
    %c0_264 = arith.constant 0 : index
    %c16 = arith.constant 16 : index
    %804 = memref.load %arg14[%c0_264, %c16] : memref<2x49xf32, #tpu.memory_space<smem>>
    %805 = vector.broadcast %804 : f32 to vector<1x512xf32>
    %806 = arith.mulf %803, %805 : vector<1x512xf32>
    %c17_i32_265 = arith.constant 17 : i32
    %807 = tpu.dynamic_rotate %609 by %c17_i32_265 dim 1 : vector<1x512xf32>, i32 -> vector<1x512xf32>
    %c1_266 = arith.constant 1 : index
    %c16_267 = arith.constant 16 : index
    %808 = memref.load %arg14[%c1_266, %c16_267] : memref<2x49xf32, #tpu.memory_space<smem>>
    %809 = vector.broadcast %808 : f32 to vector<1x512xf32>
    %810 = arith.mulf %807, %809 : vector<1x512xf32>
    %811 = arith.addf %806, %810 : vector<1x512xf32>
    %cst_268 = arith.constant 0.000000e+00 : f32
    %812 = vector.broadcast %cst_268 : f32 to vector<1x512xf32>
    %813 = arith.select %85, %811, %812 : vector<1x512xi1>, vector<1x512xf32>
    %814 = arith.addf %802, %813 : vector<1x512xf32>
    %c16_i32_269 = arith.constant 16 : i32
    %815 = tpu.dynamic_rotate %607 by %c16_i32_269 dim 1 : vector<1x512xf32>, i32 -> vector<1x512xf32>
    %c0_270 = arith.constant 0 : index
    %c17 = arith.constant 17 : index
    %816 = memref.load %arg14[%c0_270, %c17] : memref<2x49xf32, #tpu.memory_space<smem>>
    %817 = vector.broadcast %816 : f32 to vector<1x512xf32>
    %818 = arith.mulf %815, %817 : vector<1x512xf32>
    %c16_i32_271 = arith.constant 16 : i32
    %819 = tpu.dynamic_rotate %609 by %c16_i32_271 dim 1 : vector<1x512xf32>, i32 -> vector<1x512xf32>
    %c1_272 = arith.constant 1 : index
    %c17_273 = arith.constant 17 : index
    %820 = memref.load %arg14[%c1_272, %c17_273] : memref<2x49xf32, #tpu.memory_space<smem>>
    %821 = vector.broadcast %820 : f32 to vector<1x512xf32>
    %822 = arith.mulf %819, %821 : vector<1x512xf32>
    %823 = arith.addf %818, %822 : vector<1x512xf32>
    %cst_274 = arith.constant 0.000000e+00 : f32
    %824 = vector.broadcast %cst_274 : f32 to vector<1x512xf32>
    %825 = arith.select %87, %823, %824 : vector<1x512xi1>, vector<1x512xf32>
    %826 = arith.addf %814, %825 : vector<1x512xf32>
    %c15_i32_275 = arith.constant 15 : i32
    %827 = tpu.dynamic_rotate %607 by %c15_i32_275 dim 1 : vector<1x512xf32>, i32 -> vector<1x512xf32>
    %c0_276 = arith.constant 0 : index
    %c18 = arith.constant 18 : index
    %828 = memref.load %arg14[%c0_276, %c18] : memref<2x49xf32, #tpu.memory_space<smem>>
    %829 = vector.broadcast %828 : f32 to vector<1x512xf32>
    %830 = arith.mulf %827, %829 : vector<1x512xf32>
    %c15_i32_277 = arith.constant 15 : i32
    %831 = tpu.dynamic_rotate %609 by %c15_i32_277 dim 1 : vector<1x512xf32>, i32 -> vector<1x512xf32>
    %c1_278 = arith.constant 1 : index
    %c18_279 = arith.constant 18 : index
    %832 = memref.load %arg14[%c1_278, %c18_279] : memref<2x49xf32, #tpu.memory_space<smem>>
    %833 = vector.broadcast %832 : f32 to vector<1x512xf32>
    %834 = arith.mulf %831, %833 : vector<1x512xf32>
    %835 = arith.addf %830, %834 : vector<1x512xf32>
    %cst_280 = arith.constant 0.000000e+00 : f32
    %836 = vector.broadcast %cst_280 : f32 to vector<1x512xf32>
    %837 = arith.select %92, %835, %836 : vector<1x512xi1>, vector<1x512xf32>
    %838 = arith.addf %826, %837 : vector<1x512xf32>
    %c14_i32_281 = arith.constant 14 : i32
    %839 = tpu.dynamic_rotate %607 by %c14_i32_281 dim 1 : vector<1x512xf32>, i32 -> vector<1x512xf32>
    %c0_282 = arith.constant 0 : index
    %c19 = arith.constant 19 : index
    %840 = memref.load %arg14[%c0_282, %c19] : memref<2x49xf32, #tpu.memory_space<smem>>
    %841 = vector.broadcast %840 : f32 to vector<1x512xf32>
    %842 = arith.mulf %839, %841 : vector<1x512xf32>
    %c14_i32_283 = arith.constant 14 : i32
    %843 = tpu.dynamic_rotate %609 by %c14_i32_283 dim 1 : vector<1x512xf32>, i32 -> vector<1x512xf32>
    %c1_284 = arith.constant 1 : index
    %c19_285 = arith.constant 19 : index
    %844 = memref.load %arg14[%c1_284, %c19_285] : memref<2x49xf32, #tpu.memory_space<smem>>
    %845 = vector.broadcast %844 : f32 to vector<1x512xf32>
    %846 = arith.mulf %843, %845 : vector<1x512xf32>
    %847 = arith.addf %842, %846 : vector<1x512xf32>
    %cst_286 = arith.constant 0.000000e+00 : f32
    %848 = vector.broadcast %cst_286 : f32 to vector<1x512xf32>
    %849 = arith.select %97, %847, %848 : vector<1x512xi1>, vector<1x512xf32>
    %850 = arith.addf %838, %849 : vector<1x512xf32>
    %c13_i32_287 = arith.constant 13 : i32
    %851 = tpu.dynamic_rotate %607 by %c13_i32_287 dim 1 : vector<1x512xf32>, i32 -> vector<1x512xf32>
    %c0_288 = arith.constant 0 : index
    %c20 = arith.constant 20 : index
    %852 = memref.load %arg14[%c0_288, %c20] : memref<2x49xf32, #tpu.memory_space<smem>>
    %853 = vector.broadcast %852 : f32 to vector<1x512xf32>
    %854 = arith.mulf %851, %853 : vector<1x512xf32>
    %c13_i32_289 = arith.constant 13 : i32
    %855 = tpu.dynamic_rotate %609 by %c13_i32_289 dim 1 : vector<1x512xf32>, i32 -> vector<1x512xf32>
    %c1_290 = arith.constant 1 : index
    %c20_291 = arith.constant 20 : index
    %856 = memref.load %arg14[%c1_290, %c20_291] : memref<2x49xf32, #tpu.memory_space<smem>>
    %857 = vector.broadcast %856 : f32 to vector<1x512xf32>
    %858 = arith.mulf %855, %857 : vector<1x512xf32>
    %859 = arith.addf %854, %858 : vector<1x512xf32>
    %cst_292 = arith.constant 0.000000e+00 : f32
    %860 = vector.broadcast %cst_292 : f32 to vector<1x512xf32>
    %861 = arith.select %102, %859, %860 : vector<1x512xi1>, vector<1x512xf32>
    %862 = arith.addf %850, %861 : vector<1x512xf32>
    %c3_i32_293 = arith.constant 3 : i32
    %863 = tpu.dynamic_rotate %607 by %c3_i32_293 dim 1 : vector<1x512xf32>, i32 -> vector<1x512xf32>
    %c0_294 = arith.constant 0 : index
    %c21 = arith.constant 21 : index
    %864 = memref.load %arg14[%c0_294, %c21] : memref<2x49xf32, #tpu.memory_space<smem>>
    %865 = vector.broadcast %864 : f32 to vector<1x512xf32>
    %866 = arith.mulf %863, %865 : vector<1x512xf32>
    %c3_i32_295 = arith.constant 3 : i32
    %867 = tpu.dynamic_rotate %609 by %c3_i32_295 dim 1 : vector<1x512xf32>, i32 -> vector<1x512xf32>
    %c1_296 = arith.constant 1 : index
    %c21_297 = arith.constant 21 : index
    %868 = memref.load %arg14[%c1_296, %c21_297] : memref<2x49xf32, #tpu.memory_space<smem>>
    %869 = vector.broadcast %868 : f32 to vector<1x512xf32>
    %870 = arith.mulf %867, %869 : vector<1x512xf32>
    %871 = arith.addf %866, %870 : vector<1x512xf32>
    %cst_298 = arith.constant 0.000000e+00 : f32
    %872 = vector.broadcast %cst_298 : f32 to vector<1x512xf32>
    %873 = arith.select %104, %871, %872 : vector<1x512xi1>, vector<1x512xf32>
    %874 = arith.addf %862, %873 : vector<1x512xf32>
    %c2_i32_299 = arith.constant 2 : i32
    %875 = tpu.dynamic_rotate %607 by %c2_i32_299 dim 1 : vector<1x512xf32>, i32 -> vector<1x512xf32>
    %c0_300 = arith.constant 0 : index
    %c22 = arith.constant 22 : index
    %876 = memref.load %arg14[%c0_300, %c22] : memref<2x49xf32, #tpu.memory_space<smem>>
    %877 = vector.broadcast %876 : f32 to vector<1x512xf32>
    %878 = arith.mulf %875, %877 : vector<1x512xf32>
    %c2_i32_301 = arith.constant 2 : i32
    %879 = tpu.dynamic_rotate %609 by %c2_i32_301 dim 1 : vector<1x512xf32>, i32 -> vector<1x512xf32>
    %c1_302 = arith.constant 1 : index
    %c22_303 = arith.constant 22 : index
    %880 = memref.load %arg14[%c1_302, %c22_303] : memref<2x49xf32, #tpu.memory_space<smem>>
    %881 = vector.broadcast %880 : f32 to vector<1x512xf32>
    %882 = arith.mulf %879, %881 : vector<1x512xf32>
    %883 = arith.addf %878, %882 : vector<1x512xf32>
    %cst_304 = arith.constant 0.000000e+00 : f32
    %884 = vector.broadcast %cst_304 : f32 to vector<1x512xf32>
    %885 = arith.select %106, %883, %884 : vector<1x512xi1>, vector<1x512xf32>
    %886 = arith.addf %874, %885 : vector<1x512xf32>
    %c1_i32_305 = arith.constant 1 : i32
    %887 = tpu.dynamic_rotate %607 by %c1_i32_305 dim 1 : vector<1x512xf32>, i32 -> vector<1x512xf32>
    %c0_306 = arith.constant 0 : index
    %c23 = arith.constant 23 : index
    %888 = memref.load %arg14[%c0_306, %c23] : memref<2x49xf32, #tpu.memory_space<smem>>
    %889 = vector.broadcast %888 : f32 to vector<1x512xf32>
    %890 = arith.mulf %887, %889 : vector<1x512xf32>
    %c1_i32_307 = arith.constant 1 : i32
    %891 = tpu.dynamic_rotate %609 by %c1_i32_307 dim 1 : vector<1x512xf32>, i32 -> vector<1x512xf32>
    %c1_308 = arith.constant 1 : index
    %c23_309 = arith.constant 23 : index
    %892 = memref.load %arg14[%c1_308, %c23_309] : memref<2x49xf32, #tpu.memory_space<smem>>
    %893 = vector.broadcast %892 : f32 to vector<1x512xf32>
    %894 = arith.mulf %891, %893 : vector<1x512xf32>
    %895 = arith.addf %890, %894 : vector<1x512xf32>
    %cst_310 = arith.constant 0.000000e+00 : f32
    %896 = vector.broadcast %cst_310 : f32 to vector<1x512xf32>
    %897 = arith.select %108, %895, %896 : vector<1x512xi1>, vector<1x512xf32>
    %898 = arith.addf %886, %897 : vector<1x512xf32>
    %c0_311 = arith.constant 0 : index
    %c24 = arith.constant 24 : index
    %899 = memref.load %arg14[%c0_311, %c24] : memref<2x49xf32, #tpu.memory_space<smem>>
    %900 = vector.broadcast %899 : f32 to vector<1x512xf32>
    %901 = arith.mulf %607, %900 : vector<1x512xf32>
    %c1_312 = arith.constant 1 : index
    %c24_313 = arith.constant 24 : index
    %902 = memref.load %arg14[%c1_312, %c24_313] : memref<2x49xf32, #tpu.memory_space<smem>>
    %903 = vector.broadcast %902 : f32 to vector<1x512xf32>
    %904 = arith.mulf %609, %903 : vector<1x512xf32>
    %905 = arith.addf %901, %904 : vector<1x512xf32>
    %906 = arith.addf %898, %905 : vector<1x512xf32>
    %c511_i32_314 = arith.constant 511 : i32
    %907 = tpu.dynamic_rotate %607 by %c511_i32_314 dim 1 : vector<1x512xf32>, i32 -> vector<1x512xf32>
    %c0_315 = arith.constant 0 : index
    %c25 = arith.constant 25 : index
    %908 = memref.load %arg14[%c0_315, %c25] : memref<2x49xf32, #tpu.memory_space<smem>>
    %909 = vector.broadcast %908 : f32 to vector<1x512xf32>
    %910 = arith.mulf %907, %909 : vector<1x512xf32>
    %c511_i32_316 = arith.constant 511 : i32
    %911 = tpu.dynamic_rotate %609 by %c511_i32_316 dim 1 : vector<1x512xf32>, i32 -> vector<1x512xf32>
    %c1_317 = arith.constant 1 : index
    %c25_318 = arith.constant 25 : index
    %912 = memref.load %arg14[%c1_317, %c25_318] : memref<2x49xf32, #tpu.memory_space<smem>>
    %913 = vector.broadcast %912 : f32 to vector<1x512xf32>
    %914 = arith.mulf %911, %913 : vector<1x512xf32>
    %915 = arith.addf %910, %914 : vector<1x512xf32>
    %cst_319 = arith.constant 0.000000e+00 : f32
    %916 = vector.broadcast %cst_319 : f32 to vector<1x512xf32>
    %917 = arith.select %110, %915, %916 : vector<1x512xi1>, vector<1x512xf32>
    %918 = arith.addf %906, %917 : vector<1x512xf32>
    %c510_i32 = arith.constant 510 : i32
    %919 = tpu.dynamic_rotate %607 by %c510_i32 dim 1 : vector<1x512xf32>, i32 -> vector<1x512xf32>
    %c0_320 = arith.constant 0 : index
    %c26 = arith.constant 26 : index
    %920 = memref.load %arg14[%c0_320, %c26] : memref<2x49xf32, #tpu.memory_space<smem>>
    %921 = vector.broadcast %920 : f32 to vector<1x512xf32>
    %922 = arith.mulf %919, %921 : vector<1x512xf32>
    %c510_i32_321 = arith.constant 510 : i32
    %923 = tpu.dynamic_rotate %609 by %c510_i32_321 dim 1 : vector<1x512xf32>, i32 -> vector<1x512xf32>
    %c1_322 = arith.constant 1 : index
    %c26_323 = arith.constant 26 : index
    %924 = memref.load %arg14[%c1_322, %c26_323] : memref<2x49xf32, #tpu.memory_space<smem>>
    %925 = vector.broadcast %924 : f32 to vector<1x512xf32>
    %926 = arith.mulf %923, %925 : vector<1x512xf32>
    %927 = arith.addf %922, %926 : vector<1x512xf32>
    %cst_324 = arith.constant 0.000000e+00 : f32
    %928 = vector.broadcast %cst_324 : f32 to vector<1x512xf32>
    %929 = arith.select %112, %927, %928 : vector<1x512xi1>, vector<1x512xf32>
    %930 = arith.addf %918, %929 : vector<1x512xf32>
    %c509_i32 = arith.constant 509 : i32
    %931 = tpu.dynamic_rotate %607 by %c509_i32 dim 1 : vector<1x512xf32>, i32 -> vector<1x512xf32>
    %c0_325 = arith.constant 0 : index
    %c27 = arith.constant 27 : index
    %932 = memref.load %arg14[%c0_325, %c27] : memref<2x49xf32, #tpu.memory_space<smem>>
    %933 = vector.broadcast %932 : f32 to vector<1x512xf32>
    %934 = arith.mulf %931, %933 : vector<1x512xf32>
    %c509_i32_326 = arith.constant 509 : i32
    %935 = tpu.dynamic_rotate %609 by %c509_i32_326 dim 1 : vector<1x512xf32>, i32 -> vector<1x512xf32>
    %c1_327 = arith.constant 1 : index
    %c27_328 = arith.constant 27 : index
    %936 = memref.load %arg14[%c1_327, %c27_328] : memref<2x49xf32, #tpu.memory_space<smem>>
    %937 = vector.broadcast %936 : f32 to vector<1x512xf32>
    %938 = arith.mulf %935, %937 : vector<1x512xf32>
    %939 = arith.addf %934, %938 : vector<1x512xf32>
    %cst_329 = arith.constant 0.000000e+00 : f32
    %940 = vector.broadcast %cst_329 : f32 to vector<1x512xf32>
    %941 = arith.select %114, %939, %940 : vector<1x512xi1>, vector<1x512xf32>
    %942 = arith.addf %930, %941 : vector<1x512xf32>
    %c499_i32 = arith.constant 499 : i32
    %943 = tpu.dynamic_rotate %607 by %c499_i32 dim 1 : vector<1x512xf32>, i32 -> vector<1x512xf32>
    %c0_330 = arith.constant 0 : index
    %c28 = arith.constant 28 : index
    %944 = memref.load %arg14[%c0_330, %c28] : memref<2x49xf32, #tpu.memory_space<smem>>
    %945 = vector.broadcast %944 : f32 to vector<1x512xf32>
    %946 = arith.mulf %943, %945 : vector<1x512xf32>
    %c499_i32_331 = arith.constant 499 : i32
    %947 = tpu.dynamic_rotate %609 by %c499_i32_331 dim 1 : vector<1x512xf32>, i32 -> vector<1x512xf32>
    %c1_332 = arith.constant 1 : index
    %c28_333 = arith.constant 28 : index
    %948 = memref.load %arg14[%c1_332, %c28_333] : memref<2x49xf32, #tpu.memory_space<smem>>
    %949 = vector.broadcast %948 : f32 to vector<1x512xf32>
    %950 = arith.mulf %947, %949 : vector<1x512xf32>
    %951 = arith.addf %946, %950 : vector<1x512xf32>
    %cst_334 = arith.constant 0.000000e+00 : f32
    %952 = vector.broadcast %cst_334 : f32 to vector<1x512xf32>
    %953 = arith.select %119, %951, %952 : vector<1x512xi1>, vector<1x512xf32>
    %954 = arith.addf %942, %953 : vector<1x512xf32>
    %c498_i32 = arith.constant 498 : i32
    %955 = tpu.dynamic_rotate %607 by %c498_i32 dim 1 : vector<1x512xf32>, i32 -> vector<1x512xf32>
    %c0_335 = arith.constant 0 : index
    %c29 = arith.constant 29 : index
    %956 = memref.load %arg14[%c0_335, %c29] : memref<2x49xf32, #tpu.memory_space<smem>>
    %957 = vector.broadcast %956 : f32 to vector<1x512xf32>
    %958 = arith.mulf %955, %957 : vector<1x512xf32>
    %c498_i32_336 = arith.constant 498 : i32
    %959 = tpu.dynamic_rotate %609 by %c498_i32_336 dim 1 : vector<1x512xf32>, i32 -> vector<1x512xf32>
    %c1_337 = arith.constant 1 : index
    %c29_338 = arith.constant 29 : index
    %960 = memref.load %arg14[%c1_337, %c29_338] : memref<2x49xf32, #tpu.memory_space<smem>>
    %961 = vector.broadcast %960 : f32 to vector<1x512xf32>
    %962 = arith.mulf %959, %961 : vector<1x512xf32>
    %963 = arith.addf %958, %962 : vector<1x512xf32>
    %cst_339 = arith.constant 0.000000e+00 : f32
    %964 = vector.broadcast %cst_339 : f32 to vector<1x512xf32>
    %965 = arith.select %124, %963, %964 : vector<1x512xi1>, vector<1x512xf32>
    %966 = arith.addf %954, %965 : vector<1x512xf32>
    %c497_i32_340 = arith.constant 497 : i32
    %967 = tpu.dynamic_rotate %607 by %c497_i32_340 dim 1 : vector<1x512xf32>, i32 -> vector<1x512xf32>
    %c0_341 = arith.constant 0 : index
    %c30 = arith.constant 30 : index
    %968 = memref.load %arg14[%c0_341, %c30] : memref<2x49xf32, #tpu.memory_space<smem>>
    %969 = vector.broadcast %968 : f32 to vector<1x512xf32>
    %970 = arith.mulf %967, %969 : vector<1x512xf32>
    %c497_i32_342 = arith.constant 497 : i32
    %971 = tpu.dynamic_rotate %609 by %c497_i32_342 dim 1 : vector<1x512xf32>, i32 -> vector<1x512xf32>
    %c1_343 = arith.constant 1 : index
    %c30_344 = arith.constant 30 : index
    %972 = memref.load %arg14[%c1_343, %c30_344] : memref<2x49xf32, #tpu.memory_space<smem>>
    %973 = vector.broadcast %972 : f32 to vector<1x512xf32>
    %974 = arith.mulf %971, %973 : vector<1x512xf32>
    %975 = arith.addf %970, %974 : vector<1x512xf32>
    %cst_345 = arith.constant 0.000000e+00 : f32
    %976 = vector.broadcast %cst_345 : f32 to vector<1x512xf32>
    %977 = arith.select %129, %975, %976 : vector<1x512xi1>, vector<1x512xf32>
    %978 = arith.addf %966, %977 : vector<1x512xf32>
    %c496_i32_346 = arith.constant 496 : i32
    %979 = tpu.dynamic_rotate %607 by %c496_i32_346 dim 1 : vector<1x512xf32>, i32 -> vector<1x512xf32>
    %c0_347 = arith.constant 0 : index
    %c31 = arith.constant 31 : index
    %980 = memref.load %arg14[%c0_347, %c31] : memref<2x49xf32, #tpu.memory_space<smem>>
    %981 = vector.broadcast %980 : f32 to vector<1x512xf32>
    %982 = arith.mulf %979, %981 : vector<1x512xf32>
    %c496_i32_348 = arith.constant 496 : i32
    %983 = tpu.dynamic_rotate %609 by %c496_i32_348 dim 1 : vector<1x512xf32>, i32 -> vector<1x512xf32>
    %c1_349 = arith.constant 1 : index
    %c31_350 = arith.constant 31 : index
    %984 = memref.load %arg14[%c1_349, %c31_350] : memref<2x49xf32, #tpu.memory_space<smem>>
    %985 = vector.broadcast %984 : f32 to vector<1x512xf32>
    %986 = arith.mulf %983, %985 : vector<1x512xf32>
    %987 = arith.addf %982, %986 : vector<1x512xf32>
    %cst_351 = arith.constant 0.000000e+00 : f32
    %988 = vector.broadcast %cst_351 : f32 to vector<1x512xf32>
    %989 = arith.select %131, %987, %988 : vector<1x512xi1>, vector<1x512xf32>
    %990 = arith.addf %978, %989 : vector<1x512xf32>
    %c495_i32_352 = arith.constant 495 : i32
    %991 = tpu.dynamic_rotate %607 by %c495_i32_352 dim 1 : vector<1x512xf32>, i32 -> vector<1x512xf32>
    %c0_353 = arith.constant 0 : index
    %c32 = arith.constant 32 : index
    %992 = memref.load %arg14[%c0_353, %c32] : memref<2x49xf32, #tpu.memory_space<smem>>
    %993 = vector.broadcast %992 : f32 to vector<1x512xf32>
    %994 = arith.mulf %991, %993 : vector<1x512xf32>
    %c495_i32_354 = arith.constant 495 : i32
    %995 = tpu.dynamic_rotate %609 by %c495_i32_354 dim 1 : vector<1x512xf32>, i32 -> vector<1x512xf32>
    %c1_355 = arith.constant 1 : index
    %c32_356 = arith.constant 32 : index
    %996 = memref.load %arg14[%c1_355, %c32_356] : memref<2x49xf32, #tpu.memory_space<smem>>
    %997 = vector.broadcast %996 : f32 to vector<1x512xf32>
    %998 = arith.mulf %995, %997 : vector<1x512xf32>
    %999 = arith.addf %994, %998 : vector<1x512xf32>
    %cst_357 = arith.constant 0.000000e+00 : f32
    %1000 = vector.broadcast %cst_357 : f32 to vector<1x512xf32>
    %1001 = arith.select %136, %999, %1000 : vector<1x512xi1>, vector<1x512xf32>
    %1002 = arith.addf %990, %1001 : vector<1x512xf32>
    %c494_i32 = arith.constant 494 : i32
    %1003 = tpu.dynamic_rotate %607 by %c494_i32 dim 1 : vector<1x512xf32>, i32 -> vector<1x512xf32>
    %c0_358 = arith.constant 0 : index
    %c33 = arith.constant 33 : index
    %1004 = memref.load %arg14[%c0_358, %c33] : memref<2x49xf32, #tpu.memory_space<smem>>
    %1005 = vector.broadcast %1004 : f32 to vector<1x512xf32>
    %1006 = arith.mulf %1003, %1005 : vector<1x512xf32>
    %c494_i32_359 = arith.constant 494 : i32
    %1007 = tpu.dynamic_rotate %609 by %c494_i32_359 dim 1 : vector<1x512xf32>, i32 -> vector<1x512xf32>
    %c1_360 = arith.constant 1 : index
    %c33_361 = arith.constant 33 : index
    %1008 = memref.load %arg14[%c1_360, %c33_361] : memref<2x49xf32, #tpu.memory_space<smem>>
    %1009 = vector.broadcast %1008 : f32 to vector<1x512xf32>
    %1010 = arith.mulf %1007, %1009 : vector<1x512xf32>
    %1011 = arith.addf %1006, %1010 : vector<1x512xf32>
    %cst_362 = arith.constant 0.000000e+00 : f32
    %1012 = vector.broadcast %cst_362 : f32 to vector<1x512xf32>
    %1013 = arith.select %141, %1011, %1012 : vector<1x512xi1>, vector<1x512xf32>
    %1014 = arith.addf %1002, %1013 : vector<1x512xf32>
    %c493_i32 = arith.constant 493 : i32
    %1015 = tpu.dynamic_rotate %607 by %c493_i32 dim 1 : vector<1x512xf32>, i32 -> vector<1x512xf32>
    %c0_363 = arith.constant 0 : index
    %c34 = arith.constant 34 : index
    %1016 = memref.load %arg14[%c0_363, %c34] : memref<2x49xf32, #tpu.memory_space<smem>>
    %1017 = vector.broadcast %1016 : f32 to vector<1x512xf32>
    %1018 = arith.mulf %1015, %1017 : vector<1x512xf32>
    %c493_i32_364 = arith.constant 493 : i32
    %1019 = tpu.dynamic_rotate %609 by %c493_i32_364 dim 1 : vector<1x512xf32>, i32 -> vector<1x512xf32>
    %c1_365 = arith.constant 1 : index
    %c34_366 = arith.constant 34 : index
    %1020 = memref.load %arg14[%c1_365, %c34_366] : memref<2x49xf32, #tpu.memory_space<smem>>
    %1021 = vector.broadcast %1020 : f32 to vector<1x512xf32>
    %1022 = arith.mulf %1019, %1021 : vector<1x512xf32>
    %1023 = arith.addf %1018, %1022 : vector<1x512xf32>
    %cst_367 = arith.constant 0.000000e+00 : f32
    %1024 = vector.broadcast %cst_367 : f32 to vector<1x512xf32>
    %1025 = arith.select %146, %1023, %1024 : vector<1x512xi1>, vector<1x512xf32>
    %1026 = arith.addf %1014, %1025 : vector<1x512xf32>
    %c483_i32 = arith.constant 483 : i32
    %1027 = tpu.dynamic_rotate %607 by %c483_i32 dim 1 : vector<1x512xf32>, i32 -> vector<1x512xf32>
    %c0_368 = arith.constant 0 : index
    %c35 = arith.constant 35 : index
    %1028 = memref.load %arg14[%c0_368, %c35] : memref<2x49xf32, #tpu.memory_space<smem>>
    %1029 = vector.broadcast %1028 : f32 to vector<1x512xf32>
    %1030 = arith.mulf %1027, %1029 : vector<1x512xf32>
    %c483_i32_369 = arith.constant 483 : i32
    %1031 = tpu.dynamic_rotate %609 by %c483_i32_369 dim 1 : vector<1x512xf32>, i32 -> vector<1x512xf32>
    %c1_370 = arith.constant 1 : index
    %c35_371 = arith.constant 35 : index
    %1032 = memref.load %arg14[%c1_370, %c35_371] : memref<2x49xf32, #tpu.memory_space<smem>>
    %1033 = vector.broadcast %1032 : f32 to vector<1x512xf32>
    %1034 = arith.mulf %1031, %1033 : vector<1x512xf32>
    %1035 = arith.addf %1030, %1034 : vector<1x512xf32>
    %cst_372 = arith.constant 0.000000e+00 : f32
    %1036 = vector.broadcast %cst_372 : f32 to vector<1x512xf32>
    %1037 = arith.select %151, %1035, %1036 : vector<1x512xi1>, vector<1x512xf32>
    %1038 = arith.addf %1026, %1037 : vector<1x512xf32>
    %c482_i32 = arith.constant 482 : i32
    %1039 = tpu.dynamic_rotate %607 by %c482_i32 dim 1 : vector<1x512xf32>, i32 -> vector<1x512xf32>
    %c0_373 = arith.constant 0 : index
    %c36 = arith.constant 36 : index
    %1040 = memref.load %arg14[%c0_373, %c36] : memref<2x49xf32, #tpu.memory_space<smem>>
    %1041 = vector.broadcast %1040 : f32 to vector<1x512xf32>
    %1042 = arith.mulf %1039, %1041 : vector<1x512xf32>
    %c482_i32_374 = arith.constant 482 : i32
    %1043 = tpu.dynamic_rotate %609 by %c482_i32_374 dim 1 : vector<1x512xf32>, i32 -> vector<1x512xf32>
    %c1_375 = arith.constant 1 : index
    %c36_376 = arith.constant 36 : index
    %1044 = memref.load %arg14[%c1_375, %c36_376] : memref<2x49xf32, #tpu.memory_space<smem>>
    %1045 = vector.broadcast %1044 : f32 to vector<1x512xf32>
    %1046 = arith.mulf %1043, %1045 : vector<1x512xf32>
    %1047 = arith.addf %1042, %1046 : vector<1x512xf32>
    %cst_377 = arith.constant 0.000000e+00 : f32
    %1048 = vector.broadcast %cst_377 : f32 to vector<1x512xf32>
    %1049 = arith.select %156, %1047, %1048 : vector<1x512xi1>, vector<1x512xf32>
    %1050 = arith.addf %1038, %1049 : vector<1x512xf32>
    %c481_i32 = arith.constant 481 : i32
    %1051 = tpu.dynamic_rotate %607 by %c481_i32 dim 1 : vector<1x512xf32>, i32 -> vector<1x512xf32>
    %c0_378 = arith.constant 0 : index
    %c37 = arith.constant 37 : index
    %1052 = memref.load %arg14[%c0_378, %c37] : memref<2x49xf32, #tpu.memory_space<smem>>
    %1053 = vector.broadcast %1052 : f32 to vector<1x512xf32>
    %1054 = arith.mulf %1051, %1053 : vector<1x512xf32>
    %c481_i32_379 = arith.constant 481 : i32
    %1055 = tpu.dynamic_rotate %609 by %c481_i32_379 dim 1 : vector<1x512xf32>, i32 -> vector<1x512xf32>
    %c1_380 = arith.constant 1 : index
    %c37_381 = arith.constant 37 : index
    %1056 = memref.load %arg14[%c1_380, %c37_381] : memref<2x49xf32, #tpu.memory_space<smem>>
    %1057 = vector.broadcast %1056 : f32 to vector<1x512xf32>
    %1058 = arith.mulf %1055, %1057 : vector<1x512xf32>
    %1059 = arith.addf %1054, %1058 : vector<1x512xf32>
    %cst_382 = arith.constant 0.000000e+00 : f32
    %1060 = vector.broadcast %cst_382 : f32 to vector<1x512xf32>
    %1061 = arith.select %161, %1059, %1060 : vector<1x512xi1>, vector<1x512xf32>
    %1062 = arith.addf %1050, %1061 : vector<1x512xf32>
    %c480_i32 = arith.constant 480 : i32
    %1063 = tpu.dynamic_rotate %607 by %c480_i32 dim 1 : vector<1x512xf32>, i32 -> vector<1x512xf32>
    %c0_383 = arith.constant 0 : index
    %c38 = arith.constant 38 : index
    %1064 = memref.load %arg14[%c0_383, %c38] : memref<2x49xf32, #tpu.memory_space<smem>>
    %1065 = vector.broadcast %1064 : f32 to vector<1x512xf32>
    %1066 = arith.mulf %1063, %1065 : vector<1x512xf32>
    %c480_i32_384 = arith.constant 480 : i32
    %1067 = tpu.dynamic_rotate %609 by %c480_i32_384 dim 1 : vector<1x512xf32>, i32 -> vector<1x512xf32>
    %c1_385 = arith.constant 1 : index
    %c38_386 = arith.constant 38 : index
    %1068 = memref.load %arg14[%c1_385, %c38_386] : memref<2x49xf32, #tpu.memory_space<smem>>
    %1069 = vector.broadcast %1068 : f32 to vector<1x512xf32>
    %1070 = arith.mulf %1067, %1069 : vector<1x512xf32>
    %1071 = arith.addf %1066, %1070 : vector<1x512xf32>
    %cst_387 = arith.constant 0.000000e+00 : f32
    %1072 = vector.broadcast %cst_387 : f32 to vector<1x512xf32>
    %1073 = arith.select %163, %1071, %1072 : vector<1x512xi1>, vector<1x512xf32>
    %1074 = arith.addf %1062, %1073 : vector<1x512xf32>
    %c479_i32 = arith.constant 479 : i32
    %1075 = tpu.dynamic_rotate %607 by %c479_i32 dim 1 : vector<1x512xf32>, i32 -> vector<1x512xf32>
    %c0_388 = arith.constant 0 : index
    %c39 = arith.constant 39 : index
    %1076 = memref.load %arg14[%c0_388, %c39] : memref<2x49xf32, #tpu.memory_space<smem>>
    %1077 = vector.broadcast %1076 : f32 to vector<1x512xf32>
    %1078 = arith.mulf %1075, %1077 : vector<1x512xf32>
    %c479_i32_389 = arith.constant 479 : i32
    %1079 = tpu.dynamic_rotate %609 by %c479_i32_389 dim 1 : vector<1x512xf32>, i32 -> vector<1x512xf32>
    %c1_390 = arith.constant 1 : index
    %c39_391 = arith.constant 39 : index
    %1080 = memref.load %arg14[%c1_390, %c39_391] : memref<2x49xf32, #tpu.memory_space<smem>>
    %1081 = vector.broadcast %1080 : f32 to vector<1x512xf32>
    %1082 = arith.mulf %1079, %1081 : vector<1x512xf32>
    %1083 = arith.addf %1078, %1082 : vector<1x512xf32>
    %cst_392 = arith.constant 0.000000e+00 : f32
    %1084 = vector.broadcast %cst_392 : f32 to vector<1x512xf32>
    %1085 = arith.select %168, %1083, %1084 : vector<1x512xi1>, vector<1x512xf32>
    %1086 = arith.addf %1074, %1085 : vector<1x512xf32>
    %c478_i32 = arith.constant 478 : i32
    %1087 = tpu.dynamic_rotate %607 by %c478_i32 dim 1 : vector<1x512xf32>, i32 -> vector<1x512xf32>
    %c0_393 = arith.constant 0 : index
    %c40 = arith.constant 40 : index
    %1088 = memref.load %arg14[%c0_393, %c40] : memref<2x49xf32, #tpu.memory_space<smem>>
    %1089 = vector.broadcast %1088 : f32 to vector<1x512xf32>
    %1090 = arith.mulf %1087, %1089 : vector<1x512xf32>
    %c478_i32_394 = arith.constant 478 : i32
    %1091 = tpu.dynamic_rotate %609 by %c478_i32_394 dim 1 : vector<1x512xf32>, i32 -> vector<1x512xf32>
    %c1_395 = arith.constant 1 : index
    %c40_396 = arith.constant 40 : index
    %1092 = memref.load %arg14[%c1_395, %c40_396] : memref<2x49xf32, #tpu.memory_space<smem>>
    %1093 = vector.broadcast %1092 : f32 to vector<1x512xf32>
    %1094 = arith.mulf %1091, %1093 : vector<1x512xf32>
    %1095 = arith.addf %1090, %1094 : vector<1x512xf32>
    %cst_397 = arith.constant 0.000000e+00 : f32
    %1096 = vector.broadcast %cst_397 : f32 to vector<1x512xf32>
    %1097 = arith.select %173, %1095, %1096 : vector<1x512xi1>, vector<1x512xf32>
    %1098 = arith.addf %1086, %1097 : vector<1x512xf32>
    %c477_i32 = arith.constant 477 : i32
    %1099 = tpu.dynamic_rotate %607 by %c477_i32 dim 1 : vector<1x512xf32>, i32 -> vector<1x512xf32>
    %c0_398 = arith.constant 0 : index
    %c41 = arith.constant 41 : index
    %1100 = memref.load %arg14[%c0_398, %c41] : memref<2x49xf32, #tpu.memory_space<smem>>
    %1101 = vector.broadcast %1100 : f32 to vector<1x512xf32>
    %1102 = arith.mulf %1099, %1101 : vector<1x512xf32>
    %c477_i32_399 = arith.constant 477 : i32
    %1103 = tpu.dynamic_rotate %609 by %c477_i32_399 dim 1 : vector<1x512xf32>, i32 -> vector<1x512xf32>
    %c1_400 = arith.constant 1 : index
    %c41_401 = arith.constant 41 : index
    %1104 = memref.load %arg14[%c1_400, %c41_401] : memref<2x49xf32, #tpu.memory_space<smem>>
    %1105 = vector.broadcast %1104 : f32 to vector<1x512xf32>
    %1106 = arith.mulf %1103, %1105 : vector<1x512xf32>
    %1107 = arith.addf %1102, %1106 : vector<1x512xf32>
    %cst_402 = arith.constant 0.000000e+00 : f32
    %1108 = vector.broadcast %cst_402 : f32 to vector<1x512xf32>
    %1109 = arith.select %178, %1107, %1108 : vector<1x512xi1>, vector<1x512xf32>
    %1110 = arith.addf %1098, %1109 : vector<1x512xf32>
    %c467_i32 = arith.constant 467 : i32
    %1111 = tpu.dynamic_rotate %607 by %c467_i32 dim 1 : vector<1x512xf32>, i32 -> vector<1x512xf32>
    %c0_403 = arith.constant 0 : index
    %c42 = arith.constant 42 : index
    %1112 = memref.load %arg14[%c0_403, %c42] : memref<2x49xf32, #tpu.memory_space<smem>>
    %1113 = vector.broadcast %1112 : f32 to vector<1x512xf32>
    %1114 = arith.mulf %1111, %1113 : vector<1x512xf32>
    %c467_i32_404 = arith.constant 467 : i32
    %1115 = tpu.dynamic_rotate %609 by %c467_i32_404 dim 1 : vector<1x512xf32>, i32 -> vector<1x512xf32>
    %c1_405 = arith.constant 1 : index
    %c42_406 = arith.constant 42 : index
    %1116 = memref.load %arg14[%c1_405, %c42_406] : memref<2x49xf32, #tpu.memory_space<smem>>
    %1117 = vector.broadcast %1116 : f32 to vector<1x512xf32>
    %1118 = arith.mulf %1115, %1117 : vector<1x512xf32>
    %1119 = arith.addf %1114, %1118 : vector<1x512xf32>
    %cst_407 = arith.constant 0.000000e+00 : f32
    %1120 = vector.broadcast %cst_407 : f32 to vector<1x512xf32>
    %1121 = arith.select %183, %1119, %1120 : vector<1x512xi1>, vector<1x512xf32>
    %1122 = arith.addf %1110, %1121 : vector<1x512xf32>
    %c466_i32 = arith.constant 466 : i32
    %1123 = tpu.dynamic_rotate %607 by %c466_i32 dim 1 : vector<1x512xf32>, i32 -> vector<1x512xf32>
    %c0_408 = arith.constant 0 : index
    %c43 = arith.constant 43 : index
    %1124 = memref.load %arg14[%c0_408, %c43] : memref<2x49xf32, #tpu.memory_space<smem>>
    %1125 = vector.broadcast %1124 : f32 to vector<1x512xf32>
    %1126 = arith.mulf %1123, %1125 : vector<1x512xf32>
    %c466_i32_409 = arith.constant 466 : i32
    %1127 = tpu.dynamic_rotate %609 by %c466_i32_409 dim 1 : vector<1x512xf32>, i32 -> vector<1x512xf32>
    %c1_410 = arith.constant 1 : index
    %c43_411 = arith.constant 43 : index
    %1128 = memref.load %arg14[%c1_410, %c43_411] : memref<2x49xf32, #tpu.memory_space<smem>>
    %1129 = vector.broadcast %1128 : f32 to vector<1x512xf32>
    %1130 = arith.mulf %1127, %1129 : vector<1x512xf32>
    %1131 = arith.addf %1126, %1130 : vector<1x512xf32>
    %cst_412 = arith.constant 0.000000e+00 : f32
    %1132 = vector.broadcast %cst_412 : f32 to vector<1x512xf32>
    %1133 = arith.select %188, %1131, %1132 : vector<1x512xi1>, vector<1x512xf32>
    %1134 = arith.addf %1122, %1133 : vector<1x512xf32>
    %c465_i32 = arith.constant 465 : i32
    %1135 = tpu.dynamic_rotate %607 by %c465_i32 dim 1 : vector<1x512xf32>, i32 -> vector<1x512xf32>
    %c0_413 = arith.constant 0 : index
    %c44 = arith.constant 44 : index
    %1136 = memref.load %arg14[%c0_413, %c44] : memref<2x49xf32, #tpu.memory_space<smem>>
    %1137 = vector.broadcast %1136 : f32 to vector<1x512xf32>
    %1138 = arith.mulf %1135, %1137 : vector<1x512xf32>
    %c465_i32_414 = arith.constant 465 : i32
    %1139 = tpu.dynamic_rotate %609 by %c465_i32_414 dim 1 : vector<1x512xf32>, i32 -> vector<1x512xf32>
    %c1_415 = arith.constant 1 : index
    %c44_416 = arith.constant 44 : index
    %1140 = memref.load %arg14[%c1_415, %c44_416] : memref<2x49xf32, #tpu.memory_space<smem>>
    %1141 = vector.broadcast %1140 : f32 to vector<1x512xf32>
    %1142 = arith.mulf %1139, %1141 : vector<1x512xf32>
    %1143 = arith.addf %1138, %1142 : vector<1x512xf32>
    %cst_417 = arith.constant 0.000000e+00 : f32
    %1144 = vector.broadcast %cst_417 : f32 to vector<1x512xf32>
    %1145 = arith.select %193, %1143, %1144 : vector<1x512xi1>, vector<1x512xf32>
    %1146 = arith.addf %1134, %1145 : vector<1x512xf32>
    %c464_i32 = arith.constant 464 : i32
    %1147 = tpu.dynamic_rotate %607 by %c464_i32 dim 1 : vector<1x512xf32>, i32 -> vector<1x512xf32>
    %c0_418 = arith.constant 0 : index
    %c45 = arith.constant 45 : index
    %1148 = memref.load %arg14[%c0_418, %c45] : memref<2x49xf32, #tpu.memory_space<smem>>
    %1149 = vector.broadcast %1148 : f32 to vector<1x512xf32>
    %1150 = arith.mulf %1147, %1149 : vector<1x512xf32>
    %c464_i32_419 = arith.constant 464 : i32
    %1151 = tpu.dynamic_rotate %609 by %c464_i32_419 dim 1 : vector<1x512xf32>, i32 -> vector<1x512xf32>
    %c1_420 = arith.constant 1 : index
    %c45_421 = arith.constant 45 : index
    %1152 = memref.load %arg14[%c1_420, %c45_421] : memref<2x49xf32, #tpu.memory_space<smem>>
    %1153 = vector.broadcast %1152 : f32 to vector<1x512xf32>
    %1154 = arith.mulf %1151, %1153 : vector<1x512xf32>
    %1155 = arith.addf %1150, %1154 : vector<1x512xf32>
    %cst_422 = arith.constant 0.000000e+00 : f32
    %1156 = vector.broadcast %cst_422 : f32 to vector<1x512xf32>
    %1157 = arith.select %195, %1155, %1156 : vector<1x512xi1>, vector<1x512xf32>
    %1158 = arith.addf %1146, %1157 : vector<1x512xf32>
    %c463_i32 = arith.constant 463 : i32
    %1159 = tpu.dynamic_rotate %607 by %c463_i32 dim 1 : vector<1x512xf32>, i32 -> vector<1x512xf32>
    %c0_423 = arith.constant 0 : index
    %c46 = arith.constant 46 : index
    %1160 = memref.load %arg14[%c0_423, %c46] : memref<2x49xf32, #tpu.memory_space<smem>>
    %1161 = vector.broadcast %1160 : f32 to vector<1x512xf32>
    %1162 = arith.mulf %1159, %1161 : vector<1x512xf32>
    %c463_i32_424 = arith.constant 463 : i32
    %1163 = tpu.dynamic_rotate %609 by %c463_i32_424 dim 1 : vector<1x512xf32>, i32 -> vector<1x512xf32>
    %c1_425 = arith.constant 1 : index
    %c46_426 = arith.constant 46 : index
    %1164 = memref.load %arg14[%c1_425, %c46_426] : memref<2x49xf32, #tpu.memory_space<smem>>
    %1165 = vector.broadcast %1164 : f32 to vector<1x512xf32>
    %1166 = arith.mulf %1163, %1165 : vector<1x512xf32>
    %1167 = arith.addf %1162, %1166 : vector<1x512xf32>
    %cst_427 = arith.constant 0.000000e+00 : f32
    %1168 = vector.broadcast %cst_427 : f32 to vector<1x512xf32>
    %1169 = arith.select %200, %1167, %1168 : vector<1x512xi1>, vector<1x512xf32>
    %1170 = arith.addf %1158, %1169 : vector<1x512xf32>
    %c462_i32 = arith.constant 462 : i32
    %1171 = tpu.dynamic_rotate %607 by %c462_i32 dim 1 : vector<1x512xf32>, i32 -> vector<1x512xf32>
    %c0_428 = arith.constant 0 : index
    %c47 = arith.constant 47 : index
    %1172 = memref.load %arg14[%c0_428, %c47] : memref<2x49xf32, #tpu.memory_space<smem>>
    %1173 = vector.broadcast %1172 : f32 to vector<1x512xf32>
    %1174 = arith.mulf %1171, %1173 : vector<1x512xf32>
    %c462_i32_429 = arith.constant 462 : i32
    %1175 = tpu.dynamic_rotate %609 by %c462_i32_429 dim 1 : vector<1x512xf32>, i32 -> vector<1x512xf32>
    %c1_430 = arith.constant 1 : index
    %c47_431 = arith.constant 47 : index
    %1176 = memref.load %arg14[%c1_430, %c47_431] : memref<2x49xf32, #tpu.memory_space<smem>>
    %1177 = vector.broadcast %1176 : f32 to vector<1x512xf32>
    %1178 = arith.mulf %1175, %1177 : vector<1x512xf32>
    %1179 = arith.addf %1174, %1178 : vector<1x512xf32>
    %cst_432 = arith.constant 0.000000e+00 : f32
    %1180 = vector.broadcast %cst_432 : f32 to vector<1x512xf32>
    %1181 = arith.select %205, %1179, %1180 : vector<1x512xi1>, vector<1x512xf32>
    %1182 = arith.addf %1170, %1181 : vector<1x512xf32>
    %c461_i32 = arith.constant 461 : i32
    %1183 = tpu.dynamic_rotate %607 by %c461_i32 dim 1 : vector<1x512xf32>, i32 -> vector<1x512xf32>
    %c0_433 = arith.constant 0 : index
    %c48 = arith.constant 48 : index
    %1184 = memref.load %arg14[%c0_433, %c48] : memref<2x49xf32, #tpu.memory_space<smem>>
    %1185 = vector.broadcast %1184 : f32 to vector<1x512xf32>
    %1186 = arith.mulf %1183, %1185 : vector<1x512xf32>
    %c461_i32_434 = arith.constant 461 : i32
    %1187 = tpu.dynamic_rotate %609 by %c461_i32_434 dim 1 : vector<1x512xf32>, i32 -> vector<1x512xf32>
    %c1_435 = arith.constant 1 : index
    %c48_436 = arith.constant 48 : index
    %1188 = memref.load %arg14[%c1_435, %c48_436] : memref<2x49xf32, #tpu.memory_space<smem>>
    %1189 = vector.broadcast %1188 : f32 to vector<1x512xf32>
    %1190 = arith.mulf %1187, %1189 : vector<1x512xf32>
    %1191 = arith.addf %1186, %1190 : vector<1x512xf32>
    %cst_437 = arith.constant 0.000000e+00 : f32
    %1192 = vector.broadcast %cst_437 : f32 to vector<1x512xf32>
    %1193 = arith.select %210, %1191, %1192 : vector<1x512xi1>, vector<1x512xf32>
    %1194 = arith.addf %1182, %1193 : vector<1x512xf32>
    %1195 = arith.negf %1194 : vector<1x512xf32>
    %1196 = math.exp %1195 : vector<1x512xf32>
    %cst_438 = arith.constant 1.000000e+00 : f32
    %1197 = vector.broadcast %cst_438 : f32 to vector<1x512xf32>
    %1198 = arith.addf %1197, %1196 : vector<1x512xf32>
    %1199 = arith.divf %1197, %1198 : vector<1x512xf32>
    %1200 = vector.broadcast %1199 : vector<1x512xf32> to vector<48x512xf32>
    %1201 = arith.mulf %603, %1200 : vector<48x512xf32>
    %c0_439 = arith.constant 0 : index
    %c0_440 = arith.constant 0 : index
    %1202 = vector.load %arg11[%c0_439, %c0_440] : memref<8x48xf32, #tpu.memory_space<vmem>>, vector<8x48xf32>
    %cst_441 = arith.constant dense<0.000000e+00> : vector<8x512xf32>
    %1203 = tpu.matmul %1202, %1201, %cst_441 {dimension_numbers = #tpu.dot_dimension_numbers<[1], [0], [0], [1], [0, 0, 1, 1], [], []>} : vector<8x48xf32>, vector<48x512xf32>, vector<8x512xf32> -> vector<8x512xf32>
    %c0_442 = arith.constant 0 : index
    %c0_443 = arith.constant 0 : index
    %1204 = vector.load %arg12[%c0_442, %c0_443] : memref<8x1xf32, #tpu.memory_space<vmem>>, vector<8x1xf32>
    %c0_444 = arith.constant 0 : index
    %c0_445 = arith.constant 0 : index
    %1205 = vector.load %arg13[%c0_444, %c0_445] : memref<8x1xf32, #tpu.memory_space<vmem>>, vector<8x1xf32>
    %cst_446 = arith.constant dense<0.000000e+00> : vector<8xf32>
    %1206 = vector.multi_reduction <add>, %1203, %cst_446 [1] : vector<8x512xf32> to vector<8xf32>
    %1207 = vector.shape_cast %1206 : vector<8xf32> to vector<8x1xf32>
    %cst_447 = arith.constant 0.001953125 : f32
    %1208 = vector.broadcast %cst_447 : f32 to vector<8x1xf32>
    %1209 = arith.mulf %1207, %1208 : vector<8x1xf32>
    %1210 = arith.mulf %1203, %1203 : vector<8x512xf32>
    %cst_448 = arith.constant dense<0.000000e+00> : vector<8xf32>
    %1211 = vector.multi_reduction <add>, %1210, %cst_448 [1] : vector<8x512xf32> to vector<8xf32>
    %1212 = vector.shape_cast %1211 : vector<8xf32> to vector<8x1xf32>
    %cst_449 = arith.constant 0.001953125 : f32
    %1213 = vector.broadcast %cst_449 : f32 to vector<8x1xf32>
    %1214 = arith.mulf %1212, %1213 : vector<8x1xf32>
    %1215 = arith.mulf %1209, %1209 : vector<8x1xf32>
    %1216 = arith.subf %1214, %1215 : vector<8x1xf32>
    %cst_450 = arith.constant 0.000000e+00 : f32
    %1217 = vector.broadcast %cst_450 : f32 to vector<8x1xf32>
    %1218 = arith.maximumf %1216, %1217 : vector<8x1xf32>
    %1219 = vector.broadcast %1209 : vector<8x1xf32> to vector<8x512xf32>
    %1220 = arith.subf %1203, %1219 : vector<8x512xf32>
    %cst_451 = arith.constant 9.99999974E-6 : f32
    %1221 = vector.broadcast %cst_451 : f32 to vector<8x1xf32>
    %1222 = arith.addf %1218, %1221 : vector<8x1xf32>
    %1223 = math.rsqrt %1222 : vector<8x1xf32>
    %1224 = vector.broadcast %1223 : vector<8x1xf32> to vector<8x512xf32>
    %1225 = arith.mulf %1220, %1224 : vector<8x512xf32>
    %1226 = vector.broadcast %1204 : vector<8x1xf32> to vector<8x512xf32>
    %1227 = arith.mulf %1225, %1226 : vector<8x512xf32>
    %1228 = vector.broadcast %1205 : vector<8x1xf32> to vector<8x512xf32>
    %1229 = arith.addf %1227, %1228 : vector<8x512xf32>
    %c0_452 = arith.constant 0 : index
    %c0_453 = arith.constant 0 : index
    %1230 = vector.load %arg0[%c0_452, %c0_453] : memref<8x512xf32, #tpu.memory_space<vmem>>, vector<8x512xf32>
    %1231 = arith.addf %1229, %1230 : vector<8x512xf32>
    %c0_454 = arith.constant 0 : index
    %c0_455 = arith.constant 0 : index
    %1232 = vector.load %arg15[%c0_454, %c0_455] : memref<8x512xf32, #tpu.memory_space<vmem>>, vector<8x512xf32>
    tpu.vector_store %arg15[%c0_454, %c0_455], %1231 {strides = array<i32>} : memref<8x512xf32, #tpu.memory_space<vmem>>, vector<8x512xf32>,
    return
  }
}

</mosaic_0001>

<llo_original>
// kernel: tpu_custom_call.1
$region0: #{tpu_custom_call.1}
  #allocation0 [shape = 'u32[]', space=smem, size = 0x4, offset = 0x4, fixed_abs, tag = 'smem constant byte address 0x4 - core index']
  #allocation1 [shape = 'u32[72,128]{1,0:T(1,128)}', space=vmem, size = 0x9000, scoped, tag = 'internal scratch']
  %s0 = inlined_call_operand.vmem [shape: f32[8,512], index: 0, kind: input, shape index: {}]
  %s1 = inlined_call_operand.vmem [shape: f32[48,8], index: 1, kind: input, shape index: {}]
  %s2 = inlined_call_operand.vmem [shape: f32[48,1], index: 2, kind: input, shape index: {}]
  %s3 = inlined_call_operand.vmem [shape: f32[48,1], index: 3, kind: input, shape index: {}]
  %s4 = inlined_call_operand.vmem [shape: f32[48,9], index: 4, kind: input, shape index: {}]
  %s5 = inlined_call_operand.vmem [shape: f32[48,1], index: 5, kind: input, shape index: {}]
  %s6 = inlined_call_operand.vmem [shape: f32[48,1], index: 6, kind: input, shape index: {}]
  %s7 = inlined_call_operand.vmem [shape: f32[3,48], index: 7, kind: input, shape index: {}]
  %s8 = inlined_call_operand.vmem [shape: f32[3,1], index: 8, kind: input, shape index: {}]
  %s9 = inlined_call_operand.vmem [shape: f32[48,3], index: 9, kind: input, shape index: {}]
  %s10 = inlined_call_operand.vmem [shape: f32[48,1], index: 10, kind: input, shape index: {}]
  %s11 = inlined_call_operand.vmem [shape: f32[8,48], index: 11, kind: input, shape index: {}]
  %s12 = inlined_call_operand.vmem [shape: f32[8,1], index: 12, kind: input, shape index: {}]
  %s13 = inlined_call_operand.vmem [shape: f32[8,1], index: 13, kind: input, shape index: {}]
  %s14 = inlined_call_operand.vmem [shape: f32[2,49], index: 14, kind: input, shape index: {}]
  %s15 = inlined_call_operand.hbm [shape: f32[8,512], index: 15, kind: output, shape index: {}]
  %s16 = sld [smem:[#allocation0]]
  $region74: #{tpu_custom_call.1} parent=0
    _
  %s18 = ssub.s32 1, %s16
  %s19 = scalar_select 0, %s18, %s16
  $region1: #{tpu_custom_call.1} parent=0
    #allocation2 [shape = 'u8[1024]{0}', space=smem, size = 0x400, scoped, tag = 'input window, operand 14, single buffered']
    #allocation3 [shape = 's32[1]{0}', space=sflag, size = 0x4, scoped, tag = 'scoped memory for tpu_custom_call.1']
    #allocation4 [shape = 's32[1]{0}', space=sflag, size = 0x4, scoped, tag = 'scoped memory for tpu_custom_call.1']
    #allocation5 [shape = 'u8[16384]{0}', space=vmem, size = 0x4000, scoped, tag = 'output window, operand 0, single buffered']
    %20 = vsyncpa [#allocation4], 0
    %21 = vsyncpa [#allocation3], 0
    // Predicated region
    $region2: #{tpu_custom_call.1} parent=1 // pred_check
      _
    $region3: #{tpu_custom_call.1} parent=1 // pred_check_branch
      %23 = sbr.rel (0) target = $region5
    $region4: #{tpu_custom_call.1} parent=1 // pred_region
      _
    $region5: #{tpu_custom_call.1} parent=1 // pred_fallthru
      _
    // Predicated region
    $region6: #{tpu_custom_call.1} parent=1 // pred_check
      _
    $region7: #{tpu_custom_call.1} parent=1 // pred_check_branch
      %25 = sbr.rel (0) target = $region9
    $region8: #{tpu_custom_call.1} parent=1 // pred_region
      _
    $region9: #{tpu_custom_call.1} parent=1 // pred_fallthru
      _
    // Predicated region
    $region10: #{tpu_custom_call.1} parent=1 // pred_check
      _
    $region11: #{tpu_custom_call.1} parent=1 // pred_check_branch
      %27 = sbr.rel (0) target = $region13
    $region12: #{tpu_custom_call.1} parent=1 // pred_region
      _
    $region13: #{tpu_custom_call.1} parent=1 // pred_fallthru
      _
    // Predicated region
    $region14: #{tpu_custom_call.1} parent=1 // pred_check
      _
    $region15: #{tpu_custom_call.1} parent=1 // pred_check_branch
      %29 = sbr.rel (0) target = $region17
    $region16: #{tpu_custom_call.1} parent=1 // pred_region
      _
    $region17: #{tpu_custom_call.1} parent=1 // pred_fallthru
      _
    // Predicated region
    $region18: #{tpu_custom_call.1} parent=1 // pred_check
      _
    $region19: #{tpu_custom_call.1} parent=1 // pred_check_branch
      %31 = sbr.rel (0) target = $region21
    $region20: #{tpu_custom_call.1} parent=1 // pred_region
      _
    $region21: #{tpu_custom_call.1} parent=1 // pred_fallthru
      _
    // Predicated region
    $region22: #{tpu_custom_call.1} parent=1 // pred_check
      _
    $region23: #{tpu_custom_call.1} parent=1 // pred_check_branch
      %33 = sbr.rel (0) target = $region25
    $region24: #{tpu_custom_call.1} parent=1 // pred_region
      _
    $region25: #{tpu_custom_call.1} parent=1 // pred_fallthru
      _
    // Predicated region
    $region26: #{tpu_custom_call.1} parent=1 // pred_check
      _
    $region27: #{tpu_custom_call.1} parent=1 // pred_check_branch
      %35 = sbr.rel (0) target = $region29
    $region28: #{tpu_custom_call.1} parent=1 // pred_region
      _
    $region29: #{tpu_custom_call.1} parent=1 // pred_fallthru
      _
    // Predicated region
    $region30: #{tpu_custom_call.1} parent=1 // pred_check
      _
    $region31: #{tpu_custom_call.1} parent=1 // pred_check_branch
      %37 = sbr.rel (0) target = $region33
    $region32: #{tpu_custom_call.1} parent=1 // pred_region
      _
    $region33: #{tpu_custom_call.1} parent=1 // pred_fallthru
      _
    // Predicated region
    $region34: #{tpu_custom_call.1} parent=1 // pred_check
      _
    $region35: #{tpu_custom_call.1} parent=1 // pred_check_branch
      %39 = sbr.rel (0) target = $region37
    $region36: #{tpu_custom_call.1} parent=1 // pred_region
      _
    $region37: #{tpu_custom_call.1} parent=1 // pred_fallthru
      _
    // Predicated region
    $region38: #{tpu_custom_call.1} parent=1 // pred_check
      _
    $region39: #{tpu_custom_call.1} parent=1 // pred_check_branch
      %41 = sbr.rel (0) target = $region41
    $region40: #{tpu_custom_call.1} parent=1 // pred_region
      _
    $region41: #{tpu_custom_call.1} parent=1 // pred_fallthru
      _
    // Predicated region
    $region42: #{tpu_custom_call.1} parent=1 // pred_check
      _
    $region43: #{tpu_custom_call.1} parent=1 // pred_check_branch
      %43 = sbr.rel (0) target = $region45
    $region44: #{tpu_custom_call.1} parent=1 // pred_region
      _
    $region45: #{tpu_custom_call.1} parent=1 // pred_fallthru
      _
    // Predicated region
    $region46: #{tpu_custom_call.1} parent=1 // pred_check
      _
    $region47: #{tpu_custom_call.1} parent=1 // pred_check_branch
      %45 = sbr.rel (0) target = $region49
    $region48: #{tpu_custom_call.1} parent=1 // pred_region
      _
    $region49: #{tpu_custom_call.1} parent=1 // pred_fallthru
      _
    // Predicated region
    $region50: #{tpu_custom_call.1} parent=1 // pred_check
      _
    $region51: #{tpu_custom_call.1} parent=1 // pred_check_branch
      %47 = sbr.rel (0) target = $region53
    $region52: #{tpu_custom_call.1} parent=1 // pred_region
      _
    $region53: #{tpu_custom_call.1} parent=1 // pred_fallthru
      _
    // Predicated region
    $region54: #{tpu_custom_call.1} parent=1 // pred_check
      _
    $region55: #{tpu_custom_call.1} parent=1 // pred_check_branch
      %49 = sbr.rel (0) target = $region57
    $region56: #{tpu_custom_call.1} parent=1 // pred_region
      _
    $region57: #{tpu_custom_call.1} parent=1 // pred_fallthru
      _
    // Predicated region
    $region58: #{tpu_custom_call.1} parent=1 // pred_check
      _
    $region59: #{tpu_custom_call.1} parent=1 // pred_check_branch
      %51 = sbr.rel (0) target = $region61
    $region60: #{tpu_custom_call.1} parent=1 // pred_region
      %53 = vsyncadd [#allocation4], 0
      %s55 = sshll.u32 %s14, 4
      %s56 = int_to_ptr.vmem [resolvable:$true] %s55
      %58 = dma.vmem_to_smem %s56, 32, [#allocation2], [#allocation4]
    $region61: #{tpu_custom_call.1} parent=1 // pred_fallthru
      _
    // Predicated region
    $region62: #{tpu_custom_call.1} parent=1 // pred_check
      _
    $region63: #{tpu_custom_call.1} parent=1 // pred_check_branch
      %60 = sbr.rel (0) target = $region65
    $region64: #{tpu_custom_call.1} parent=1 // pred_region
      %62 = dma.done [#allocation4], 32
    $region65: #{tpu_custom_call.1} parent=1 // pred_fallthru
      _
    %63 = sfence
    %v64 = vlaneseq
    %v65 = vand.u32 %v64, 127
    %v66 = vadd.s32 %v65, 128
    %v67 = vadd.s32 %v65, 256
    %v68 = vadd.s32 %v65, 384
    %v69 = vand.u32 %v65, 15
    %v70 = vand.u32 %v66, 15
    %v71 = vand.u32 %v67, 15
    %v72 = vand.u32 %v68, 15
    %v73 = vand.u32 %v65, 255
    %v74 = vand.u32 %v66, 255
    %v75 = vand.u32 %v67, 255
    %v76 = vand.u32 %v68, 255
    %v77 = vshra.s32 %v73, 4
    %v78 = vshra.s32 %v74, 4
    %v79 = vshra.s32 %v75, 4
    %v80 = vshra.s32 %v76, 4
    %vm81 = vcmp.ge.s32.totalorder %v77, 3
    %vm82 = vcmp.ge.s32.totalorder %v78, 3
    %vm83 = vcmp.ge.s32.totalorder %v79, 3
    %vm84 = vcmp.ge.s32.totalorder %v80, 3
    %vm85 = vcmp.ge.s32.totalorder %v69, 3
    %vm86 = vcmp.ge.s32.totalorder %v70, 3
    %vm87 = vcmp.ge.s32.totalorder %v71, 3
    %vm88 = vcmp.ge.s32.totalorder %v72, 3
    %vm89 = vmand %vm81, %vm85
    %vm90 = vmand %vm82, %vm86
    %vm91 = vmand %vm83, %vm87
    %vm92 = vmand %vm84, %vm88
    %vm93 = vcmp.ge.s32.totalorder %v69, 2
    %vm94 = vcmp.ge.s32.totalorder %v70, 2
    %vm95 = vcmp.ge.s32.totalorder %v71, 2
    %vm96 = vcmp.ge.s32.totalorder %v72, 2
    %vm97 = vmand %vm81, %vm93
    %vm98 = vmand %vm82, %vm94
    %vm99 = vmand %vm83, %vm95
    %vm100 = vmand %vm84, %vm96
    %vm101 = vcmp.ge.s32.totalorder %v69, 1
    %vm102 = vcmp.ge.s32.totalorder %v70, 1
    %vm103 = vcmp.ge.s32.totalorder %v71, 1
    %vm104 = vcmp.ge.s32.totalorder %v72, 1
    %vm105 = vmand %vm81, %vm101
    %vm106 = vmand %vm82, %vm102
    %vm107 = vmand %vm83, %vm103
    %vm108 = vmand %vm84, %vm104
    %vm109 = vcmp.lt.s32.totalorder %v69, 15
    %vm110 = vcmp.lt.s32.totalorder %v70, 15
    %vm111 = vcmp.lt.s32.totalorder %v71, 15
    %vm112 = vcmp.lt.s32.totalorder %v72, 15
    %vm113 = vmand %vm81, %vm109
    %vm114 = vmand %vm82, %vm110
    %vm115 = vmand %vm83, %vm111
    %vm116 = vmand %vm84, %vm112
    %vm117 = vcmp.lt.s32.totalorder %v69, 14
    %vm118 = vcmp.lt.s32.totalorder %v70, 14
    %vm119 = vcmp.lt.s32.totalorder %v71, 14
    %vm120 = vcmp.lt.s32.totalorder %v72, 14
    %vm121 = vmand %vm81, %vm117
    %vm122 = vmand %vm82, %vm118
    %vm123 = vmand %vm83, %vm119
    %vm124 = vmand %vm84, %vm120
    %vm125 = vcmp.lt.s32.totalorder %v69, 13
    %vm126 = vcmp.lt.s32.totalorder %v70, 13
    %vm127 = vcmp.lt.s32.totalorder %v71, 13
    %vm128 = vcmp.lt.s32.totalorder %v72, 13
    %vm129 = vmand %vm81, %vm125
    %vm130 = vmand %vm82, %vm126
    %vm131 = vmand %vm83, %vm127
    %vm132 = vmand %vm84, %vm128
    %vm133 = vcmp.ge.s32.totalorder %v77, 2
    %vm134 = vcmp.ge.s32.totalorder %v78, 2
    %vm135 = vcmp.ge.s32.totalorder %v79, 2
    %vm136 = vcmp.ge.s32.totalorder %v80, 2
    %vm137 = vmand %vm133, %vm85
    %vm138 = vmand %vm134, %vm86
    %vm139 = vmand %vm135, %vm87
    %vm140 = vmand %vm136, %vm88
    %vm141 = vmand %vm133, %vm93
    %vm142 = vmand %vm134, %vm94
    %vm143 = vmand %vm135, %vm95
    %vm144 = vmand %vm136, %vm96
    %vm145 = vmand %vm133, %vm101
    %vm146 = vmand %vm134, %vm102
    %vm147 = vmand %vm135, %vm103
    %vm148 = vmand %vm136, %vm104
    %vm149 = vmand %vm133, %vm109
    %vm150 = vmand %vm134, %vm110
    %vm151 = vmand %vm135, %vm111
    %vm152 = vmand %vm136, %vm112
    %vm153 = vmand %vm133, %vm117
    %vm154 = vmand %vm134, %vm118
    %vm155 = vmand %vm135, %vm119
    %vm156 = vmand %vm136, %vm120
    %vm157 = vmand %vm133, %vm125
    %vm158 = vmand %vm134, %vm126
    %vm159 = vmand %vm135, %vm127
    %vm160 = vmand %vm136, %vm128
    %vm161 = vcmp.ge.s32.totalorder %v77, 1
    %vm162 = vcmp.ge.s32.totalorder %v78, 1
    %vm163 = vcmp.ge.s32.totalorder %v79, 1
    %vm164 = vcmp.ge.s32.totalorder %v80, 1
    %vm165 = vmand %vm161, %vm85
    %vm166 = vmand %vm162, %vm86
    %vm167 = vmand %vm163, %vm87
    %vm168 = vmand %vm164, %vm88
    %vm169 = vmand %vm161, %vm93
    %vm170 = vmand %vm162, %vm94
    %vm171 = vmand %vm163, %vm95
    %vm172 = vmand %vm164, %vm96
    %vm173 = vmand %vm161, %vm101
    %vm174 = vmand %vm162, %vm102
    %vm175 = vmand %vm163, %vm103
    %vm176 = vmand %vm164, %vm104
    %vm177 = vmand %vm161, %vm109
    %vm178 = vmand %vm162, %vm110
    %vm179 = vmand %vm163, %vm111
    %vm180 = vmand %vm164, %vm112
    %vm181 = vmand %vm161, %vm117
    %vm182 = vmand %vm162, %vm118
    %vm183 = vmand %vm163, %vm119
    %vm184 = vmand %vm164, %vm120
    %vm185 = vmand %vm161, %vm125
    %vm186 = vmand %vm162, %vm126
    %vm187 = vmand %vm163, %vm127
    %vm188 = vmand %vm164, %vm128
    %vm189 = vcmp.lt.s32.totalorder %v77, 15
    %vm190 = vcmp.lt.s32.totalorder %v78, 15
    %vm191 = vcmp.lt.s32.totalorder %v79, 15
    %vm192 = vcmp.lt.s32.totalorder %v80, 15
    %vm193 = vmand %vm189, %vm85
    %vm194 = vmand %vm190, %vm86
    %vm195 = vmand %vm191, %vm87
    %vm196 = vmand %vm192, %vm88
    %vm197 = vmand %vm189, %vm93
    %vm198 = vmand %vm190, %vm94
    %vm199 = vmand %vm191, %vm95
    %vm200 = vmand %vm192, %vm96
    %vm201 = vmand %vm189, %vm101
    %vm202 = vmand %vm190, %vm102
    %vm203 = vmand %vm191, %vm103
    %vm204 = vmand %vm192, %vm104
    %vm205 = vmand %vm189, %vm109
    %vm206 = vmand %vm190, %vm110
    %vm207 = vmand %vm191, %vm111
    %vm208 = vmand %vm192, %vm112
    %vm209 = vmand %vm189, %vm117
    %vm210 = vmand %vm190, %vm118
    %vm211 = vmand %vm191, %vm119
    %vm212 = vmand %vm192, %vm120
    %vm213 = vmand %vm189, %vm125
    %vm214 = vmand %vm190, %vm126
    %vm215 = vmand %vm191, %vm127
    %vm216 = vmand %vm192, %vm128
    %vm217 = vcmp.lt.s32.totalorder %v77, 14
    %vm218 = vcmp.lt.s32.totalorder %v78, 14
    %vm219 = vcmp.lt.s32.totalorder %v79, 14
    %vm220 = vcmp.lt.s32.totalorder %v80, 14
    %vm221 = vmand %vm217, %vm85
    %vm222 = vmand %vm218, %vm86
    %vm223 = vmand %vm219, %vm87
    %vm224 = vmand %vm220, %vm88
    %vm225 = vmand %vm217, %vm93
    %vm226 = vmand %vm218, %vm94
    %vm227 = vmand %vm219, %vm95
    %vm228 = vmand %vm220, %vm96
    %vm229 = vmand %vm217, %vm101
    %vm230 = vmand %vm218, %vm102
    %vm231 = vmand %vm219, %vm103
    %vm232 = vmand %vm220, %vm104
    %vm233 = vmand %vm217, %vm109
    %vm234 = vmand %vm218, %vm110
    %vm235 = vmand %vm219, %vm111
    %vm236 = vmand %vm220, %vm112
    %vm237 = vmand %vm217, %vm117
    %vm238 = vmand %vm218, %vm118
    %vm239 = vmand %vm219, %vm119
    %vm240 = vmand %vm220, %vm120
    %vm241 = vmand %vm217, %vm125
    %vm242 = vmand %vm218, %vm126
    %vm243 = vmand %vm219, %vm127
    %vm244 = vmand %vm220, %vm128
    %vm245 = vcmp.lt.s32.totalorder %v77, 13
    %vm246 = vcmp.lt.s32.totalorder %v78, 13
    %vm247 = vcmp.lt.s32.totalorder %v79, 13
    %vm248 = vcmp.lt.s32.totalorder %v80, 13
    %vm249 = vmand %vm245, %vm85
    %vm250 = vmand %vm246, %vm86
    %vm251 = vmand %vm247, %vm87
    %vm252 = vmand %vm248, %vm88
    %vm253 = vmand %vm245, %vm93
    %vm254 = vmand %vm246, %vm94
    %vm255 = vmand %vm247, %vm95
    %vm256 = vmand %vm248, %vm96
    %vm257 = vmand %vm245, %vm101
    %vm258 = vmand %vm246, %vm102
    %vm259 = vmand %vm247, %vm103
    %vm260 = vmand %vm248, %vm104
    %vm261 = vmand %vm245, %vm109
    %vm262 = vmand %vm246, %vm110
    %vm263 = vmand %vm247, %vm111
    %vm264 = vmand %vm248, %vm112
    %vm265 = vmand %vm245, %vm117
    %vm266 = vmand %vm246, %vm118
    %vm267 = vmand %vm247, %vm119
    %vm268 = vmand %vm248, %vm120
    %vm269 = vmand %vm245, %vm125
    %vm270 = vmand %vm246, %vm126
    %vm271 = vmand %vm247, %vm127
    %vm272 = vmand %vm248, %vm128
    %v273 = vld [vmem:[%s1] sm:$0xff]
    %v274 = vld [vmem:[%s1 + $0x8] sm:$0xff]
    %v275 = vld [vmem:[%s1 + $0x10] sm:$0xff]
    %v276 = vld [vmem:[%s1 + $0x18] sm:$0xff]
    %v277 = vld [vmem:[%s1 + $0x20] sm:$0xff]
    %v278 = vld [vmem:[%s1 + $0x28] sm:$0xff]
    %v279 = vld [vmem:[%s0] sm:$0xff]
    %v280 = vld [vmem:[%s0 + $0x8] sm:$0xff]
    %v281 = vld [vmem:[%s0 + $0x10] sm:$0xff]
    %v282 = vld [vmem:[%s0 + $0x18] sm:$0xff]
    %vm283 = vcmask 64512
    %v285 = vsel %vm283, %v273, 0
    %v288 = vsel %vm283, %v274, 0
    %v291 = vsel %vm283, %v275, 0
    %v294 = vsel %vm283, %v276, 0
    %v297 = vsel %vm283, %v277, 0
    %v300 = vsel %vm283, %v278, 0
    %302 = vmatpush.msra.mxu0 0.0
    %303 = vmatpush.msra.mxu0 0.0
    %304 = vmatpush.msra.mxu0 0.0
    %305 = vmatpush.msra.mxu0 0.0
    %306 = vmatpush.msra.mxu0 0.0
    %307 = vmatpush.msra.mxu0 0.0
    %308 = vmatpush.msra.mxu0 0.0
    %309 = vmatpush.msra.mxu0 0.0
    %310 = vmatpush.msra.mxu0 0.0
    %311 = vmatpush.msra.mxu0 0.0
    %312 = vmatpush.msra.mxu0 0.0
    %313 = vmatpush.msra.mxu0 0.0
    %314 = vmatpush.msra.mxu0 0.0
    %315 = vmatpush.msra.mxu0 0.0
    %316 = vmatpush.msra.mxu0 0.0
    %317 = vmatpush.msra.mxu0 %v279
    %318 = vmatmul.f32.gmra.mxu0 %v285
    %v319 = vpop.f32.mrf.mxu0
    %v320 = vadd.f32 0.0, %v319
    %321 = vmatmul.f32.gmra.mxu0 %v288
    %v322 = vpop.f32.mrf.mxu0
    %v323 = vadd.f32 0.0, %v322
    %324 = vmatmul.f32.gmra.mxu0 %v291
    %v325 = vpop.f32.mrf.mxu0
    %v326 = vadd.f32 0.0, %v325
    %327 = vmatmul.f32.gmra.mxu0 %v294
    %v328 = vpop.f32.mrf.mxu0
    %v329 = vadd.f32 0.0, %v328
    %330 = vmatmul.f32.gmra.mxu0 %v297
    %v331 = vpop.f32.mrf.mxu0
    %v332 = vadd.f32 0.0, %v331
    %333 = vmatmul.f32.gmra.mxu0 %v300
    %v334 = vpop.f32.mrf.mxu0
    %v335 = vadd.f32 0.0, %v334
    %336 = vdwg.mxu0
    %337 = vmatpush.msra.mxu0 0.0
    %338 = vmatpush.msra.mxu0 0.0
    %339 = vmatpush.msra.mxu0 0.0
    %340 = vmatpush.msra.mxu0 0.0
    %341 = vmatpush.msra.mxu0 0.0
    %342 = vmatpush.msra.mxu0 0.0
    %343 = vmatpush.msra.mxu0 0.0
    %344 = vmatpush.msra.mxu0 0.0
    %345 = vmatpush.msra.mxu0 0.0
    %346 = vmatpush.msra.mxu0 0.0
    %347 = vmatpush.msra.mxu0 0.0
    %348 = vmatpush.msra.mxu0 0.0
    %349 = vmatpush.msra.mxu0 0.0
    %350 = vmatpush.msra.mxu0 0.0
    %351 = vmatpush.msra.mxu0 0.0
    %352 = vmatpush.msra.mxu0 %v280
    %353 = vmatmul.f32.gmra.mxu0 %v285
    %v354 = vpop.f32.mrf.mxu0
    %v355 = vadd.f32 0.0, %v354
    %356 = vmatmul.f32.gmra.mxu0 %v288
    %v357 = vpop.f32.mrf.mxu0
    %v358 = vadd.f32 0.0, %v357
    %359 = vmatmul.f32.gmra.mxu0 %v291
    %v360 = vpop.f32.mrf.mxu0
    %v361 = vadd.f32 0.0, %v360
    %362 = vmatmul.f32.gmra.mxu0 %v294
    %v363 = vpop.f32.mrf.mxu0
    %v364 = vadd.f32 0.0, %v363
    %365 = vmatmul.f32.gmra.mxu0 %v297
    %v366 = vpop.f32.mrf.mxu0
    %v367 = vadd.f32 0.0, %v366
    %368 = vmatmul.f32.gmra.mxu0 %v300
    %v369 = vpop.f32.mrf.mxu0
    %v370 = vadd.f32 0.0, %v369
    %371 = vdwg.mxu0
    %372 = vmatpush.msra.mxu0 0.0
    %373 = vmatpush.msra.mxu0 0.0
    %374 = vmatpush.msra.mxu0 0.0
    %375 = vmatpush.msra.mxu0 0.0
    %376 = vmatpush.msra.mxu0 0.0
    %377 = vmatpush.msra.mxu0 0.0
    %378 = vmatpush.msra.mxu0 0.0
    %379 = vmatpush.msra.mxu0 0.0
    %380 = vmatpush.msra.mxu0 0.0
    %381 = vmatpush.msra.mxu0 0.0
    %382 = vmatpush.msra.mxu0 0.0
    %383 = vmatpush.msra.mxu0 0.0
    %384 = vmatpush.msra.mxu0 0.0
    %385 = vmatpush.msra.mxu0 0.0
    %386 = vmatpush.msra.mxu0 0.0
    %387 = vmatpush.msra.mxu0 %v281
    %388 = vmatmul.f32.gmra.mxu0 %v285
    %v389 = vpop.f32.mrf.mxu0
    %v390 = vadd.f32 0.0, %v389
    %391 = vmatmul.f32.gmra.mxu0 %v288
    %v392 = vpop.f32.mrf.mxu0
    %v393 = vadd.f32 0.0, %v392
    %394 = vmatmul.f32.gmra.mxu0 %v291
    %v395 = vpop.f32.mrf.mxu0
    %v396 = vadd.f32 0.0, %v395
    %397 = vmatmul.f32.gmra.mxu0 %v294
    %v398 = vpop.f32.mrf.mxu0
    %v399 = vadd.f32 0.0, %v398
    %400 = vmatmul.f32.gmra.mxu0 %v297
    %v401 = vpop.f32.mrf.mxu0
    %v402 = vadd.f32 0.0, %v401
    %403 = vmatmul.f32.gmra.mxu0 %v300
    %v404 = vpop.f32.mrf.mxu0
    %v405 = vadd.f32 0.0, %v404
    %406 = vdwg.mxu0
    %407 = vmatpush.msra.mxu0 0.0
    %408 = vmatpush.msra.mxu0 0.0
    %409 = vmatpush.msra.mxu0 0.0
    %410 = vmatpush.msra.mxu0 0.0
    %411 = vmatpush.msra.mxu0 0.0
    %412 = vmatpush.msra.mxu0 0.0
    %413 = vmatpush.msra.mxu0 0.0
    %414 = vmatpush.msra.mxu0 0.0
    %415 = vmatpush.msra.mxu0 0.0
    %416 = vmatpush.msra.mxu0 0.0
    %417 = vmatpush.msra.mxu0 0.0
    %418 = vmatpush.msra.mxu0 0.0
    %419 = vmatpush.msra.mxu0 0.0
    %420 = vmatpush.msra.mxu0 0.0
    %421 = vmatpush.msra.mxu0 0.0
    %422 = vmatpush.msra.mxu0 %v282
    %423 = vmatmul.f32.gmra.mxu0 %v285
    %v424 = vpop.f32.mrf.mxu0
    %v425 = vadd.f32 0.0, %v424
    %426 = vmatmul.f32.gmra.mxu0 %v288
    %v427 = vpop.f32.mrf.mxu0
    %v428 = vadd.f32 0.0, %v427
    %429 = vmatmul.f32.gmra.mxu0 %v291
    %v430 = vpop.f32.mrf.mxu0
    %v431 = vadd.f32 0.0, %v430
    %432 = vmatmul.f32.gmra.mxu0 %v294
    %v433 = vpop.f32.mrf.mxu0
    %v434 = vadd.f32 0.0, %v433
    %435 = vmatmul.f32.gmra.mxu0 %v297
    %v436 = vpop.f32.mrf.mxu0
    %v437 = vadd.f32 0.0, %v436
    %438 = vmatmul.f32.gmra.mxu0 %v300
    %v439 = vpop.f32.mrf.mxu0
    %v440 = vadd.f32 0.0, %v439
    %441 = vdwg.mxu0
    %v442 = vld [vmem:[%s2] sm:$0xff]
    %v443 = vld [vmem:[%s2 + $0x8] sm:$0xff]
    %v444 = vld [vmem:[%s2 + $0x10] sm:$0xff]
    %v445 = vld [vmem:[%s2 + $0x18] sm:$0xff]
    %v446 = vld [vmem:[%s2 + $0x20] sm:$0xff]
    %v447 = vld [vmem:[%s2 + $0x28] sm:$0xff]
    %v448 = vld [vmem:[%s3] sm:$0xff]
    %v449 = vld [vmem:[%s3 + $0x8] sm:$0xff]
    %v450 = vld [vmem:[%s3 + $0x10] sm:$0xff]
    %v451 = vld [vmem:[%s3 + $0x18] sm:$0xff]
    %v452 = vld [vmem:[%s3 + $0x20] sm:$0xff]
    %v453 = vld [vmem:[%s3 + $0x28] sm:$0xff]
    %v454 = vadd.f32 %v320, %v355
    %v455 = vadd.f32 %v454, %v390
    %v456 = vadd.f32 %v455, %v425
    %457 = vadd.xlane.f32.xlu0 %v456
    %v458 = vpop.xlane.xlu0 %457
    %v459 = vadd.f32 %v323, %v358
    %v460 = vadd.f32 %v459, %v393
    %v461 = vadd.f32 %v460, %v428
    %462 = vadd.xlane.f32.xlu0 %v461
    %v463 = vpop.xlane.xlu0 %462
    %v464 = vadd.f32 %v326, %v361
    %v465 = vadd.f32 %v464, %v396
    %v466 = vadd.f32 %v465, %v431
    %467 = vadd.xlane.f32.xlu0 %v466
    %v468 = vpop.xlane.xlu0 %467
    %v469 = vadd.f32 %v329, %v364
    %v470 = vadd.f32 %v469, %v399
    %v471 = vadd.f32 %v470, %v434
    %472 = vadd.xlane.f32.xlu0 %v471
    %v473 = vpop.xlane.xlu0 %472
    %v474 = vadd.f32 %v332, %v367
    %v475 = vadd.f32 %v474, %v402
    %v476 = vadd.f32 %v475, %v437
    %477 = vadd.xlane.f32.xlu0 %v476
    %v478 = vpop.xlane.xlu0 %477
    %v479 = vadd.f32 %v335, %v370
    %v480 = vadd.f32 %v479, %v405
    %v481 = vadd.f32 %v480, %v440
    %482 = vadd.xlane.f32.xlu0 %v481
    %v483 = vpop.xlane.xlu0 %482
    %v484 = vmul.f32 %v458, 0.001953125
    %v485 = vmul.f32 %v463, 0.001953125
    %v486 = vmul.f32 %v468, 0.001953125
    %v487 = vmul.f32 %v473, 0.001953125
    %v488 = vmul.f32 %v478, 0.001953125
    %v489 = vmul.f32 %v483, 0.001953125
    %v490 = vmul.f32 %v320, %v320
    %v491 = vmul.f32 %v355, %v355
    %v492 = vmul.f32 %v390, %v390
    %v493 = vmul.f32 %v425, %v425
    %v494 = vmul.f32 %v323, %v323
    %v495 = vmul.f32 %v358, %v358
    %v496 = vmul.f32 %v393, %v393
    %v497 = vmul.f32 %v428, %v428
    %v498 = vmul.f32 %v326, %v326
    %v499 = vmul.f32 %v361, %v361
    %v500 = vmul.f32 %v396, %v396
    %v501 = vmul.f32 %v431, %v431
    %v502 = vmul.f32 %v329, %v329
    %v503 = vmul.f32 %v364, %v364
    %v504 = vmul.f32 %v399, %v399
    %v505 = vmul.f32 %v434, %v434
    %v506 = vmul.f32 %v332, %v332
    %v507 = vmul.f32 %v367, %v367
    %v508 = vmul.f32 %v402, %v402
    %v509 = vmul.f32 %v437, %v437
    %v510 = vmul.f32 %v335, %v335
    %v511 = vmul.f32 %v370, %v370
    %v512 = vmul.f32 %v405, %v405
    %v513 = vmul.f32 %v440, %v440
    %v514 = vadd.f32 %v490, %v491
    %v515 = vadd.f32 %v514, %v492
    %v516 = vadd.f32 %v515, %v493
    %517 = vadd.xlane.f32.xlu0 %v516
    %v518 = vpop.xlane.xlu0 %517
    %v519 = vadd.f32 %v494, %v495
    %v520 = vadd.f32 %v519, %v496
    %v521 = vadd.f32 %v520, %v497
    %522 = vadd.xlane.f32.xlu0 %v521
    %v523 = vpop.xlane.xlu0 %522
    %v524 = vadd.f32 %v498, %v499
    %v525 = vadd.f32 %v524, %v500
    %v526 = vadd.f32 %v525, %v501
    %527 = vadd.xlane.f32.xlu0 %v526
    %v528 = vpop.xlane.xlu0 %527
    %v529 = vadd.f32 %v502, %v503
    %v530 = vadd.f32 %v529, %v504
    %v531 = vadd.f32 %v530, %v505
    %532 = vadd.xlane.f32.xlu0 %v531
    %v533 = vpop.xlane.xlu0 %532
    %v534 = vadd.f32 %v506, %v507
    %v535 = vadd.f32 %v534, %v508
    %v536 = vadd.f32 %v535, %v509
    %537 = vadd.xlane.f32.xlu0 %v536
    %v538 = vpop.xlane.xlu0 %537
    %v539 = vadd.f32 %v510, %v511
    %v540 = vadd.f32 %v539, %v512
    %v541 = vadd.f32 %v540, %v513
    %542 = vadd.xlane.f32.xlu0 %v541
    %v543 = vpop.xlane.xlu0 %542
    %v544 = vmul.f32 %v518, 0.001953125
    %v545 = vmul.f32 %v523, 0.001953125
    %v546 = vmul.f32 %v528, 0.001953125
    %v547 = vmul.f32 %v533, 0.001953125
    %v548 = vmul.f32 %v538, 0.001953125
    %v549 = vmul.f32 %v543, 0.001953125
    %v550 = vmul.f32 %v484, %v484
    %v551 = vmul.f32 %v485, %v485
    %v552 = vmul.f32 %v486, %v486
    %v553 = vmul.f32 %v487, %v487
    %v554 = vmul.f32 %v488, %v488
    %v555 = vmul.f32 %v489, %v489
    %v556 = vsub.f32 %v544, %v550
    %v557 = vsub.f32 %v545, %v551
    %v558 = vsub.f32 %v546, %v552
    %v559 = vsub.f32 %v547, %v553
    %v560 = vsub.f32 %v548, %v554
    %v561 = vsub.f32 %v549, %v555
    %v562 = vmax.f32 %v556, 0.0
    %v563 = vmax.f32 %v557, 0.0
    %v564 = vmax.f32 %v558, 0.0
    %v565 = vmax.f32 %v559, 0.0
    %v566 = vmax.f32 %v560, 0.0
    %v567 = vmax.f32 %v561, 0.0
    %v568 = vsub.f32 %v320, %v484
    %v569 = vsub.f32 %v355, %v484
    %v570 = vsub.f32 %v390, %v484
    %v571 = vsub.f32 %v425, %v484
    %v572 = vsub.f32 %v323, %v485
    %v573 = vsub.f32 %v358, %v485
    %v574 = vsub.f32 %v393, %v485
    %v575 = vsub.f32 %v428, %v485
    %v576 = vsub.f32 %v326, %v486
    %v577 = vsub.f32 %v361, %v486
    %v578 = vsub.f32 %v396, %v486
    %v579 = vsub.f32 %v431, %v486
    %v580 = vsub.f32 %v329, %v487
    %v581 = vsub.f32 %v364, %v487
    %v582 = vsub.f32 %v399, %v487
    %v583 = vsub.f32 %v434, %v487
    %v584 = vsub.f32 %v332, %v488
    %v585 = vsub.f32 %v367, %v488
    %v586 = vsub.f32 %v402, %v488
    %v587 = vsub.f32 %v437, %v488
    %v588 = vsub.f32 %v335, %v489
    %v589 = vsub.f32 %v370, %v489
    %v590 = vsub.f32 %v405, %v489
    %v591 = vsub.f32 %v440, %v489
    %v592 = vadd.f32 %v562, 1e-05
    %v593 = vadd.f32 %v563, 1e-05
    %v594 = vadd.f32 %v564, 1e-05
    %v595 = vadd.f32 %v565, 1e-05
    %v596 = vadd.f32 %v566, 1e-05
    %v597 = vadd.f32 %v567, 1e-05
    %v598 = vrsqrt.pop %v592
    %v599 = vmul.f32 %v598, %v592
    %v600 = vmul.f32 %v599, %v598
    %v601 = vmul.f32 0.5, %v600
    %v602 = vsub.f32 1.5, %v601
    %v603 = vmul.f32 %v598, %v602
    %vm604 = vweird.f32 %v592
    %vm605 = vweird.f32 %v598
    %vm606 = vmor %vm604, %vm605
    %v607 = vsel %vm606, %v598, %v603
    %v608 = vrsqrt.pop %v593
    %v609 = vmul.f32 %v608, %v593
    %v610 = vmul.f32 %v609, %v608
    %v611 = vmul.f32 0.5, %v610
    %v612 = vsub.f32 1.5, %v611
    %v613 = vmul.f32 %v608, %v612
    %vm614 = vweird.f32 %v593
    %vm615 = vweird.f32 %v608
    %vm616 = vmor %vm614, %vm615
    %v617 = vsel %vm616, %v608, %v613
    %v618 = vrsqrt.pop %v594
    %v619 = vmul.f32 %v618, %v594
    %v620 = vmul.f32 %v619, %v618
    %v621 = vmul.f32 0.5, %v620
    %v622 = vsub.f32 1.5, %v621
    %v623 = vmul.f32 %v618, %v622
    %vm624 = vweird.f32 %v594
    %vm625 = vweird.f32 %v618
    %vm626 = vmor %vm624, %vm625
    %v627 = vsel %vm626, %v618, %v623
    %v628 = vrsqrt.pop %v595
    %v629 = vmul.f32 %v628, %v595
    %v630 = vmul.f32 %v629, %v628
    %v631 = vmul.f32 0.5, %v630
    %v632 = vsub.f32 1.5, %v631
    %v633 = vmul.f32 %v628, %v632
    %vm634 = vweird.f32 %v595
    %vm635 = vweird.f32 %v628
    %vm636 = vmor %vm634, %vm635
    %v637 = vsel %vm636, %v628, %v633
    %v638 = vrsqrt.pop %v596
    %v639 = vmul.f32 %v638, %v596
    %v640 = vmul.f32 %v639, %v638
    %v641 = vmul.f32 0.5, %v640
    %v642 = vsub.f32 1.5, %v641
    %v643 = vmul.f32 %v638, %v642
    %vm644 = vweird.f32 %v596
    %vm645 = vweird.f32 %v638
    %vm646 = vmor %vm644, %vm645
    %v647 = vsel %vm646, %v638, %v643
    %v648 = vrsqrt.pop %v597
    %v649 = vmul.f32 %v648, %v597
    %v650 = vmul.f32 %v649, %v648
    %v651 = vmul.f32 0.5, %v650
    %v652 = vsub.f32 1.5, %v651
    %v653 = vmul.f32 %v648, %v652
    %vm654 = vweird.f32 %v597
    %vm655 = vweird.f32 %v648
    %vm656 = vmor %vm654, %vm655
    %v657 = vsel %vm656, %v648, %v653
    %v658 = vmul.f32 %v568, %v607
    %v659 = vmul.f32 %v569, %v607
    %v660 = vmul.f32 %v570, %v607
    %v661 = vmul.f32 %v571, %v607
    %v662 = vmul.f32 %v572, %v617
    %v663 = vmul.f32 %v573, %v617
    %v664 = vmul.f32 %v574, %v617
    %v665 = vmul.f32 %v575, %v617
    %v666 = vmul.f32 %v576, %v627
    %v667 = vmul.f32 %v577, %v627
    %v668 = vmul.f32 %v578, %v627
    %v669 = vmul.f32 %v579, %v627
    %v670 = vmul.f32 %v580, %v637
    %v671 = vmul.f32 %v581, %v637
    %v672 = vmul.f32 %v582, %v637
    %v673 = vmul.f32 %v583, %v637
    %v674 = vmul.f32 %v584, %v647
    %v675 = vmul.f32 %v585, %v647
    %v676 = vmul.f32 %v586, %v647
    %v677 = vmul.f32 %v587, %v647
    %v678 = vmul.f32 %v588, %v657
    %v679 = vmul.f32 %v589, %v657
    %v680 = vmul.f32 %v590, %v657
    %v681 = vmul.f32 %v591, %v657
    %683 = vset.pattern.permute.xlu0 0
    %684 = vperm.xlu0 %683, %v442
    %v685 = vpop.permute.xlu0 %684
    %688 = vset.pattern.permute.xlu0 0
    %689 = vperm.xlu0 %688, %v443
    %v690 = vpop.permute.xlu0 %689
    %693 = vset.pattern.permute.xlu0 0
    %694 = vperm.xlu0 %693, %v444
    %v695 = vpop.permute.xlu0 %694
    %698 = vset.pattern.permute.xlu0 0
    %699 = vperm.xlu0 %698, %v445
    %v700 = vpop.permute.xlu0 %699
    %703 = vset.pattern.permute.xlu0 0
    %704 = vperm.xlu0 %703, %v446
    %v705 = vpop.permute.xlu0 %704
    %708 = vset.pattern.permute.xlu0 0
    %709 = vperm.xlu0 %708, %v447
    %v710 = vpop.permute.xlu0 %709
    %v712 = vmul.f32 %v658, %v685
    %v713 = vmul.f32 %v659, %v685
    %v714 = vmul.f32 %v660, %v685
    %v715 = vmul.f32 %v661, %v685
    %v716 = vmul.f32 %v662, %v690
    %v717 = vmul.f32 %v663, %v690
    %v718 = vmul.f32 %v664, %v690
    %v719 = vmul.f32 %v665, %v690
    %v720 = vmul.f32 %v666, %v695
    %v721 = vmul.f32 %v667, %v695
    %v722 = vmul.f32 %v668, %v695
    %v723 = vmul.f32 %v669, %v695
    %v724 = vmul.f32 %v670, %v700
    %v725 = vmul.f32 %v671, %v700
    %v726 = vmul.f32 %v672, %v700
    %v727 = vmul.f32 %v673, %v700
    %v728 = vmul.f32 %v674, %v705
    %v729 = vmul.f32 %v675, %v705
    %v730 = vmul.f32 %v676, %v705
    %v731 = vmul.f32 %v677, %v705
    %v732 = vmul.f32 %v678, %v710
    %v733 = vmul.f32 %v679, %v710
    %v734 = vmul.f32 %v680, %v710
    %v735 = vmul.f32 %v681, %v710
    %737 = vset.pattern.permute.xlu0 0
    %738 = vperm.xlu0 %737, %v448
    %v739 = vpop.permute.xlu0 %738
    %742 = vset.pattern.permute.xlu0 0
    %743 = vperm.xlu0 %742, %v449
    %v744 = vpop.permute.xlu0 %743
    %747 = vset.pattern.permute.xlu0 0
    %748 = vperm.xlu0 %747, %v450
    %v749 = vpop.permute.xlu0 %748
    %752 = vset.pattern.permute.xlu0 0
    %753 = vperm.xlu0 %752, %v451
    %v754 = vpop.permute.xlu0 %753
    %757 = vset.pattern.permute.xlu0 0
    %758 = vperm.xlu0 %757, %v452
    %v759 = vpop.permute.xlu0 %758
    %762 = vset.pattern.permute.xlu0 0
    %763 = vperm.xlu0 %762, %v453
    %v764 = vpop.permute.xlu0 %763
    %v766 = vadd.f32 %v712, %v739
    %v767 = vadd.f32 %v713, %v739
    %v768 = vadd.f32 %v714, %v739
    %v769 = vadd.f32 %v715, %v739
    %v770 = vadd.f32 %v716, %v744
    %v771 = vadd.f32 %v717, %v744
    %v772 = vadd.f32 %v718, %v744
    %v773 = vadd.f32 %v719, %v744
    %v774 = vadd.f32 %v720, %v749
    %v775 = vadd.f32 %v721, %v749
    %v776 = vadd.f32 %v722, %v749
    %v777 = vadd.f32 %v723, %v749
    %v778 = vadd.f32 %v724, %v754
    %v779 = vadd.f32 %v725, %v754
    %v780 = vadd.f32 %v726, %v754
    %v781 = vadd.f32 %v727, %v754
    %v782 = vadd.f32 %v728, %v759
    %v783 = vadd.f32 %v729, %v759
    %v784 = vadd.f32 %v730, %v759
    %v785 = vadd.f32 %v731, %v759
    %v786 = vadd.f32 %v732, %v764
    %v787 = vadd.f32 %v733, %v764
    %v788 = vadd.f32 %v734, %v764
    %v789 = vadd.f32 %v735, %v764
    %v790 = vxor.u32 %v766, 2147483648
    %v791 = vxor.u32 %v767, 2147483648
    %v792 = vxor.u32 %v768, 2147483648
    %v793 = vxor.u32 %v769, 2147483648
    %v794 = vxor.u32 %v770, 2147483648
    %v795 = vxor.u32 %v771, 2147483648
    %v796 = vxor.u32 %v772, 2147483648
    %v797 = vxor.u32 %v773, 2147483648
    %v798 = vxor.u32 %v774, 2147483648
    %v799 = vxor.u32 %v775, 2147483648
    %v800 = vxor.u32 %v776, 2147483648
    %v801 = vxor.u32 %v777, 2147483648
    %v802 = vxor.u32 %v778, 2147483648
    %v803 = vxor.u32 %v779, 2147483648
    %v804 = vxor.u32 %v780, 2147483648
    %v805 = vxor.u32 %v781, 2147483648
    %v806 = vxor.u32 %v782, 2147483648
    %v807 = vxor.u32 %v783, 2147483648
    %v808 = vxor.u32 %v784, 2147483648
    %v809 = vxor.u32 %v785, 2147483648
    %v810 = vxor.u32 %v786, 2147483648
    %v811 = vxor.u32 %v787, 2147483648
    %v812 = vxor.u32 %v788, 2147483648
    %v813 = vxor.u32 %v789, 2147483648
    %v814 = vmul.f32 %v790, 1.442695
    %v815 = vpow.pop %v814
    %v816 = vmul.f32 %v791, 1.442695
    %v817 = vpow.pop %v816
    %v818 = vmul.f32 %v792, 1.442695
    %v819 = vpow.pop %v818
    %v820 = vmul.f32 %v793, 1.442695
    %v821 = vpow.pop %v820
    %v822 = vmul.f32 %v794, 1.442695
    %v823 = vpow.pop %v822
    %v824 = vmul.f32 %v795, 1.442695
    %v825 = vpow.pop %v824
    %v826 = vmul.f32 %v796, 1.442695
    %v827 = vpow.pop %v826
    %v828 = vmul.f32 %v797, 1.442695
    %v829 = vpow.pop %v828
    %v830 = vmul.f32 %v798, 1.442695
    %v831 = vpow.pop %v830
    %v832 = vmul.f32 %v799, 1.442695
    %v833 = vpow.pop %v832
    %v834 = vmul.f32 %v800, 1.442695
    %v835 = vpow.pop %v834
    %v836 = vmul.f32 %v801, 1.442695
    %v837 = vpow.pop %v836
    %v838 = vmul.f32 %v802, 1.442695
    %v839 = vpow.pop %v838
    %v840 = vmul.f32 %v803, 1.442695
    %v841 = vpow.pop %v840
    %v842 = vmul.f32 %v804, 1.442695
    %v843 = vpow.pop %v842
    %v844 = vmul.f32 %v805, 1.442695
    %v845 = vpow.pop %v844
    %v846 = vmul.f32 %v806, 1.442695
    %v847 = vpow.pop %v846
    %v848 = vmul.f32 %v807, 1.442695
    %v849 = vpow.pop %v848
    %v850 = vmul.f32 %v808, 1.442695
    %v851 = vpow.pop %v850
    %v852 = vmul.f32 %v809, 1.442695
    %v853 = vpow.pop %v852
    %v854 = vmul.f32 %v810, 1.442695
    %v855 = vpow.pop %v854
    %v856 = vmul.f32 %v811, 1.442695
    %v857 = vpow.pop %v856
    %v858 = vmul.f32 %v812, 1.442695
    %v859 = vpow.pop %v858
    %v860 = vmul.f32 %v813, 1.442695
    %v861 = vpow.pop %v860
    %v862 = vadd.f32 %v815, 1.0
    %v863 = vadd.f32 %v817, 1.0
    %v864 = vadd.f32 %v819, 1.0
    %v865 = vadd.f32 %v821, 1.0
    %v866 = vadd.f32 %v823, 1.0
    %v867 = vadd.f32 %v825, 1.0
    %v868 = vadd.f32 %v827, 1.0
    %v869 = vadd.f32 %v829, 1.0
    %v870 = vadd.f32 %v831, 1.0
    %v871 = vadd.f32 %v833, 1.0
    %v872 = vadd.f32 %v835, 1.0
    %v873 = vadd.f32 %v837, 1.0
    %v874 = vadd.f32 %v839, 1.0
    %v875 = vadd.f32 %v841, 1.0
    %v876 = vadd.f32 %v843, 1.0
    %v877 = vadd.f32 %v845, 1.0
    %v878 = vadd.f32 %v847, 1.0
    %v879 = vadd.f32 %v849, 1.0
    %v880 = vadd.f32 %v851, 1.0
    %v881 = vadd.f32 %v853, 1.0
    %v882 = vadd.f32 %v855, 1.0
    %v883 = vadd.f32 %v857, 1.0
    %v884 = vadd.f32 %v859, 1.0
    %v885 = vadd.f32 %v861, 1.0
    %v886 = vrcp.pop %v862
    %v887 = vmul.f32 %v862, %v886
    %v888 = vsub.f32 1.0, %v887
    %v889 = vmul.f32 %v886, %v888
    %v890 = vadd.f32 %v886, %v889
    %vm891 = vweird.f32 %v862
    %vm892 = vweird.f32 %v886
    %vm893 = vmor %vm891, %vm892
    %v894 = vsel %vm893, %v886, %v890
    %v895 = vand.u32 2147483647, %v862
    %vm896 = vcmp.eq.f32.partialorder %v895, 8.507059e+37
    %v897 = vand.u32 %v862, 2147483648
    %v898 = vor.u32 1.1754944e-38, %v897
    %v899 = vsel %vm896, %v898, %v894
    %v900 = vmul.f32 1.0, %v899
    %v901 = vrcp.pop %v863
    %v902 = vmul.f32 %v863, %v901
    %v903 = vsub.f32 1.0, %v902
    %v904 = vmul.f32 %v901, %v903
    %v905 = vadd.f32 %v901, %v904
    %vm906 = vweird.f32 %v863
    %vm907 = vweird.f32 %v901
    %vm908 = vmor %vm906, %vm907
    %v909 = vsel %vm908, %v901, %v905
    %v910 = vand.u32 2147483647, %v863
    %vm911 = vcmp.eq.f32.partialorder %v910, 8.507059e+37
    %v912 = vand.u32 %v863, 2147483648
    %v913 = vor.u32 1.1754944e-38, %v912
    %v914 = vsel %vm911, %v913, %v909
    %v915 = vmul.f32 1.0, %v914
    %v916 = vrcp.pop %v864
    %v917 = vmul.f32 %v864, %v916
    %v918 = vsub.f32 1.0, %v917
    %v919 = vmul.f32 %v916, %v918
    %v920 = vadd.f32 %v916, %v919
    %vm921 = vweird.f32 %v864
    %vm922 = vweird.f32 %v916
    %vm923 = vmor %vm921, %vm922
    %v924 = vsel %vm923, %v916, %v920
    %v925 = vand.u32 2147483647, %v864
    %vm926 = vcmp.eq.f32.partialorder %v925, 8.507059e+37
    %v927 = vand.u32 %v864, 2147483648
    %v928 = vor.u32 1.1754944e-38, %v927
    %v929 = vsel %vm926, %v928, %v924
    %v930 = vmul.f32 1.0, %v929
    %v931 = vrcp.pop %v865
    %v932 = vmul.f32 %v865, %v931
    %v933 = vsub.f32 1.0, %v932
    %v934 = vmul.f32 %v931, %v933
    %v935 = vadd.f32 %v931, %v934
    %vm936 = vweird.f32 %v865
    %vm937 = vweird.f32 %v931
    %vm938 = vmor %vm936, %vm937
    %v939 = vsel %vm938, %v931, %v935
    %v940 = vand.u32 2147483647, %v865
    %vm941 = vcmp.eq.f32.partialorder %v940, 8.507059e+37
    %v942 = vand.u32 %v865, 2147483648
    %v943 = vor.u32 1.1754944e-38, %v942
    %v944 = vsel %vm941, %v943, %v939
    %v945 = vmul.f32 1.0, %v944
    %v946 = vrcp.pop %v866
    %v947 = vmul.f32 %v866, %v946
    %v948 = vsub.f32 1.0, %v947
    %v949 = vmul.f32 %v946, %v948
    %v950 = vadd.f32 %v946, %v949
    %vm951 = vweird.f32 %v866
    %vm952 = vweird.f32 %v946
    %vm953 = vmor %vm951, %vm952
    %v954 = vsel %vm953, %v946, %v950
    %v955 = vand.u32 2147483647, %v866
    %vm956 = vcmp.eq.f32.partialorder %v955, 8.507059e+37
    %v957 = vand.u32 %v866, 2147483648
    %v958 = vor.u32 1.1754944e-38, %v957
    %v959 = vsel %vm956, %v958, %v954
    %v960 = vmul.f32 1.0, %v959
    %v961 = vrcp.pop %v867
    %v962 = vmul.f32 %v867, %v961
    %v963 = vsub.f32 1.0, %v962
    %v964 = vmul.f32 %v961, %v963
    %v965 = vadd.f32 %v961, %v964
    %vm966 = vweird.f32 %v867
    %vm967 = vweird.f32 %v961
    %vm968 = vmor %vm966, %vm967
    %v969 = vsel %vm968, %v961, %v965
    %v970 = vand.u32 2147483647, %v867
    %vm971 = vcmp.eq.f32.partialorder %v970, 8.507059e+37
    %v972 = vand.u32 %v867, 2147483648
    %v973 = vor.u32 1.1754944e-38, %v972
    %v974 = vsel %vm971, %v973, %v969
    %v975 = vmul.f32 1.0, %v974
    %v976 = vrcp.pop %v868
    %v977 = vmul.f32 %v868, %v976
    %v978 = vsub.f32 1.0, %v977
    %v979 = vmul.f32 %v976, %v978
    %v980 = vadd.f32 %v976, %v979
    %vm981 = vweird.f32 %v868
    %vm982 = vweird.f32 %v976
    %vm983 = vmor %vm981, %vm982
    %v984 = vsel %vm983, %v976, %v980
    %v985 = vand.u32 2147483647, %v868
    %vm986 = vcmp.eq.f32.partialorder %v985, 8.507059e+37
    %v987 = vand.u32 %v868, 2147483648
    %v988 = vor.u32 1.1754944e-38, %v987
    %v989 = vsel %vm986, %v988, %v984
    %v990 = vmul.f32 1.0, %v989
    %v991 = vrcp.pop %v869
    %v992 = vmul.f32 %v869, %v991
    %v993 = vsub.f32 1.0, %v992
    %v994 = vmul.f32 %v991, %v993
    %v995 = vadd.f32 %v991, %v994
    %vm996 = vweird.f32 %v869
    %vm997 = vweird.f32 %v991
    %vm998 = vmor %vm996, %vm997
    %v999 = vsel %vm998, %v991, %v995
    %v1000 = vand.u32 2147483647, %v869
    %vm1001 = vcmp.eq.f32.partialorder %v1000, 8.507059e+37
    %v1002 = vand.u32 %v869, 2147483648
    %v1003 = vor.u32 1.1754944e-38, %v1002
    %v1004 = vsel %vm1001, %v1003, %v999
    %v1005 = vmul.f32 1.0, %v1004
    %v1006 = vrcp.pop %v870
    %v1007 = vmul.f32 %v870, %v1006
    %v1008 = vsub.f32 1.0, %v1007
    %v1009 = vmul.f32 %v1006, %v1008
    %v1010 = vadd.f32 %v1006, %v1009
    %vm1011 = vweird.f32 %v870
    %vm1012 = vweird.f32 %v1006
    %vm1013 = vmor %vm1011, %vm1012
    %v1014 = vsel %vm1013, %v1006, %v1010
    %v1015 = vand.u32 2147483647, %v870
    %vm1016 = vcmp.eq.f32.partialorder %v1015, 8.507059e+37
    %v1017 = vand.u32 %v870, 2147483648
    %v1018 = vor.u32 1.1754944e-38, %v1017
    %v1019 = vsel %vm1016, %v1018, %v1014
    %v1020 = vmul.f32 1.0, %v1019
    %v1021 = vrcp.pop %v871
    %v1022 = vmul.f32 %v871, %v1021
    %v1023 = vsub.f32 1.0, %v1022
    %v1024 = vmul.f32 %v1021, %v1023
    %v1025 = vadd.f32 %v1021, %v1024
    %vm1026 = vweird.f32 %v871
    %vm1027 = vweird.f32 %v1021
    %vm1028 = vmor %vm1026, %vm1027
    %v1029 = vsel %vm1028, %v1021, %v1025
    %v1030 = vand.u32 2147483647, %v871
    %vm1031 = vcmp.eq.f32.partialorder %v1030, 8.507059e+37
    %v1032 = vand.u32 %v871, 2147483648
    %v1033 = vor.u32 1.1754944e-38, %v1032
    %v1034 = vsel %vm1031, %v1033, %v1029
    %v1035 = vmul.f32 1.0, %v1034
    %v1036 = vrcp.pop %v872
    %v1037 = vmul.f32 %v872, %v1036
    %v1038 = vsub.f32 1.0, %v1037
    %v1039 = vmul.f32 %v1036, %v1038
    %v1040 = vadd.f32 %v1036, %v1039
    %vm1041 = vweird.f32 %v872
    %vm1042 = vweird.f32 %v1036
    %vm1043 = vmor %vm1041, %vm1042
    %v1044 = vsel %vm1043, %v1036, %v1040
    %v1045 = vand.u32 2147483647, %v872
    %vm1046 = vcmp.eq.f32.partialorder %v1045, 8.507059e+37
    %v1047 = vand.u32 %v872, 2147483648
    %v1048 = vor.u32 1.1754944e-38, %v1047
    %v1049 = vsel %vm1046, %v1048, %v1044
    %v1050 = vmul.f32 1.0, %v1049
    %v1051 = vrcp.pop %v873
    %v1052 = vmul.f32 %v873, %v1051
    %v1053 = vsub.f32 1.0, %v1052
    %v1054 = vmul.f32 %v1051, %v1053
    %v1055 = vadd.f32 %v1051, %v1054
    %vm1056 = vweird.f32 %v873
    %vm1057 = vweird.f32 %v1051
    %vm1058 = vmor %vm1056, %vm1057
    %v1059 = vsel %vm1058, %v1051, %v1055
    %v1060 = vand.u32 2147483647, %v873
    %vm1061 = vcmp.eq.f32.partialorder %v1060, 8.507059e+37
    %v1062 = vand.u32 %v873, 2147483648
    %v1063 = vor.u32 1.1754944e-38, %v1062
    %v1064 = vsel %vm1061, %v1063, %v1059
    %v1065 = vmul.f32 1.0, %v1064
    %v1066 = vrcp.pop %v874
    %v1067 = vmul.f32 %v874, %v1066
    %v1068 = vsub.f32 1.0, %v1067
    %v1069 = vmul.f32 %v1066, %v1068
    %v1070 = vadd.f32 %v1066, %v1069
    %vm1071 = vweird.f32 %v874
    %vm1072 = vweird.f32 %v1066
    %vm1073 = vmor %vm1071, %vm1072
    %v1074 = vsel %vm1073, %v1066, %v1070
    %v1075 = vand.u32 2147483647, %v874
    %vm1076 = vcmp.eq.f32.partialorder %v1075, 8.507059e+37
    %v1077 = vand.u32 %v874, 2147483648
    %v1078 = vor.u32 1.1754944e-38, %v1077
    %v1079 = vsel %vm1076, %v1078, %v1074
    %v1080 = vmul.f32 1.0, %v1079
    %v1081 = vrcp.pop %v875
    %v1082 = vmul.f32 %v875, %v1081
    %v1083 = vsub.f32 1.0, %v1082
    %v1084 = vmul.f32 %v1081, %v1083
    %v1085 = vadd.f32 %v1081, %v1084
    %vm1086 = vweird.f32 %v875
    %vm1087 = vweird.f32 %v1081
    %vm1088 = vmor %vm1086, %vm1087
    %v1089 = vsel %vm1088, %v1081, %v1085
    %v1090 = vand.u32 2147483647, %v875
    %vm1091 = vcmp.eq.f32.partialorder %v1090, 8.507059e+37
    %v1092 = vand.u32 %v875, 2147483648
    %v1093 = vor.u32 1.1754944e-38, %v1092
    %v1094 = vsel %vm1091, %v1093, %v1089
    %v1095 = vmul.f32 1.0, %v1094
    %v1096 = vrcp.pop %v876
    %v1097 = vmul.f32 %v876, %v1096
    %v1098 = vsub.f32 1.0, %v1097
    %v1099 = vmul.f32 %v1096, %v1098
    %v1100 = vadd.f32 %v1096, %v1099
    %vm1101 = vweird.f32 %v876
    %vm1102 = vweird.f32 %v1096
    %vm1103 = vmor %vm1101, %vm1102
    %v1104 = vsel %vm1103, %v1096, %v1100
    %v1105 = vand.u32 2147483647, %v876
    %vm1106 = vcmp.eq.f32.partialorder %v1105, 8.507059e+37
    %v1107 = vand.u32 %v876, 2147483648
    %v1108 = vor.u32 1.1754944e-38, %v1107
    %v1109 = vsel %vm1106, %v1108, %v1104
    %v1110 = vmul.f32 1.0, %v1109
    %v1111 = vrcp.pop %v877
    %v1112 = vmul.f32 %v877, %v1111
    %v1113 = vsub.f32 1.0, %v1112
    %v1114 = vmul.f32 %v1111, %v1113
    %v1115 = vadd.f32 %v1111, %v1114
    %vm1116 = vweird.f32 %v877
    %vm1117 = vweird.f32 %v1111
    %vm1118 = vmor %vm1116, %vm1117
    %v1119 = vsel %vm1118, %v1111, %v1115
    %v1120 = vand.u32 2147483647, %v877
    %vm1121 = vcmp.eq.f32.partialorder %v1120, 8.507059e+37
    %v1122 = vand.u32 %v877, 2147483648
    %v1123 = vor.u32 1.1754944e-38, %v1122
    %v1124 = vsel %vm1121, %v1123, %v1119
    %v1125 = vmul.f32 1.0, %v1124
    %v1126 = vrcp.pop %v878
    %v1127 = vmul.f32 %v878, %v1126
    %v1128 = vsub.f32 1.0, %v1127
    %v1129 = vmul.f32 %v1126, %v1128
    %v1130 = vadd.f32 %v1126, %v1129
    %vm1131 = vweird.f32 %v878
    %vm1132 = vweird.f32 %v1126
    %vm1133 = vmor %vm1131, %vm1132
    %v1134 = vsel %vm1133, %v1126, %v1130
    %v1135 = vand.u32 2147483647, %v878
    %vm1136 = vcmp.eq.f32.partialorder %v1135, 8.507059e+37
    %v1137 = vand.u32 %v878, 2147483648
    %v1138 = vor.u32 1.1754944e-38, %v1137
    %v1139 = vsel %vm1136, %v1138, %v1134
    %v1140 = vmul.f32 1.0, %v1139
    %v1141 = vrcp.pop %v879
    %v1142 = vmul.f32 %v879, %v1141
    %v1143 = vsub.f32 1.0, %v1142
    %v1144 = vmul.f32 %v1141, %v1143
    %v1145 = vadd.f32 %v1141, %v1144
    %vm1146 = vweird.f32 %v879
    %vm1147 = vweird.f32 %v1141
    %vm1148 = vmor %vm1146, %vm1147
    %v1149 = vsel %vm1148, %v1141, %v1145
    %v1150 = vand.u32 2147483647, %v879
    %vm1151 = vcmp.eq.f32.partialorder %v1150, 8.507059e+37
    %v1152 = vand.u32 %v879, 2147483648
    %v1153 = vor.u32 1.1754944e-38, %v1152
    %v1154 = vsel %vm1151, %v1153, %v1149
    %v1155 = vmul.f32 1.0, %v1154
    %v1156 = vrcp.pop %v880
    %v1157 = vmul.f32 %v880, %v1156
    %v1158 = vsub.f32 1.0, %v1157
    %v1159 = vmul.f32 %v1156, %v1158
    %v1160 = vadd.f32 %v1156, %v1159
    %vm1161 = vweird.f32 %v880
    %vm1162 = vweird.f32 %v1156
    %vm1163 = vmor %vm1161, %vm1162
    %v1164 = vsel %vm1163, %v1156, %v1160
    %v1165 = vand.u32 2147483647, %v880
    %vm1166 = vcmp.eq.f32.partialorder %v1165, 8.507059e+37
    %v1167 = vand.u32 %v880, 2147483648
    %v1168 = vor.u32 1.1754944e-38, %v1167
    %v1169 = vsel %vm1166, %v1168, %v1164
    %v1170 = vmul.f32 1.0, %v1169
    %v1171 = vrcp.pop %v881
    %v1172 = vmul.f32 %v881, %v1171
    %v1173 = vsub.f32 1.0, %v1172
    %v1174 = vmul.f32 %v1171, %v1173
    %v1175 = vadd.f32 %v1171, %v1174
    %vm1176 = vweird.f32 %v881
    %vm1177 = vweird.f32 %v1171
    %vm1178 = vmor %vm1176, %vm1177
    %v1179 = vsel %vm1178, %v1171, %v1175
    %v1180 = vand.u32 2147483647, %v881
    %vm1181 = vcmp.eq.f32.partialorder %v1180, 8.507059e+37
    %v1182 = vand.u32 %v881, 2147483648
    %v1183 = vor.u32 1.1754944e-38, %v1182
    %v1184 = vsel %vm1181, %v1183, %v1179
    %v1185 = vmul.f32 1.0, %v1184
    %v1186 = vrcp.pop %v882
    %v1187 = vmul.f32 %v882, %v1186
    %v1188 = vsub.f32 1.0, %v1187
    %v1189 = vmul.f32 %v1186, %v1188
    %v1190 = vadd.f32 %v1186, %v1189
    %vm1191 = vweird.f32 %v882
    %vm1192 = vweird.f32 %v1186
    %vm1193 = vmor %vm1191, %vm1192
    %v1194 = vsel %vm1193, %v1186, %v1190
    %v1195 = vand.u32 2147483647, %v882
    %vm1196 = vcmp.eq.f32.partialorder %v1195, 8.507059e+37
    %v1197 = vand.u32 %v882, 2147483648
    %v1198 = vor.u32 1.1754944e-38, %v1197
    %v1199 = vsel %vm1196, %v1198, %v1194
    %v1200 = vmul.f32 1.0, %v1199
    %v1201 = vrcp.pop %v883
    %v1202 = vmul.f32 %v883, %v1201
    %v1203 = vsub.f32 1.0, %v1202
    %v1204 = vmul.f32 %v1201, %v1203
    %v1205 = vadd.f32 %v1201, %v1204
    %vm1206 = vweird.f32 %v883
    %vm1207 = vweird.f32 %v1201
    %vm1208 = vmor %vm1206, %vm1207
    %v1209 = vsel %vm1208, %v1201, %v1205
    %v1210 = vand.u32 2147483647, %v883
    %vm1211 = vcmp.eq.f32.partialorder %v1210, 8.507059e+37
    %v1212 = vand.u32 %v883, 2147483648
    %v1213 = vor.u32 1.1754944e-38, %v1212
    %v1214 = vsel %vm1211, %v1213, %v1209
    %v1215 = vmul.f32 1.0, %v1214
    %v1216 = vrcp.pop %v884
    %v1217 = vmul.f32 %v884, %v1216
    %v1218 = vsub.f32 1.0, %v1217
    %v1219 = vmul.f32 %v1216, %v1218
    %v1220 = vadd.f32 %v1216, %v1219
    %vm1221 = vweird.f32 %v884
    %vm1222 = vweird.f32 %v1216
    %vm1223 = vmor %vm1221, %vm1222
    %v1224 = vsel %vm1223, %v1216, %v1220
    %v1225 = vand.u32 2147483647, %v884
    %vm1226 = vcmp.eq.f32.partialorder %v1225, 8.507059e+37
    %v1227 = vand.u32 %v884, 2147483648
    %v1228 = vor.u32 1.1754944e-38, %v1227
    %v1229 = vsel %vm1226, %v1228, %v1224
    %v1230 = vmul.f32 1.0, %v1229
    %v1231 = vrcp.pop %v885
    %v1232 = vmul.f32 %v885, %v1231
    %v1233 = vsub.f32 1.0, %v1232
    %v1234 = vmul.f32 %v1231, %v1233
    %v1235 = vadd.f32 %v1231, %v1234
    %vm1236 = vweird.f32 %v885
    %vm1237 = vweird.f32 %v1231
    %vm1238 = vmor %vm1236, %vm1237
    %v1239 = vsel %vm1238, %v1231, %v1235
    %v1240 = vand.u32 2147483647, %v885
    %vm1241 = vcmp.eq.f32.partialorder %v1240, 8.507059e+37
    %v1242 = vand.u32 %v885, 2147483648
    %v1243 = vor.u32 1.1754944e-38, %v1242
    %v1244 = vsel %vm1241, %v1243, %v1239
    %v1245 = vmul.f32 1.0, %v1244
    %v1246 = vmul.f32 %v766, %v900
    %v1247 = vmul.f32 %v767, %v915
    %v1248 = vmul.f32 %v768, %v930
    %v1249 = vmul.f32 %v769, %v945
    %v1250 = vmul.f32 %v770, %v960
    %v1251 = vmul.f32 %v771, %v975
    %v1252 = vmul.f32 %v772, %v990
    %v1253 = vmul.f32 %v773, %v1005
    %v1254 = vmul.f32 %v774, %v1020
    %v1255 = vmul.f32 %v775, %v1035
    %v1256 = vmul.f32 %v776, %v1050
    %v1257 = vmul.f32 %v777, %v1065
    %v1258 = vmul.f32 %v778, %v1080
    %v1259 = vmul.f32 %v779, %v1095
    %v1260 = vmul.f32 %v780, %v1110
    %v1261 = vmul.f32 %v781, %v1125
    %v1262 = vmul.f32 %v782, %v1140
    %v1263 = vmul.f32 %v783, %v1155
    %v1264 = vmul.f32 %v784, %v1170
    %v1265 = vmul.f32 %v785, %v1185
    %v1266 = vmul.f32 %v786, %v1200
    %v1267 = vmul.f32 %v787, %v1215
    %v1268 = vmul.f32 %v788, %v1230
    %v1269 = vmul.f32 %v789, %v1245
    %v1270 = vld [vmem:[%s4] sm:$0xff]
    %v1271 = vld [vmem:[%s4 + $0x8] sm:$0xff]
    %v1272 = vld [vmem:[%s4 + $0x10] sm:$0xff]
    %v1273 = vld [vmem:[%s4 + $0x18] sm:$0xff]
    %v1274 = vld [vmem:[%s4 + $0x20] sm:$0xff]
    %v1275 = vld [vmem:[%s4 + $0x28] sm:$0xff]
    %1276 = vrot.lane.b32.xlu0 %v1246, 17
    %v1277 = vpop.permute.xlu0 %1276
    %1278 = vrot.lane.b32.xlu0 %v1250, 17
    %v1279 = vpop.permute.xlu0 %1278
    %1280 = vrot.lane.b32.xlu0 %v1247, 17
    %v1281 = vpop.permute.xlu0 %1280
    %1282 = vrot.lane.b32.xlu0 %v1251, 17
    %v1283 = vpop.permute.xlu0 %1282
    %1284 = vrot.lane.b32.xlu0 %v1248, 17
    %v1285 = vpop.permute.xlu0 %1284
    %1286 = vrot.lane.b32.xlu0 %v1252, 17
    %v1287 = vpop.permute.xlu0 %1286
    %1288 = vrot.lane.b32.xlu0 %v1249, 17
    %v1289 = vpop.permute.xlu0 %1288
    %1290 = vrot.lane.b32.xlu0 %v1253, 17
    %v1291 = vpop.permute.xlu0 %1290
    %vm1292 = vcmp.lt.s32.totalorder %v65, 17
    %v1293 = vsel %vm1292, %v1285, %v1289
    %v1294 = vsel %vm1292, %v1287, %v1291
    %v1295 = vsel %vm1292, %v1281, %v1285
    %v1296 = vsel %vm1292, %v1283, %v1287
    %v1297 = vsel %vm1292, %v1277, %v1281
    %v1298 = vsel %vm1292, %v1279, %v1283
    %v1299 = vsel %vm1292, %v1289, %v1277
    %v1300 = vsel %vm1292, %v1291, %v1279
    %v1301 = vsel %vm173, 1, 0
    %v1302 = vsel %vm174, 1, 0
    %v1303 = vsel %vm175, 1, 0
    %v1304 = vsel %vm176, 1, 0
    %vm1305 = vcmp.eq.s32.totalorder %v1301, 1
    %vm1306 = vcmp.eq.s32.totalorder %v1302, 1
    %vm1307 = vcmp.eq.s32.totalorder %v1303, 1
    %vm1308 = vcmp.eq.s32.totalorder %v1304, 1
    %v1309 = vsel %vm1305, %v1299, 0.0
    %v1310 = vsel %vm1306, %v1297, 0.0
    %v1311 = vsel %vm1307, %v1295, 0.0
    %v1312 = vsel %vm1308, %v1293, 0.0
    %v1313 = vsel %vm1305, %v1300, 0.0
    %v1314 = vsel %vm1306, %v1298, 0.0
    %v1315 = vsel %vm1307, %v1296, 0.0
    %v1316 = vsel %vm1308, %v1294, 0.0
    %1318 = vset.pattern.permute.xlu0 0
    %1319 = vperm.xlu0 %1318, %v1270
    %v1320 = vpop.permute.xlu0 %1319
    %1323 = vset.pattern.permute.xlu0 0
    %1324 = vperm.xlu0 %1323, %v1271
    %v1325 = vpop.permute.xlu0 %1324
    %v1327 = vmul.f32 %v1309, %v1320
    %v1328 = vmul.f32 %v1310, %v1320
    %v1329 = vmul.f32 %v1311, %v1320
    %v1330 = vmul.f32 %v1312, %v1320
    %v1331 = vmul.f32 %v1313, %v1325
    %v1332 = vmul.f32 %v1314, %v1325
    %v1333 = vmul.f32 %v1315, %v1325
    %v1334 = vmul.f32 %v1316, %v1325
    %v1335 = vadd.f32 %v1327, 0.0
    %v1336 = vadd.f32 %v1328, 0.0
    %v1337 = vadd.f32 %v1329, 0.0
    %v1338 = vadd.f32 %v1330, 0.0
    %v1339 = vadd.f32 %v1331, 0.0
    %v1340 = vadd.f32 %v1332, 0.0
    %v1341 = vadd.f32 %v1333, 0.0
    %v1342 = vadd.f32 %v1334, 0.0
    %1343 = vrot.lane.b32.xlu0 %v1246, 16
    %v1344 = vpop.permute.xlu0 %1343
    %1345 = vrot.lane.b32.xlu0 %v1250, 16
    %v1346 = vpop.permute.xlu0 %1345
    %1347 = vrot.lane.b32.xlu0 %v1247, 16
    %v1348 = vpop.permute.xlu0 %1347
    %1349 = vrot.lane.b32.xlu0 %v1251, 16
    %v1350 = vpop.permute.xlu0 %1349
    %1351 = vrot.lane.b32.xlu0 %v1248, 16
    %v1352 = vpop.permute.xlu0 %1351
    %1353 = vrot.lane.b32.xlu0 %v1252, 16
    %v1354 = vpop.permute.xlu0 %1353
    %1355 = vrot.lane.b32.xlu0 %v1249, 16
    %v1356 = vpop.permute.xlu0 %1355
    %1357 = vrot.lane.b32.xlu0 %v1253, 16
    %v1358 = vpop.permute.xlu0 %1357
    %vm1359 = vcmp.lt.s32.totalorder %v65, 16
    %v1360 = vsel %vm1359, %v1352, %v1356
    %v1361 = vsel %vm1359, %v1354, %v1358
    %v1362 = vsel %vm1359, %v1348, %v1352
    %v1363 = vsel %vm1359, %v1350, %v1354
    %v1364 = vsel %vm1359, %v1344, %v1348
    %v1365 = vsel %vm1359, %v1346, %v1350
    %v1366 = vsel %vm1359, %v1356, %v1344
    %v1367 = vsel %vm1359, %v1358, %v1346
    %v1368 = vsel %vm161, 1, 0
    %v1369 = vsel %vm162, 1, 0
    %v1370 = vsel %vm163, 1, 0
    %v1371 = vsel %vm164, 1, 0
    %vm1372 = vcmp.eq.s32.totalorder %v1368, 1
    %vm1373 = vcmp.eq.s32.totalorder %v1369, 1
    %vm1374 = vcmp.eq.s32.totalorder %v1370, 1
    %vm1375 = vcmp.eq.s32.totalorder %v1371, 1
    %v1376 = vsel %vm1372, %v1366, 0.0
    %v1377 = vsel %vm1373, %v1364, 0.0
    %v1378 = vsel %vm1374, %v1362, 0.0
    %v1379 = vsel %vm1375, %v1360, 0.0
    %v1380 = vsel %vm1372, %v1367, 0.0
    %v1381 = vsel %vm1373, %v1365, 0.0
    %v1382 = vsel %vm1374, %v1363, 0.0
    %v1383 = vsel %vm1375, %v1361, 0.0
    %1384 = vset.pattern.permute.xlu0 1
    %1385 = vperm.xlu0 %1384, %v1270
    %v1386 = vpop.permute.xlu0 %1385
    %1388 = vset.pattern.permute.xlu0 1
    %1389 = vperm.xlu0 %1388, %v1271
    %v1390 = vpop.permute.xlu0 %1389
    %v1392 = vmul.f32 %v1376, %v1386
    %v1393 = vmul.f32 %v1377, %v1386
    %v1394 = vmul.f32 %v1378, %v1386
    %v1395 = vmul.f32 %v1379, %v1386
    %v1396 = vmul.f32 %v1380, %v1390
    %v1397 = vmul.f32 %v1381, %v1390
    %v1398 = vmul.f32 %v1382, %v1390
    %v1399 = vmul.f32 %v1383, %v1390
    %v1400 = vadd.f32 %v1335, %v1392
    %v1401 = vadd.f32 %v1336, %v1393
    %v1402 = vadd.f32 %v1337, %v1394
    %v1403 = vadd.f32 %v1338, %v1395
    %v1404 = vadd.f32 %v1339, %v1396
    %v1405 = vadd.f32 %v1340, %v1397
    %v1406 = vadd.f32 %v1341, %v1398
    %v1407 = vadd.f32 %v1342, %v1399
    %1408 = vrot.lane.b32.xlu0 %v1246, 15
    %v1409 = vpop.permute.xlu0 %1408
    %1410 = vrot.lane.b32.xlu0 %v1250, 15
    %v1411 = vpop.permute.xlu0 %1410
    %1412 = vrot.lane.b32.xlu0 %v1247, 15
    %v1413 = vpop.permute.xlu0 %1412
    %1414 = vrot.lane.b32.xlu0 %v1251, 15
    %v1415 = vpop.permute.xlu0 %1414
    %1416 = vrot.lane.b32.xlu0 %v1248, 15
    %v1417 = vpop.permute.xlu0 %1416
    %1418 = vrot.lane.b32.xlu0 %v1252, 15
    %v1419 = vpop.permute.xlu0 %1418
    %1420 = vrot.lane.b32.xlu0 %v1249, 15
    %v1421 = vpop.permute.xlu0 %1420
    %1422 = vrot.lane.b32.xlu0 %v1253, 15
    %v1423 = vpop.permute.xlu0 %1422
    %vm1424 = vcmp.lt.s32.totalorder %v65, 15
    %v1425 = vsel %vm1424, %v1417, %v1421
    %v1426 = vsel %vm1424, %v1419, %v1423
    %v1427 = vsel %vm1424, %v1413, %v1417
    %v1428 = vsel %vm1424, %v1415, %v1419
    %v1429 = vsel %vm1424, %v1409, %v1413
    %v1430 = vsel %vm1424, %v1411, %v1415
    %v1431 = vsel %vm1424, %v1421, %v1409
    %v1432 = vsel %vm1424, %v1423, %v1411
    %v1433 = vsel %vm177, 1, 0
    %v1434 = vsel %vm178, 1, 0
    %v1435 = vsel %vm179, 1, 0
    %v1436 = vsel %vm180, 1, 0
    %vm1437 = vcmp.eq.s32.totalorder %v1433, 1
    %vm1438 = vcmp.eq.s32.totalorder %v1434, 1
    %vm1439 = vcmp.eq.s32.totalorder %v1435, 1
    %vm1440 = vcmp.eq.s32.totalorder %v1436, 1
    %v1441 = vsel %vm1437, %v1431, 0.0
    %v1442 = vsel %vm1438, %v1429, 0.0
    %v1443 = vsel %vm1439, %v1427, 0.0
    %v1444 = vsel %vm1440, %v1425, 0.0
    %v1445 = vsel %vm1437, %v1432, 0.0
    %v1446 = vsel %vm1438, %v1430, 0.0
    %v1447 = vsel %vm1439, %v1428, 0.0
    %v1448 = vsel %vm1440, %v1426, 0.0
    %1449 = vset.pattern.permute.xlu0 2
    %1450 = vperm.xlu0 %1449, %v1270
    %v1451 = vpop.permute.xlu0 %1450
    %1453 = vset.pattern.permute.xlu0 2
    %1454 = vperm.xlu0 %1453, %v1271
    %v1455 = vpop.permute.xlu0 %1454
    %v1457 = vmul.f32 %v1441, %v1451
    %v1458 = vmul.f32 %v1442, %v1451
    %v1459 = vmul.f32 %v1443, %v1451
    %v1460 = vmul.f32 %v1444, %v1451
    %v1461 = vmul.f32 %v1445, %v1455
    %v1462 = vmul.f32 %v1446, %v1455
    %v1463 = vmul.f32 %v1447, %v1455
    %v1464 = vmul.f32 %v1448, %v1455
    %v1465 = vadd.f32 %v1400, %v1457
    %v1466 = vadd.f32 %v1401, %v1458
    %v1467 = vadd.f32 %v1402, %v1459
    %v1468 = vadd.f32 %v1403, %v1460
    %v1469 = vadd.f32 %v1404, %v1461
    %v1470 = vadd.f32 %v1405, %v1462
    %v1471 = vadd.f32 %v1406, %v1463
    %v1472 = vadd.f32 %v1407, %v1464
    %1473 = vrot.lane.b32.xlu0 %v1246, 1
    %v1474 = vpop.permute.xlu0 %1473
    %1475 = vrot.lane.b32.xlu0 %v1250, 1
    %v1476 = vpop.permute.xlu0 %1475
    %1477 = vrot.lane.b32.xlu0 %v1247, 1
    %v1478 = vpop.permute.xlu0 %1477
    %1479 = vrot.lane.b32.xlu0 %v1251, 1
    %v1480 = vpop.permute.xlu0 %1479
    %1481 = vrot.lane.b32.xlu0 %v1248, 1
    %v1482 = vpop.permute.xlu0 %1481
    %1483 = vrot.lane.b32.xlu0 %v1252, 1
    %v1484 = vpop.permute.xlu0 %1483
    %1485 = vrot.lane.b32.xlu0 %v1249, 1
    %v1486 = vpop.permute.xlu0 %1485
    %1487 = vrot.lane.b32.xlu0 %v1253, 1
    %v1488 = vpop.permute.xlu0 %1487
    %vm1489 = vcmp.lt.s32.totalorder %v65, 1
    %v1490 = vsel %vm1489, %v1482, %v1486
    %v1491 = vsel %vm1489, %v1484, %v1488
    %v1492 = vsel %vm1489, %v1478, %v1482
    %v1493 = vsel %vm1489, %v1480, %v1484
    %v1494 = vsel %vm1489, %v1474, %v1478
    %v1495 = vsel %vm1489, %v1476, %v1480
    %v1496 = vsel %vm1489, %v1486, %v1474
    %v1497 = vsel %vm1489, %v1488, %v1476
    %v1498 = vsel %vm101, 1, 0
    %v1499 = vsel %vm102, 1, 0
    %v1500 = vsel %vm103, 1, 0
    %v1501 = vsel %vm104, 1, 0
    %vm1502 = vcmp.eq.s32.totalorder %v1498, 1
    %vm1503 = vcmp.eq.s32.totalorder %v1499, 1
    %vm1504 = vcmp.eq.s32.totalorder %v1500, 1
    %vm1505 = vcmp.eq.s32.totalorder %v1501, 1
    %v1506 = vsel %vm1502, %v1496, 0.0
    %v1507 = vsel %vm1503, %v1494, 0.0
    %v1508 = vsel %vm1504, %v1492, 0.0
    %v1509 = vsel %vm1505, %v1490, 0.0
    %v1510 = vsel %vm1502, %v1497, 0.0
    %v1511 = vsel %vm1503, %v1495, 0.0
    %v1512 = vsel %vm1504, %v1493, 0.0
    %v1513 = vsel %vm1505, %v1491, 0.0
    %1514 = vset.pattern.permute.xlu0 3
    %1515 = vperm.xlu0 %1514, %v1270
    %v1516 = vpop.permute.xlu0 %1515
    %1518 = vset.pattern.permute.xlu0 3
    %1519 = vperm.xlu0 %1518, %v1271
    %v1520 = vpop.permute.xlu0 %1519
    %v1522 = vmul.f32 %v1506, %v1516
    %v1523 = vmul.f32 %v1507, %v1516
    %v1524 = vmul.f32 %v1508, %v1516
    %v1525 = vmul.f32 %v1509, %v1516
    %v1526 = vmul.f32 %v1510, %v1520
    %v1527 = vmul.f32 %v1511, %v1520
    %v1528 = vmul.f32 %v1512, %v1520
    %v1529 = vmul.f32 %v1513, %v1520
    %v1530 = vadd.f32 %v1465, %v1522
    %v1531 = vadd.f32 %v1466, %v1523
    %v1532 = vadd.f32 %v1467, %v1524
    %v1533 = vadd.f32 %v1468, %v1525
    %v1534 = vadd.f32 %v1469, %v1526
    %v1535 = vadd.f32 %v1470, %v1527
    %v1536 = vadd.f32 %v1471, %v1528
    %v1537 = vadd.f32 %v1472, %v1529
    %1538 = vset.pattern.permute.xlu0 4
    %1539 = vperm.xlu0 %1538, %v1270
    %v1540 = vpop.permute.xlu0 %1539
    %1542 = vset.pattern.permute.xlu0 4
    %1543 = vperm.xlu0 %1542, %v1271
    %v1544 = vpop.permute.xlu0 %1543
    %v1546 = vmul.f32 %v1246, %v1540
    %v1547 = vmul.f32 %v1247, %v1540
    %v1548 = vmul.f32 %v1248, %v1540
    %v1549 = vmul.f32 %v1249, %v1540
    %v1550 = vmul.f32 %v1250, %v1544
    %v1551 = vmul.f32 %v1251, %v1544
    %v1552 = vmul.f32 %v1252, %v1544
    %v1553 = vmul.f32 %v1253, %v1544
    %v1554 = vadd.f32 %v1530, %v1546
    %v1555 = vadd.f32 %v1531, %v1547
    %v1556 = vadd.f32 %v1532, %v1548
    %v1557 = vadd.f32 %v1533, %v1549
    %v1558 = vadd.f32 %v1534, %v1550
    %v1559 = vadd.f32 %v1535, %v1551
    %v1560 = vadd.f32 %v1536, %v1552
    %v1561 = vadd.f32 %v1537, %v1553
    %1562 = vrot.lane.b32.xlu0 %v1246, 127
    %v1563 = vpop.permute.xlu0 %1562
    %1564 = vrot.lane.b32.xlu0 %v1250, 127
    %v1565 = vpop.permute.xlu0 %1564
    %1566 = vrot.lane.b32.xlu0 %v1247, 127
    %v1567 = vpop.permute.xlu0 %1566
    %1568 = vrot.lane.b32.xlu0 %v1251, 127
    %v1569 = vpop.permute.xlu0 %1568
    %1570 = vrot.lane.b32.xlu0 %v1248, 127
    %v1571 = vpop.permute.xlu0 %1570
    %1572 = vrot.lane.b32.xlu0 %v1252, 127
    %v1573 = vpop.permute.xlu0 %1572
    %1574 = vrot.lane.b32.xlu0 %v1249, 127
    %v1575 = vpop.permute.xlu0 %1574
    %1576 = vrot.lane.b32.xlu0 %v1253, 127
    %v1577 = vpop.permute.xlu0 %1576
    %vm1578 = vcmp.lt.s32.totalorder %v65, 127
    %v1579 = vsel %vm1578, %v1571, %v1575
    %v1580 = vsel %vm1578, %v1573, %v1577
    %v1581 = vsel %vm1578, %v1567, %v1571
    %v1582 = vsel %vm1578, %v1569, %v1573
    %v1583 = vsel %vm1578, %v1563, %v1567
    %v1584 = vsel %vm1578, %v1565, %v1569
    %v1585 = vsel %vm1578, %v1575, %v1563
    %v1586 = vsel %vm1578, %v1577, %v1565
    %v1587 = vsel %vm109, 1, 0
    %v1588 = vsel %vm110, 1, 0
    %v1589 = vsel %vm111, 1, 0
    %v1590 = vsel %vm112, 1, 0
    %vm1591 = vcmp.eq.s32.totalorder %v1587, 1
    %vm1592 = vcmp.eq.s32.totalorder %v1588, 1
    %vm1593 = vcmp.eq.s32.totalorder %v1589, 1
    %vm1594 = vcmp.eq.s32.totalorder %v1590, 1
    %v1595 = vsel %vm1591, %v1583, 0.0
    %v1596 = vsel %vm1592, %v1581, 0.0
    %v1597 = vsel %vm1593, %v1579, 0.0
    %v1598 = vsel %vm1594, %v1585, 0.0
    %v1599 = vsel %vm1591, %v1584, 0.0
    %v1600 = vsel %vm1592, %v1582, 0.0
    %v1601 = vsel %vm1593, %v1580, 0.0
    %v1602 = vsel %vm1594, %v1586, 0.0
    %1603 = vset.pattern.permute.xlu0 5
    %1604 = vperm.xlu0 %1603, %v1270
    %v1605 = vpop.permute.xlu0 %1604
    %1607 = vset.pattern.permute.xlu0 5
    %1608 = vperm.xlu0 %1607, %v1271
    %v1609 = vpop.permute.xlu0 %1608
    %v1611 = vmul.f32 %v1595, %v1605
    %v1612 = vmul.f32 %v1596, %v1605
    %v1613 = vmul.f32 %v1597, %v1605
    %v1614 = vmul.f32 %v1598, %v1605
    %v1615 = vmul.f32 %v1599, %v1609
    %v1616 = vmul.f32 %v1600, %v1609
    %v1617 = vmul.f32 %v1601, %v1609
    %v1618 = vmul.f32 %v1602, %v1609
    %v1619 = vadd.f32 %v1554, %v1611
    %v1620 = vadd.f32 %v1555, %v1612
    %v1621 = vadd.f32 %v1556, %v1613
    %v1622 = vadd.f32 %v1557, %v1614
    %v1623 = vadd.f32 %v1558, %v1615
    %v1624 = vadd.f32 %v1559, %v1616
    %v1625 = vadd.f32 %v1560, %v1617
    %v1626 = vadd.f32 %v1561, %v1618
    %1627 = vrot.lane.b32.xlu0 %v1246, 113
    %v1628 = vpop.permute.xlu0 %1627
    %1629 = vrot.lane.b32.xlu0 %v1250, 113
    %v1630 = vpop.permute.xlu0 %1629
    %1631 = vrot.lane.b32.xlu0 %v1247, 113
    %v1632 = vpop.permute.xlu0 %1631
    %1633 = vrot.lane.b32.xlu0 %v1251, 113
    %v1634 = vpop.permute.xlu0 %1633
    %1635 = vrot.lane.b32.xlu0 %v1248, 113
    %v1636 = vpop.permute.xlu0 %1635
    %1637 = vrot.lane.b32.xlu0 %v1252, 113
    %v1638 = vpop.permute.xlu0 %1637
    %1639 = vrot.lane.b32.xlu0 %v1249, 113
    %v1640 = vpop.permute.xlu0 %1639
    %1641 = vrot.lane.b32.xlu0 %v1253, 113
    %v1642 = vpop.permute.xlu0 %1641
    %vm1643 = vcmp.lt.s32.totalorder %v65, 113
    %v1644 = vsel %vm1643, %v1636, %v1640
    %v1645 = vsel %vm1643, %v1638, %v1642
    %v1646 = vsel %vm1643, %v1632, %v1636
    %v1647 = vsel %vm1643, %v1634, %v1638
    %v1648 = vsel %vm1643, %v1628, %v1632
    %v1649 = vsel %vm1643, %v1630, %v1634
    %v1650 = vsel %vm1643, %v1640, %v1628
    %v1651 = vsel %vm1643, %v1642, %v1630
    %v1652 = vsel %vm201, 1, 0
    %v1653 = vsel %vm202, 1, 0
    %v1654 = vsel %vm203, 1, 0
    %v1655 = vsel %vm204, 1, 0
    %vm1656 = vcmp.eq.s32.totalorder %v1652, 1
    %vm1657 = vcmp.eq.s32.totalorder %v1653, 1
    %vm1658 = vcmp.eq.s32.totalorder %v1654, 1
    %vm1659 = vcmp.eq.s32.totalorder %v1655, 1
    %v1660 = vsel %vm1656, %v1648, 0.0
    %v1661 = vsel %vm1657, %v1646, 0.0
    %v1662 = vsel %vm1658, %v1644, 0.0
    %v1663 = vsel %vm1659, %v1650, 0.0
    %v1664 = vsel %vm1656, %v1649, 0.0
    %v1665 = vsel %vm1657, %v1647, 0.0
    %v1666 = vsel %vm1658, %v1645, 0.0
    %v1667 = vsel %vm1659, %v1651, 0.0
    %1668 = vset.pattern.permute.xlu0 6
    %1669 = vperm.xlu0 %1668, %v1270
    %v1670 = vpop.permute.xlu0 %1669
    %1672 = vset.pattern.permute.xlu0 6
    %1673 = vperm.xlu0 %1672, %v1271
    %v1674 = vpop.permute.xlu0 %1673
    %v1676 = vmul.f32 %v1660, %v1670
    %v1677 = vmul.f32 %v1661, %v1670
    %v1678 = vmul.f32 %v1662, %v1670
    %v1679 = vmul.f32 %v1663, %v1670
    %v1680 = vmul.f32 %v1664, %v1674
    %v1681 = vmul.f32 %v1665, %v1674
    %v1682 = vmul.f32 %v1666, %v1674
    %v1683 = vmul.f32 %v1667, %v1674
    %v1684 = vadd.f32 %v1619, %v1676
    %v1685 = vadd.f32 %v1620, %v1677
    %v1686 = vadd.f32 %v1621, %v1678
    %v1687 = vadd.f32 %v1622, %v1679
    %v1688 = vadd.f32 %v1623, %v1680
    %v1689 = vadd.f32 %v1624, %v1681
    %v1690 = vadd.f32 %v1625, %v1682
    %v1691 = vadd.f32 %v1626, %v1683
    %1692 = vrot.lane.b32.xlu0 %v1246, 112
    %v1693 = vpop.permute.xlu0 %1692
    %1694 = vrot.lane.b32.xlu0 %v1250, 112
    %v1695 = vpop.permute.xlu0 %1694
    %1696 = vrot.lane.b32.xlu0 %v1247, 112
    %v1697 = vpop.permute.xlu0 %1696
    %1698 = vrot.lane.b32.xlu0 %v1251, 112
    %v1699 = vpop.permute.xlu0 %1698
    %1700 = vrot.lane.b32.xlu0 %v1248, 112
    %v1701 = vpop.permute.xlu0 %1700
    %1702 = vrot.lane.b32.xlu0 %v1252, 112
    %v1703 = vpop.permute.xlu0 %1702
    %1704 = vrot.lane.b32.xlu0 %v1249, 112
    %v1705 = vpop.permute.xlu0 %1704
    %1706 = vrot.lane.b32.xlu0 %v1253, 112
    %v1707 = vpop.permute.xlu0 %1706
    %vm1708 = vcmp.lt.s32.totalorder %v65, 112
    %v1709 = vsel %vm1708, %v1701, %v1705
    %v1710 = vsel %vm1708, %v1703, %v1707
    %v1711 = vsel %vm1708, %v1697, %v1701
    %v1712 = vsel %vm1708, %v1699, %v1703
    %v1713 = vsel %vm1708, %v1693, %v1697
    %v1714 = vsel %vm1708, %v1695, %v1699
    %v1715 = vsel %vm1708, %v1705, %v1693
    %v1716 = vsel %vm1708, %v1707, %v1695
    %v1717 = vsel %vm189, 1, 0
    %v1718 = vsel %vm190, 1, 0
    %v1719 = vsel %vm191, 1, 0
    %v1720 = vsel %vm192, 1, 0
    %vm1721 = vcmp.eq.s32.totalorder %v1717, 1
    %vm1722 = vcmp.eq.s32.totalorder %v1718, 1
    %vm1723 = vcmp.eq.s32.totalorder %v1719, 1
    %vm1724 = vcmp.eq.s32.totalorder %v1720, 1
    %v1725 = vsel %vm1721, %v1713, 0.0
    %v1726 = vsel %vm1722, %v1711, 0.0
    %v1727 = vsel %vm1723, %v1709, 0.0
    %v1728 = vsel %vm1724, %v1715, 0.0
    %v1729 = vsel %vm1721, %v1714, 0.0
    %v1730 = vsel %vm1722, %v1712, 0.0
    %v1731 = vsel %vm1723, %v1710, 0.0
    %v1732 = vsel %vm1724, %v1716, 0.0
    %1733 = vset.pattern.permute.xlu0 7
    %1734 = vperm.xlu0 %1733, %v1270
    %v1735 = vpop.permute.xlu0 %1734
    %1737 = vset.pattern.permute.xlu0 7
    %1738 = vperm.xlu0 %1737, %v1271
    %v1739 = vpop.permute.xlu0 %1738
    %v1741 = vmul.f32 %v1725, %v1735
    %v1742 = vmul.f32 %v1726, %v1735
    %v1743 = vmul.f32 %v1727, %v1735
    %v1744 = vmul.f32 %v1728, %v1735
    %v1745 = vmul.f32 %v1729, %v1739
    %v1746 = vmul.f32 %v1730, %v1739
    %v1747 = vmul.f32 %v1731, %v1739
    %v1748 = vmul.f32 %v1732, %v1739
    %v1749 = vadd.f32 %v1684, %v1741
    %v1750 = vadd.f32 %v1685, %v1742
    %v1751 = vadd.f32 %v1686, %v1743
    %v1752 = vadd.f32 %v1687, %v1744
    %v1753 = vadd.f32 %v1688, %v1745
    %v1754 = vadd.f32 %v1689, %v1746
    %v1755 = vadd.f32 %v1690, %v1747
    %v1756 = vadd.f32 %v1691, %v1748
    %1757 = vrot.lane.b32.xlu0 %v1246, 111
    %v1758 = vpop.permute.xlu0 %1757
    %1759 = vrot.lane.b32.xlu0 %v1250, 111
    %v1760 = vpop.permute.xlu0 %1759
    %1761 = vrot.lane.b32.xlu0 %v1247, 111
    %v1762 = vpop.permute.xlu0 %1761
    %1763 = vrot.lane.b32.xlu0 %v1251, 111
    %v1764 = vpop.permute.xlu0 %1763
    %1765 = vrot.lane.b32.xlu0 %v1248, 111
    %v1766 = vpop.permute.xlu0 %1765
    %1767 = vrot.lane.b32.xlu0 %v1252, 111
    %v1768 = vpop.permute.xlu0 %1767
    %1769 = vrot.lane.b32.xlu0 %v1249, 111
    %v1770 = vpop.permute.xlu0 %1769
    %1771 = vrot.lane.b32.xlu0 %v1253, 111
    %v1772 = vpop.permute.xlu0 %1771
    %vm1773 = vcmp.lt.s32.totalorder %v65, 111
    %v1774 = vsel %vm1773, %v1766, %v1770
    %v1775 = vsel %vm1773, %v1768, %v1772
    %v1776 = vsel %vm1773, %v1762, %v1766
    %v1777 = vsel %vm1773, %v1764, %v1768
    %v1778 = vsel %vm1773, %v1758, %v1762
    %v1779 = vsel %vm1773, %v1760, %v1764
    %v1780 = vsel %vm1773, %v1770, %v1758
    %v1781 = vsel %vm1773, %v1772, %v1760
    %v1782 = vsel %vm205, 1, 0
    %v1783 = vsel %vm206, 1, 0
    %v1784 = vsel %vm207, 1, 0
    %v1785 = vsel %vm208, 1, 0
    %vm1786 = vcmp.eq.s32.totalorder %v1782, 1
    %vm1787 = vcmp.eq.s32.totalorder %v1783, 1
    %vm1788 = vcmp.eq.s32.totalorder %v1784, 1
    %vm1789 = vcmp.eq.s32.totalorder %v1785, 1
    %v1790 = vsel %vm1786, %v1778, 0.0
    %v1791 = vsel %vm1787, %v1776, 0.0
    %v1792 = vsel %vm1788, %v1774, 0.0
    %v1793 = vsel %vm1789, %v1780, 0.0
    %v1794 = vsel %vm1786, %v1779, 0.0
    %v1795 = vsel %vm1787, %v1777, 0.0
    %v1796 = vsel %vm1788, %v1775, 0.0
    %v1797 = vsel %vm1789, %v1781, 0.0
    %1798 = vset.pattern.permute.xlu0 8
    %1799 = vperm.xlu0 %1798, %v1270
    %v1800 = vpop.permute.xlu0 %1799
    %1802 = vset.pattern.permute.xlu0 8
    %1803 = vperm.xlu0 %1802, %v1271
    %v1804 = vpop.permute.xlu0 %1803
    %v1806 = vmul.f32 %v1790, %v1800
    %v1807 = vmul.f32 %v1791, %v1800
    %v1808 = vmul.f32 %v1792, %v1800
    %v1809 = vmul.f32 %v1793, %v1800
    %v1810 = vmul.f32 %v1794, %v1804
    %v1811 = vmul.f32 %v1795, %v1804
    %v1812 = vmul.f32 %v1796, %v1804
    %v1813 = vmul.f32 %v1797, %v1804
    %v1814 = vadd.f32 %v1749, %v1806
    %v1815 = vadd.f32 %v1750, %v1807
    %v1816 = vadd.f32 %v1751, %v1808
    %v1817 = vadd.f32 %v1752, %v1809
    %v1818 = vadd.f32 %v1753, %v1810
    %v1819 = vadd.f32 %v1754, %v1811
    %v1820 = vadd.f32 %v1755, %v1812
    %v1821 = vadd.f32 %v1756, %v1813
    %1822 = vrot.lane.b32.xlu0 %v1254, 17
    %v1823 = vpop.permute.xlu0 %1822
    %1824 = vrot.lane.b32.xlu0 %v1258, 17
    %v1825 = vpop.permute.xlu0 %1824
    %1826 = vrot.lane.b32.xlu0 %v1255, 17
    %v1827 = vpop.permute.xlu0 %1826
    %1828 = vrot.lane.b32.xlu0 %v1259, 17
    %v1829 = vpop.permute.xlu0 %1828
    %1830 = vrot.lane.b32.xlu0 %v1256, 17
    %v1831 = vpop.permute.xlu0 %1830
    %1832 = vrot.lane.b32.xlu0 %v1260, 17
    %v1833 = vpop.permute.xlu0 %1832
    %1834 = vrot.lane.b32.xlu0 %v1257, 17
    %v1835 = vpop.permute.xlu0 %1834
    %1836 = vrot.lane.b32.xlu0 %v1261, 17
    %v1837 = vpop.permute.xlu0 %1836
    %v1838 = vsel %vm1292, %v1831, %v1835
    %v1839 = vsel %vm1292, %v1833, %v1837
    %v1840 = vsel %vm1292, %v1827, %v1831
    %v1841 = vsel %vm1292, %v1829, %v1833
    %v1842 = vsel %vm1292, %v1823, %v1827
    %v1843 = vsel %vm1292, %v1825, %v1829
    %v1844 = vsel %vm1292, %v1835, %v1823
    %v1845 = vsel %vm1292, %v1837, %v1825
    %v1846 = vsel %vm1305, %v1844, 0.0
    %v1847 = vsel %vm1306, %v1842, 0.0
    %v1848 = vsel %vm1307, %v1840, 0.0
    %v1849 = vsel %vm1308, %v1838, 0.0
    %v1850 = vsel %vm1305, %v1845, 0.0
    %v1851 = vsel %vm1306, %v1843, 0.0
    %v1852 = vsel %vm1307, %v1841, 0.0
    %v1853 = vsel %vm1308, %v1839, 0.0
    %1855 = vset.pattern.permute.xlu0 0
    %1856 = vperm.xlu0 %1855, %v1272
    %v1857 = vpop.permute.xlu0 %1856
    %1860 = vset.pattern.permute.xlu0 0
    %1861 = vperm.xlu0 %1860, %v1273
    %v1862 = vpop.permute.xlu0 %1861
    %v1864 = vmul.f32 %v1846, %v1857
    %v1865 = vmul.f32 %v1847, %v1857
    %v1866 = vmul.f32 %v1848, %v1857
    %v1867 = vmul.f32 %v1849, %v1857
    %v1868 = vmul.f32 %v1850, %v1862
    %v1869 = vmul.f32 %v1851, %v1862
    %v1870 = vmul.f32 %v1852, %v1862
    %v1871 = vmul.f32 %v1853, %v1862
    %v1872 = vadd.f32 %v1864, 0.0
    %v1873 = vadd.f32 %v1865, 0.0
    %v1874 = vadd.f32 %v1866, 0.0
    %v1875 = vadd.f32 %v1867, 0.0
    %v1876 = vadd.f32 %v1868, 0.0
    %v1877 = vadd.f32 %v1869, 0.0
    %v1878 = vadd.f32 %v1870, 0.0
    %v1879 = vadd.f32 %v1871, 0.0
    %1880 = vrot.lane.b32.xlu0 %v1254, 16
    %v1881 = vpop.permute.xlu0 %1880
    %1882 = vrot.lane.b32.xlu0 %v1258, 16
    %v1883 = vpop.permute.xlu0 %1882
    %1884 = vrot.lane.b32.xlu0 %v1255, 16
    %v1885 = vpop.permute.xlu0 %1884
    %1886 = vrot.lane.b32.xlu0 %v1259, 16
    %v1887 = vpop.permute.xlu0 %1886
    %1888 = vrot.lane.b32.xlu0 %v1256, 16
    %v1889 = vpop.permute.xlu0 %1888
    %1890 = vrot.lane.b32.xlu0 %v1260, 16
    %v1891 = vpop.permute.xlu0 %1890
    %1892 = vrot.lane.b32.xlu0 %v1257, 16
    %v1893 = vpop.permute.xlu0 %1892
    %1894 = vrot.lane.b32.xlu0 %v1261, 16
    %v1895 = vpop.permute.xlu0 %1894
    %v1896 = vsel %vm1359, %v1889, %v1893
    %v1897 = vsel %vm1359, %v1891, %v1895
    %v1898 = vsel %vm1359, %v1885, %v1889
    %v1899 = vsel %vm1359, %v1887, %v1891
    %v1900 = vsel %vm1359, %v1881, %v1885
    %v1901 = vsel %vm1359, %v1883, %v1887
    %v1902 = vsel %vm1359, %v1893, %v1881
    %v1903 = vsel %vm1359, %v1895, %v1883
    %v1904 = vsel %vm1372, %v1902, 0.0
    %v1905 = vsel %vm1373, %v1900, 0.0
    %v1906 = vsel %vm1374, %v1898, 0.0
    %v1907 = vsel %vm1375, %v1896, 0.0
    %v1908 = vsel %vm1372, %v1903, 0.0
    %v1909 = vsel %vm1373, %v1901, 0.0
    %v1910 = vsel %vm1374, %v1899, 0.0
    %v1911 = vsel %vm1375, %v1897, 0.0
    %1912 = vset.pattern.permute.xlu0 1
    %1913 = vperm.xlu0 %1912, %v1272
    %v1914 = vpop.permute.xlu0 %1913
    %1916 = vset.pattern.permute.xlu0 1
    %1917 = vperm.xlu0 %1916, %v1273
    %v1918 = vpop.permute.xlu0 %1917
    %v1920 = vmul.f32 %v1904, %v1914
    %v1921 = vmul.f32 %v1905, %v1914
    %v1922 = vmul.f32 %v1906, %v1914
    %v1923 = vmul.f32 %v1907, %v1914
    %v1924 = vmul.f32 %v1908, %v1918
    %v1925 = vmul.f32 %v1909, %v1918
    %v1926 = vmul.f32 %v1910, %v1918
    %v1927 = vmul.f32 %v1911, %v1918
    %v1928 = vadd.f32 %v1872, %v1920
    %v1929 = vadd.f32 %v1873, %v1921
    %v1930 = vadd.f32 %v1874, %v1922
    %v1931 = vadd.f32 %v1875, %v1923
    %v1932 = vadd.f32 %v1876, %v1924
    %v1933 = vadd.f32 %v1877, %v1925
    %v1934 = vadd.f32 %v1878, %v1926
    %v1935 = vadd.f32 %v1879, %v1927
    %1936 = vrot.lane.b32.xlu0 %v1254, 15
    %v1937 = vpop.permute.xlu0 %1936
    %1938 = vrot.lane.b32.xlu0 %v1258, 15
    %v1939 = vpop.permute.xlu0 %1938
    %1940 = vrot.lane.b32.xlu0 %v1255, 15
    %v1941 = vpop.permute.xlu0 %1940
    %1942 = vrot.lane.b32.xlu0 %v1259, 15
    %v1943 = vpop.permute.xlu0 %1942
    %1944 = vrot.lane.b32.xlu0 %v1256, 15
    %v1945 = vpop.permute.xlu0 %1944
    %1946 = vrot.lane.b32.xlu0 %v1260, 15
    %v1947 = vpop.permute.xlu0 %1946
    %1948 = vrot.lane.b32.xlu0 %v1257, 15
    %v1949 = vpop.permute.xlu0 %1948
    %1950 = vrot.lane.b32.xlu0 %v1261, 15
    %v1951 = vpop.permute.xlu0 %1950
    %v1952 = vsel %vm1424, %v1945, %v1949
    %v1953 = vsel %vm1424, %v1947, %v1951
    %v1954 = vsel %vm1424, %v1941, %v1945
    %v1955 = vsel %vm1424, %v1943, %v1947
    %v1956 = vsel %vm1424, %v1937, %v1941
    %v1957 = vsel %vm1424, %v1939, %v1943
    %v1958 = vsel %vm1424, %v1949, %v1937
    %v1959 = vsel %vm1424, %v1951, %v1939
    %v1960 = vsel %vm1437, %v1958, 0.0
    %v1961 = vsel %vm1438, %v1956, 0.0
    %v1962 = vsel %vm1439, %v1954, 0.0
    %v1963 = vsel %vm1440, %v1952, 0.0
    %v1964 = vsel %vm1437, %v1959, 0.0
    %v1965 = vsel %vm1438, %v1957, 0.0
    %v1966 = vsel %vm1439, %v1955, 0.0
    %v1967 = vsel %vm1440, %v1953, 0.0
    %1968 = vset.pattern.permute.xlu0 2
    %1969 = vperm.xlu0 %1968, %v1272
    %v1970 = vpop.permute.xlu0 %1969
    %1972 = vset.pattern.permute.xlu0 2
    %1973 = vperm.xlu0 %1972, %v1273
    %v1974 = vpop.permute.xlu0 %1973
    %v1976 = vmul.f32 %v1960, %v1970
    %v1977 = vmul.f32 %v1961, %v1970
    %v1978 = vmul.f32 %v1962, %v1970
    %v1979 = vmul.f32 %v1963, %v1970
    %v1980 = vmul.f32 %v1964, %v1974
    %v1981 = vmul.f32 %v1965, %v1974
    %v1982 = vmul.f32 %v1966, %v1974
    %v1983 = vmul.f32 %v1967, %v1974
    %v1984 = vadd.f32 %v1928, %v1976
    %v1985 = vadd.f32 %v1929, %v1977
    %v1986 = vadd.f32 %v1930, %v1978
    %v1987 = vadd.f32 %v1931, %v1979
    %v1988 = vadd.f32 %v1932, %v1980
    %v1989 = vadd.f32 %v1933, %v1981
    %v1990 = vadd.f32 %v1934, %v1982
    %v1991 = vadd.f32 %v1935, %v1983
    %1992 = vrot.lane.b32.xlu0 %v1254, 1
    %v1993 = vpop.permute.xlu0 %1992
    %1994 = vrot.lane.b32.xlu0 %v1258, 1
    %v1995 = vpop.permute.xlu0 %1994
    %1996 = vrot.lane.b32.xlu0 %v1255, 1
    %v1997 = vpop.permute.xlu0 %1996
    %1998 = vrot.lane.b32.xlu0 %v1259, 1
    %v1999 = vpop.permute.xlu0 %1998
    %2000 = vrot.lane.b32.xlu0 %v1256, 1
    %v2001 = vpop.permute.xlu0 %2000
    %2002 = vrot.lane.b32.xlu0 %v1260, 1
    %v2003 = vpop.permute.xlu0 %2002
    %2004 = vrot.lane.b32.xlu0 %v1257, 1
    %v2005 = vpop.permute.xlu0 %2004
    %2006 = vrot.lane.b32.xlu0 %v1261, 1
    %v2007 = vpop.permute.xlu0 %2006
    %v2008 = vsel %vm1489, %v2001, %v2005
    %v2009 = vsel %vm1489, %v2003, %v2007
    %v2010 = vsel %vm1489, %v1997, %v2001
    %v2011 = vsel %vm1489, %v1999, %v2003
    %v2012 = vsel %vm1489, %v1993, %v1997
    %v2013 = vsel %vm1489, %v1995, %v1999
    %v2014 = vsel %vm1489, %v2005, %v1993
    %v2015 = vsel %vm1489, %v2007, %v1995
    %v2016 = vsel %vm1502, %v2014, 0.0
    %v2017 = vsel %vm1503, %v2012, 0.0
    %v2018 = vsel %vm1504, %v2010, 0.0
    %v2019 = vsel %vm1505, %v2008, 0.0
    %v2020 = vsel %vm1502, %v2015, 0.0
    %v2021 = vsel %vm1503, %v2013, 0.0
    %v2022 = vsel %vm1504, %v2011, 0.0
    %v2023 = vsel %vm1505, %v2009, 0.0
    %2024 = vset.pattern.permute.xlu0 3
    %2025 = vperm.xlu0 %2024, %v1272
    %v2026 = vpop.permute.xlu0 %2025
    %2028 = vset.pattern.permute.xlu0 3
    %2029 = vperm.xlu0 %2028, %v1273
    %v2030 = vpop.permute.xlu0 %2029
    %v2032 = vmul.f32 %v2016, %v2026
    %v2033 = vmul.f32 %v2017, %v2026
    %v2034 = vmul.f32 %v2018, %v2026
    %v2035 = vmul.f32 %v2019, %v2026
    %v2036 = vmul.f32 %v2020, %v2030
    %v2037 = vmul.f32 %v2021, %v2030
    %v2038 = vmul.f32 %v2022, %v2030
    %v2039 = vmul.f32 %v2023, %v2030
    %v2040 = vadd.f32 %v1984, %v2032
    %v2041 = vadd.f32 %v1985, %v2033
    %v2042 = vadd.f32 %v1986, %v2034
    %v2043 = vadd.f32 %v1987, %v2035
    %v2044 = vadd.f32 %v1988, %v2036
    %v2045 = vadd.f32 %v1989, %v2037
    %v2046 = vadd.f32 %v1990, %v2038
    %v2047 = vadd.f32 %v1991, %v2039
    %2048 = vset.pattern.permute.xlu0 4
    %2049 = vperm.xlu0 %2048, %v1272
    %v2050 = vpop.permute.xlu0 %2049
    %2052 = vset.pattern.permute.xlu0 4
    %2053 = vperm.xlu0 %2052, %v1273
    %v2054 = vpop.permute.xlu0 %2053
    %v2056 = vmul.f32 %v1254, %v2050
    %v2057 = vmul.f32 %v1255, %v2050
    %v2058 = vmul.f32 %v1256, %v2050
    %v2059 = vmul.f32 %v1257, %v2050
    %v2060 = vmul.f32 %v1258, %v2054
    %v2061 = vmul.f32 %v1259, %v2054
    %v2062 = vmul.f32 %v1260, %v2054
    %v2063 = vmul.f32 %v1261, %v2054
    %v2064 = vadd.f32 %v2040, %v2056
    %v2065 = vadd.f32 %v2041, %v2057
    %v2066 = vadd.f32 %v2042, %v2058
    %v2067 = vadd.f32 %v2043, %v2059
    %v2068 = vadd.f32 %v2044, %v2060
    %v2069 = vadd.f32 %v2045, %v2061
    %v2070 = vadd.f32 %v2046, %v2062
    %v2071 = vadd.f32 %v2047, %v2063
    %2072 = vrot.lane.b32.xlu0 %v1254, 127
    %v2073 = vpop.permute.xlu0 %2072
    %2074 = vrot.lane.b32.xlu0 %v1258, 127
    %v2075 = vpop.permute.xlu0 %2074
    %2076 = vrot.lane.b32.xlu0 %v1255, 127
    %v2077 = vpop.permute.xlu0 %2076
    %2078 = vrot.lane.b32.xlu0 %v1259, 127
    %v2079 = vpop.permute.xlu0 %2078
    %2080 = vrot.lane.b32.xlu0 %v1256, 127
    %v2081 = vpop.permute.xlu0 %2080
    %2082 = vrot.lane.b32.xlu0 %v1260, 127
    %v2083 = vpop.permute.xlu0 %2082
    %2084 = vrot.lane.b32.xlu0 %v1257, 127
    %v2085 = vpop.permute.xlu0 %2084
    %2086 = vrot.lane.b32.xlu0 %v1261, 127
    %v2087 = vpop.permute.xlu0 %2086
    %v2088 = vsel %vm1578, %v2081, %v2085
    %v2089 = vsel %vm1578, %v2083, %v2087
    %v2090 = vsel %vm1578, %v2077, %v2081
    %v2091 = vsel %vm1578, %v2079, %v2083
    %v2092 = vsel %vm1578, %v2073, %v2077
    %v2093 = vsel %vm1578, %v2075, %v2079
    %v2094 = vsel %vm1578, %v2085, %v2073
    %v2095 = vsel %vm1578, %v2087, %v2075
    %v2096 = vsel %vm1591, %v2092, 0.0
    %v2097 = vsel %vm1592, %v2090, 0.0
    %v2098 = vsel %vm1593, %v2088, 0.0
    %v2099 = vsel %vm1594, %v2094, 0.0
    %v2100 = vsel %vm1591, %v2093, 0.0
    %v2101 = vsel %vm1592, %v2091, 0.0
    %v2102 = vsel %vm1593, %v2089, 0.0
    %v2103 = vsel %vm1594, %v2095, 0.0
    %2104 = vset.pattern.permute.xlu0 5
    %2105 = vperm.xlu0 %2104, %v1272
    %v2106 = vpop.permute.xlu0 %2105
    %2108 = vset.pattern.permute.xlu0 5
    %2109 = vperm.xlu0 %2108, %v1273
    %v2110 = vpop.permute.xlu0 %2109
    %v2112 = vmul.f32 %v2096, %v2106
    %v2113 = vmul.f32 %v2097, %v2106
    %v2114 = vmul.f32 %v2098, %v2106
    %v2115 = vmul.f32 %v2099, %v2106
    %v2116 = vmul.f32 %v2100, %v2110
    %v2117 = vmul.f32 %v2101, %v2110
    %v2118 = vmul.f32 %v2102, %v2110
    %v2119 = vmul.f32 %v2103, %v2110
    %v2120 = vadd.f32 %v2064, %v2112
    %v2121 = vadd.f32 %v2065, %v2113
    %v2122 = vadd.f32 %v2066, %v2114
    %v2123 = vadd.f32 %v2067, %v2115
    %v2124 = vadd.f32 %v2068, %v2116
    %v2125 = vadd.f32 %v2069, %v2117
    %v2126 = vadd.f32 %v2070, %v2118
    %v2127 = vadd.f32 %v2071, %v2119
    %2128 = vrot.lane.b32.xlu0 %v1254, 113
    %v2129 = vpop.permute.xlu0 %2128
    %2130 = vrot.lane.b32.xlu0 %v1258, 113
    %v2131 = vpop.permute.xlu0 %2130
    %2132 = vrot.lane.b32.xlu0 %v1255, 113
    %v2133 = vpop.permute.xlu0 %2132
    %2134 = vrot.lane.b32.xlu0 %v1259, 113
    %v2135 = vpop.permute.xlu0 %2134
    %2136 = vrot.lane.b32.xlu0 %v1256, 113
    %v2137 = vpop.permute.xlu0 %2136
    %2138 = vrot.lane.b32.xlu0 %v1260, 113
    %v2139 = vpop.permute.xlu0 %2138
    %2140 = vrot.lane.b32.xlu0 %v1257, 113
    %v2141 = vpop.permute.xlu0 %2140
    %2142 = vrot.lane.b32.xlu0 %v1261, 113
    %v2143 = vpop.permute.xlu0 %2142
    %v2144 = vsel %vm1643, %v2137, %v2141
    %v2145 = vsel %vm1643, %v2139, %v2143
    %v2146 = vsel %vm1643, %v2133, %v2137
    %v2147 = vsel %vm1643, %v2135, %v2139
    %v2148 = vsel %vm1643, %v2129, %v2133
    %v2149 = vsel %vm1643, %v2131, %v2135
    %v2150 = vsel %vm1643, %v2141, %v2129
    %v2151 = vsel %vm1643, %v2143, %v2131
    %v2152 = vsel %vm1656, %v2148, 0.0
    %v2153 = vsel %vm1657, %v2146, 0.0
    %v2154 = vsel %vm1658, %v2144, 0.0
    %v2155 = vsel %vm1659, %v2150, 0.0
    %v2156 = vsel %vm1656, %v2149, 0.0
    %v2157 = vsel %vm1657, %v2147, 0.0
    %v2158 = vsel %vm1658, %v2145, 0.0
    %v2159 = vsel %vm1659, %v2151, 0.0
    %2160 = vset.pattern.permute.xlu0 6
    %2161 = vperm.xlu0 %2160, %v1272
    %v2162 = vpop.permute.xlu0 %2161
    %2164 = vset.pattern.permute.xlu0 6
    %2165 = vperm.xlu0 %2164, %v1273
    %v2166 = vpop.permute.xlu0 %2165
    %v2168 = vmul.f32 %v2152, %v2162
    %v2169 = vmul.f32 %v2153, %v2162
    %v2170 = vmul.f32 %v2154, %v2162
    %v2171 = vmul.f32 %v2155, %v2162
    %v2172 = vmul.f32 %v2156, %v2166
    %v2173 = vmul.f32 %v2157, %v2166
    %v2174 = vmul.f32 %v2158, %v2166
    %v2175 = vmul.f32 %v2159, %v2166
    %v2176 = vadd.f32 %v2120, %v2168
    %v2177 = vadd.f32 %v2121, %v2169
    %v2178 = vadd.f32 %v2122, %v2170
    %v2179 = vadd.f32 %v2123, %v2171
    %v2180 = vadd.f32 %v2124, %v2172
    %v2181 = vadd.f32 %v2125, %v2173
    %v2182 = vadd.f32 %v2126, %v2174
    %v2183 = vadd.f32 %v2127, %v2175
    %2184 = vrot.lane.b32.xlu0 %v1254, 112
    %v2185 = vpop.permute.xlu0 %2184
    %2186 = vrot.lane.b32.xlu0 %v1258, 112
    %v2187 = vpop.permute.xlu0 %2186
    %2188 = vrot.lane.b32.xlu0 %v1255, 112
    %v2189 = vpop.permute.xlu0 %2188
    %2190 = vrot.lane.b32.xlu0 %v1259, 112
    %v2191 = vpop.permute.xlu0 %2190
    %2192 = vrot.lane.b32.xlu0 %v1256, 112
    %v2193 = vpop.permute.xlu0 %2192
    %2194 = vrot.lane.b32.xlu0 %v1260, 112
    %v2195 = vpop.permute.xlu0 %2194
    %2196 = vrot.lane.b32.xlu0 %v1257, 112
    %v2197 = vpop.permute.xlu0 %2196
    %2198 = vrot.lane.b32.xlu0 %v1261, 112
    %v2199 = vpop.permute.xlu0 %2198
    %v2200 = vsel %vm1708, %v2193, %v2197
    %v2201 = vsel %vm1708, %v2195, %v2199
    %v2202 = vsel %vm1708, %v2189, %v2193
    %v2203 = vsel %vm1708, %v2191, %v2195
    %v2204 = vsel %vm1708, %v2185, %v2189
    %v2205 = vsel %vm1708, %v2187, %v2191
    %v2206 = vsel %vm1708, %v2197, %v2185
    %v2207 = vsel %vm1708, %v2199, %v2187
    %v2208 = vsel %vm1721, %v2204, 0.0
    %v2209 = vsel %vm1722, %v2202, 0.0
    %v2210 = vsel %vm1723, %v2200, 0.0
    %v2211 = vsel %vm1724, %v2206, 0.0
    %v2212 = vsel %vm1721, %v2205, 0.0
    %v2213 = vsel %vm1722, %v2203, 0.0
    %v2214 = vsel %vm1723, %v2201, 0.0
    %v2215 = vsel %vm1724, %v2207, 0.0
    %2216 = vset.pattern.permute.xlu0 7
    %2217 = vperm.xlu0 %2216, %v1272
    %v2218 = vpop.permute.xlu0 %2217
    %2220 = vset.pattern.permute.xlu0 7
    %2221 = vperm.xlu0 %2220, %v1273
    %v2222 = vpop.permute.xlu0 %2221
    %v2224 = vmul.f32 %v2208, %v2218
    %v2225 = vmul.f32 %v2209, %v2218
    %v2226 = vmul.f32 %v2210, %v2218
    %v2227 = vmul.f32 %v2211, %v2218
    %v2228 = vmul.f32 %v2212, %v2222
    %v2229 = vmul.f32 %v2213, %v2222
    %v2230 = vmul.f32 %v2214, %v2222
    %v2231 = vmul.f32 %v2215, %v2222
    %v2232 = vadd.f32 %v2176, %v2224
    %v2233 = vadd.f32 %v2177, %v2225
    %v2234 = vadd.f32 %v2178, %v2226
    %v2235 = vadd.f32 %v2179, %v2227
    %v2236 = vadd.f32 %v2180, %v2228
    %v2237 = vadd.f32 %v2181, %v2229
    %v2238 = vadd.f32 %v2182, %v2230
    %v2239 = vadd.f32 %v2183, %v2231
    %2240 = vrot.lane.b32.xlu0 %v1254, 111
    %v2241 = vpop.permute.xlu0 %2240
    %2242 = vrot.lane.b32.xlu0 %v1258, 111
    %v2243 = vpop.permute.xlu0 %2242
    %2244 = vrot.lane.b32.xlu0 %v1255, 111
    %v2245 = vpop.permute.xlu0 %2244
    %2246 = vrot.lane.b32.xlu0 %v1259, 111
    %v2247 = vpop.permute.xlu0 %2246
    %2248 = vrot.lane.b32.xlu0 %v1256, 111
    %v2249 = vpop.permute.xlu0 %2248
    %2250 = vrot.lane.b32.xlu0 %v1260, 111
    %v2251 = vpop.permute.xlu0 %2250
    %2252 = vrot.lane.b32.xlu0 %v1257, 111
    %v2253 = vpop.permute.xlu0 %2252
    %2254 = vrot.lane.b32.xlu0 %v1261, 111
    %v2255 = vpop.permute.xlu0 %2254
    %v2256 = vsel %vm1773, %v2249, %v2253
    %v2257 = vsel %vm1773, %v2251, %v2255
    %v2258 = vsel %vm1773, %v2245, %v2249
    %v2259 = vsel %vm1773, %v2247, %v2251
    %v2260 = vsel %vm1773, %v2241, %v2245
    %v2261 = vsel %vm1773, %v2243, %v2247
    %v2262 = vsel %vm1773, %v2253, %v2241
    %v2263 = vsel %vm1773, %v2255, %v2243
    %v2264 = vsel %vm1786, %v2260, 0.0
    %v2265 = vsel %vm1787, %v2258, 0.0
    %v2266 = vsel %vm1788, %v2256, 0.0
    %v2267 = vsel %vm1789, %v2262, 0.0
    %v2268 = vsel %vm1786, %v2261, 0.0
    %v2269 = vsel %vm1787, %v2259, 0.0
    %v2270 = vsel %vm1788, %v2257, 0.0
    %v2271 = vsel %vm1789, %v2263, 0.0
    %2272 = vset.pattern.permute.xlu0 8
    %2273 = vperm.xlu0 %2272, %v1272
    %v2274 = vpop.permute.xlu0 %2273
    %2276 = vset.pattern.permute.xlu0 8
    %2277 = vperm.xlu0 %2276, %v1273
    %v2278 = vpop.permute.xlu0 %2277
    %v2280 = vmul.f32 %v2264, %v2274
    %v2281 = vmul.f32 %v2265, %v2274
    %v2282 = vmul.f32 %v2266, %v2274
    %v2283 = vmul.f32 %v2267, %v2274
    %v2284 = vmul.f32 %v2268, %v2278
    %v2285 = vmul.f32 %v2269, %v2278
    %v2286 = vmul.f32 %v2270, %v2278
    %v2287 = vmul.f32 %v2271, %v2278
    %v2288 = vadd.f32 %v2232, %v2280
    %v2289 = vadd.f32 %v2233, %v2281
    %v2290 = vadd.f32 %v2234, %v2282
    %v2291 = vadd.f32 %v2235, %v2283
    %v2292 = vadd.f32 %v2236, %v2284
    %v2293 = vadd.f32 %v2237, %v2285
    %v2294 = vadd.f32 %v2238, %v2286
    %v2295 = vadd.f32 %v2239, %v2287
    %2296 = vrot.lane.b32.xlu0 %v1262, 17
    %v2297 = vpop.permute.xlu0 %2296
    %2298 = vrot.lane.b32.xlu0 %v1266, 17
    %v2299 = vpop.permute.xlu0 %2298
    %2300 = vrot.lane.b32.xlu0 %v1263, 17
    %v2301 = vpop.permute.xlu0 %2300
    %2302 = vrot.lane.b32.xlu0 %v1267, 17
    %v2303 = vpop.permute.xlu0 %2302
    %2304 = vrot.lane.b32.xlu0 %v1264, 17
    %v2305 = vpop.permute.xlu0 %2304
    %2306 = vrot.lane.b32.xlu0 %v1268, 17
    %v2307 = vpop.permute.xlu0 %2306
    %2308 = vrot.lane.b32.xlu0 %v1265, 17
    %v2309 = vpop.permute.xlu0 %2308
    %2310 = vrot.lane.b32.xlu0 %v1269, 17
    %v2311 = vpop.permute.xlu0 %2310
    %v2312 = vsel %vm1292, %v2305, %v2309
    %v2313 = vsel %vm1292, %v2307, %v2311
    %v2314 = vsel %vm1292, %v2301, %v2305
    %v2315 = vsel %vm1292, %v2303, %v2307
    %v2316 = vsel %vm1292, %v2297, %v2301
    %v2317 = vsel %vm1292, %v2299, %v2303
    %v2318 = vsel %vm1292, %v2309, %v2297
    %v2319 = vsel %vm1292, %v2311, %v2299
    %v2320 = vsel %vm1305, %v2318, 0.0
    %v2321 = vsel %vm1306, %v2316, 0.0
    %v2322 = vsel %vm1307, %v2314, 0.0
    %v2323 = vsel %vm1308, %v2312, 0.0
    %v2324 = vsel %vm1305, %v2319, 0.0
    %v2325 = vsel %vm1306, %v2317, 0.0
    %v2326 = vsel %vm1307, %v2315, 0.0
    %v2327 = vsel %vm1308, %v2313, 0.0
    %2329 = vset.pattern.permute.xlu0 0
    %2330 = vperm.xlu0 %2329, %v1274
    %v2331 = vpop.permute.xlu0 %2330
    %2334 = vset.pattern.permute.xlu0 0
    %2335 = vperm.xlu0 %2334, %v1275
    %v2336 = vpop.permute.xlu0 %2335
    %v2338 = vmul.f32 %v2320, %v2331
    %v2339 = vmul.f32 %v2321, %v2331
    %v2340 = vmul.f32 %v2322, %v2331
    %v2341 = vmul.f32 %v2323, %v2331
    %v2342 = vmul.f32 %v2324, %v2336
    %v2343 = vmul.f32 %v2325, %v2336
    %v2344 = vmul.f32 %v2326, %v2336
    %v2345 = vmul.f32 %v2327, %v2336
    %v2346 = vadd.f32 %v2338, 0.0
    %v2347 = vadd.f32 %v2339, 0.0
    %v2348 = vadd.f32 %v2340, 0.0
    %v2349 = vadd.f32 %v2341, 0.0
    %v2350 = vadd.f32 %v2342, 0.0
    %v2351 = vadd.f32 %v2343, 0.0
    %v2352 = vadd.f32 %v2344, 0.0
    %v2353 = vadd.f32 %v2345, 0.0
    %2354 = vrot.lane.b32.xlu0 %v1262, 16
    %v2355 = vpop.permute.xlu0 %2354
    %2356 = vrot.lane.b32.xlu0 %v1266, 16
    %v2357 = vpop.permute.xlu0 %2356
    %2358 = vrot.lane.b32.xlu0 %v1263, 16
    %v2359 = vpop.permute.xlu0 %2358
    %2360 = vrot.lane.b32.xlu0 %v1267, 16
    %v2361 = vpop.permute.xlu0 %2360
    %2362 = vrot.lane.b32.xlu0 %v1264, 16
    %v2363 = vpop.permute.xlu0 %2362
    %2364 = vrot.lane.b32.xlu0 %v1268, 16
    %v2365 = vpop.permute.xlu0 %2364
    %2366 = vrot.lane.b32.xlu0 %v1265, 16
    %v2367 = vpop.permute.xlu0 %2366
    %2368 = vrot.lane.b32.xlu0 %v1269, 16
    %v2369 = vpop.permute.xlu0 %2368
    %v2370 = vsel %vm1359, %v2363, %v2367
    %v2371 = vsel %vm1359, %v2365, %v2369
    %v2372 = vsel %vm1359, %v2359, %v2363
    %v2373 = vsel %vm1359, %v2361, %v2365
    %v2374 = vsel %vm1359, %v2355, %v2359
    %v2375 = vsel %vm1359, %v2357, %v2361
    %v2376 = vsel %vm1359, %v2367, %v2355
    %v2377 = vsel %vm1359, %v2369, %v2357
    %v2378 = vsel %vm1372, %v2376, 0.0
    %v2379 = vsel %vm1373, %v2374, 0.0
    %v2380 = vsel %vm1374, %v2372, 0.0
    %v2381 = vsel %vm1375, %v2370, 0.0
    %v2382 = vsel %vm1372, %v2377, 0.0
    %v2383 = vsel %vm1373, %v2375, 0.0
    %v2384 = vsel %vm1374, %v2373, 0.0
    %v2385 = vsel %vm1375, %v2371, 0.0
    %2386 = vset.pattern.permute.xlu0 1
    %2387 = vperm.xlu0 %2386, %v1274
    %v2388 = vpop.permute.xlu0 %2387
    %2390 = vset.pattern.permute.xlu0 1
    %2391 = vperm.xlu0 %2390, %v1275
    %v2392 = vpop.permute.xlu0 %2391
    %v2394 = vmul.f32 %v2378, %v2388
    %v2395 = vmul.f32 %v2379, %v2388
    %v2396 = vmul.f32 %v2380, %v2388
    %v2397 = vmul.f32 %v2381, %v2388
    %v2398 = vmul.f32 %v2382, %v2392
    %v2399 = vmul.f32 %v2383, %v2392
    %v2400 = vmul.f32 %v2384, %v2392
    %v2401 = vmul.f32 %v2385, %v2392
    %v2402 = vadd.f32 %v2346, %v2394
    %v2403 = vadd.f32 %v2347, %v2395
    %v2404 = vadd.f32 %v2348, %v2396
    %v2405 = vadd.f32 %v2349, %v2397
    %v2406 = vadd.f32 %v2350, %v2398
    %v2407 = vadd.f32 %v2351, %v2399
    %v2408 = vadd.f32 %v2352, %v2400
    %v2409 = vadd.f32 %v2353, %v2401
    %2410 = vrot.lane.b32.xlu0 %v1262, 15
    %v2411 = vpop.permute.xlu0 %2410
    %2412 = vrot.lane.b32.xlu0 %v1266, 15
    %v2413 = vpop.permute.xlu0 %2412
    %2414 = vrot.lane.b32.xlu0 %v1263, 15
    %v2415 = vpop.permute.xlu0 %2414
    %2416 = vrot.lane.b32.xlu0 %v1267, 15
    %v2417 = vpop.permute.xlu0 %2416
    %2418 = vrot.lane.b32.xlu0 %v1264, 15
    %v2419 = vpop.permute.xlu0 %2418
    %2420 = vrot.lane.b32.xlu0 %v1268, 15
    %v2421 = vpop.permute.xlu0 %2420
    %2422 = vrot.lane.b32.xlu0 %v1265, 15
    %v2423 = vpop.permute.xlu0 %2422
    %2424 = vrot.lane.b32.xlu0 %v1269, 15
    %v2425 = vpop.permute.xlu0 %2424
    %v2426 = vsel %vm1424, %v2419, %v2423
    %v2427 = vsel %vm1424, %v2421, %v2425
    %v2428 = vsel %vm1424, %v2415, %v2419
    %v2429 = vsel %vm1424, %v2417, %v2421
    %v2430 = vsel %vm1424, %v2411, %v2415
    %v2431 = vsel %vm1424, %v2413, %v2417
    %v2432 = vsel %vm1424, %v2423, %v2411
    %v2433 = vsel %vm1424, %v2425, %v2413
    %v2434 = vsel %vm1437, %v2432, 0.0
    %v2435 = vsel %vm1438, %v2430, 0.0
    %v2436 = vsel %vm1439, %v2428, 0.0
    %v2437 = vsel %vm1440, %v2426, 0.0
    %v2438 = vsel %vm1437, %v2433, 0.0
    %v2439 = vsel %vm1438, %v2431, 0.0
    %v2440 = vsel %vm1439, %v2429, 0.0
    %v2441 = vsel %vm1440, %v2427, 0.0
    %2442 = vset.pattern.permute.xlu0 2
    %2443 = vperm.xlu0 %2442, %v1274
    %v2444 = vpop.permute.xlu0 %2443
    %2446 = vset.pattern.permute.xlu0 2
    %2447 = vperm.xlu0 %2446, %v1275
    %v2448 = vpop.permute.xlu0 %2447
    %v2450 = vmul.f32 %v2434, %v2444
    %v2451 = vmul.f32 %v2435, %v2444
    %v2452 = vmul.f32 %v2436, %v2444
    %v2453 = vmul.f32 %v2437, %v2444
    %v2454 = vmul.f32 %v2438, %v2448
    %v2455 = vmul.f32 %v2439, %v2448
    %v2456 = vmul.f32 %v2440, %v2448
    %v2457 = vmul.f32 %v2441, %v2448
    %v2458 = vadd.f32 %v2402, %v2450
    %v2459 = vadd.f32 %v2403, %v2451
    %v2460 = vadd.f32 %v2404, %v2452
    %v2461 = vadd.f32 %v2405, %v2453
    %v2462 = vadd.f32 %v2406, %v2454
    %v2463 = vadd.f32 %v2407, %v2455
    %v2464 = vadd.f32 %v2408, %v2456
    %v2465 = vadd.f32 %v2409, %v2457
    %2466 = vrot.lane.b32.xlu0 %v1262, 1
    %v2467 = vpop.permute.xlu0 %2466
    %2468 = vrot.lane.b32.xlu0 %v1266, 1
    %v2469 = vpop.permute.xlu0 %2468
    %2470 = vrot.lane.b32.xlu0 %v1263, 1
    %v2471 = vpop.permute.xlu0 %2470
    %2472 = vrot.lane.b32.xlu0 %v1267, 1
    %v2473 = vpop.permute.xlu0 %2472
    %2474 = vrot.lane.b32.xlu0 %v1264, 1
    %v2475 = vpop.permute.xlu0 %2474
    %2476 = vrot.lane.b32.xlu0 %v1268, 1
    %v2477 = vpop.permute.xlu0 %2476
    %2478 = vrot.lane.b32.xlu0 %v1265, 1
    %v2479 = vpop.permute.xlu0 %2478
    %2480 = vrot.lane.b32.xlu0 %v1269, 1
    %v2481 = vpop.permute.xlu0 %2480
    %v2482 = vsel %vm1489, %v2475, %v2479
    %v2483 = vsel %vm1489, %v2477, %v2481
    %v2484 = vsel %vm1489, %v2471, %v2475
    %v2485 = vsel %vm1489, %v2473, %v2477
    %v2486 = vsel %vm1489, %v2467, %v2471
    %v2487 = vsel %vm1489, %v2469, %v2473
    %v2488 = vsel %vm1489, %v2479, %v2467
    %v2489 = vsel %vm1489, %v2481, %v2469
    %v2490 = vsel %vm1502, %v2488, 0.0
    %v2491 = vsel %vm1503, %v2486, 0.0
    %v2492 = vsel %vm1504, %v2484, 0.0
    %v2493 = vsel %vm1505, %v2482, 0.0
    %v2494 = vsel %vm1502, %v2489, 0.0
    %v2495 = vsel %vm1503, %v2487, 0.0
    %v2496 = vsel %vm1504, %v2485, 0.0
    %v2497 = vsel %vm1505, %v2483, 0.0
    %2498 = vset.pattern.permute.xlu0 3
    %2499 = vperm.xlu0 %2498, %v1274
    %v2500 = vpop.permute.xlu0 %2499
    %2502 = vset.pattern.permute.xlu0 3
    %2503 = vperm.xlu0 %2502, %v1275
    %v2504 = vpop.permute.xlu0 %2503
    %v2506 = vmul.f32 %v2490, %v2500
    %v2507 = vmul.f32 %v2491, %v2500
    %v2508 = vmul.f32 %v2492, %v2500
    %v2509 = vmul.f32 %v2493, %v2500
    %v2510 = vmul.f32 %v2494, %v2504
    %v2511 = vmul.f32 %v2495, %v2504
    %v2512 = vmul.f32 %v2496, %v2504
    %v2513 = vmul.f32 %v2497, %v2504
    %v2514 = vadd.f32 %v2458, %v2506
    %v2515 = vadd.f32 %v2459, %v2507
    %v2516 = vadd.f32 %v2460, %v2508
    %v2517 = vadd.f32 %v2461, %v2509
    %v2518 = vadd.f32 %v2462, %v2510
    %v2519 = vadd.f32 %v2463, %v2511
    %v2520 = vadd.f32 %v2464, %v2512
    %v2521 = vadd.f32 %v2465, %v2513
    %2522 = vset.pattern.permute.xlu0 4
    %2523 = vperm.xlu0 %2522, %v1274
    %v2524 = vpop.permute.xlu0 %2523
    %2526 = vset.pattern.permute.xlu0 4
    %2527 = vperm.xlu0 %2526, %v1275
    %v2528 = vpop.permute.xlu0 %2527
    %v2530 = vmul.f32 %v1262, %v2524
    %v2531 = vmul.f32 %v1263, %v2524
    %v2532 = vmul.f32 %v1264, %v2524
    %v2533 = vmul.f32 %v1265, %v2524
    %v2534 = vmul.f32 %v1266, %v2528
    %v2535 = vmul.f32 %v1267, %v2528
    %v2536 = vmul.f32 %v1268, %v2528
    %v2537 = vmul.f32 %v1269, %v2528
    %v2538 = vadd.f32 %v2514, %v2530
    %v2539 = vadd.f32 %v2515, %v2531
    %v2540 = vadd.f32 %v2516, %v2532
    %v2541 = vadd.f32 %v2517, %v2533
    %v2542 = vadd.f32 %v2518, %v2534
    %v2543 = vadd.f32 %v2519, %v2535
    %v2544 = vadd.f32 %v2520, %v2536
    %v2545 = vadd.f32 %v2521, %v2537
    %2546 = vrot.lane.b32.xlu0 %v1262, 127
    %v2547 = vpop.permute.xlu0 %2546
    %2548 = vrot.lane.b32.xlu0 %v1266, 127
    %v2549 = vpop.permute.xlu0 %2548
    %2550 = vrot.lane.b32.xlu0 %v1263, 127
    %v2551 = vpop.permute.xlu0 %2550
    %2552 = vrot.lane.b32.xlu0 %v1267, 127
    %v2553 = vpop.permute.xlu0 %2552
    %2554 = vrot.lane.b32.xlu0 %v1264, 127
    %v2555 = vpop.permute.xlu0 %2554
    %2556 = vrot.lane.b32.xlu0 %v1268, 127
    %v2557 = vpop.permute.xlu0 %2556
    %2558 = vrot.lane.b32.xlu0 %v1265, 127
    %v2559 = vpop.permute.xlu0 %2558
    %2560 = vrot.lane.b32.xlu0 %v1269, 127
    %v2561 = vpop.permute.xlu0 %2560
    %v2562 = vsel %vm1578, %v2555, %v2559
    %v2563 = vsel %vm1578, %v2557, %v2561
    %v2564 = vsel %vm1578, %v2551, %v2555
    %v2565 = vsel %vm1578, %v2553, %v2557
    %v2566 = vsel %vm1578, %v2547, %v2551
    %v2567 = vsel %vm1578, %v2549, %v2553
    %v2568 = vsel %vm1578, %v2559, %v2547
    %v2569 = vsel %vm1578, %v2561, %v2549
    %v2570 = vsel %vm1591, %v2566, 0.0
    %v2571 = vsel %vm1592, %v2564, 0.0
    %v2572 = vsel %vm1593, %v2562, 0.0
    %v2573 = vsel %vm1594, %v2568, 0.0
    %v2574 = vsel %vm1591, %v2567, 0.0
    %v2575 = vsel %vm1592, %v2565, 0.0
    %v2576 = vsel %vm1593, %v2563, 0.0
    %v2577 = vsel %vm1594, %v2569, 0.0
    %2578 = vset.pattern.permute.xlu0 5
    %2579 = vperm.xlu0 %2578, %v1274
    %v2580 = vpop.permute.xlu0 %2579
    %2582 = vset.pattern.permute.xlu0 5
    %2583 = vperm.xlu0 %2582, %v1275
    %v2584 = vpop.permute.xlu0 %2583
    %v2586 = vmul.f32 %v2570, %v2580
    %v2587 = vmul.f32 %v2571, %v2580
    %v2588 = vmul.f32 %v2572, %v2580
    %v2589 = vmul.f32 %v2573, %v2580
    %v2590 = vmul.f32 %v2574, %v2584
    %v2591 = vmul.f32 %v2575, %v2584
    %v2592 = vmul.f32 %v2576, %v2584
    %v2593 = vmul.f32 %v2577, %v2584
    %v2594 = vadd.f32 %v2538, %v2586
    %v2595 = vadd.f32 %v2539, %v2587
    %v2596 = vadd.f32 %v2540, %v2588
    %v2597 = vadd.f32 %v2541, %v2589
    %v2598 = vadd.f32 %v2542, %v2590
    %v2599 = vadd.f32 %v2543, %v2591
    %v2600 = vadd.f32 %v2544, %v2592
    %v2601 = vadd.f32 %v2545, %v2593
    %2602 = vrot.lane.b32.xlu0 %v1262, 113
    %v2603 = vpop.permute.xlu0 %2602
    %2604 = vrot.lane.b32.xlu0 %v1266, 113
    %v2605 = vpop.permute.xlu0 %2604
    %2606 = vrot.lane.b32.xlu0 %v1263, 113
    %v2607 = vpop.permute.xlu0 %2606
    %2608 = vrot.lane.b32.xlu0 %v1267, 113
    %v2609 = vpop.permute.xlu0 %2608
    %2610 = vrot.lane.b32.xlu0 %v1264, 113
    %v2611 = vpop.permute.xlu0 %2610
    %2612 = vrot.lane.b32.xlu0 %v1268, 113
    %v2613 = vpop.permute.xlu0 %2612
    %2614 = vrot.lane.b32.xlu0 %v1265, 113
    %v2615 = vpop.permute.xlu0 %2614
    %2616 = vrot.lane.b32.xlu0 %v1269, 113
    %v2617 = vpop.permute.xlu0 %2616
    %v2618 = vsel %vm1643, %v2611, %v2615
    %v2619 = vsel %vm1643, %v2613, %v2617
    %v2620 = vsel %vm1643, %v2607, %v2611
    %v2621 = vsel %vm1643, %v2609, %v2613
    %v2622 = vsel %vm1643, %v2603, %v2607
    %v2623 = vsel %vm1643, %v2605, %v2609
    %v2624 = vsel %vm1643, %v2615, %v2603
    %v2625 = vsel %vm1643, %v2617, %v2605
    %v2626 = vsel %vm1656, %v2622, 0.0
    %v2627 = vsel %vm1657, %v2620, 0.0
    %v2628 = vsel %vm1658, %v2618, 0.0
    %v2629 = vsel %vm1659, %v2624, 0.0
    %v2630 = vsel %vm1656, %v2623, 0.0
    %v2631 = vsel %vm1657, %v2621, 0.0
    %v2632 = vsel %vm1658, %v2619, 0.0
    %v2633 = vsel %vm1659, %v2625, 0.0
    %2634 = vset.pattern.permute.xlu0 6
    %2635 = vperm.xlu0 %2634, %v1274
    %v2636 = vpop.permute.xlu0 %2635
    %2638 = vset.pattern.permute.xlu0 6
    %2639 = vperm.xlu0 %2638, %v1275
    %v2640 = vpop.permute.xlu0 %2639
    %v2642 = vmul.f32 %v2626, %v2636
    %v2643 = vmul.f32 %v2627, %v2636
    %v2644 = vmul.f32 %v2628, %v2636
    %v2645 = vmul.f32 %v2629, %v2636
    %v2646 = vmul.f32 %v2630, %v2640
    %v2647 = vmul.f32 %v2631, %v2640
    %v2648 = vmul.f32 %v2632, %v2640
    %v2649 = vmul.f32 %v2633, %v2640
    %v2650 = vadd.f32 %v2594, %v2642
    %v2651 = vadd.f32 %v2595, %v2643
    %v2652 = vadd.f32 %v2596, %v2644
    %v2653 = vadd.f32 %v2597, %v2645
    %v2654 = vadd.f32 %v2598, %v2646
    %v2655 = vadd.f32 %v2599, %v2647
    %v2656 = vadd.f32 %v2600, %v2648
    %v2657 = vadd.f32 %v2601, %v2649
    %2658 = vrot.lane.b32.xlu0 %v1262, 112
    %v2659 = vpop.permute.xlu0 %2658
    %2660 = vrot.lane.b32.xlu0 %v1266, 112
    %v2661 = vpop.permute.xlu0 %2660
    %2662 = vrot.lane.b32.xlu0 %v1263, 112
    %v2663 = vpop.permute.xlu0 %2662
    %2664 = vrot.lane.b32.xlu0 %v1267, 112
    %v2665 = vpop.permute.xlu0 %2664
    %2666 = vrot.lane.b32.xlu0 %v1264, 112
    %v2667 = vpop.permute.xlu0 %2666
    %2668 = vrot.lane.b32.xlu0 %v1268, 112
    %v2669 = vpop.permute.xlu0 %2668
    %2670 = vrot.lane.b32.xlu0 %v1265, 112
    %v2671 = vpop.permute.xlu0 %2670
    %2672 = vrot.lane.b32.xlu0 %v1269, 112
    %v2673 = vpop.permute.xlu0 %2672
    %v2674 = vsel %vm1708, %v2667, %v2671
    %v2675 = vsel %vm1708, %v2669, %v2673
    %v2676 = vsel %vm1708, %v2663, %v2667
    %v2677 = vsel %vm1708, %v2665, %v2669
    %v2678 = vsel %vm1708, %v2659, %v2663
    %v2679 = vsel %vm1708, %v2661, %v2665
    %v2680 = vsel %vm1708, %v2671, %v2659
    %v2681 = vsel %vm1708, %v2673, %v2661
    %v2682 = vsel %vm1721, %v2678, 0.0
    %v2683 = vsel %vm1722, %v2676, 0.0
    %v2684 = vsel %vm1723, %v2674, 0.0
    %v2685 = vsel %vm1724, %v2680, 0.0
    %v2686 = vsel %vm1721, %v2679, 0.0
    %v2687 = vsel %vm1722, %v2677, 0.0
    %v2688 = vsel %vm1723, %v2675, 0.0
    %v2689 = vsel %vm1724, %v2681, 0.0
    %2690 = vset.pattern.permute.xlu0 7
    %2691 = vperm.xlu0 %2690, %v1274
    %v2692 = vpop.permute.xlu0 %2691
    %2694 = vset.pattern.permute.xlu0 7
    %2695 = vperm.xlu0 %2694, %v1275
    %v2696 = vpop.permute.xlu0 %2695
    %v2698 = vmul.f32 %v2682, %v2692
    %v2699 = vmul.f32 %v2683, %v2692
    %v2700 = vmul.f32 %v2684, %v2692
    %v2701 = vmul.f32 %v2685, %v2692
    %v2702 = vmul.f32 %v2686, %v2696
    %v2703 = vmul.f32 %v2687, %v2696
    %v2704 = vmul.f32 %v2688, %v2696
    %v2705 = vmul.f32 %v2689, %v2696
    %v2706 = vadd.f32 %v2650, %v2698
    %v2707 = vadd.f32 %v2651, %v2699
    %v2708 = vadd.f32 %v2652, %v2700
    %v2709 = vadd.f32 %v2653, %v2701
    %v2710 = vadd.f32 %v2654, %v2702
    %v2711 = vadd.f32 %v2655, %v2703
    %v2712 = vadd.f32 %v2656, %v2704
    %v2713 = vadd.f32 %v2657, %v2705
    %2714 = vrot.lane.b32.xlu0 %v1262, 111
    %v2715 = vpop.permute.xlu0 %2714
    %2716 = vrot.lane.b32.xlu0 %v1266, 111
    %v2717 = vpop.permute.xlu0 %2716
    %2718 = vrot.lane.b32.xlu0 %v1263, 111
    %v2719 = vpop.permute.xlu0 %2718
    %2720 = vrot.lane.b32.xlu0 %v1267, 111
    %v2721 = vpop.permute.xlu0 %2720
    %2722 = vrot.lane.b32.xlu0 %v1264, 111
    %v2723 = vpop.permute.xlu0 %2722
    %2724 = vrot.lane.b32.xlu0 %v1268, 111
    %v2725 = vpop.permute.xlu0 %2724
    %2726 = vrot.lane.b32.xlu0 %v1265, 111
    %v2727 = vpop.permute.xlu0 %2726
    %2728 = vrot.lane.b32.xlu0 %v1269, 111
    %v2729 = vpop.permute.xlu0 %2728
    %v2730 = vsel %vm1773, %v2723, %v2727
    %v2731 = vsel %vm1773, %v2725, %v2729
    %v2732 = vsel %vm1773, %v2719, %v2723
    %v2733 = vsel %vm1773, %v2721, %v2725
    %v2734 = vsel %vm1773, %v2715, %v2719
    %v2735 = vsel %vm1773, %v2717, %v2721
    %v2736 = vsel %vm1773, %v2727, %v2715
    %v2737 = vsel %vm1773, %v2729, %v2717
    %v2738 = vsel %vm1786, %v2734, 0.0
    %v2739 = vsel %vm1787, %v2732, 0.0
    %v2740 = vsel %vm1788, %v2730, 0.0
    %v2741 = vsel %vm1789, %v2736, 0.0
    %v2742 = vsel %vm1786, %v2735, 0.0
    %v2743 = vsel %vm1787, %v2733, 0.0
    %v2744 = vsel %vm1788, %v2731, 0.0
    %v2745 = vsel %vm1789, %v2737, 0.0
    %2746 = vset.pattern.permute.xlu0 8
    %2747 = vperm.xlu0 %2746, %v1274
    %v2748 = vpop.permute.xlu0 %2747
    %2750 = vset.pattern.permute.xlu0 8
    %2751 = vperm.xlu0 %2750, %v1275
    %v2752 = vpop.permute.xlu0 %2751
    %v2754 = vmul.f32 %v2738, %v2748
    %v2755 = vmul.f32 %v2739, %v2748
    %v2756 = vmul.f32 %v2740, %v2748
    %v2757 = vmul.f32 %v2741, %v2748
    %v2758 = vmul.f32 %v2742, %v2752
    %v2759 = vmul.f32 %v2743, %v2752
    %v2760 = vmul.f32 %v2744, %v2752
    %v2761 = vmul.f32 %v2745, %v2752
    %v2762 = vadd.f32 %v2706, %v2754
    %v2763 = vadd.f32 %v2707, %v2755
    %v2764 = vadd.f32 %v2708, %v2756
    %v2765 = vadd.f32 %v2709, %v2757
    %v2766 = vadd.f32 %v2710, %v2758
    %v2767 = vadd.f32 %v2711, %v2759
    %v2768 = vadd.f32 %v2712, %v2760
    %v2769 = vadd.f32 %v2713, %v2761
    %v2770 = vld [vmem:[%s5] sm:$0xff]
    %v2771 = vld [vmem:[%s5 + $0x8] sm:$0xff]
    %v2772 = vld [vmem:[%s5 + $0x10] sm:$0xff]
    %v2773 = vld [vmem:[%s5 + $0x18] sm:$0xff]
    %v2774 = vld [vmem:[%s5 + $0x20] sm:$0xff]
    %v2775 = vld [vmem:[%s5 + $0x28] sm:$0xff]
    %v2776 = vld [vmem:[%s6] sm:$0xff]
    %v2777 = vld [vmem:[%s6 + $0x8] sm:$0xff]
    %v2778 = vld [vmem:[%s6 + $0x10] sm:$0xff]
    %v2779 = vld [vmem:[%s6 + $0x18] sm:$0xff]
    %v2780 = vld [vmem:[%s6 + $0x20] sm:$0xff]
    %v2781 = vld [vmem:[%s6 + $0x28] sm:$0xff]
    %v2782 = vadd.f32 %v1814, %v1815
    %v2783 = vadd.f32 %v2782, %v1816
    %v2784 = vadd.f32 %v2783, %v1817
    %2785 = vadd.xlane.f32.xlu0 %v2784
    %v2786 = vpop.xlane.xlu0 %2785
    %v2787 = vadd.f32 %v1818, %v1819
    %v2788 = vadd.f32 %v2787, %v1820
    %v2789 = vadd.f32 %v2788, %v1821
    %2790 = vadd.xlane.f32.xlu0 %v2789
    %v2791 = vpop.xlane.xlu0 %2790
    %v2792 = vadd.f32 %v2288, %v2289
    %v2793 = vadd.f32 %v2792, %v2290
    %v2794 = vadd.f32 %v2793, %v2291
    %2795 = vadd.xlane.f32.xlu0 %v2794
    %v2796 = vpop.xlane.xlu0 %2795
    %v2797 = vadd.f32 %v2292, %v2293
    %v2798 = vadd.f32 %v2797, %v2294
    %v2799 = vadd.f32 %v2798, %v2295
    %2800 = vadd.xlane.f32.xlu0 %v2799
    %v2801 = vpop.xlane.xlu0 %2800
    %v2802 = vadd.f32 %v2762, %v2763
    %v2803 = vadd.f32 %v2802, %v2764
    %v2804 = vadd.f32 %v2803, %v2765
    %2805 = vadd.xlane.f32.xlu0 %v2804
    %v2806 = vpop.xlane.xlu0 %2805
    %v2807 = vadd.f32 %v2766, %v2767
    %v2808 = vadd.f32 %v2807, %v2768
    %v2809 = vadd.f32 %v2808, %v2769
    %2810 = vadd.xlane.f32.xlu0 %v2809
    %v2811 = vpop.xlane.xlu0 %2810
    %v2812 = vmul.f32 %v2786, 0.001953125
    %v2813 = vmul.f32 %v2791, 0.001953125
    %v2814 = vmul.f32 %v2796, 0.001953125
    %v2815 = vmul.f32 %v2801, 0.001953125
    %v2816 = vmul.f32 %v2806, 0.001953125
    %v2817 = vmul.f32 %v2811, 0.001953125
    %v2818 = vmul.f32 %v1814, %v1814
    %v2819 = vmul.f32 %v1815, %v1815
    %v2820 = vmul.f32 %v1816, %v1816
    %v2821 = vmul.f32 %v1817, %v1817
    %v2822 = vmul.f32 %v1818, %v1818
    %v2823 = vmul.f32 %v1819, %v1819
    %v2824 = vmul.f32 %v1820, %v1820
    %v2825 = vmul.f32 %v1821, %v1821
    %v2826 = vmul.f32 %v2288, %v2288
    %v2827 = vmul.f32 %v2289, %v2289
    %v2828 = vmul.f32 %v2290, %v2290
    %v2829 = vmul.f32 %v2291, %v2291
    %v2830 = vmul.f32 %v2292, %v2292
    %v2831 = vmul.f32 %v2293, %v2293
    %v2832 = vmul.f32 %v2294, %v2294
    %v2833 = vmul.f32 %v2295, %v2295
    %v2834 = vmul.f32 %v2762, %v2762
    %v2835 = vmul.f32 %v2763, %v2763
    %v2836 = vmul.f32 %v2764, %v2764
    %v2837 = vmul.f32 %v2765, %v2765
    %v2838 = vmul.f32 %v2766, %v2766
    %v2839 = vmul.f32 %v2767, %v2767
    %v2840 = vmul.f32 %v2768, %v2768
    %v2841 = vmul.f32 %v2769, %v2769
    %v2842 = vadd.f32 %v2818, %v2819
    %v2843 = vadd.f32 %v2842, %v2820
    %v2844 = vadd.f32 %v2843, %v2821
    %2845 = vadd.xlane.f32.xlu0 %v2844
    %v2846 = vpop.xlane.xlu0 %2845
    %v2847 = vadd.f32 %v2822, %v2823
    %v2848 = vadd.f32 %v2847, %v2824
    %v2849 = vadd.f32 %v2848, %v2825
    %2850 = vadd.xlane.f32.xlu0 %v2849
    %v2851 = vpop.xlane.xlu0 %2850
    %v2852 = vadd.f32 %v2826, %v2827
    %v2853 = vadd.f32 %v2852, %v2828
    %v2854 = vadd.f32 %v2853, %v2829
    %2855 = vadd.xlane.f32.xlu0 %v2854
    %v2856 = vpop.xlane.xlu0 %2855
    %v2857 = vadd.f32 %v2830, %v2831
    %v2858 = vadd.f32 %v2857, %v2832
    %v2859 = vadd.f32 %v2858, %v2833
    %2860 = vadd.xlane.f32.xlu0 %v2859
    %v2861 = vpop.xlane.xlu0 %2860
    %v2862 = vadd.f32 %v2834, %v2835
    %v2863 = vadd.f32 %v2862, %v2836
    %v2864 = vadd.f32 %v2863, %v2837
    %2865 = vadd.xlane.f32.xlu0 %v2864
    %v2866 = vpop.xlane.xlu0 %2865
    %v2867 = vadd.f32 %v2838, %v2839
    %v2868 = vadd.f32 %v2867, %v2840
    %v2869 = vadd.f32 %v2868, %v2841
    %2870 = vadd.xlane.f32.xlu0 %v2869
    %v2871 = vpop.xlane.xlu0 %2870
    %v2872 = vmul.f32 %v2846, 0.001953125
    %v2873 = vmul.f32 %v2851, 0.001953125
    %v2874 = vmul.f32 %v2856, 0.001953125
    %v2875 = vmul.f32 %v2861, 0.001953125
    %v2876 = vmul.f32 %v2866, 0.001953125
    %v2877 = vmul.f32 %v2871, 0.001953125
    %v2878 = vmul.f32 %v2812, %v2812
    %v2879 = vmul.f32 %v2813, %v2813
    %v2880 = vmul.f32 %v2814, %v2814
    %v2881 = vmul.f32 %v2815, %v2815
    %v2882 = vmul.f32 %v2816, %v2816
    %v2883 = vmul.f32 %v2817, %v2817
    %v2884 = vsub.f32 %v2872, %v2878
    %v2885 = vsub.f32 %v2873, %v2879
    %v2886 = vsub.f32 %v2874, %v2880
    %v2887 = vsub.f32 %v2875, %v2881
    %v2888 = vsub.f32 %v2876, %v2882
    %v2889 = vsub.f32 %v2877, %v2883
    %v2890 = vmax.f32 %v2884, 0.0
    %v2891 = vmax.f32 %v2885, 0.0
    %v2892 = vmax.f32 %v2886, 0.0
    %v2893 = vmax.f32 %v2887, 0.0
    %v2894 = vmax.f32 %v2888, 0.0
    %v2895 = vmax.f32 %v2889, 0.0
    %v2896 = vsub.f32 %v1814, %v2812
    %v2897 = vsub.f32 %v1815, %v2812
    %v2898 = vsub.f32 %v1816, %v2812
    %v2899 = vsub.f32 %v1817, %v2812
    %v2900 = vsub.f32 %v1818, %v2813
    %v2901 = vsub.f32 %v1819, %v2813
    %v2902 = vsub.f32 %v1820, %v2813
    %v2903 = vsub.f32 %v1821, %v2813
    %v2904 = vsub.f32 %v2288, %v2814
    %v2905 = vsub.f32 %v2289, %v2814
    %v2906 = vsub.f32 %v2290, %v2814
    %v2907 = vsub.f32 %v2291, %v2814
    %v2908 = vsub.f32 %v2292, %v2815
    %v2909 = vsub.f32 %v2293, %v2815
    %v2910 = vsub.f32 %v2294, %v2815
    %v2911 = vsub.f32 %v2295, %v2815
    %v2912 = vsub.f32 %v2762, %v2816
    %v2913 = vsub.f32 %v2763, %v2816
    %v2914 = vsub.f32 %v2764, %v2816
    %v2915 = vsub.f32 %v2765, %v2816
    %v2916 = vsub.f32 %v2766, %v2817
    %v2917 = vsub.f32 %v2767, %v2817
    %v2918 = vsub.f32 %v2768, %v2817
    %v2919 = vsub.f32 %v2769, %v2817
    %v2920 = vadd.f32 %v2890, 1e-05
    %v2921 = vadd.f32 %v2891, 1e-05
    %v2922 = vadd.f32 %v2892, 1e-05
    %v2923 = vadd.f32 %v2893, 1e-05
    %v2924 = vadd.f32 %v2894, 1e-05
    %v2925 = vadd.f32 %v2895, 1e-05
    %v2926 = vrsqrt.pop %v2920
    %v2927 = vmul.f32 %v2926, %v2920
    %v2928 = vmul.f32 %v2927, %v2926
    %v2929 = vmul.f32 0.5, %v2928
    %v2930 = vsub.f32 1.5, %v2929
    %v2931 = vmul.f32 %v2926, %v2930
    %vm2932 = vweird.f32 %v2920
    %vm2933 = vweird.f32 %v2926
    %vm2934 = vmor %vm2932, %vm2933
    %v2935 = vsel %vm2934, %v2926, %v2931
    %v2936 = vrsqrt.pop %v2921
    %v2937 = vmul.f32 %v2936, %v2921
    %v2938 = vmul.f32 %v2937, %v2936
    %v2939 = vmul.f32 0.5, %v2938
    %v2940 = vsub.f32 1.5, %v2939
    %v2941 = vmul.f32 %v2936, %v2940
    %vm2942 = vweird.f32 %v2921
    %vm2943 = vweird.f32 %v2936
    %vm2944 = vmor %vm2942, %vm2943
    %v2945 = vsel %vm2944, %v2936, %v2941
    %v2946 = vrsqrt.pop %v2922
    %v2947 = vmul.f32 %v2946, %v2922
    %v2948 = vmul.f32 %v2947, %v2946
    %v2949 = vmul.f32 0.5, %v2948
    %v2950 = vsub.f32 1.5, %v2949
    %v2951 = vmul.f32 %v2946, %v2950
    %vm2952 = vweird.f32 %v2922
    %vm2953 = vweird.f32 %v2946
    %vm2954 = vmor %vm2952, %vm2953
    %v2955 = vsel %vm2954, %v2946, %v2951
    %v2956 = vrsqrt.pop %v2923
    %v2957 = vmul.f32 %v2956, %v2923
    %v2958 = vmul.f32 %v2957, %v2956
    %v2959 = vmul.f32 0.5, %v2958
    %v2960 = vsub.f32 1.5, %v2959
    %v2961 = vmul.f32 %v2956, %v2960
    %vm2962 = vweird.f32 %v2923
    %vm2963 = vweird.f32 %v2956
    %vm2964 = vmor %vm2962, %vm2963
    %v2965 = vsel %vm2964, %v2956, %v2961
    %v2966 = vrsqrt.pop %v2924
    %v2967 = vmul.f32 %v2966, %v2924
    %v2968 = vmul.f32 %v2967, %v2966
    %v2969 = vmul.f32 0.5, %v2968
    %v2970 = vsub.f32 1.5, %v2969
    %v2971 = vmul.f32 %v2966, %v2970
    %vm2972 = vweird.f32 %v2924
    %vm2973 = vweird.f32 %v2966
    %vm2974 = vmor %vm2972, %vm2973
    %v2975 = vsel %vm2974, %v2966, %v2971
    %v2976 = vrsqrt.pop %v2925
    %v2977 = vmul.f32 %v2976, %v2925
    %v2978 = vmul.f32 %v2977, %v2976
    %v2979 = vmul.f32 0.5, %v2978
    %v2980 = vsub.f32 1.5, %v2979
    %v2981 = vmul.f32 %v2976, %v2980
    %vm2982 = vweird.f32 %v2925
    %vm2983 = vweird.f32 %v2976
    %vm2984 = vmor %vm2982, %vm2983
    %v2985 = vsel %vm2984, %v2976, %v2981
    %v2986 = vmul.f32 %v2896, %v2935
    %v2987 = vmul.f32 %v2897, %v2935
    %v2988 = vmul.f32 %v2898, %v2935
    %v2989 = vmul.f32 %v2899, %v2935
    %v2990 = vmul.f32 %v2900, %v2945
    %v2991 = vmul.f32 %v2901, %v2945
    %v2992 = vmul.f32 %v2902, %v2945
    %v2993 = vmul.f32 %v2903, %v2945
    %v2994 = vmul.f32 %v2904, %v2955
    %v2995 = vmul.f32 %v2905, %v2955
    %v2996 = vmul.f32 %v2906, %v2955
    %v2997 = vmul.f32 %v2907, %v2955
    %v2998 = vmul.f32 %v2908, %v2965
    %v2999 = vmul.f32 %v2909, %v2965
    %v3000 = vmul.f32 %v2910, %v2965
    %v3001 = vmul.f32 %v2911, %v2965
    %v3002 = vmul.f32 %v2912, %v2975
    %v3003 = vmul.f32 %v2913, %v2975
    %v3004 = vmul.f32 %v2914, %v2975
    %v3005 = vmul.f32 %v2915, %v2975
    %v3006 = vmul.f32 %v2916, %v2985
    %v3007 = vmul.f32 %v2917, %v2985
    %v3008 = vmul.f32 %v2918, %v2985
    %v3009 = vmul.f32 %v2919, %v2985
    %3011 = vset.pattern.permute.xlu0 0
    %3012 = vperm.xlu0 %3011, %v2770
    %v3013 = vpop.permute.xlu0 %3012
    %3016 = vset.pattern.permute.xlu0 0
    %3017 = vperm.xlu0 %3016, %v2771
    %v3018 = vpop.permute.xlu0 %3017
    %3021 = vset.pattern.permute.xlu0 0
    %3022 = vperm.xlu0 %3021, %v2772
    %v3023 = vpop.permute.xlu0 %3022
    %3026 = vset.pattern.permute.xlu0 0
    %3027 = vperm.xlu0 %3026, %v2773
    %v3028 = vpop.permute.xlu0 %3027
    %3031 = vset.pattern.permute.xlu0 0
    %3032 = vperm.xlu0 %3031, %v2774
    %v3033 = vpop.permute.xlu0 %3032
    %3036 = vset.pattern.permute.xlu0 0
    %3037 = vperm.xlu0 %3036, %v2775
    %v3038 = vpop.permute.xlu0 %3037
    %v3040 = vmul.f32 %v2986, %v3013
    %v3041 = vmul.f32 %v2987, %v3013
    %v3042 = vmul.f32 %v2988, %v3013
    %v3043 = vmul.f32 %v2989, %v3013
    %v3044 = vmul.f32 %v2990, %v3018
    %v3045 = vmul.f32 %v2991, %v3018
    %v3046 = vmul.f32 %v2992, %v3018
    %v3047 = vmul.f32 %v2993, %v3018
    %v3048 = vmul.f32 %v2994, %v3023
    %v3049 = vmul.f32 %v2995, %v3023
    %v3050 = vmul.f32 %v2996, %v3023
    %v3051 = vmul.f32 %v2997, %v3023
    %v3052 = vmul.f32 %v2998, %v3028
    %v3053 = vmul.f32 %v2999, %v3028
    %v3054 = vmul.f32 %v3000, %v3028
    %v3055 = vmul.f32 %v3001, %v3028
    %v3056 = vmul.f32 %v3002, %v3033
    %v3057 = vmul.f32 %v3003, %v3033
    %v3058 = vmul.f32 %v3004, %v3033
    %v3059 = vmul.f32 %v3005, %v3033
    %v3060 = vmul.f32 %v3006, %v3038
    %v3061 = vmul.f32 %v3007, %v3038
    %v3062 = vmul.f32 %v3008, %v3038
    %v3063 = vmul.f32 %v3009, %v3038
    %3065 = vset.pattern.permute.xlu0 0
    %3066 = vperm.xlu0 %3065, %v2776
    %v3067 = vpop.permute.xlu0 %3066
    %3070 = vset.pattern.permute.xlu0 0
    %3071 = vperm.xlu0 %3070, %v2777
    %v3072 = vpop.permute.xlu0 %3071
    %3075 = vset.pattern.permute.xlu0 0
    %3076 = vperm.xlu0 %3075, %v2778
    %v3077 = vpop.permute.xlu0 %3076
    %3080 = vset.pattern.permute.xlu0 0
    %3081 = vperm.xlu0 %3080, %v2779
    %v3082 = vpop.permute.xlu0 %3081
    %3085 = vset.pattern.permute.xlu0 0
    %3086 = vperm.xlu0 %3085, %v2780
    %v3087 = vpop.permute.xlu0 %3086
    %3090 = vset.pattern.permute.xlu0 0
    %3091 = vperm.xlu0 %3090, %v2781
    %v3092 = vpop.permute.xlu0 %3091
    %v3094 = vadd.f32 %v3040, %v3067
    %v3095 = vadd.f32 %v3041, %v3067
    %v3096 = vadd.f32 %v3042, %v3067
    %v3097 = vadd.f32 %v3043, %v3067
    %v3098 = vadd.f32 %v3044, %v3072
    %v3099 = vadd.f32 %v3045, %v3072
    %v3100 = vadd.f32 %v3046, %v3072
    %v3101 = vadd.f32 %v3047, %v3072
    %v3102 = vadd.f32 %v3048, %v3077
    %v3103 = vadd.f32 %v3049, %v3077
    %v3104 = vadd.f32 %v3050, %v3077
    %v3105 = vadd.f32 %v3051, %v3077
    %v3106 = vadd.f32 %v3052, %v3082
    %v3107 = vadd.f32 %v3053, %v3082
    %v3108 = vadd.f32 %v3054, %v3082
    %v3109 = vadd.f32 %v3055, %v3082
    %v3110 = vadd.f32 %v3056, %v3087
    %v3111 = vadd.f32 %v3057, %v3087
    %v3112 = vadd.f32 %v3058, %v3087
    %v3113 = vadd.f32 %v3059, %v3087
    %v3114 = vadd.f32 %v3060, %v3092
    %v3115 = vadd.f32 %v3061, %v3092
    %v3116 = vadd.f32 %v3062, %v3092
    %v3117 = vadd.f32 %v3063, %v3092
    %v3118 = vxor.u32 %v3094, 2147483648
    %v3119 = vxor.u32 %v3095, 2147483648
    %v3120 = vxor.u32 %v3096, 2147483648
    %v3121 = vxor.u32 %v3097, 2147483648
    %v3122 = vxor.u32 %v3098, 2147483648
    %v3123 = vxor.u32 %v3099, 2147483648
    %v3124 = vxor.u32 %v3100, 2147483648
    %v3125 = vxor.u32 %v3101, 2147483648
    %v3126 = vxor.u32 %v3102, 2147483648
    %v3127 = vxor.u32 %v3103, 2147483648
    %v3128 = vxor.u32 %v3104, 2147483648
    %v3129 = vxor.u32 %v3105, 2147483648
    %v3130 = vxor.u32 %v3106, 2147483648
    %v3131 = vxor.u32 %v3107, 2147483648
    %v3132 = vxor.u32 %v3108, 2147483648
    %v3133 = vxor.u32 %v3109, 2147483648
    %v3134 = vxor.u32 %v3110, 2147483648
    %v3135 = vxor.u32 %v3111, 2147483648
    %v3136 = vxor.u32 %v3112, 2147483648
    %v3137 = vxor.u32 %v3113, 2147483648
    %v3138 = vxor.u32 %v3114, 2147483648
    %v3139 = vxor.u32 %v3115, 2147483648
    %v3140 = vxor.u32 %v3116, 2147483648
    %v3141 = vxor.u32 %v3117, 2147483648
    %v3142 = vmul.f32 %v3118, 1.442695
    %v3143 = vpow.pop %v3142
    %v3144 = vmul.f32 %v3119, 1.442695
    %v3145 = vpow.pop %v3144
    %v3146 = vmul.f32 %v3120, 1.442695
    %v3147 = vpow.pop %v3146
    %v3148 = vmul.f32 %v3121, 1.442695
    %v3149 = vpow.pop %v3148
    %v3150 = vmul.f32 %v3122, 1.442695
    %v3151 = vpow.pop %v3150
    %v3152 = vmul.f32 %v3123, 1.442695
    %v3153 = vpow.pop %v3152
    %v3154 = vmul.f32 %v3124, 1.442695
    %v3155 = vpow.pop %v3154
    %v3156 = vmul.f32 %v3125, 1.442695
    %v3157 = vpow.pop %v3156
    %v3158 = vmul.f32 %v3126, 1.442695
    %v3159 = vpow.pop %v3158
    %v3160 = vmul.f32 %v3127, 1.442695
    %v3161 = vpow.pop %v3160
    %v3162 = vmul.f32 %v3128, 1.442695
    %v3163 = vpow.pop %v3162
    %v3164 = vmul.f32 %v3129, 1.442695
    %v3165 = vpow.pop %v3164
    %v3166 = vmul.f32 %v3130, 1.442695
    %v3167 = vpow.pop %v3166
    %v3168 = vmul.f32 %v3131, 1.442695
    %v3169 = vpow.pop %v3168
    %v3170 = vmul.f32 %v3132, 1.442695
    %v3171 = vpow.pop %v3170
    %v3172 = vmul.f32 %v3133, 1.442695
    %v3173 = vpow.pop %v3172
    %v3174 = vmul.f32 %v3134, 1.442695
    %v3175 = vpow.pop %v3174
    %v3176 = vmul.f32 %v3135, 1.442695
    %v3177 = vpow.pop %v3176
    %v3178 = vmul.f32 %v3136, 1.442695
    %v3179 = vpow.pop %v3178
    %v3180 = vmul.f32 %v3137, 1.442695
    %v3181 = vpow.pop %v3180
    %v3182 = vmul.f32 %v3138, 1.442695
    %v3183 = vpow.pop %v3182
    %v3184 = vmul.f32 %v3139, 1.442695
    %v3185 = vpow.pop %v3184
    %v3186 = vmul.f32 %v3140, 1.442695
    %v3187 = vpow.pop %v3186
    %v3188 = vmul.f32 %v3141, 1.442695
    %v3189 = vpow.pop %v3188
    %v3190 = vadd.f32 %v3143, 1.0
    %v3191 = vadd.f32 %v3145, 1.0
    %v3192 = vadd.f32 %v3147, 1.0
    %v3193 = vadd.f32 %v3149, 1.0
    %v3194 = vadd.f32 %v3151, 1.0
    %v3195 = vadd.f32 %v3153, 1.0
    %v3196 = vadd.f32 %v3155, 1.0
    %v3197 = vadd.f32 %v3157, 1.0
    %v3198 = vadd.f32 %v3159, 1.0
    %v3199 = vadd.f32 %v3161, 1.0
    %v3200 = vadd.f32 %v3163, 1.0
    %v3201 = vadd.f32 %v3165, 1.0
    %v3202 = vadd.f32 %v3167, 1.0
    %v3203 = vadd.f32 %v3169, 1.0
    %v3204 = vadd.f32 %v3171, 1.0
    %v3205 = vadd.f32 %v3173, 1.0
    %v3206 = vadd.f32 %v3175, 1.0
    %v3207 = vadd.f32 %v3177, 1.0
    %v3208 = vadd.f32 %v3179, 1.0
    %v3209 = vadd.f32 %v3181, 1.0
    %v3210 = vadd.f32 %v3183, 1.0
    %v3211 = vadd.f32 %v3185, 1.0
    %v3212 = vadd.f32 %v3187, 1.0
    %v3213 = vadd.f32 %v3189, 1.0
    %v3214 = vrcp.pop %v3190
    %v3215 = vmul.f32 %v3190, %v3214
    %v3216 = vsub.f32 1.0, %v3215
    %v3217 = vmul.f32 %v3214, %v3216
    %v3218 = vadd.f32 %v3214, %v3217
    %vm3219 = vweird.f32 %v3190
    %vm3220 = vweird.f32 %v3214
    %vm3221 = vmor %vm3219, %vm3220
    %v3222 = vsel %vm3221, %v3214, %v3218
    %v3223 = vand.u32 2147483647, %v3190
    %vm3224 = vcmp.eq.f32.partialorder %v3223, 8.507059e+37
    %v3225 = vand.u32 %v3190, 2147483648
    %v3226 = vor.u32 1.1754944e-38, %v3225
    %v3227 = vsel %vm3224, %v3226, %v3222
    %v3228 = vmul.f32 1.0, %v3227
    %v3229 = vrcp.pop %v3191
    %v3230 = vmul.f32 %v3191, %v3229
    %v3231 = vsub.f32 1.0, %v3230
    %v3232 = vmul.f32 %v3229, %v3231
    %v3233 = vadd.f32 %v3229, %v3232
    %vm3234 = vweird.f32 %v3191
    %vm3235 = vweird.f32 %v3229
    %vm3236 = vmor %vm3234, %vm3235
    %v3237 = vsel %vm3236, %v3229, %v3233
    %v3238 = vand.u32 2147483647, %v3191
    %vm3239 = vcmp.eq.f32.partialorder %v3238, 8.507059e+37
    %v3240 = vand.u32 %v3191, 2147483648
    %v3241 = vor.u32 1.1754944e-38, %v3240
    %v3242 = vsel %vm3239, %v3241, %v3237
    %v3243 = vmul.f32 1.0, %v3242
    %v3244 = vrcp.pop %v3192
    %v3245 = vmul.f32 %v3192, %v3244
    %v3246 = vsub.f32 1.0, %v3245
    %v3247 = vmul.f32 %v3244, %v3246
    %v3248 = vadd.f32 %v3244, %v3247
    %vm3249 = vweird.f32 %v3192
    %vm3250 = vweird.f32 %v3244
    %vm3251 = vmor %vm3249, %vm3250
    %v3252 = vsel %vm3251, %v3244, %v3248
    %v3253 = vand.u32 2147483647, %v3192
    %vm3254 = vcmp.eq.f32.partialorder %v3253, 8.507059e+37
    %v3255 = vand.u32 %v3192, 2147483648
    %v3256 = vor.u32 1.1754944e-38, %v3255
    %v3257 = vsel %vm3254, %v3256, %v3252
    %v3258 = vmul.f32 1.0, %v3257
    %v3259 = vrcp.pop %v3193
    %v3260 = vmul.f32 %v3193, %v3259
    %v3261 = vsub.f32 1.0, %v3260
    %v3262 = vmul.f32 %v3259, %v3261
    %v3263 = vadd.f32 %v3259, %v3262
    %vm3264 = vweird.f32 %v3193
    %vm3265 = vweird.f32 %v3259
    %vm3266 = vmor %vm3264, %vm3265
    %v3267 = vsel %vm3266, %v3259, %v3263
    %v3268 = vand.u32 2147483647, %v3193
    %vm3269 = vcmp.eq.f32.partialorder %v3268, 8.507059e+37
    %v3270 = vand.u32 %v3193, 2147483648
    %v3271 = vor.u32 1.1754944e-38, %v3270
    %v3272 = vsel %vm3269, %v3271, %v3267
    %v3273 = vmul.f32 1.0, %v3272
    %v3274 = vrcp.pop %v3194
    %v3275 = vmul.f32 %v3194, %v3274
    %v3276 = vsub.f32 1.0, %v3275
    %v3277 = vmul.f32 %v3274, %v3276
    %v3278 = vadd.f32 %v3274, %v3277
    %vm3279 = vweird.f32 %v3194
    %vm3280 = vweird.f32 %v3274
    %vm3281 = vmor %vm3279, %vm3280
    %v3282 = vsel %vm3281, %v3274, %v3278
    %v3283 = vand.u32 2147483647, %v3194
    %vm3284 = vcmp.eq.f32.partialorder %v3283, 8.507059e+37
    %v3285 = vand.u32 %v3194, 2147483648
    %v3286 = vor.u32 1.1754944e-38, %v3285
    %v3287 = vsel %vm3284, %v3286, %v3282
    %v3288 = vmul.f32 1.0, %v3287
    %v3289 = vrcp.pop %v3195
    %v3290 = vmul.f32 %v3195, %v3289
    %v3291 = vsub.f32 1.0, %v3290
    %v3292 = vmul.f32 %v3289, %v3291
    %v3293 = vadd.f32 %v3289, %v3292
    %vm3294 = vweird.f32 %v3195
    %vm3295 = vweird.f32 %v3289
    %vm3296 = vmor %vm3294, %vm3295
    %v3297 = vsel %vm3296, %v3289, %v3293
    %v3298 = vand.u32 2147483647, %v3195
    %vm3299 = vcmp.eq.f32.partialorder %v3298, 8.507059e+37
    %v3300 = vand.u32 %v3195, 2147483648
    %v3301 = vor.u32 1.1754944e-38, %v3300
    %v3302 = vsel %vm3299, %v3301, %v3297
    %v3303 = vmul.f32 1.0, %v3302
    %v3304 = vrcp.pop %v3196
    %v3305 = vmul.f32 %v3196, %v3304
    %v3306 = vsub.f32 1.0, %v3305
    %v3307 = vmul.f32 %v3304, %v3306
    %v3308 = vadd.f32 %v3304, %v3307
    %vm3309 = vweird.f32 %v3196
    %vm3310 = vweird.f32 %v3304
    %vm3311 = vmor %vm3309, %vm3310
    %v3312 = vsel %vm3311, %v3304, %v3308
    %v3313 = vand.u32 2147483647, %v3196
    %vm3314 = vcmp.eq.f32.partialorder %v3313, 8.507059e+37
    %v3315 = vand.u32 %v3196, 2147483648
    %v3316 = vor.u32 1.1754944e-38, %v3315
    %v3317 = vsel %vm3314, %v3316, %v3312
    %v3318 = vmul.f32 1.0, %v3317
    %v3319 = vrcp.pop %v3197
    %v3320 = vmul.f32 %v3197, %v3319
    %v3321 = vsub.f32 1.0, %v3320
    %v3322 = vmul.f32 %v3319, %v3321
    %v3323 = vadd.f32 %v3319, %v3322
    %vm3324 = vweird.f32 %v3197
    %vm3325 = vweird.f32 %v3319
    %vm3326 = vmor %vm3324, %vm3325
    %v3327 = vsel %vm3326, %v3319, %v3323
    %v3328 = vand.u32 2147483647, %v3197
    %vm3329 = vcmp.eq.f32.partialorder %v3328, 8.507059e+37
    %v3330 = vand.u32 %v3197, 2147483648
    %v3331 = vor.u32 1.1754944e-38, %v3330
    %v3332 = vsel %vm3329, %v3331, %v3327
    %v3333 = vmul.f32 1.0, %v3332
    %v3334 = vrcp.pop %v3198
    %v3335 = vmul.f32 %v3198, %v3334
    %v3336 = vsub.f32 1.0, %v3335
    %v3337 = vmul.f32 %v3334, %v3336
    %v3338 = vadd.f32 %v3334, %v3337
    %vm3339 = vweird.f32 %v3198
    %vm3340 = vweird.f32 %v3334
    %vm3341 = vmor %vm3339, %vm3340
    %v3342 = vsel %vm3341, %v3334, %v3338
    %v3343 = vand.u32 2147483647, %v3198
    %vm3344 = vcmp.eq.f32.partialorder %v3343, 8.507059e+37
    %v3345 = vand.u32 %v3198, 2147483648
    %v3346 = vor.u32 1.1754944e-38, %v3345
    %v3347 = vsel %vm3344, %v3346, %v3342
    %v3348 = vmul.f32 1.0, %v3347
    %v3349 = vrcp.pop %v3199
    %v3350 = vmul.f32 %v3199, %v3349
    %v3351 = vsub.f32 1.0, %v3350
    %v3352 = vmul.f32 %v3349, %v3351
    %v3353 = vadd.f32 %v3349, %v3352
    %vm3354 = vweird.f32 %v3199
    %vm3355 = vweird.f32 %v3349
    %vm3356 = vmor %vm3354, %vm3355
    %v3357 = vsel %vm3356, %v3349, %v3353
    %v3358 = vand.u32 2147483647, %v3199
    %vm3359 = vcmp.eq.f32.partialorder %v3358, 8.507059e+37
    %v3360 = vand.u32 %v3199, 2147483648
    %v3361 = vor.u32 1.1754944e-38, %v3360
    %v3362 = vsel %vm3359, %v3361, %v3357
    %v3363 = vmul.f32 1.0, %v3362
    %v3364 = vrcp.pop %v3200
    %v3365 = vmul.f32 %v3200, %v3364
    %v3366 = vsub.f32 1.0, %v3365
    %v3367 = vmul.f32 %v3364, %v3366
    %v3368 = vadd.f32 %v3364, %v3367
    %vm3369 = vweird.f32 %v3200
    %vm3370 = vweird.f32 %v3364
    %vm3371 = vmor %vm3369, %vm3370
    %v3372 = vsel %vm3371, %v3364, %v3368
    %v3373 = vand.u32 2147483647, %v3200
    %vm3374 = vcmp.eq.f32.partialorder %v3373, 8.507059e+37
    %v3375 = vand.u32 %v3200, 2147483648
    %v3376 = vor.u32 1.1754944e-38, %v3375
    %v3377 = vsel %vm3374, %v3376, %v3372
    %v3378 = vmul.f32 1.0, %v3377
    %v3379 = vrcp.pop %v3201
    %v3380 = vmul.f32 %v3201, %v3379
    %v3381 = vsub.f32 1.0, %v3380
    %v3382 = vmul.f32 %v3379, %v3381
    %v3383 = vadd.f32 %v3379, %v3382
    %vm3384 = vweird.f32 %v3201
    %vm3385 = vweird.f32 %v3379
    %vm3386 = vmor %vm3384, %vm3385
    %v3387 = vsel %vm3386, %v3379, %v3383
    %v3388 = vand.u32 2147483647, %v3201
    %vm3389 = vcmp.eq.f32.partialorder %v3388, 8.507059e+37
    %v3390 = vand.u32 %v3201, 2147483648
    %v3391 = vor.u32 1.1754944e-38, %v3390
    %v3392 = vsel %vm3389, %v3391, %v3387
    %v3393 = vmul.f32 1.0, %v3392
    %v3394 = vrcp.pop %v3202
    %v3395 = vmul.f32 %v3202, %v3394
    %v3396 = vsub.f32 1.0, %v3395
    %v3397 = vmul.f32 %v3394, %v3396
    %v3398 = vadd.f32 %v3394, %v3397
    %vm3399 = vweird.f32 %v3202
    %vm3400 = vweird.f32 %v3394
    %vm3401 = vmor %vm3399, %vm3400
    %v3402 = vsel %vm3401, %v3394, %v3398
    %v3403 = vand.u32 2147483647, %v3202
    %vm3404 = vcmp.eq.f32.partialorder %v3403, 8.507059e+37
    %v3405 = vand.u32 %v3202, 2147483648
    %v3406 = vor.u32 1.1754944e-38, %v3405
    %v3407 = vsel %vm3404, %v3406, %v3402
    %v3408 = vmul.f32 1.0, %v3407
    %v3409 = vrcp.pop %v3203
    %v3410 = vmul.f32 %v3203, %v3409
    %v3411 = vsub.f32 1.0, %v3410
    %v3412 = vmul.f32 %v3409, %v3411
    %v3413 = vadd.f32 %v3409, %v3412
    %vm3414 = vweird.f32 %v3203
    %vm3415 = vweird.f32 %v3409
    %vm3416 = vmor %vm3414, %vm3415
    %v3417 = vsel %vm3416, %v3409, %v3413
    %v3418 = vand.u32 2147483647, %v3203
    %vm3419 = vcmp.eq.f32.partialorder %v3418, 8.507059e+37
    %v3420 = vand.u32 %v3203, 2147483648
    %v3421 = vor.u32 1.1754944e-38, %v3420
    %v3422 = vsel %vm3419, %v3421, %v3417
    %v3423 = vmul.f32 1.0, %v3422
    %v3424 = vrcp.pop %v3204
    %v3425 = vmul.f32 %v3204, %v3424
    %v3426 = vsub.f32 1.0, %v3425
    %v3427 = vmul.f32 %v3424, %v3426
    %v3428 = vadd.f32 %v3424, %v3427
    %vm3429 = vweird.f32 %v3204
    %vm3430 = vweird.f32 %v3424
    %vm3431 = vmor %vm3429, %vm3430
    %v3432 = vsel %vm3431, %v3424, %v3428
    %v3433 = vand.u32 2147483647, %v3204
    %vm3434 = vcmp.eq.f32.partialorder %v3433, 8.507059e+37
    %v3435 = vand.u32 %v3204, 2147483648
    %v3436 = vor.u32 1.1754944e-38, %v3435
    %v3437 = vsel %vm3434, %v3436, %v3432
    %v3438 = vmul.f32 1.0, %v3437
    %v3439 = vrcp.pop %v3205
    %v3440 = vmul.f32 %v3205, %v3439
    %v3441 = vsub.f32 1.0, %v3440
    %v3442 = vmul.f32 %v3439, %v3441
    %v3443 = vadd.f32 %v3439, %v3442
    %vm3444 = vweird.f32 %v3205
    %vm3445 = vweird.f32 %v3439
    %vm3446 = vmor %vm3444, %vm3445
    %v3447 = vsel %vm3446, %v3439, %v3443
    %v3448 = vand.u32 2147483647, %v3205
    %vm3449 = vcmp.eq.f32.partialorder %v3448, 8.507059e+37
    %v3450 = vand.u32 %v3205, 2147483648
    %v3451 = vor.u32 1.1754944e-38, %v3450
    %v3452 = vsel %vm3449, %v3451, %v3447
    %v3453 = vmul.f32 1.0, %v3452
    %v3454 = vrcp.pop %v3206
    %v3455 = vmul.f32 %v3206, %v3454
    %v3456 = vsub.f32 1.0, %v3455
    %v3457 = vmul.f32 %v3454, %v3456
    %v3458 = vadd.f32 %v3454, %v3457
    %vm3459 = vweird.f32 %v3206
    %vm3460 = vweird.f32 %v3454
    %vm3461 = vmor %vm3459, %vm3460
    %v3462 = vsel %vm3461, %v3454, %v3458
    %v3463 = vand.u32 2147483647, %v3206
    %vm3464 = vcmp.eq.f32.partialorder %v3463, 8.507059e+37
    %v3465 = vand.u32 %v3206, 2147483648
    %v3466 = vor.u32 1.1754944e-38, %v3465
    %v3467 = vsel %vm3464, %v3466, %v3462
    %v3468 = vmul.f32 1.0, %v3467
    %v3469 = vrcp.pop %v3207
    %v3470 = vmul.f32 %v3207, %v3469
    %v3471 = vsub.f32 1.0, %v3470
    %v3472 = vmul.f32 %v3469, %v3471
    %v3473 = vadd.f32 %v3469, %v3472
    %vm3474 = vweird.f32 %v3207
    %vm3475 = vweird.f32 %v3469
    %vm3476 = vmor %vm3474, %vm3475
    %v3477 = vsel %vm3476, %v3469, %v3473
    %v3478 = vand.u32 2147483647, %v3207
    %vm3479 = vcmp.eq.f32.partialorder %v3478, 8.507059e+37
    %v3480 = vand.u32 %v3207, 2147483648
    %v3481 = vor.u32 1.1754944e-38, %v3480
    %v3482 = vsel %vm3479, %v3481, %v3477
    %v3483 = vmul.f32 1.0, %v3482
    %v3484 = vrcp.pop %v3208
    %v3485 = vmul.f32 %v3208, %v3484
    %v3486 = vsub.f32 1.0, %v3485
    %v3487 = vmul.f32 %v3484, %v3486
    %v3488 = vadd.f32 %v3484, %v3487
    %vm3489 = vweird.f32 %v3208
    %vm3490 = vweird.f32 %v3484
    %vm3491 = vmor %vm3489, %vm3490
    %v3492 = vsel %vm3491, %v3484, %v3488
    %v3493 = vand.u32 2147483647, %v3208
    %vm3494 = vcmp.eq.f32.partialorder %v3493, 8.507059e+37
    %v3495 = vand.u32 %v3208, 2147483648
    %v3496 = vor.u32 1.1754944e-38, %v3495
    %v3497 = vsel %vm3494, %v3496, %v3492
    %v3498 = vmul.f32 1.0, %v3497
    %v3499 = vrcp.pop %v3209
    %v3500 = vmul.f32 %v3209, %v3499
    %v3501 = vsub.f32 1.0, %v3500
    %v3502 = vmul.f32 %v3499, %v3501
    %v3503 = vadd.f32 %v3499, %v3502
    %vm3504 = vweird.f32 %v3209
    %vm3505 = vweird.f32 %v3499
    %vm3506 = vmor %vm3504, %vm3505
    %v3507 = vsel %vm3506, %v3499, %v3503
    %v3508 = vand.u32 2147483647, %v3209
    %vm3509 = vcmp.eq.f32.partialorder %v3508, 8.507059e+37
    %v3510 = vand.u32 %v3209, 2147483648
    %v3511 = vor.u32 1.1754944e-38, %v3510
    %v3512 = vsel %vm3509, %v3511, %v3507
    %v3513 = vmul.f32 1.0, %v3512
    %v3514 = vrcp.pop %v3210
    %v3515 = vmul.f32 %v3210, %v3514
    %v3516 = vsub.f32 1.0, %v3515
    %v3517 = vmul.f32 %v3514, %v3516
    %v3518 = vadd.f32 %v3514, %v3517
    %vm3519 = vweird.f32 %v3210
    %vm3520 = vweird.f32 %v3514
    %vm3521 = vmor %vm3519, %vm3520
    %v3522 = vsel %vm3521, %v3514, %v3518
    %v3523 = vand.u32 2147483647, %v3210
    %vm3524 = vcmp.eq.f32.partialorder %v3523, 8.507059e+37
    %v3525 = vand.u32 %v3210, 2147483648
    %v3526 = vor.u32 1.1754944e-38, %v3525
    %v3527 = vsel %vm3524, %v3526, %v3522
    %v3528 = vmul.f32 1.0, %v3527
    %v3529 = vrcp.pop %v3211
    %v3530 = vmul.f32 %v3211, %v3529
    %v3531 = vsub.f32 1.0, %v3530
    %v3532 = vmul.f32 %v3529, %v3531
    %v3533 = vadd.f32 %v3529, %v3532
    %vm3534 = vweird.f32 %v3211
    %vm3535 = vweird.f32 %v3529
    %vm3536 = vmor %vm3534, %vm3535
    %v3537 = vsel %vm3536, %v3529, %v3533
    %v3538 = vand.u32 2147483647, %v3211
    %vm3539 = vcmp.eq.f32.partialorder %v3538, 8.507059e+37
    %v3540 = vand.u32 %v3211, 2147483648
    %v3541 = vor.u32 1.1754944e-38, %v3540
    %v3542 = vsel %vm3539, %v3541, %v3537
    %v3543 = vmul.f32 1.0, %v3542
    %v3544 = vrcp.pop %v3212
    %v3545 = vmul.f32 %v3212, %v3544
    %v3546 = vsub.f32 1.0, %v3545
    %v3547 = vmul.f32 %v3544, %v3546
    %v3548 = vadd.f32 %v3544, %v3547
    %vm3549 = vweird.f32 %v3212
    %vm3550 = vweird.f32 %v3544
    %vm3551 = vmor %vm3549, %vm3550
    %v3552 = vsel %vm3551, %v3544, %v3548
    %v3553 = vand.u32 2147483647, %v3212
    %vm3554 = vcmp.eq.f32.partialorder %v3553, 8.507059e+37
    %v3555 = vand.u32 %v3212, 2147483648
    %v3556 = vor.u32 1.1754944e-38, %v3555
    %v3557 = vsel %vm3554, %v3556, %v3552
    %v3558 = vmul.f32 1.0, %v3557
    %v3559 = vrcp.pop %v3213
    %v3560 = vmul.f32 %v3213, %v3559
    %v3561 = vsub.f32 1.0, %v3560
    %v3562 = vmul.f32 %v3559, %v3561
    %v3563 = vadd.f32 %v3559, %v3562
    %vm3564 = vweird.f32 %v3213
    %vm3565 = vweird.f32 %v3559
    %vm3566 = vmor %vm3564, %vm3565
    %v3567 = vsel %vm3566, %v3559, %v3563
    %v3568 = vand.u32 2147483647, %v3213
    %vm3569 = vcmp.eq.f32.partialorder %v3568, 8.507059e+37
    %v3570 = vand.u32 %v3213, 2147483648
    %v3571 = vor.u32 1.1754944e-38, %v3570
    %v3572 = vsel %vm3569, %v3571, %v3567
    %v3573 = vmul.f32 1.0, %v3572
    %v3574 = vmul.f32 %v3094, %v3228
    %v3575 = vmul.f32 %v3095, %v3243
    %v3576 = vmul.f32 %v3096, %v3258
    %v3577 = vmul.f32 %v3097, %v3273
    %v3578 = vmul.f32 %v3098, %v3288
    %v3579 = vmul.f32 %v3099, %v3303
    %v3580 = vmul.f32 %v3100, %v3318
    %v3581 = vmul.f32 %v3101, %v3333
    %v3582 = vmul.f32 %v3102, %v3348
    %v3583 = vmul.f32 %v3103, %v3363
    %v3584 = vmul.f32 %v3104, %v3378
    %v3585 = vmul.f32 %v3105, %v3393
    %v3586 = vmul.f32 %v3106, %v3408
    %v3587 = vmul.f32 %v3107, %v3423
    %v3588 = vmul.f32 %v3108, %v3438
    %v3589 = vmul.f32 %v3109, %v3453
    %v3590 = vmul.f32 %v3110, %v3468
    %v3591 = vmul.f32 %v3111, %v3483
    %v3592 = vmul.f32 %v3112, %v3498
    %v3593 = vmul.f32 %v3113, %v3513
    %v3594 = vmul.f32 %v3114, %v3528
    %v3595 = vmul.f32 %v3115, %v3543
    %v3596 = vmul.f32 %v3116, %v3558
    %v3597 = vmul.f32 %v3117, %v3573
    %vm3598 = vcmp.eq.s32.totalorder %v65, 0
    %v3599 = vadd.f32 %v3574, %v3575
    %3600 = vadd.xlane.f32.xlu0 %v3599
    %v3601 = vpop.xlane.xlu0 %3600
    %v3602 = vadd.f32 %v3578, %v3579
    %3603 = vadd.xlane.f32.xlu0 %v3602
    %v3604 = vpop.xlane.xlu0 %3603
    %v3605 = vadd.f32 %v3582, %v3583
    %3606 = vadd.xlane.f32.xlu0 %v3605
    %v3607 = vpop.xlane.xlu0 %3606
    %v3608 = vadd.f32 %v3586, %v3587
    %3609 = vadd.xlane.f32.xlu0 %v3608
    %v3610 = vpop.xlane.xlu0 %3609
    %v3611 = vadd.f32 %v3590, %v3591
    %3612 = vadd.xlane.f32.xlu0 %v3611
    %v3613 = vpop.xlane.xlu0 %3612
    %v3614 = vadd.f32 %v3594, %v3595
    %3615 = vadd.xlane.f32.xlu0 %v3614
    %v3616 = vpop.xlane.xlu0 %3615
    %v3617 = vrcp.pop 256.0
    %v3618 = vmul.f32 256.0, %v3617
    %v3619 = vsub.f32 1.0, %v3618
    %v3620 = vmul.f32 %v3617, %v3619
    %v3621 = vadd.f32 %v3617, %v3620
    %vm3622 = vweird.f32 %v3617
    %v3623 = vsel %vm3622, %v3617, %v3621
    %v3624 = vmul.f32 %v3601, %v3623
    %v3625 = vmul.f32 %v3604, %v3623
    %v3626 = vmul.f32 %v3607, %v3623
    %v3627 = vmul.f32 %v3610, %v3623
    %v3628 = vmul.f32 %v3613, %v3623
    %v3629 = vmul.f32 %v3616, %v3623
    %v3630 = vsel %vm3598, 1, 0
    %vm3631 = vcmp.eq.s32.totalorder %v3630, 1
    %v3632 = vsel %vm3631, %v3624, 0.0
    %v3633 = vsel %vm3631, %v3625, 0.0
    %v3634 = vsel %vm3631, %v3626, 0.0
    %v3635 = vsel %vm3631, %v3627, 0.0
    %v3636 = vsel %vm3631, %v3628, 0.0
    %v3637 = vsel %vm3631, %v3629, 0.0
    %v3638 = vadd.f32 %v3632, 0.0
    %v3639 = vadd.f32 %v3633, 0.0
    %v3640 = vadd.f32 %v3634, 0.0
    %v3641 = vadd.f32 %v3635, 0.0
    %v3642 = vadd.f32 %v3636, 0.0
    %v3643 = vadd.f32 %v3637, 0.0
    %vm3644 = vcmp.eq.s32.totalorder %v65, 2
    %v3645 = vmax.f32 %v3574, %v3575
    %3646 = vmax.xlane.f32.xlu0 %v3645
    %v3647 = vpop.xlane.xlu0 %3646
    %v3648 = vmax.f32 %v3578, %v3579
    %3649 = vmax.xlane.f32.xlu0 %v3648
    %v3650 = vpop.xlane.xlu0 %3649
    %v3651 = vmax.f32 %v3582, %v3583
    %3652 = vmax.xlane.f32.xlu0 %v3651
    %v3653 = vpop.xlane.xlu0 %3652
    %v3654 = vmax.f32 %v3586, %v3587
    %3655 = vmax.xlane.f32.xlu0 %v3654
    %v3656 = vpop.xlane.xlu0 %3655
    %v3657 = vmax.f32 %v3590, %v3591
    %3658 = vmax.xlane.f32.xlu0 %v3657
    %v3659 = vpop.xlane.xlu0 %3658
    %v3660 = vmax.f32 %v3594, %v3595
    %3661 = vmax.xlane.f32.xlu0 %v3660
    %v3662 = vpop.xlane.xlu0 %3661
    %v3663 = vsel %vm3644, 1, 0
    %vm3664 = vcmp.eq.s32.totalorder %v3663, 1
    %v3665 = vsel %vm3664, %v3647, 0.0
    %v3666 = vsel %vm3664, %v3650, 0.0
    %v3667 = vsel %vm3664, %v3653, 0.0
    %v3668 = vsel %vm3664, %v3656, 0.0
    %v3669 = vsel %vm3664, %v3659, 0.0
    %v3670 = vsel %vm3664, %v3662, 0.0
    %v3671 = vadd.f32 %v3638, %v3665
    %v3672 = vadd.f32 %v3639, %v3666
    %v3673 = vadd.f32 %v3640, %v3667
    %v3674 = vadd.f32 %v3641, %v3668
    %v3675 = vadd.f32 %v3642, %v3669
    %v3676 = vadd.f32 %v3643, %v3670
    %vm3677 = vcmp.eq.s32.totalorder %v65, 1
    %v3678 = vadd.f32 %v3576, %v3577
    %3679 = vadd.xlane.f32.xlu0 %v3678
    %v3680 = vpop.xlane.xlu0 %3679
    %v3681 = vadd.f32 %v3580, %v3581
    %3682 = vadd.xlane.f32.xlu0 %v3681
    %v3683 = vpop.xlane.xlu0 %3682
    %v3684 = vadd.f32 %v3584, %v3585
    %3685 = vadd.xlane.f32.xlu0 %v3684
    %v3686 = vpop.xlane.xlu0 %3685
    %v3687 = vadd.f32 %v3588, %v3589
    %3688 = vadd.xlane.f32.xlu0 %v3687
    %v3689 = vpop.xlane.xlu0 %3688
    %v3690 = vadd.f32 %v3592, %v3593
    %3691 = vadd.xlane.f32.xlu0 %v3690
    %v3692 = vpop.xlane.xlu0 %3691
    %v3693 = vadd.f32 %v3596, %v3597
    %3694 = vadd.xlane.f32.xlu0 %v3693
    %v3695 = vpop.xlane.xlu0 %3694
    %v3696 = vmul.f32 %v3680, %v3623
    %v3697 = vmul.f32 %v3683, %v3623
    %v3698 = vmul.f32 %v3686, %v3623
    %v3699 = vmul.f32 %v3689, %v3623
    %v3700 = vmul.f32 %v3692, %v3623
    %v3701 = vmul.f32 %v3695, %v3623
    %v3702 = vsel %vm3677, 1, 0
    %vm3703 = vcmp.eq.s32.totalorder %v3702, 1
    %v3704 = vsel %vm3703, %v3696, 0.0
    %v3705 = vsel %vm3703, %v3697, 0.0
    %v3706 = vsel %vm3703, %v3698, 0.0
    %v3707 = vsel %vm3703, %v3699, 0.0
    %v3708 = vsel %vm3703, %v3700, 0.0
    %v3709 = vsel %vm3703, %v3701, 0.0
    %v3710 = vadd.f32 %v3671, %v3704
    %v3711 = vadd.f32 %v3672, %v3705
    %v3712 = vadd.f32 %v3673, %v3706
    %v3713 = vadd.f32 %v3674, %v3707
    %v3714 = vadd.f32 %v3675, %v3708
    %v3715 = vadd.f32 %v3676, %v3709
    %vm3716 = vcmp.eq.s32.totalorder %v65, 3
    %v3717 = vmax.f32 %v3576, %v3577
    %3718 = vmax.xlane.f32.xlu0 %v3717
    %v3719 = vpop.xlane.xlu0 %3718
    %v3720 = vmax.f32 %v3580, %v3581
    %3721 = vmax.xlane.f32.xlu0 %v3720
    %v3722 = vpop.xlane.xlu0 %3721
    %v3723 = vmax.f32 %v3584, %v3585
    %3724 = vmax.xlane.f32.xlu0 %v3723
    %v3725 = vpop.xlane.xlu0 %3724
    %v3726 = vmax.f32 %v3588, %v3589
    %3727 = vmax.xlane.f32.xlu0 %v3726
    %v3728 = vpop.xlane.xlu0 %3727
    %v3729 = vmax.f32 %v3592, %v3593
    %3730 = vmax.xlane.f32.xlu0 %v3729
    %v3731 = vpop.xlane.xlu0 %3730
    %v3732 = vmax.f32 %v3596, %v3597
    %3733 = vmax.xlane.f32.xlu0 %v3732
    %v3734 = vpop.xlane.xlu0 %3733
    %v3735 = vsel %vm3716, 1, 0
    %vm3736 = vcmp.eq.s32.totalorder %v3735, 1
    %v3737 = vsel %vm3736, %v3719, 0.0
    %v3738 = vsel %vm3736, %v3722, 0.0
    %v3739 = vsel %vm3736, %v3725, 0.0
    %v3740 = vsel %vm3736, %v3728, 0.0
    %v3741 = vsel %vm3736, %v3731, 0.0
    %v3742 = vsel %vm3736, %v3734, 0.0
    %v3743 = vadd.f32 %v3710, %v3737
    %v3744 = vadd.f32 %v3711, %v3738
    %v3745 = vadd.f32 %v3712, %v3739
    %v3746 = vadd.f32 %v3713, %v3740
    %v3747 = vadd.f32 %v3714, %v3741
    %v3748 = vadd.f32 %v3715, %v3742
    %v3749 = vld [vmem:[%s7] sm:$0x7]
    %v3750 = vld [vmem:[%s8] sm:$0x7]
    %3752 = vset.pattern.permute.xlu0 0
    %3753 = vperm.xlu0 %3752, %v3750
    %v3754 = vpop.permute.xlu0 %3753
    %vm3756 = vcmask 392192
    %v3758 = vsel %vm3756, %v3749, 0
    %3760 = vmatpush.msra.mxu0 0.0
    %3761 = vmatpush.msra.mxu0 0.0
    %3762 = vmatpush.msra.mxu0 0.0
    %3763 = vmatpush.msra.mxu0 0.0
    %3764 = vmatpush.msra.mxu0 0.0
    %3765 = vmatpush.msra.mxu0 0.0
    %3766 = vmatpush.msra.mxu0 0.0
    %3767 = vmatpush.msra.mxu0 0.0
    %3768 = vmatpush.msra.mxu0 0.0
    %3769 = vmatpush.msra.mxu0 0.0
    %3770 = vmatpush.msra.mxu0 %v3748
    %3771 = vmatpush.msra.mxu0 %v3747
    %3772 = vmatpush.msra.mxu0 %v3746
    %3773 = vmatpush.msra.mxu0 %v3745
    %3774 = vmatpush.msra.mxu0 %v3744
    %3775 = vmatpush.msra.mxu0 %v3743
    %3776 = vmatmul.f32.gmra.mxu0 %v3758
    %v3777 = vpop.f32.mrf.mxu0
    %v3778 = vadd.f32 %v3754, %v3777
    %3779 = vdwg.mxu0
    %v3780 = vmax.f32 %v3778, 0.0
    %v3781 = vld [vmem:[%s9] sm:$0xff]
    %v3782 = vld [vmem:[%s9 + $0x8] sm:$0xff]
    %v3783 = vld [vmem:[%s9 + $0x10] sm:$0xff]
    %v3784 = vld [vmem:[%s9 + $0x18] sm:$0xff]
    %v3785 = vld [vmem:[%s9 + $0x20] sm:$0xff]
    %v3786 = vld [vmem:[%s9 + $0x28] sm:$0xff]
    %v3787 = vld [vmem:[%s10] sm:$0xff]
    %v3788 = vld [vmem:[%s10 + $0x8] sm:$0xff]
    %v3789 = vld [vmem:[%s10 + $0x10] sm:$0xff]
    %v3790 = vld [vmem:[%s10 + $0x18] sm:$0xff]
    %v3791 = vld [vmem:[%s10 + $0x20] sm:$0xff]
    %v3792 = vld [vmem:[%s10 + $0x28] sm:$0xff]
    %3794 = vset.pattern.permute.xlu0 0
    %3795 = vperm.xlu0 %3794, %v3787
    %v3796 = vpop.permute.xlu0 %3795
    %3799 = vset.pattern.permute.xlu0 0
    %3800 = vperm.xlu0 %3799, %v3788
    %v3801 = vpop.permute.xlu0 %3800
    %3804 = vset.pattern.permute.xlu0 0
    %3805 = vperm.xlu0 %3804, %v3789
    %v3806 = vpop.permute.xlu0 %3805
    %3809 = vset.pattern.permute.xlu0 0
    %3810 = vperm.xlu0 %3809, %v3790
    %v3811 = vpop.permute.xlu0 %3810
    %3814 = vset.pattern.permute.xlu0 0
    %3815 = vperm.xlu0 %3814, %v3791
    %v3816 = vpop.permute.xlu0 %3815
    %3819 = vset.pattern.permute.xlu0 0
    %3820 = vperm.xlu0 %3819, %v3792
    %v3821 = vpop.permute.xlu0 %3820
    %vm3823 = vcmask 23552
    %v3825 = vsel %vm3823, %v3781, 0
    %v3828 = vsel %vm3823, %v3782, 0
    %v3831 = vsel %vm3823, %v3783, 0
    %v3834 = vsel %vm3823, %v3784, 0
    %v3837 = vsel %vm3823, %v3785, 0
    %v3840 = vsel %vm3823, %v3786, 0
    %vm3842 = vcmask 1042432
    %v3844 = vsel %vm3842, %v3780, 0
    %3846 = vmatpush.msra.mxu0 0.0
    %3847 = vmatpush.msra.mxu0 0.0
    %3848 = vmatpush.msra.mxu0 0.0
    %3849 = vmatpush.msra.mxu0 0.0
    %3850 = vmatpush.msra.mxu0 0.0
    %3851 = vmatpush.msra.mxu0 0.0
    %3852 = vmatpush.msra.mxu0 0.0
    %3853 = vmatpush.msra.mxu0 0.0
    %3854 = vmatpush.msra.mxu0 0.0
    %3855 = vmatpush.msra.mxu0 0.0
    %3856 = vmatpush.msra.mxu0 0.0
    %3857 = vmatpush.msra.mxu0 0.0
    %3858 = vmatpush.msra.mxu0 0.0
    %3859 = vmatpush.msra.mxu0 0.0
    %3860 = vmatpush.msra.mxu0 0.0
    %3861 = vmatpush.msra.mxu0 %v3844
    %3862 = vmatmul.f32.gmra.mxu0 %v3825
    %v3863 = vpop.f32.mrf.mxu0
    %v3864 = vadd.f32 %v3796, %v3863
    %3865 = vmatmul.f32.gmra.mxu0 %v3828
    %v3866 = vpop.f32.mrf.mxu0
    %v3867 = vadd.f32 %v3801, %v3866
    %3868 = vmatmul.f32.gmra.mxu0 %v3831
    %v3869 = vpop.f32.mrf.mxu0
    %v3870 = vadd.f32 %v3806, %v3869
    %3871 = vmatmul.f32.gmra.mxu0 %v3834
    %v3872 = vpop.f32.mrf.mxu0
    %v3873 = vadd.f32 %v3811, %v3872
    %3874 = vmatmul.f32.gmra.mxu0 %v3837
    %v3875 = vpop.f32.mrf.mxu0
    %v3876 = vadd.f32 %v3816, %v3875
    %3877 = vmatmul.f32.gmra.mxu0 %v3840
    %v3878 = vpop.f32.mrf.mxu0
    %v3879 = vadd.f32 %v3821, %v3878
    %3880 = vdwg.mxu0
    %3887 = vrot.lane.b32.xlu0 %v3864, 126
    %v3888 = vpop.permute.xlu0 %3887
    %3889 = vrot.lane.b32.xlu0 %v3867, 126
    %v3890 = vpop.permute.xlu0 %3889
    %3891 = vrot.lane.b32.xlu0 %v3870, 126
    %v3892 = vpop.permute.xlu0 %3891
    %3893 = vrot.lane.b32.xlu0 %v3873, 126
    %v3894 = vpop.permute.xlu0 %3893
    %3895 = vrot.lane.b32.xlu0 %v3876, 126
    %v3896 = vpop.permute.xlu0 %3895
    %3897 = vrot.lane.b32.xlu0 %v3879, 126
    %v3898 = vpop.permute.xlu0 %3897
    %v3905 = vadd.f32 %v3864, %v3888
    %v3906 = vadd.f32 %v3867, %v3890
    %v3907 = vadd.f32 %v3870, %v3892
    %v3908 = vadd.f32 %v3873, %v3894
    %v3909 = vadd.f32 %v3876, %v3896
    %v3910 = vadd.f32 %v3879, %v3898
    %v3911 = vxor.u32 %v3905, 2147483648
    %v3912 = vxor.u32 %v3906, 2147483648
    %v3913 = vxor.u32 %v3907, 2147483648
    %v3914 = vxor.u32 %v3908, 2147483648
    %v3915 = vxor.u32 %v3909, 2147483648
    %v3916 = vxor.u32 %v3910, 2147483648
    %v3917 = vmul.f32 %v3911, 1.442695
    %v3918 = vpow.pop %v3917
    %v3919 = vmul.f32 %v3912, 1.442695
    %v3920 = vpow.pop %v3919
    %v3921 = vmul.f32 %v3913, 1.442695
    %v3922 = vpow.pop %v3921
    %v3923 = vmul.f32 %v3914, 1.442695
    %v3924 = vpow.pop %v3923
    %v3925 = vmul.f32 %v3915, 1.442695
    %v3926 = vpow.pop %v3925
    %v3927 = vmul.f32 %v3916, 1.442695
    %v3928 = vpow.pop %v3927
    %v3929 = vadd.f32 %v3918, 1.0
    %v3930 = vadd.f32 %v3920, 1.0
    %v3931 = vadd.f32 %v3922, 1.0
    %v3932 = vadd.f32 %v3924, 1.0
    %v3933 = vadd.f32 %v3926, 1.0
    %v3934 = vadd.f32 %v3928, 1.0
    %v3935 = vrcp.pop %v3929
    %v3936 = vmul.f32 %v3929, %v3935
    %v3937 = vsub.f32 1.0, %v3936
    %v3938 = vmul.f32 %v3935, %v3937
    %v3939 = vadd.f32 %v3935, %v3938
    %vm3940 = vweird.f32 %v3929
    %vm3941 = vweird.f32 %v3935
    %vm3942 = vmor %vm3940, %vm3941
    %v3943 = vsel %vm3942, %v3935, %v3939
    %v3944 = vand.u32 2147483647, %v3929
    %vm3945 = vcmp.eq.f32.partialorder %v3944, 8.507059e+37
    %v3946 = vand.u32 %v3929, 2147483648
    %v3947 = vor.u32 1.1754944e-38, %v3946
    %v3948 = vsel %vm3945, %v3947, %v3943
    %v3949 = vmul.f32 1.0, %v3948
    %v3950 = vrcp.pop %v3930
    %v3951 = vmul.f32 %v3930, %v3950
    %v3952 = vsub.f32 1.0, %v3951
    %v3953 = vmul.f32 %v3950, %v3952
    %v3954 = vadd.f32 %v3950, %v3953
    %vm3955 = vweird.f32 %v3930
    %vm3956 = vweird.f32 %v3950
    %vm3957 = vmor %vm3955, %vm3956
    %v3958 = vsel %vm3957, %v3950, %v3954
    %v3959 = vand.u32 2147483647, %v3930
    %vm3960 = vcmp.eq.f32.partialorder %v3959, 8.507059e+37
    %v3961 = vand.u32 %v3930, 2147483648
    %v3962 = vor.u32 1.1754944e-38, %v3961
    %v3963 = vsel %vm3960, %v3962, %v3958
    %v3964 = vmul.f32 1.0, %v3963
    %v3965 = vrcp.pop %v3931
    %v3966 = vmul.f32 %v3931, %v3965
    %v3967 = vsub.f32 1.0, %v3966
    %v3968 = vmul.f32 %v3965, %v3967
    %v3969 = vadd.f32 %v3965, %v3968
    %vm3970 = vweird.f32 %v3931
    %vm3971 = vweird.f32 %v3965
    %vm3972 = vmor %vm3970, %vm3971
    %v3973 = vsel %vm3972, %v3965, %v3969
    %v3974 = vand.u32 2147483647, %v3931
    %vm3975 = vcmp.eq.f32.partialorder %v3974, 8.507059e+37
    %v3976 = vand.u32 %v3931, 2147483648
    %v3977 = vor.u32 1.1754944e-38, %v3976
    %v3978 = vsel %vm3975, %v3977, %v3973
    %v3979 = vmul.f32 1.0, %v3978
    %v3980 = vrcp.pop %v3932
    %v3981 = vmul.f32 %v3932, %v3980
    %v3982 = vsub.f32 1.0, %v3981
    %v3983 = vmul.f32 %v3980, %v3982
    %v3984 = vadd.f32 %v3980, %v3983
    %vm3985 = vweird.f32 %v3932
    %vm3986 = vweird.f32 %v3980
    %vm3987 = vmor %vm3985, %vm3986
    %v3988 = vsel %vm3987, %v3980, %v3984
    %v3989 = vand.u32 2147483647, %v3932
    %vm3990 = vcmp.eq.f32.partialorder %v3989, 8.507059e+37
    %v3991 = vand.u32 %v3932, 2147483648
    %v3992 = vor.u32 1.1754944e-38, %v3991
    %v3993 = vsel %vm3990, %v3992, %v3988
    %v3994 = vmul.f32 1.0, %v3993
    %v3995 = vrcp.pop %v3933
    %v3996 = vmul.f32 %v3933, %v3995
    %v3997 = vsub.f32 1.0, %v3996
    %v3998 = vmul.f32 %v3995, %v3997
    %v3999 = vadd.f32 %v3995, %v3998
    %vm4000 = vweird.f32 %v3933
    %vm4001 = vweird.f32 %v3995
    %vm4002 = vmor %vm4000, %vm4001
    %v4003 = vsel %vm4002, %v3995, %v3999
    %v4004 = vand.u32 2147483647, %v3933
    %vm4005 = vcmp.eq.f32.partialorder %v4004, 8.507059e+37
    %v4006 = vand.u32 %v3933, 2147483648
    %v4007 = vor.u32 1.1754944e-38, %v4006
    %v4008 = vsel %vm4005, %v4007, %v4003
    %v4009 = vmul.f32 1.0, %v4008
    %v4010 = vrcp.pop %v3934
    %v4011 = vmul.f32 %v3934, %v4010
    %v4012 = vsub.f32 1.0, %v4011
    %v4013 = vmul.f32 %v4010, %v4012
    %v4014 = vadd.f32 %v4010, %v4013
    %vm4015 = vweird.f32 %v3934
    %vm4016 = vweird.f32 %v4010
    %vm4017 = vmor %vm4015, %vm4016
    %v4018 = vsel %vm4017, %v4010, %v4014
    %v4019 = vand.u32 2147483647, %v3934
    %vm4020 = vcmp.eq.f32.partialorder %v4019, 8.507059e+37
    %v4021 = vand.u32 %v3934, 2147483648
    %v4022 = vor.u32 1.1754944e-38, %v4021
    %v4023 = vsel %vm4020, %v4022, %v4018
    %v4024 = vmul.f32 1.0, %v4023
    %v4025 = vshra.s32 %v65, 8
    %v4026 = vshra.s32 %v66, 8
    %v4027 = vshra.s32 %v67, 8
    %v4028 = vshra.s32 %v68, 8
    %vm4029 = vcmp.ge.s32.totalorder %v4025, 1
    %vm4030 = vcmp.ge.s32.totalorder %v4026, 1
    %vm4031 = vcmp.ge.s32.totalorder %v4027, 1
    %vm4032 = vcmp.ge.s32.totalorder %v4028, 1
    %v4033 = vsel %vm4029, 1, 0
    %v4034 = vsel %vm4030, 1, 0
    %v4035 = vsel %vm4031, 1, 0
    %v4036 = vsel %vm4032, 1, 0
    %vm4037 = vcmp.eq.s32.totalorder %v4033, 1
    %vm4038 = vcmp.eq.s32.totalorder %v4034, 1
    %vm4039 = vcmp.eq.s32.totalorder %v4035, 1
    %vm4040 = vcmp.eq.s32.totalorder %v4036, 1
    %4042 = vset.pattern.permute.xlu0 1
    %4043 = vperm.xlu0 %4042, %v3949
    %v4044 = vpop.permute.xlu0 %4043
    %4047 = vset.pattern.permute.xlu0 1
    %4048 = vperm.xlu0 %4047, %v3964
    %v4049 = vpop.permute.xlu0 %4048
    %4052 = vset.pattern.permute.xlu0 1
    %4053 = vperm.xlu0 %4052, %v3979
    %v4054 = vpop.permute.xlu0 %4053
    %4057 = vset.pattern.permute.xlu0 1
    %4058 = vperm.xlu0 %4057, %v3994
    %v4059 = vpop.permute.xlu0 %4058
    %4062 = vset.pattern.permute.xlu0 1
    %4063 = vperm.xlu0 %4062, %v4009
    %v4064 = vpop.permute.xlu0 %4063
    %4067 = vset.pattern.permute.xlu0 1
    %4068 = vperm.xlu0 %4067, %v4024
    %v4069 = vpop.permute.xlu0 %4068
    %4071 = vset.pattern.permute.xlu0 0
    %4072 = vperm.xlu0 %4071, %v3949
    %v4073 = vpop.permute.xlu0 %4072
    %4075 = vset.pattern.permute.xlu0 0
    %4076 = vperm.xlu0 %4075, %v3964
    %v4077 = vpop.permute.xlu0 %4076
    %4079 = vset.pattern.permute.xlu0 0
    %4080 = vperm.xlu0 %4079, %v3979
    %v4081 = vpop.permute.xlu0 %4080
    %4083 = vset.pattern.permute.xlu0 0
    %4084 = vperm.xlu0 %4083, %v3994
    %v4085 = vpop.permute.xlu0 %4084
    %4087 = vset.pattern.permute.xlu0 0
    %4088 = vperm.xlu0 %4087, %v4009
    %v4089 = vpop.permute.xlu0 %4088
    %4091 = vset.pattern.permute.xlu0 0
    %4092 = vperm.xlu0 %4091, %v4024
    %v4093 = vpop.permute.xlu0 %4092
    %v4095 = vsel %vm4037, %v4044, %v4073
    %v4096 = vsel %vm4038, %v4044, %v4073
    %v4097 = vsel %vm4039, %v4044, %v4073
    %v4098 = vsel %vm4040, %v4044, %v4073
    %v4099 = vsel %vm4037, %v4049, %v4077
    %v4100 = vsel %vm4038, %v4049, %v4077
    %v4101 = vsel %vm4039, %v4049, %v4077
    %v4102 = vsel %vm4040, %v4049, %v4077
    %v4103 = vsel %vm4037, %v4054, %v4081
    %v4104 = vsel %vm4038, %v4054, %v4081
    %v4105 = vsel %vm4039, %v4054, %v4081
    %v4106 = vsel %vm4040, %v4054, %v4081
    %v4107 = vsel %vm4037, %v4059, %v4085
    %v4108 = vsel %vm4038, %v4059, %v4085
    %v4109 = vsel %vm4039, %v4059, %v4085
    %v4110 = vsel %vm4040, %v4059, %v4085
    %v4111 = vsel %vm4037, %v4064, %v4089
    %v4112 = vsel %vm4038, %v4064, %v4089
    %v4113 = vsel %vm4039, %v4064, %v4089
    %v4114 = vsel %vm4040, %v4064, %v4089
    %v4115 = vsel %vm4037, %v4069, %v4093
    %v4116 = vsel %vm4038, %v4069, %v4093
    %v4117 = vsel %vm4039, %v4069, %v4093
    %v4118 = vsel %vm4040, %v4069, %v4093
    %v4119 = vmul.f32 %v3574, %v4095
    %v4120 = vmul.f32 %v3575, %v4096
    %v4121 = vmul.f32 %v3576, %v4097
    %v4122 = vmul.f32 %v3577, %v4098
    %v4123 = vmul.f32 %v3578, %v4099
    %v4124 = vmul.f32 %v3579, %v4100
    %v4125 = vmul.f32 %v3580, %v4101
    %v4126 = vmul.f32 %v3581, %v4102
    %v4127 = vmul.f32 %v3582, %v4103
    %v4128 = vmul.f32 %v3583, %v4104
    %v4129 = vmul.f32 %v3584, %v4105
    %v4130 = vmul.f32 %v3585, %v4106
    %v4131 = vmul.f32 %v3586, %v4107
    %v4132 = vmul.f32 %v3587, %v4108
    %v4133 = vmul.f32 %v3588, %v4109
    %v4134 = vmul.f32 %v3589, %v4110
    %v4135 = vmul.f32 %v3590, %v4111
    %v4136 = vmul.f32 %v3591, %v4112
    %v4137 = vmul.f32 %v3592, %v4113
    %v4138 = vmul.f32 %v3593, %v4114
    %v4139 = vmul.f32 %v3594, %v4115
    %v4140 = vmul.f32 %v3595, %v4116
    %v4141 = vmul.f32 %v3596, %v4117
    %v4142 = vmul.f32 %v3597, %v4118
    %v4143 = vadd.f32 %v4119, %v4123
    %v4144 = vadd.f32 %v4143, %v4127
    %v4145 = vadd.f32 %v4144, %v4131
    %v4146 = vadd.f32 %v4145, %v4135
    %v4147 = vadd.f32 %v4146, %v4139
    %v4148 = vrot.slane %v4147, 4
    %v4149 = vadd.f32 %v4147, %v4148
    %v4150 = vrot.slane %v4149, 2
    %v4151 = vadd.f32 %v4149, %v4150
    %v4152 = vrot.slane %v4151, 1
    %v4153 = vadd.f32 %v4151, %v4152
    %v4154 = vadd.f32 %v4120, %v4124
    %v4155 = vadd.f32 %v4154, %v4128
    %v4156 = vadd.f32 %v4155, %v4132
    %v4157 = vadd.f32 %v4156, %v4136
    %v4158 = vadd.f32 %v4157, %v4140
    %v4159 = vrot.slane %v4158, 4
    %v4160 = vadd.f32 %v4158, %v4159
    %v4161 = vrot.slane %v4160, 2
    %v4162 = vadd.f32 %v4160, %v4161
    %v4163 = vrot.slane %v4162, 1
    %v4164 = vadd.f32 %v4162, %v4163
    %v4165 = vadd.f32 %v4121, %v4125
    %v4166 = vadd.f32 %v4165, %v4129
    %v4167 = vadd.f32 %v4166, %v4133
    %v4168 = vadd.f32 %v4167, %v4137
    %v4169 = vadd.f32 %v4168, %v4141
    %v4170 = vrot.slane %v4169, 4
    %v4171 = vadd.f32 %v4169, %v4170
    %v4172 = vrot.slane %v4171, 2
    %v4173 = vadd.f32 %v4171, %v4172
    %v4174 = vrot.slane %v4173, 1
    %v4175 = vadd.f32 %v4173, %v4174
    %v4176 = vadd.f32 %v4122, %v4126
    %v4177 = vadd.f32 %v4176, %v4130
    %v4178 = vadd.f32 %v4177, %v4134
    %v4179 = vadd.f32 %v4178, %v4138
    %v4180 = vadd.f32 %v4179, %v4142
    %v4181 = vrot.slane %v4180, 4
    %v4182 = vadd.f32 %v4180, %v4181
    %v4183 = vrot.slane %v4182, 2
    %v4184 = vadd.f32 %v4182, %v4183
    %v4185 = vrot.slane %v4184, 1
    %v4186 = vadd.f32 %v4184, %v4185
    %v4187 = vrcp.pop 48.0
    %v4188 = vmul.f32 48.0, %v4187
    %v4189 = vsub.f32 1.0, %v4188
    %v4190 = vmul.f32 %v4187, %v4189
    %v4191 = vadd.f32 %v4187, %v4190
    %vm4192 = vweird.f32 %v4187
    %v4193 = vsel %vm4192, %v4187, %v4191
    %v4194 = vmul.f32 %v4153, %v4193
    %v4195 = vmul.f32 %v4164, %v4193
    %v4196 = vmul.f32 %v4175, %v4193
    %v4197 = vmul.f32 %v4186, %v4193
    %v4198 = vmax.f32 %v4119, %v4123
    %v4199 = vmax.f32 %v4198, %v4127
    %v4200 = vmax.f32 %v4199, %v4131
    %v4201 = vmax.f32 %v4200, %v4135
    %v4202 = vmax.f32 %v4201, %v4139
    %v4203 = vrot.slane %v4202, 4
    %v4204 = vmax.f32 %v4202, %v4203
    %v4205 = vrot.slane %v4204, 2
    %v4206 = vmax.f32 %v4204, %v4205
    %v4207 = vrot.slane %v4206, 1
    %v4208 = vmax.f32 %v4206, %v4207
    %v4209 = vmax.f32 %v4120, %v4124
    %v4210 = vmax.f32 %v4209, %v4128
    %v4211 = vmax.f32 %v4210, %v4132
    %v4212 = vmax.f32 %v4211, %v4136
    %v4213 = vmax.f32 %v4212, %v4140
    %v4214 = vrot.slane %v4213, 4
    %v4215 = vmax.f32 %v4213, %v4214
    %v4216 = vrot.slane %v4215, 2
    %v4217 = vmax.f32 %v4215, %v4216
    %v4218 = vrot.slane %v4217, 1
    %v4219 = vmax.f32 %v4217, %v4218
    %v4220 = vmax.f32 %v4121, %v4125
    %v4221 = vmax.f32 %v4220, %v4129
    %v4222 = vmax.f32 %v4221, %v4133
    %v4223 = vmax.f32 %v4222, %v4137
    %v4224 = vmax.f32 %v4223, %v4141
    %v4225 = vrot.slane %v4224, 4
    %v4226 = vmax.f32 %v4224, %v4225
    %v4227 = vrot.slane %v4226, 2
    %v4228 = vmax.f32 %v4226, %v4227
    %v4229 = vrot.slane %v4228, 1
    %v4230 = vmax.f32 %v4228, %v4229
    %v4231 = vmax.f32 %v4122, %v4126
    %v4232 = vmax.f32 %v4231, %v4130
    %v4233 = vmax.f32 %v4232, %v4134
    %v4234 = vmax.f32 %v4233, %v4138
    %v4235 = vmax.f32 %v4234, %v4142
    %v4236 = vrot.slane %v4235, 4
    %v4237 = vmax.f32 %v4235, %v4236
    %v4238 = vrot.slane %v4237, 2
    %v4239 = vmax.f32 %v4237, %v4238
    %v4240 = vrot.slane %v4239, 1
    %v4241 = vmax.f32 %v4239, %v4240
    %4242 = vrot.lane.b32.xlu0 %v4194, 51
    %v4243 = vpop.permute.xlu0 %4242
    %4244 = vrot.lane.b32.xlu0 %v4195, 51
    %v4245 = vpop.permute.xlu0 %4244
    %4246 = vrot.lane.b32.xlu0 %v4196, 51
    %v4247 = vpop.permute.xlu0 %4246
    %4248 = vrot.lane.b32.xlu0 %v4197, 51
    %v4249 = vpop.permute.xlu0 %4248
    %vm4250 = vcmp.lt.s32.totalorder %v65, 51
    %v4251 = vsel %vm4250, %v4247, %v4249
    %v4252 = vsel %vm4250, %v4245, %v4247
    %v4253 = vsel %vm4250, %v4243, %v4245
    %v4254 = vsel %vm4250, %v4249, %v4243
    %s4255 = sld [smem:[#allocation2]]
    %v4256 = vstv %s4255
    %v4257 = vmul.f32 %v4254, %v4256
    %v4258 = vmul.f32 %v4253, %v4256
    %v4259 = vmul.f32 %v4252, %v4256
    %v4260 = vmul.f32 %v4251, %v4256
    %4261 = vrot.lane.b32.xlu0 %v4208, 51
    %v4262 = vpop.permute.xlu0 %4261
    %4263 = vrot.lane.b32.xlu0 %v4219, 51
    %v4264 = vpop.permute.xlu0 %4263
    %4265 = vrot.lane.b32.xlu0 %v4230, 51
    %v4266 = vpop.permute.xlu0 %4265
    %4267 = vrot.lane.b32.xlu0 %v4241, 51
    %v4268 = vpop.permute.xlu0 %4267
    %v4269 = vsel %vm4250, %v4266, %v4268
    %v4270 = vsel %vm4250, %v4264, %v4266
    %v4271 = vsel %vm4250, %v4262, %v4264
    %v4272 = vsel %vm4250, %v4268, %v4262
    %s4273 = sld [smem:[#allocation2 + $0x80]]
    %v4274 = vstv %s4273
    %v4275 = vmul.f32 %v4272, %v4274
    %v4276 = vmul.f32 %v4271, %v4274
    %v4277 = vmul.f32 %v4270, %v4274
    %v4278 = vmul.f32 %v4269, %v4274
    %v4279 = vadd.f32 %v4257, %v4275
    %v4280 = vadd.f32 %v4258, %v4276
    %v4281 = vadd.f32 %v4259, %v4277
    %v4282 = vadd.f32 %v4260, %v4278
    %v4283 = vsel %vm89, %v4279, 0.0
    %v4284 = vsel %vm90, %v4280, 0.0
    %v4285 = vsel %vm91, %v4281, 0.0
    %v4286 = vsel %vm92, %v4282, 0.0
    %v4287 = vadd.f32 %v4283, 0.0
    %v4288 = vadd.f32 %v4284, 0.0
    %v4289 = vadd.f32 %v4285, 0.0
    %v4290 = vadd.f32 %v4286, 0.0
    %4291 = vrot.lane.b32.xlu0 %v4194, 50
    %v4292 = vpop.permute.xlu0 %4291
    %4293 = vrot.lane.b32.xlu0 %v4195, 50
    %v4294 = vpop.permute.xlu0 %4293
    %4295 = vrot.lane.b32.xlu0 %v4196, 50
    %v4296 = vpop.permute.xlu0 %4295
    %4297 = vrot.lane.b32.xlu0 %v4197, 50
    %v4298 = vpop.permute.xlu0 %4297
    %vm4299 = vcmp.lt.s32.totalorder %v65, 50
    %v4300 = vsel %vm4299, %v4296, %v4298
    %v4301 = vsel %vm4299, %v4294, %v4296
    %v4302 = vsel %vm4299, %v4292, %v4294
    %v4303 = vsel %vm4299, %v4298, %v4292
    %s4304 = sld [smem:[#allocation2 + $0x1]]
    %v4305 = vstv %s4304
    %v4306 = vmul.f32 %v4303, %v4305
    %v4307 = vmul.f32 %v4302, %v4305
    %v4308 = vmul.f32 %v4301, %v4305
    %v4309 = vmul.f32 %v4300, %v4305
    %4310 = vrot.lane.b32.xlu0 %v4208, 50
    %v4311 = vpop.permute.xlu0 %4310
    %4312 = vrot.lane.b32.xlu0 %v4219, 50
    %v4313 = vpop.permute.xlu0 %4312
    %4314 = vrot.lane.b32.xlu0 %v4230, 50
    %v4315 = vpop.permute.xlu0 %4314
    %4316 = vrot.lane.b32.xlu0 %v4241, 50
    %v4317 = vpop.permute.xlu0 %4316
    %v4318 = vsel %vm4299, %v4315, %v4317
    %v4319 = vsel %vm4299, %v4313, %v4315
    %v4320 = vsel %vm4299, %v4311, %v4313
    %v4321 = vsel %vm4299, %v4317, %v4311
    %s4322 = sld [smem:[#allocation2 + $0x81]]
    %v4323 = vstv %s4322
    %v4324 = vmul.f32 %v4321, %v4323
    %v4325 = vmul.f32 %v4320, %v4323
    %v4326 = vmul.f32 %v4319, %v4323
    %v4327 = vmul.f32 %v4318, %v4323
    %v4328 = vadd.f32 %v4306, %v4324
    %v4329 = vadd.f32 %v4307, %v4325
    %v4330 = vadd.f32 %v4308, %v4326
    %v4331 = vadd.f32 %v4309, %v4327
    %v4332 = vsel %vm97, %v4328, 0.0
    %v4333 = vsel %vm98, %v4329, 0.0
    %v4334 = vsel %vm99, %v4330, 0.0
    %v4335 = vsel %vm100, %v4331, 0.0
    %v4336 = vadd.f32 %v4287, %v4332
    %v4337 = vadd.f32 %v4288, %v4333
    %v4338 = vadd.f32 %v4289, %v4334
    %v4339 = vadd.f32 %v4290, %v4335
    %4340 = vrot.lane.b32.xlu0 %v4194, 49
    %v4341 = vpop.permute.xlu0 %4340
    %4342 = vrot.lane.b32.xlu0 %v4195, 49
    %v4343 = vpop.permute.xlu0 %4342
    %4344 = vrot.lane.b32.xlu0 %v4196, 49
    %v4345 = vpop.permute.xlu0 %4344
    %4346 = vrot.lane.b32.xlu0 %v4197, 49
    %v4347 = vpop.permute.xlu0 %4346
    %vm4348 = vcmp.lt.s32.totalorder %v65, 49
    %v4349 = vsel %vm4348, %v4345, %v4347
    %v4350 = vsel %vm4348, %v4343, %v4345
    %v4351 = vsel %vm4348, %v4341, %v4343
    %v4352 = vsel %vm4348, %v4347, %v4341
    %s4353 = sld [smem:[#allocation2 + $0x2]]
    %v4354 = vstv %s4353
    %v4355 = vmul.f32 %v4352, %v4354
    %v4356 = vmul.f32 %v4351, %v4354
    %v4357 = vmul.f32 %v4350, %v4354
    %v4358 = vmul.f32 %v4349, %v4354
    %4359 = vrot.lane.b32.xlu0 %v4208, 49
    %v4360 = vpop.permute.xlu0 %4359
    %4361 = vrot.lane.b32.xlu0 %v4219, 49
    %v4362 = vpop.permute.xlu0 %4361
    %4363 = vrot.lane.b32.xlu0 %v4230, 49
    %v4364 = vpop.permute.xlu0 %4363
    %4365 = vrot.lane.b32.xlu0 %v4241, 49
    %v4366 = vpop.permute.xlu0 %4365
    %v4367 = vsel %vm4348, %v4364, %v4366
    %v4368 = vsel %vm4348, %v4362, %v4364
    %v4369 = vsel %vm4348, %v4360, %v4362
    %v4370 = vsel %vm4348, %v4366, %v4360
    %s4371 = sld [smem:[#allocation2 + $0x82]]
    %v4372 = vstv %s4371
    %v4373 = vmul.f32 %v4370, %v4372
    %v4374 = vmul.f32 %v4369, %v4372
    %v4375 = vmul.f32 %v4368, %v4372
    %v4376 = vmul.f32 %v4367, %v4372
    %v4377 = vadd.f32 %v4355, %v4373
    %v4378 = vadd.f32 %v4356, %v4374
    %v4379 = vadd.f32 %v4357, %v4375
    %v4380 = vadd.f32 %v4358, %v4376
    %v4381 = vsel %vm105, %v4377, 0.0
    %v4382 = vsel %vm106, %v4378, 0.0
    %v4383 = vsel %vm107, %v4379, 0.0
    %v4384 = vsel %vm108, %v4380, 0.0
    %v4385 = vadd.f32 %v4336, %v4381
    %v4386 = vadd.f32 %v4337, %v4382
    %v4387 = vadd.f32 %v4338, %v4383
    %v4388 = vadd.f32 %v4339, %v4384
    %4389 = vrot.lane.b32.xlu0 %v4194, 48
    %v4390 = vpop.permute.xlu0 %4389
    %4391 = vrot.lane.b32.xlu0 %v4195, 48
    %v4392 = vpop.permute.xlu0 %4391
    %4393 = vrot.lane.b32.xlu0 %v4196, 48
    %v4394 = vpop.permute.xlu0 %4393
    %4395 = vrot.lane.b32.xlu0 %v4197, 48
    %v4396 = vpop.permute.xlu0 %4395
    %vm4397 = vcmp.lt.s32.totalorder %v65, 48
    %v4398 = vsel %vm4397, %v4394, %v4396
    %v4399 = vsel %vm4397, %v4392, %v4394
    %v4400 = vsel %vm4397, %v4390, %v4392
    %v4401 = vsel %vm4397, %v4396, %v4390
    %s4402 = sld [smem:[#allocation2 + $0x3]]
    %v4403 = vstv %s4402
    %v4404 = vmul.f32 %v4401, %v4403
    %v4405 = vmul.f32 %v4400, %v4403
    %v4406 = vmul.f32 %v4399, %v4403
    %v4407 = vmul.f32 %v4398, %v4403
    %4408 = vrot.lane.b32.xlu0 %v4208, 48
    %v4409 = vpop.permute.xlu0 %4408
    %4410 = vrot.lane.b32.xlu0 %v4219, 48
    %v4411 = vpop.permute.xlu0 %4410
    %4412 = vrot.lane.b32.xlu0 %v4230, 48
    %v4413 = vpop.permute.xlu0 %4412
    %4414 = vrot.lane.b32.xlu0 %v4241, 48
    %v4415 = vpop.permute.xlu0 %4414
    %v4416 = vsel %vm4397, %v4413, %v4415
    %v4417 = vsel %vm4397, %v4411, %v4413
    %v4418 = vsel %vm4397, %v4409, %v4411
    %v4419 = vsel %vm4397, %v4415, %v4409
    %s4420 = sld [smem:[#allocation2 + $0x83]]
    %v4421 = vstv %s4420
    %v4422 = vmul.f32 %v4419, %v4421
    %v4423 = vmul.f32 %v4418, %v4421
    %v4424 = vmul.f32 %v4417, %v4421
    %v4425 = vmul.f32 %v4416, %v4421
    %v4426 = vadd.f32 %v4404, %v4422
    %v4427 = vadd.f32 %v4405, %v4423
    %v4428 = vadd.f32 %v4406, %v4424
    %v4429 = vadd.f32 %v4407, %v4425
    %v4430 = vsel %vm81, %v4426, 0.0
    %v4431 = vsel %vm82, %v4427, 0.0
    %v4432 = vsel %vm83, %v4428, 0.0
    %v4433 = vsel %vm84, %v4429, 0.0
    %v4434 = vadd.f32 %v4385, %v4430
    %v4435 = vadd.f32 %v4386, %v4431
    %v4436 = vadd.f32 %v4387, %v4432
    %v4437 = vadd.f32 %v4388, %v4433
    %4438 = vrot.lane.b32.xlu0 %v4194, 47
    %v4439 = vpop.permute.xlu0 %4438
    %4440 = vrot.lane.b32.xlu0 %v4195, 47
    %v4441 = vpop.permute.xlu0 %4440
    %4442 = vrot.lane.b32.xlu0 %v4196, 47
    %v4443 = vpop.permute.xlu0 %4442
    %4444 = vrot.lane.b32.xlu0 %v4197, 47
    %v4445 = vpop.permute.xlu0 %4444
    %vm4446 = vcmp.lt.s32.totalorder %v65, 47
    %v4447 = vsel %vm4446, %v4443, %v4445
    %v4448 = vsel %vm4446, %v4441, %v4443
    %v4449 = vsel %vm4446, %v4439, %v4441
    %v4450 = vsel %vm4446, %v4445, %v4439
    %s4451 = sld [smem:[#allocation2 + $0x4]]
    %v4452 = vstv %s4451
    %v4453 = vmul.f32 %v4450, %v4452
    %v4454 = vmul.f32 %v4449, %v4452
    %v4455 = vmul.f32 %v4448, %v4452
    %v4456 = vmul.f32 %v4447, %v4452
    %4457 = vrot.lane.b32.xlu0 %v4208, 47
    %v4458 = vpop.permute.xlu0 %4457
    %4459 = vrot.lane.b32.xlu0 %v4219, 47
    %v4460 = vpop.permute.xlu0 %4459
    %4461 = vrot.lane.b32.xlu0 %v4230, 47
    %v4462 = vpop.permute.xlu0 %4461
    %4463 = vrot.lane.b32.xlu0 %v4241, 47
    %v4464 = vpop.permute.xlu0 %4463
    %v4465 = vsel %vm4446, %v4462, %v4464
    %v4466 = vsel %vm4446, %v4460, %v4462
    %v4467 = vsel %vm4446, %v4458, %v4460
    %v4468 = vsel %vm4446, %v4464, %v4458
    %s4469 = sld [smem:[#allocation2 + $0x84]]
    %v4470 = vstv %s4469
    %v4471 = vmul.f32 %v4468, %v4470
    %v4472 = vmul.f32 %v4467, %v4470
    %v4473 = vmul.f32 %v4466, %v4470
    %v4474 = vmul.f32 %v4465, %v4470
    %v4475 = vadd.f32 %v4453, %v4471
    %v4476 = vadd.f32 %v4454, %v4472
    %v4477 = vadd.f32 %v4455, %v4473
    %v4478 = vadd.f32 %v4456, %v4474
    %v4479 = vsel %vm113, %v4475, 0.0
    %v4480 = vsel %vm114, %v4476, 0.0
    %v4481 = vsel %vm115, %v4477, 0.0
    %v4482 = vsel %vm116, %v4478, 0.0
    %v4483 = vadd.f32 %v4434, %v4479
    %v4484 = vadd.f32 %v4435, %v4480
    %v4485 = vadd.f32 %v4436, %v4481
    %v4486 = vadd.f32 %v4437, %v4482
    %4487 = vrot.lane.b32.xlu0 %v4194, 46
    %v4488 = vpop.permute.xlu0 %4487
    %4489 = vrot.lane.b32.xlu0 %v4195, 46
    %v4490 = vpop.permute.xlu0 %4489
    %4491 = vrot.lane.b32.xlu0 %v4196, 46
    %v4492 = vpop.permute.xlu0 %4491
    %4493 = vrot.lane.b32.xlu0 %v4197, 46
    %v4494 = vpop.permute.xlu0 %4493
    %vm4495 = vcmp.lt.s32.totalorder %v65, 46
    %v4496 = vsel %vm4495, %v4492, %v4494
    %v4497 = vsel %vm4495, %v4490, %v4492
    %v4498 = vsel %vm4495, %v4488, %v4490
    %v4499 = vsel %vm4495, %v4494, %v4488
    %s4500 = sld [smem:[#allocation2 + $0x5]]
    %v4501 = vstv %s4500
    %v4502 = vmul.f32 %v4499, %v4501
    %v4503 = vmul.f32 %v4498, %v4501
    %v4504 = vmul.f32 %v4497, %v4501
    %v4505 = vmul.f32 %v4496, %v4501
    %4506 = vrot.lane.b32.xlu0 %v4208, 46
    %v4507 = vpop.permute.xlu0 %4506
    %4508 = vrot.lane.b32.xlu0 %v4219, 46
    %v4509 = vpop.permute.xlu0 %4508
    %4510 = vrot.lane.b32.xlu0 %v4230, 46
    %v4511 = vpop.permute.xlu0 %4510
    %4512 = vrot.lane.b32.xlu0 %v4241, 46
    %v4513 = vpop.permute.xlu0 %4512
    %v4514 = vsel %vm4495, %v4511, %v4513
    %v4515 = vsel %vm4495, %v4509, %v4511
    %v4516 = vsel %vm4495, %v4507, %v4509
    %v4517 = vsel %vm4495, %v4513, %v4507
    %s4518 = sld [smem:[#allocation2 + $0x85]]
    %v4519 = vstv %s4518
    %v4520 = vmul.f32 %v4517, %v4519
    %v4521 = vmul.f32 %v4516, %v4519
    %v4522 = vmul.f32 %v4515, %v4519
    %v4523 = vmul.f32 %v4514, %v4519
    %v4524 = vadd.f32 %v4502, %v4520
    %v4525 = vadd.f32 %v4503, %v4521
    %v4526 = vadd.f32 %v4504, %v4522
    %v4527 = vadd.f32 %v4505, %v4523
    %v4528 = vsel %vm121, %v4524, 0.0
    %v4529 = vsel %vm122, %v4525, 0.0
    %v4530 = vsel %vm123, %v4526, 0.0
    %v4531 = vsel %vm124, %v4527, 0.0
    %v4532 = vadd.f32 %v4483, %v4528
    %v4533 = vadd.f32 %v4484, %v4529
    %v4534 = vadd.f32 %v4485, %v4530
    %v4535 = vadd.f32 %v4486, %v4531
    %4536 = vrot.lane.b32.xlu0 %v4194, 45
    %v4537 = vpop.permute.xlu0 %4536
    %4538 = vrot.lane.b32.xlu0 %v4195, 45
    %v4539 = vpop.permute.xlu0 %4538
    %4540 = vrot.lane.b32.xlu0 %v4196, 45
    %v4541 = vpop.permute.xlu0 %4540
    %4542 = vrot.lane.b32.xlu0 %v4197, 45
    %v4543 = vpop.permute.xlu0 %4542
    %vm4544 = vcmp.lt.s32.totalorder %v65, 45
    %v4545 = vsel %vm4544, %v4541, %v4543
    %v4546 = vsel %vm4544, %v4539, %v4541
    %v4547 = vsel %vm4544, %v4537, %v4539
    %v4548 = vsel %vm4544, %v4543, %v4537
    %s4549 = sld [smem:[#allocation2 + $0x6]]
    %v4550 = vstv %s4549
    %v4551 = vmul.f32 %v4548, %v4550
    %v4552 = vmul.f32 %v4547, %v4550
    %v4553 = vmul.f32 %v4546, %v4550
    %v4554 = vmul.f32 %v4545, %v4550
    %4555 = vrot.lane.b32.xlu0 %v4208, 45
    %v4556 = vpop.permute.xlu0 %4555
    %4557 = vrot.lane.b32.xlu0 %v4219, 45
    %v4558 = vpop.permute.xlu0 %4557
    %4559 = vrot.lane.b32.xlu0 %v4230, 45
    %v4560 = vpop.permute.xlu0 %4559
    %4561 = vrot.lane.b32.xlu0 %v4241, 45
    %v4562 = vpop.permute.xlu0 %4561
    %v4563 = vsel %vm4544, %v4560, %v4562
    %v4564 = vsel %vm4544, %v4558, %v4560
    %v4565 = vsel %vm4544, %v4556, %v4558
    %v4566 = vsel %vm4544, %v4562, %v4556
    %s4567 = sld [smem:[#allocation2 + $0x86]]
    %v4568 = vstv %s4567
    %v4569 = vmul.f32 %v4566, %v4568
    %v4570 = vmul.f32 %v4565, %v4568
    %v4571 = vmul.f32 %v4564, %v4568
    %v4572 = vmul.f32 %v4563, %v4568
    %v4573 = vadd.f32 %v4551, %v4569
    %v4574 = vadd.f32 %v4552, %v4570
    %v4575 = vadd.f32 %v4553, %v4571
    %v4576 = vadd.f32 %v4554, %v4572
    %v4577 = vsel %vm129, %v4573, 0.0
    %v4578 = vsel %vm130, %v4574, 0.0
    %v4579 = vsel %vm131, %v4575, 0.0
    %v4580 = vsel %vm132, %v4576, 0.0
    %v4581 = vadd.f32 %v4532, %v4577
    %v4582 = vadd.f32 %v4533, %v4578
    %v4583 = vadd.f32 %v4534, %v4579
    %v4584 = vadd.f32 %v4535, %v4580
    %4585 = vrot.lane.b32.xlu0 %v4194, 35
    %v4586 = vpop.permute.xlu0 %4585
    %4587 = vrot.lane.b32.xlu0 %v4195, 35
    %v4588 = vpop.permute.xlu0 %4587
    %4589 = vrot.lane.b32.xlu0 %v4196, 35
    %v4590 = vpop.permute.xlu0 %4589
    %4591 = vrot.lane.b32.xlu0 %v4197, 35
    %v4592 = vpop.permute.xlu0 %4591
    %vm4593 = vcmp.lt.s32.totalorder %v65, 35
    %v4594 = vsel %vm4593, %v4590, %v4592
    %v4595 = vsel %vm4593, %v4588, %v4590
    %v4596 = vsel %vm4593, %v4586, %v4588
    %v4597 = vsel %vm4593, %v4592, %v4586
    %s4598 = sld [smem:[#allocation2 + $0x7]]
    %v4599 = vstv %s4598
    %v4600 = vmul.f32 %v4597, %v4599
    %v4601 = vmul.f32 %v4596, %v4599
    %v4602 = vmul.f32 %v4595, %v4599
    %v4603 = vmul.f32 %v4594, %v4599
    %4604 = vrot.lane.b32.xlu0 %v4208, 35
    %v4605 = vpop.permute.xlu0 %4604
    %4606 = vrot.lane.b32.xlu0 %v4219, 35
    %v4607 = vpop.permute.xlu0 %4606
    %4608 = vrot.lane.b32.xlu0 %v4230, 35
    %v4609 = vpop.permute.xlu0 %4608
    %4610 = vrot.lane.b32.xlu0 %v4241, 35
    %v4611 = vpop.permute.xlu0 %4610
    %v4612 = vsel %vm4593, %v4609, %v4611
    %v4613 = vsel %vm4593, %v4607, %v4609
    %v4614 = vsel %vm4593, %v4605, %v4607
    %v4615 = vsel %vm4593, %v4611, %v4605
    %s4616 = sld [smem:[#allocation2 + $0x87]]
    %v4617 = vstv %s4616
    %v4618 = vmul.f32 %v4615, %v4617
    %v4619 = vmul.f32 %v4614, %v4617
    %v4620 = vmul.f32 %v4613, %v4617
    %v4621 = vmul.f32 %v4612, %v4617
    %v4622 = vadd.f32 %v4600, %v4618
    %v4623 = vadd.f32 %v4601, %v4619
    %v4624 = vadd.f32 %v4602, %v4620
    %v4625 = vadd.f32 %v4603, %v4621
    %v4626 = vsel %vm137, %v4622, 0.0
    %v4627 = vsel %vm138, %v4623, 0.0
    %v4628 = vsel %vm139, %v4624, 0.0
    %v4629 = vsel %vm140, %v4625, 0.0
    %v4630 = vadd.f32 %v4581, %v4626
    %v4631 = vadd.f32 %v4582, %v4627
    %v4632 = vadd.f32 %v4583, %v4628
    %v4633 = vadd.f32 %v4584, %v4629
    %4634 = vrot.lane.b32.xlu0 %v4194, 34
    %v4635 = vpop.permute.xlu0 %4634
    %4636 = vrot.lane.b32.xlu0 %v4195, 34
    %v4637 = vpop.permute.xlu0 %4636
    %4638 = vrot.lane.b32.xlu0 %v4196, 34
    %v4639 = vpop.permute.xlu0 %4638
    %4640 = vrot.lane.b32.xlu0 %v4197, 34
    %v4641 = vpop.permute.xlu0 %4640
    %vm4642 = vcmp.lt.s32.totalorder %v65, 34
    %v4643 = vsel %vm4642, %v4639, %v4641
    %v4644 = vsel %vm4642, %v4637, %v4639
    %v4645 = vsel %vm4642, %v4635, %v4637
    %v4646 = vsel %vm4642, %v4641, %v4635
    %s4647 = sld [smem:[#allocation2 + $0x8]]
    %v4648 = vstv %s4647
    %v4649 = vmul.f32 %v4646, %v4648
    %v4650 = vmul.f32 %v4645, %v4648
    %v4651 = vmul.f32 %v4644, %v4648
    %v4652 = vmul.f32 %v4643, %v4648
    %4653 = vrot.lane.b32.xlu0 %v4208, 34
    %v4654 = vpop.permute.xlu0 %4653
    %4655 = vrot.lane.b32.xlu0 %v4219, 34
    %v4656 = vpop.permute.xlu0 %4655
    %4657 = vrot.lane.b32.xlu0 %v4230, 34
    %v4658 = vpop.permute.xlu0 %4657
    %4659 = vrot.lane.b32.xlu0 %v4241, 34
    %v4660 = vpop.permute.xlu0 %4659
    %v4661 = vsel %vm4642, %v4658, %v4660
    %v4662 = vsel %vm4642, %v4656, %v4658
    %v4663 = vsel %vm4642, %v4654, %v4656
    %v4664 = vsel %vm4642, %v4660, %v4654
    %s4665 = sld [smem:[#allocation2 + $0x88]]
    %v4666 = vstv %s4665
    %v4667 = vmul.f32 %v4664, %v4666
    %v4668 = vmul.f32 %v4663, %v4666
    %v4669 = vmul.f32 %v4662, %v4666
    %v4670 = vmul.f32 %v4661, %v4666
    %v4671 = vadd.f32 %v4649, %v4667
    %v4672 = vadd.f32 %v4650, %v4668
    %v4673 = vadd.f32 %v4651, %v4669
    %v4674 = vadd.f32 %v4652, %v4670
    %v4675 = vsel %vm141, %v4671, 0.0
    %v4676 = vsel %vm142, %v4672, 0.0
    %v4677 = vsel %vm143, %v4673, 0.0
    %v4678 = vsel %vm144, %v4674, 0.0
    %v4679 = vadd.f32 %v4630, %v4675
    %v4680 = vadd.f32 %v4631, %v4676
    %v4681 = vadd.f32 %v4632, %v4677
    %v4682 = vadd.f32 %v4633, %v4678
    %4683 = vrot.lane.b32.xlu0 %v4194, 33
    %v4684 = vpop.permute.xlu0 %4683
    %4685 = vrot.lane.b32.xlu0 %v4195, 33
    %v4686 = vpop.permute.xlu0 %4685
    %4687 = vrot.lane.b32.xlu0 %v4196, 33
    %v4688 = vpop.permute.xlu0 %4687
    %4689 = vrot.lane.b32.xlu0 %v4197, 33
    %v4690 = vpop.permute.xlu0 %4689
    %vm4691 = vcmp.lt.s32.totalorder %v65, 33
    %v4692 = vsel %vm4691, %v4688, %v4690
    %v4693 = vsel %vm4691, %v4686, %v4688
    %v4694 = vsel %vm4691, %v4684, %v4686
    %v4695 = vsel %vm4691, %v4690, %v4684
    %s4696 = sld [smem:[#allocation2 + $0x9]]
    %v4697 = vstv %s4696
    %v4698 = vmul.f32 %v4695, %v4697
    %v4699 = vmul.f32 %v4694, %v4697
    %v4700 = vmul.f32 %v4693, %v4697
    %v4701 = vmul.f32 %v4692, %v4697
    %4702 = vrot.lane.b32.xlu0 %v4208, 33
    %v4703 = vpop.permute.xlu0 %4702
    %4704 = vrot.lane.b32.xlu0 %v4219, 33
    %v4705 = vpop.permute.xlu0 %4704
    %4706 = vrot.lane.b32.xlu0 %v4230, 33
    %v4707 = vpop.permute.xlu0 %4706
    %4708 = vrot.lane.b32.xlu0 %v4241, 33
    %v4709 = vpop.permute.xlu0 %4708
    %v4710 = vsel %vm4691, %v4707, %v4709
    %v4711 = vsel %vm4691, %v4705, %v4707
    %v4712 = vsel %vm4691, %v4703, %v4705
    %v4713 = vsel %vm4691, %v4709, %v4703
    %s4714 = sld [smem:[#allocation2 + $0x89]]
    %v4715 = vstv %s4714
    %v4716 = vmul.f32 %v4713, %v4715
    %v4717 = vmul.f32 %v4712, %v4715
    %v4718 = vmul.f32 %v4711, %v4715
    %v4719 = vmul.f32 %v4710, %v4715
    %v4720 = vadd.f32 %v4698, %v4716
    %v4721 = vadd.f32 %v4699, %v4717
    %v4722 = vadd.f32 %v4700, %v4718
    %v4723 = vadd.f32 %v4701, %v4719
    %v4724 = vsel %vm145, %v4720, 0.0
    %v4725 = vsel %vm146, %v4721, 0.0
    %v4726 = vsel %vm147, %v4722, 0.0
    %v4727 = vsel %vm148, %v4723, 0.0
    %v4728 = vadd.f32 %v4679, %v4724
    %v4729 = vadd.f32 %v4680, %v4725
    %v4730 = vadd.f32 %v4681, %v4726
    %v4731 = vadd.f32 %v4682, %v4727
    %4732 = vrot.lane.b32.xlu0 %v4194, 32
    %v4733 = vpop.permute.xlu0 %4732
    %4734 = vrot.lane.b32.xlu0 %v4195, 32
    %v4735 = vpop.permute.xlu0 %4734
    %4736 = vrot.lane.b32.xlu0 %v4196, 32
    %v4737 = vpop.permute.xlu0 %4736
    %4738 = vrot.lane.b32.xlu0 %v4197, 32
    %v4739 = vpop.permute.xlu0 %4738
    %vm4740 = vcmp.lt.s32.totalorder %v65, 32
    %v4741 = vsel %vm4740, %v4737, %v4739
    %v4742 = vsel %vm4740, %v4735, %v4737
    %v4743 = vsel %vm4740, %v4733, %v4735
    %v4744 = vsel %vm4740, %v4739, %v4733
    %s4745 = sld [smem:[#allocation2 + $0xa]]
    %v4746 = vstv %s4745
    %v4747 = vmul.f32 %v4744, %v4746
    %v4748 = vmul.f32 %v4743, %v4746
    %v4749 = vmul.f32 %v4742, %v4746
    %v4750 = vmul.f32 %v4741, %v4746
    %4751 = vrot.lane.b32.xlu0 %v4208, 32
    %v4752 = vpop.permute.xlu0 %4751
    %4753 = vrot.lane.b32.xlu0 %v4219, 32
    %v4754 = vpop.permute.xlu0 %4753
    %4755 = vrot.lane.b32.xlu0 %v4230, 32
    %v4756 = vpop.permute.xlu0 %4755
    %4757 = vrot.lane.b32.xlu0 %v4241, 32
    %v4758 = vpop.permute.xlu0 %4757
    %v4759 = vsel %vm4740, %v4756, %v4758
    %v4760 = vsel %vm4740, %v4754, %v4756
    %v4761 = vsel %vm4740, %v4752, %v4754
    %v4762 = vsel %vm4740, %v4758, %v4752
    %s4763 = sld [smem:[#allocation2 + $0x8a]]
    %v4764 = vstv %s4763
    %v4765 = vmul.f32 %v4762, %v4764
    %v4766 = vmul.f32 %v4761, %v4764
    %v4767 = vmul.f32 %v4760, %v4764
    %v4768 = vmul.f32 %v4759, %v4764
    %v4769 = vadd.f32 %v4747, %v4765
    %v4770 = vadd.f32 %v4748, %v4766
    %v4771 = vadd.f32 %v4749, %v4767
    %v4772 = vadd.f32 %v4750, %v4768
    %v4773 = vsel %vm133, %v4769, 0.0
    %v4774 = vsel %vm134, %v4770, 0.0
    %v4775 = vsel %vm135, %v4771, 0.0
    %v4776 = vsel %vm136, %v4772, 0.0
    %v4777 = vadd.f32 %v4728, %v4773
    %v4778 = vadd.f32 %v4729, %v4774
    %v4779 = vadd.f32 %v4730, %v4775
    %v4780 = vadd.f32 %v4731, %v4776
    %4781 = vrot.lane.b32.xlu0 %v4194, 31
    %v4782 = vpop.permute.xlu0 %4781
    %4783 = vrot.lane.b32.xlu0 %v4195, 31
    %v4784 = vpop.permute.xlu0 %4783
    %4785 = vrot.lane.b32.xlu0 %v4196, 31
    %v4786 = vpop.permute.xlu0 %4785
    %4787 = vrot.lane.b32.xlu0 %v4197, 31
    %v4788 = vpop.permute.xlu0 %4787
    %vm4789 = vcmp.lt.s32.totalorder %v65, 31
    %v4790 = vsel %vm4789, %v4786, %v4788
    %v4791 = vsel %vm4789, %v4784, %v4786
    %v4792 = vsel %vm4789, %v4782, %v4784
    %v4793 = vsel %vm4789, %v4788, %v4782
    %s4794 = sld [smem:[#allocation2 + $0xb]]
    %v4795 = vstv %s4794
    %v4796 = vmul.f32 %v4793, %v4795
    %v4797 = vmul.f32 %v4792, %v4795
    %v4798 = vmul.f32 %v4791, %v4795
    %v4799 = vmul.f32 %v4790, %v4795
    %4800 = vrot.lane.b32.xlu0 %v4208, 31
    %v4801 = vpop.permute.xlu0 %4800
    %4802 = vrot.lane.b32.xlu0 %v4219, 31
    %v4803 = vpop.permute.xlu0 %4802
    %4804 = vrot.lane.b32.xlu0 %v4230, 31
    %v4805 = vpop.permute.xlu0 %4804
    %4806 = vrot.lane.b32.xlu0 %v4241, 31
    %v4807 = vpop.permute.xlu0 %4806
    %v4808 = vsel %vm4789, %v4805, %v4807
    %v4809 = vsel %vm4789, %v4803, %v4805
    %v4810 = vsel %vm4789, %v4801, %v4803
    %v4811 = vsel %vm4789, %v4807, %v4801
    %s4812 = sld [smem:[#allocation2 + $0x8b]]
    %v4813 = vstv %s4812
    %v4814 = vmul.f32 %v4811, %v4813
    %v4815 = vmul.f32 %v4810, %v4813
    %v4816 = vmul.f32 %v4809, %v4813
    %v4817 = vmul.f32 %v4808, %v4813
    %v4818 = vadd.f32 %v4796, %v4814
    %v4819 = vadd.f32 %v4797, %v4815
    %v4820 = vadd.f32 %v4798, %v4816
    %v4821 = vadd.f32 %v4799, %v4817
    %v4822 = vsel %vm149, %v4818, 0.0
    %v4823 = vsel %vm150, %v4819, 0.0
    %v4824 = vsel %vm151, %v4820, 0.0
    %v4825 = vsel %vm152, %v4821, 0.0
    %v4826 = vadd.f32 %v4777, %v4822
    %v4827 = vadd.f32 %v4778, %v4823
    %v4828 = vadd.f32 %v4779, %v4824
    %v4829 = vadd.f32 %v4780, %v4825
    %4830 = vrot.lane.b32.xlu0 %v4194, 30
    %v4831 = vpop.permute.xlu0 %4830
    %4832 = vrot.lane.b32.xlu0 %v4195, 30
    %v4833 = vpop.permute.xlu0 %4832
    %4834 = vrot.lane.b32.xlu0 %v4196, 30
    %v4835 = vpop.permute.xlu0 %4834
    %4836 = vrot.lane.b32.xlu0 %v4197, 30
    %v4837 = vpop.permute.xlu0 %4836
    %vm4838 = vcmp.lt.s32.totalorder %v65, 30
    %v4839 = vsel %vm4838, %v4835, %v4837
    %v4840 = vsel %vm4838, %v4833, %v4835
    %v4841 = vsel %vm4838, %v4831, %v4833
    %v4842 = vsel %vm4838, %v4837, %v4831
    %s4843 = sld [smem:[#allocation2 + $0xc]]
    %v4844 = vstv %s4843
    %v4845 = vmul.f32 %v4842, %v4844
    %v4846 = vmul.f32 %v4841, %v4844
    %v4847 = vmul.f32 %v4840, %v4844
    %v4848 = vmul.f32 %v4839, %v4844
    %4849 = vrot.lane.b32.xlu0 %v4208, 30
    %v4850 = vpop.permute.xlu0 %4849
    %4851 = vrot.lane.b32.xlu0 %v4219, 30
    %v4852 = vpop.permute.xlu0 %4851
    %4853 = vrot.lane.b32.xlu0 %v4230, 30
    %v4854 = vpop.permute.xlu0 %4853
    %4855 = vrot.lane.b32.xlu0 %v4241, 30
    %v4856 = vpop.permute.xlu0 %4855
    %v4857 = vsel %vm4838, %v4854, %v4856
    %v4858 = vsel %vm4838, %v4852, %v4854
    %v4859 = vsel %vm4838, %v4850, %v4852
    %v4860 = vsel %vm4838, %v4856, %v4850
    %s4861 = sld [smem:[#allocation2 + $0x8c]]
    %v4862 = vstv %s4861
    %v4863 = vmul.f32 %v4860, %v4862
    %v4864 = vmul.f32 %v4859, %v4862
    %v4865 = vmul.f32 %v4858, %v4862
    %v4866 = vmul.f32 %v4857, %v4862
    %v4867 = vadd.f32 %v4845, %v4863
    %v4868 = vadd.f32 %v4846, %v4864
    %v4869 = vadd.f32 %v4847, %v4865
    %v4870 = vadd.f32 %v4848, %v4866
    %v4871 = vsel %vm153, %v4867, 0.0
    %v4872 = vsel %vm154, %v4868, 0.0
    %v4873 = vsel %vm155, %v4869, 0.0
    %v4874 = vsel %vm156, %v4870, 0.0
    %v4875 = vadd.f32 %v4826, %v4871
    %v4876 = vadd.f32 %v4827, %v4872
    %v4877 = vadd.f32 %v4828, %v4873
    %v4878 = vadd.f32 %v4829, %v4874
    %4879 = vrot.lane.b32.xlu0 %v4194, 29
    %v4880 = vpop.permute.xlu0 %4879
    %4881 = vrot.lane.b32.xlu0 %v4195, 29
    %v4882 = vpop.permute.xlu0 %4881
    %4883 = vrot.lane.b32.xlu0 %v4196, 29
    %v4884 = vpop.permute.xlu0 %4883
    %4885 = vrot.lane.b32.xlu0 %v4197, 29
    %v4886 = vpop.permute.xlu0 %4885
    %vm4887 = vcmp.lt.s32.totalorder %v65, 29
    %v4888 = vsel %vm4887, %v4884, %v4886
    %v4889 = vsel %vm4887, %v4882, %v4884
    %v4890 = vsel %vm4887, %v4880, %v4882
    %v4891 = vsel %vm4887, %v4886, %v4880
    %s4892 = sld [smem:[#allocation2 + $0xd]]
    %v4893 = vstv %s4892
    %v4894 = vmul.f32 %v4891, %v4893
    %v4895 = vmul.f32 %v4890, %v4893
    %v4896 = vmul.f32 %v4889, %v4893
    %v4897 = vmul.f32 %v4888, %v4893
    %4898 = vrot.lane.b32.xlu0 %v4208, 29
    %v4899 = vpop.permute.xlu0 %4898
    %4900 = vrot.lane.b32.xlu0 %v4219, 29
    %v4901 = vpop.permute.xlu0 %4900
    %4902 = vrot.lane.b32.xlu0 %v4230, 29
    %v4903 = vpop.permute.xlu0 %4902
    %4904 = vrot.lane.b32.xlu0 %v4241, 29
    %v4905 = vpop.permute.xlu0 %4904
    %v4906 = vsel %vm4887, %v4903, %v4905
    %v4907 = vsel %vm4887, %v4901, %v4903
    %v4908 = vsel %vm4887, %v4899, %v4901
    %v4909 = vsel %vm4887, %v4905, %v4899
    %s4910 = sld [smem:[#allocation2 + $0x8d]]
    %v4911 = vstv %s4910
    %v4912 = vmul.f32 %v4909, %v4911
    %v4913 = vmul.f32 %v4908, %v4911
    %v4914 = vmul.f32 %v4907, %v4911
    %v4915 = vmul.f32 %v4906, %v4911
    %v4916 = vadd.f32 %v4894, %v4912
    %v4917 = vadd.f32 %v4895, %v4913
    %v4918 = vadd.f32 %v4896, %v4914
    %v4919 = vadd.f32 %v4897, %v4915
    %v4920 = vsel %vm157, %v4916, 0.0
    %v4921 = vsel %vm158, %v4917, 0.0
    %v4922 = vsel %vm159, %v4918, 0.0
    %v4923 = vsel %vm160, %v4919, 0.0
    %v4924 = vadd.f32 %v4875, %v4920
    %v4925 = vadd.f32 %v4876, %v4921
    %v4926 = vadd.f32 %v4877, %v4922
    %v4927 = vadd.f32 %v4878, %v4923
    %4928 = vrot.lane.b32.xlu0 %v4194, 19
    %v4929 = vpop.permute.xlu0 %4928
    %4930 = vrot.lane.b32.xlu0 %v4195, 19
    %v4931 = vpop.permute.xlu0 %4930
    %4932 = vrot.lane.b32.xlu0 %v4196, 19
    %v4933 = vpop.permute.xlu0 %4932
    %4934 = vrot.lane.b32.xlu0 %v4197, 19
    %v4935 = vpop.permute.xlu0 %4934
    %vm4936 = vcmp.lt.s32.totalorder %v65, 19
    %v4937 = vsel %vm4936, %v4933, %v4935
    %v4938 = vsel %vm4936, %v4931, %v4933
    %v4939 = vsel %vm4936, %v4929, %v4931
    %v4940 = vsel %vm4936, %v4935, %v4929
    %s4941 = sld [smem:[#allocation2 + $0xe]]
    %v4942 = vstv %s4941
    %v4943 = vmul.f32 %v4940, %v4942
    %v4944 = vmul.f32 %v4939, %v4942
    %v4945 = vmul.f32 %v4938, %v4942
    %v4946 = vmul.f32 %v4937, %v4942
    %4947 = vrot.lane.b32.xlu0 %v4208, 19
    %v4948 = vpop.permute.xlu0 %4947
    %4949 = vrot.lane.b32.xlu0 %v4219, 19
    %v4950 = vpop.permute.xlu0 %4949
    %4951 = vrot.lane.b32.xlu0 %v4230, 19
    %v4952 = vpop.permute.xlu0 %4951
    %4953 = vrot.lane.b32.xlu0 %v4241, 19
    %v4954 = vpop.permute.xlu0 %4953
    %v4955 = vsel %vm4936, %v4952, %v4954
    %v4956 = vsel %vm4936, %v4950, %v4952
    %v4957 = vsel %vm4936, %v4948, %v4950
    %v4958 = vsel %vm4936, %v4954, %v4948
    %s4959 = sld [smem:[#allocation2 + $0x8e]]
    %v4960 = vstv %s4959
    %v4961 = vmul.f32 %v4958, %v4960
    %v4962 = vmul.f32 %v4957, %v4960
    %v4963 = vmul.f32 %v4956, %v4960
    %v4964 = vmul.f32 %v4955, %v4960
    %v4965 = vadd.f32 %v4943, %v4961
    %v4966 = vadd.f32 %v4944, %v4962
    %v4967 = vadd.f32 %v4945, %v4963
    %v4968 = vadd.f32 %v4946, %v4964
    %v4969 = vsel %vm165, %v4965, 0.0
    %v4970 = vsel %vm166, %v4966, 0.0
    %v4971 = vsel %vm167, %v4967, 0.0
    %v4972 = vsel %vm168, %v4968, 0.0
    %v4973 = vadd.f32 %v4924, %v4969
    %v4974 = vadd.f32 %v4925, %v4970
    %v4975 = vadd.f32 %v4926, %v4971
    %v4976 = vadd.f32 %v4927, %v4972
    %4977 = vrot.lane.b32.xlu0 %v4194, 18
    %v4978 = vpop.permute.xlu0 %4977
    %4979 = vrot.lane.b32.xlu0 %v4195, 18
    %v4980 = vpop.permute.xlu0 %4979
    %4981 = vrot.lane.b32.xlu0 %v4196, 18
    %v4982 = vpop.permute.xlu0 %4981
    %4983 = vrot.lane.b32.xlu0 %v4197, 18
    %v4984 = vpop.permute.xlu0 %4983
    %vm4985 = vcmp.lt.s32.totalorder %v65, 18
    %v4986 = vsel %vm4985, %v4982, %v4984
    %v4987 = vsel %vm4985, %v4980, %v4982
    %v4988 = vsel %vm4985, %v4978, %v4980
    %v4989 = vsel %vm4985, %v4984, %v4978
    %s4990 = sld [smem:[#allocation2 + $0xf]]
    %v4991 = vstv %s4990
    %v4992 = vmul.f32 %v4989, %v4991
    %v4993 = vmul.f32 %v4988, %v4991
    %v4994 = vmul.f32 %v4987, %v4991
    %v4995 = vmul.f32 %v4986, %v4991
    %4996 = vrot.lane.b32.xlu0 %v4208, 18
    %v4997 = vpop.permute.xlu0 %4996
    %4998 = vrot.lane.b32.xlu0 %v4219, 18
    %v4999 = vpop.permute.xlu0 %4998
    %5000 = vrot.lane.b32.xlu0 %v4230, 18
    %v5001 = vpop.permute.xlu0 %5000
    %5002 = vrot.lane.b32.xlu0 %v4241, 18
    %v5003 = vpop.permute.xlu0 %5002
    %v5004 = vsel %vm4985, %v5001, %v5003
    %v5005 = vsel %vm4985, %v4999, %v5001
    %v5006 = vsel %vm4985, %v4997, %v4999
    %v5007 = vsel %vm4985, %v5003, %v4997
    %s5008 = sld [smem:[#allocation2 + $0x8f]]
    %v5009 = vstv %s5008
    %v5010 = vmul.f32 %v5007, %v5009
    %v5011 = vmul.f32 %v5006, %v5009
    %v5012 = vmul.f32 %v5005, %v5009
    %v5013 = vmul.f32 %v5004, %v5009
    %v5014 = vadd.f32 %v4992, %v5010
    %v5015 = vadd.f32 %v4993, %v5011
    %v5016 = vadd.f32 %v4994, %v5012
    %v5017 = vadd.f32 %v4995, %v5013
    %v5018 = vsel %vm169, %v5014, 0.0
    %v5019 = vsel %vm170, %v5015, 0.0
    %v5020 = vsel %vm171, %v5016, 0.0
    %v5021 = vsel %vm172, %v5017, 0.0
    %v5022 = vadd.f32 %v4973, %v5018
    %v5023 = vadd.f32 %v4974, %v5019
    %v5024 = vadd.f32 %v4975, %v5020
    %v5025 = vadd.f32 %v4976, %v5021
    %5026 = vrot.lane.b32.xlu0 %v4194, 17
    %v5027 = vpop.permute.xlu0 %5026
    %5028 = vrot.lane.b32.xlu0 %v4195, 17
    %v5029 = vpop.permute.xlu0 %5028
    %5030 = vrot.lane.b32.xlu0 %v4196, 17
    %v5031 = vpop.permute.xlu0 %5030
    %5032 = vrot.lane.b32.xlu0 %v4197, 17
    %v5033 = vpop.permute.xlu0 %5032
    %v5034 = vsel %vm1292, %v5031, %v5033
    %v5035 = vsel %vm1292, %v5029, %v5031
    %v5036 = vsel %vm1292, %v5027, %v5029
    %v5037 = vsel %vm1292, %v5033, %v5027
    %s5038 = sld [smem:[#allocation2 + $0x10]]
    %v5039 = vstv %s5038
    %v5040 = vmul.f32 %v5037, %v5039
    %v5041 = vmul.f32 %v5036, %v5039
    %v5042 = vmul.f32 %v5035, %v5039
    %v5043 = vmul.f32 %v5034, %v5039
    %5044 = vrot.lane.b32.xlu0 %v4208, 17
    %v5045 = vpop.permute.xlu0 %5044
    %5046 = vrot.lane.b32.xlu0 %v4219, 17
    %v5047 = vpop.permute.xlu0 %5046
    %5048 = vrot.lane.b32.xlu0 %v4230, 17
    %v5049 = vpop.permute.xlu0 %5048
    %5050 = vrot.lane.b32.xlu0 %v4241, 17
    %v5051 = vpop.permute.xlu0 %5050
    %v5052 = vsel %vm1292, %v5049, %v5051
    %v5053 = vsel %vm1292, %v5047, %v5049
    %v5054 = vsel %vm1292, %v5045, %v5047
    %v5055 = vsel %vm1292, %v5051, %v5045
    %s5056 = sld [smem:[#allocation2 + $0x90]]
    %v5057 = vstv %s5056
    %v5058 = vmul.f32 %v5055, %v5057
    %v5059 = vmul.f32 %v5054, %v5057
    %v5060 = vmul.f32 %v5053, %v5057
    %v5061 = vmul.f32 %v5052, %v5057
    %v5062 = vadd.f32 %v5040, %v5058
    %v5063 = vadd.f32 %v5041, %v5059
    %v5064 = vadd.f32 %v5042, %v5060
    %v5065 = vadd.f32 %v5043, %v5061
    %v5066 = vsel %vm173, %v5062, 0.0
    %v5067 = vsel %vm174, %v5063, 0.0
    %v5068 = vsel %vm175, %v5064, 0.0
    %v5069 = vsel %vm176, %v5065, 0.0
    %v5070 = vadd.f32 %v5022, %v5066
    %v5071 = vadd.f32 %v5023, %v5067
    %v5072 = vadd.f32 %v5024, %v5068
    %v5073 = vadd.f32 %v5025, %v5069
    %5074 = vrot.lane.b32.xlu0 %v4194, 16
    %v5075 = vpop.permute.xlu0 %5074
    %5076 = vrot.lane.b32.xlu0 %v4195, 16
    %v5077 = vpop.permute.xlu0 %5076
    %5078 = vrot.lane.b32.xlu0 %v4196, 16
    %v5079 = vpop.permute.xlu0 %5078
    %5080 = vrot.lane.b32.xlu0 %v4197, 16
    %v5081 = vpop.permute.xlu0 %5080
    %v5082 = vsel %vm1359, %v5079, %v5081
    %v5083 = vsel %vm1359, %v5077, %v5079
    %v5084 = vsel %vm1359, %v5075, %v5077
    %v5085 = vsel %vm1359, %v5081, %v5075
    %s5086 = sld [smem:[#allocation2 + $0x11]]
    %v5087 = vstv %s5086
    %v5088 = vmul.f32 %v5085, %v5087
    %v5089 = vmul.f32 %v5084, %v5087
    %v5090 = vmul.f32 %v5083, %v5087
    %v5091 = vmul.f32 %v5082, %v5087
    %5092 = vrot.lane.b32.xlu0 %v4208, 16
    %v5093 = vpop.permute.xlu0 %5092
    %5094 = vrot.lane.b32.xlu0 %v4219, 16
    %v5095 = vpop.permute.xlu0 %5094
    %5096 = vrot.lane.b32.xlu0 %v4230, 16
    %v5097 = vpop.permute.xlu0 %5096
    %5098 = vrot.lane.b32.xlu0 %v4241, 16
    %v5099 = vpop.permute.xlu0 %5098
    %v5100 = vsel %vm1359, %v5097, %v5099
    %v5101 = vsel %vm1359, %v5095, %v5097
    %v5102 = vsel %vm1359, %v5093, %v5095
    %v5103 = vsel %vm1359, %v5099, %v5093
    %s5104 = sld [smem:[#allocation2 + $0x91]]
    %v5105 = vstv %s5104
    %v5106 = vmul.f32 %v5103, %v5105
    %v5107 = vmul.f32 %v5102, %v5105
    %v5108 = vmul.f32 %v5101, %v5105
    %v5109 = vmul.f32 %v5100, %v5105
    %v5110 = vadd.f32 %v5088, %v5106
    %v5111 = vadd.f32 %v5089, %v5107
    %v5112 = vadd.f32 %v5090, %v5108
    %v5113 = vadd.f32 %v5091, %v5109
    %v5114 = vsel %vm161, %v5110, 0.0
    %v5115 = vsel %vm162, %v5111, 0.0
    %v5116 = vsel %vm163, %v5112, 0.0
    %v5117 = vsel %vm164, %v5113, 0.0
    %v5118 = vadd.f32 %v5070, %v5114
    %v5119 = vadd.f32 %v5071, %v5115
    %v5120 = vadd.f32 %v5072, %v5116
    %v5121 = vadd.f32 %v5073, %v5117
    %5122 = vrot.lane.b32.xlu0 %v4194, 15
    %v5123 = vpop.permute.xlu0 %5122
    %5124 = vrot.lane.b32.xlu0 %v4195, 15
    %v5125 = vpop.permute.xlu0 %5124
    %5126 = vrot.lane.b32.xlu0 %v4196, 15
    %v5127 = vpop.permute.xlu0 %5126
    %5128 = vrot.lane.b32.xlu0 %v4197, 15
    %v5129 = vpop.permute.xlu0 %5128
    %v5130 = vsel %vm1424, %v5127, %v5129
    %v5131 = vsel %vm1424, %v5125, %v5127
    %v5132 = vsel %vm1424, %v5123, %v5125
    %v5133 = vsel %vm1424, %v5129, %v5123
    %s5134 = sld [smem:[#allocation2 + $0x12]]
    %v5135 = vstv %s5134
    %v5136 = vmul.f32 %v5133, %v5135
    %v5137 = vmul.f32 %v5132, %v5135
    %v5138 = vmul.f32 %v5131, %v5135
    %v5139 = vmul.f32 %v5130, %v5135
    %5140 = vrot.lane.b32.xlu0 %v4208, 15
    %v5141 = vpop.permute.xlu0 %5140
    %5142 = vrot.lane.b32.xlu0 %v4219, 15
    %v5143 = vpop.permute.xlu0 %5142
    %5144 = vrot.lane.b32.xlu0 %v4230, 15
    %v5145 = vpop.permute.xlu0 %5144
    %5146 = vrot.lane.b32.xlu0 %v4241, 15
    %v5147 = vpop.permute.xlu0 %5146
    %v5148 = vsel %vm1424, %v5145, %v5147
    %v5149 = vsel %vm1424, %v5143, %v5145
    %v5150 = vsel %vm1424, %v5141, %v5143
    %v5151 = vsel %vm1424, %v5147, %v5141
    %s5152 = sld [smem:[#allocation2 + $0x92]]
    %v5153 = vstv %s5152
    %v5154 = vmul.f32 %v5151, %v5153
    %v5155 = vmul.f32 %v5150, %v5153
    %v5156 = vmul.f32 %v5149, %v5153
    %v5157 = vmul.f32 %v5148, %v5153
    %v5158 = vadd.f32 %v5136, %v5154
    %v5159 = vadd.f32 %v5137, %v5155
    %v5160 = vadd.f32 %v5138, %v5156
    %v5161 = vadd.f32 %v5139, %v5157
    %v5162 = vsel %vm177, %v5158, 0.0
    %v5163 = vsel %vm178, %v5159, 0.0
    %v5164 = vsel %vm179, %v5160, 0.0
    %v5165 = vsel %vm180, %v5161, 0.0
    %v5166 = vadd.f32 %v5118, %v5162
    %v5167 = vadd.f32 %v5119, %v5163
    %v5168 = vadd.f32 %v5120, %v5164
    %v5169 = vadd.f32 %v5121, %v5165
    %5170 = vrot.lane.b32.xlu0 %v4194, 14
    %v5171 = vpop.permute.xlu0 %5170
    %5172 = vrot.lane.b32.xlu0 %v4195, 14
    %v5173 = vpop.permute.xlu0 %5172
    %5174 = vrot.lane.b32.xlu0 %v4196, 14
    %v5175 = vpop.permute.xlu0 %5174
    %5176 = vrot.lane.b32.xlu0 %v4197, 14
    %v5177 = vpop.permute.xlu0 %5176
    %vm5178 = vcmp.lt.s32.totalorder %v65, 14
    %v5179 = vsel %vm5178, %v5175, %v5177
    %v5180 = vsel %vm5178, %v5173, %v5175
    %v5181 = vsel %vm5178, %v5171, %v5173
    %v5182 = vsel %vm5178, %v5177, %v5171
    %s5183 = sld [smem:[#allocation2 + $0x13]]
    %v5184 = vstv %s5183
    %v5185 = vmul.f32 %v5182, %v5184
    %v5186 = vmul.f32 %v5181, %v5184
    %v5187 = vmul.f32 %v5180, %v5184
    %v5188 = vmul.f32 %v5179, %v5184
    %5189 = vrot.lane.b32.xlu0 %v4208, 14
    %v5190 = vpop.permute.xlu0 %5189
    %5191 = vrot.lane.b32.xlu0 %v4219, 14
    %v5192 = vpop.permute.xlu0 %5191
    %5193 = vrot.lane.b32.xlu0 %v4230, 14
    %v5194 = vpop.permute.xlu0 %5193
    %5195 = vrot.lane.b32.xlu0 %v4241, 14
    %v5196 = vpop.permute.xlu0 %5195
    %v5197 = vsel %vm5178, %v5194, %v5196
    %v5198 = vsel %vm5178, %v5192, %v5194
    %v5199 = vsel %vm5178, %v5190, %v5192
    %v5200 = vsel %vm5178, %v5196, %v5190
    %s5201 = sld [smem:[#allocation2 + $0x93]]
    %v5202 = vstv %s5201
    %v5203 = vmul.f32 %v5200, %v5202
    %v5204 = vmul.f32 %v5199, %v5202
    %v5205 = vmul.f32 %v5198, %v5202
    %v5206 = vmul.f32 %v5197, %v5202
    %v5207 = vadd.f32 %v5185, %v5203
    %v5208 = vadd.f32 %v5186, %v5204
    %v5209 = vadd.f32 %v5187, %v5205
    %v5210 = vadd.f32 %v5188, %v5206
    %v5211 = vsel %vm181, %v5207, 0.0
    %v5212 = vsel %vm182, %v5208, 0.0
    %v5213 = vsel %vm183, %v5209, 0.0
    %v5214 = vsel %vm184, %v5210, 0.0
    %v5215 = vadd.f32 %v5166, %v5211
    %v5216 = vadd.f32 %v5167, %v5212
    %v5217 = vadd.f32 %v5168, %v5213
    %v5218 = vadd.f32 %v5169, %v5214
    %5219 = vrot.lane.b32.xlu0 %v4194, 13
    %v5220 = vpop.permute.xlu0 %5219
    %5221 = vrot.lane.b32.xlu0 %v4195, 13
    %v5222 = vpop.permute.xlu0 %5221
    %5223 = vrot.lane.b32.xlu0 %v4196, 13
    %v5224 = vpop.permute.xlu0 %5223
    %5225 = vrot.lane.b32.xlu0 %v4197, 13
    %v5226 = vpop.permute.xlu0 %5225
    %vm5227 = vcmp.lt.s32.totalorder %v65, 13
    %v5228 = vsel %vm5227, %v5224, %v5226
    %v5229 = vsel %vm5227, %v5222, %v5224
    %v5230 = vsel %vm5227, %v5220, %v5222
    %v5231 = vsel %vm5227, %v5226, %v5220
    %s5232 = sld [smem:[#allocation2 + $0x14]]
    %v5233 = vstv %s5232
    %v5234 = vmul.f32 %v5231, %v5233
    %v5235 = vmul.f32 %v5230, %v5233
    %v5236 = vmul.f32 %v5229, %v5233
    %v5237 = vmul.f32 %v5228, %v5233
    %5238 = vrot.lane.b32.xlu0 %v4208, 13
    %v5239 = vpop.permute.xlu0 %5238
    %5240 = vrot.lane.b32.xlu0 %v4219, 13
    %v5241 = vpop.permute.xlu0 %5240
    %5242 = vrot.lane.b32.xlu0 %v4230, 13
    %v5243 = vpop.permute.xlu0 %5242
    %5244 = vrot.lane.b32.xlu0 %v4241, 13
    %v5245 = vpop.permute.xlu0 %5244
    %v5246 = vsel %vm5227, %v5243, %v5245
    %v5247 = vsel %vm5227, %v5241, %v5243
    %v5248 = vsel %vm5227, %v5239, %v5241
    %v5249 = vsel %vm5227, %v5245, %v5239
    %s5250 = sld [smem:[#allocation2 + $0x94]]
    %v5251 = vstv %s5250
    %v5252 = vmul.f32 %v5249, %v5251
    %v5253 = vmul.f32 %v5248, %v5251
    %v5254 = vmul.f32 %v5247, %v5251
    %v5255 = vmul.f32 %v5246, %v5251
    %v5256 = vadd.f32 %v5234, %v5252
    %v5257 = vadd.f32 %v5235, %v5253
    %v5258 = vadd.f32 %v5236, %v5254
    %v5259 = vadd.f32 %v5237, %v5255
    %v5260 = vsel %vm185, %v5256, 0.0
    %v5261 = vsel %vm186, %v5257, 0.0
    %v5262 = vsel %vm187, %v5258, 0.0
    %v5263 = vsel %vm188, %v5259, 0.0
    %v5264 = vadd.f32 %v5215, %v5260
    %v5265 = vadd.f32 %v5216, %v5261
    %v5266 = vadd.f32 %v5217, %v5262
    %v5267 = vadd.f32 %v5218, %v5263
    %5268 = vrot.lane.b32.xlu0 %v4194, 3
    %v5269 = vpop.permute.xlu0 %5268
    %5270 = vrot.lane.b32.xlu0 %v4195, 3
    %v5271 = vpop.permute.xlu0 %5270
    %5272 = vrot.lane.b32.xlu0 %v4196, 3
    %v5273 = vpop.permute.xlu0 %5272
    %5274 = vrot.lane.b32.xlu0 %v4197, 3
    %v5275 = vpop.permute.xlu0 %5274
    %vm5276 = vcmp.lt.s32.totalorder %v65, 3
    %v5277 = vsel %vm5276, %v5273, %v5275
    %v5278 = vsel %vm5276, %v5271, %v5273
    %v5279 = vsel %vm5276, %v5269, %v5271
    %v5280 = vsel %vm5276, %v5275, %v5269
    %s5281 = sld [smem:[#allocation2 + $0x15]]
    %v5282 = vstv %s5281
    %v5283 = vmul.f32 %v5280, %v5282
    %v5284 = vmul.f32 %v5279, %v5282
    %v5285 = vmul.f32 %v5278, %v5282
    %v5286 = vmul.f32 %v5277, %v5282
    %5287 = vrot.lane.b32.xlu0 %v4208, 3
    %v5288 = vpop.permute.xlu0 %5287
    %5289 = vrot.lane.b32.xlu0 %v4219, 3
    %v5290 = vpop.permute.xlu0 %5289
    %5291 = vrot.lane.b32.xlu0 %v4230, 3
    %v5292 = vpop.permute.xlu0 %5291
    %5293 = vrot.lane.b32.xlu0 %v4241, 3
    %v5294 = vpop.permute.xlu0 %5293
    %v5295 = vsel %vm5276, %v5292, %v5294
    %v5296 = vsel %vm5276, %v5290, %v5292
    %v5297 = vsel %vm5276, %v5288, %v5290
    %v5298 = vsel %vm5276, %v5294, %v5288
    %s5299 = sld [smem:[#allocation2 + $0x95]]
    %v5300 = vstv %s5299
    %v5301 = vmul.f32 %v5298, %v5300
    %v5302 = vmul.f32 %v5297, %v5300
    %v5303 = vmul.f32 %v5296, %v5300
    %v5304 = vmul.f32 %v5295, %v5300
    %v5305 = vadd.f32 %v5283, %v5301
    %v5306 = vadd.f32 %v5284, %v5302
    %v5307 = vadd.f32 %v5285, %v5303
    %v5308 = vadd.f32 %v5286, %v5304
    %v5309 = vsel %vm85, %v5305, 0.0
    %v5310 = vsel %vm86, %v5306, 0.0
    %v5311 = vsel %vm87, %v5307, 0.0
    %v5312 = vsel %vm88, %v5308, 0.0
    %v5313 = vadd.f32 %v5264, %v5309
    %v5314 = vadd.f32 %v5265, %v5310
    %v5315 = vadd.f32 %v5266, %v5311
    %v5316 = vadd.f32 %v5267, %v5312
    %5317 = vrot.lane.b32.xlu0 %v4194, 2
    %v5318 = vpop.permute.xlu0 %5317
    %5319 = vrot.lane.b32.xlu0 %v4195, 2
    %v5320 = vpop.permute.xlu0 %5319
    %5321 = vrot.lane.b32.xlu0 %v4196, 2
    %v5322 = vpop.permute.xlu0 %5321
    %5323 = vrot.lane.b32.xlu0 %v4197, 2
    %v5324 = vpop.permute.xlu0 %5323
    %vm5325 = vcmp.lt.s32.totalorder %v65, 2
    %v5326 = vsel %vm5325, %v5322, %v5324
    %v5327 = vsel %vm5325, %v5320, %v5322
    %v5328 = vsel %vm5325, %v5318, %v5320
    %v5329 = vsel %vm5325, %v5324, %v5318
    %s5330 = sld [smem:[#allocation2 + $0x16]]
    %v5331 = vstv %s5330
    %v5332 = vmul.f32 %v5329, %v5331
    %v5333 = vmul.f32 %v5328, %v5331
    %v5334 = vmul.f32 %v5327, %v5331
    %v5335 = vmul.f32 %v5326, %v5331
    %5336 = vrot.lane.b32.xlu0 %v4208, 2
    %v5337 = vpop.permute.xlu0 %5336
    %5338 = vrot.lane.b32.xlu0 %v4219, 2
    %v5339 = vpop.permute.xlu0 %5338
    %5340 = vrot.lane.b32.xlu0 %v4230, 2
    %v5341 = vpop.permute.xlu0 %5340
    %5342 = vrot.lane.b32.xlu0 %v4241, 2
    %v5343 = vpop.permute.xlu0 %5342
    %v5344 = vsel %vm5325, %v5341, %v5343
    %v5345 = vsel %vm5325, %v5339, %v5341
    %v5346 = vsel %vm5325, %v5337, %v5339
    %v5347 = vsel %vm5325, %v5343, %v5337
    %s5348 = sld [smem:[#allocation2 + $0x96]]
    %v5349 = vstv %s5348
    %v5350 = vmul.f32 %v5347, %v5349
    %v5351 = vmul.f32 %v5346, %v5349
    %v5352 = vmul.f32 %v5345, %v5349
    %v5353 = vmul.f32 %v5344, %v5349
    %v5354 = vadd.f32 %v5332, %v5350
    %v5355 = vadd.f32 %v5333, %v5351
    %v5356 = vadd.f32 %v5334, %v5352
    %v5357 = vadd.f32 %v5335, %v5353
    %v5358 = vsel %vm93, %v5354, 0.0
    %v5359 = vsel %vm94, %v5355, 0.0
    %v5360 = vsel %vm95, %v5356, 0.0
    %v5361 = vsel %vm96, %v5357, 0.0
    %v5362 = vadd.f32 %v5313, %v5358
    %v5363 = vadd.f32 %v5314, %v5359
    %v5364 = vadd.f32 %v5315, %v5360
    %v5365 = vadd.f32 %v5316, %v5361
    %5366 = vrot.lane.b32.xlu0 %v4194, 1
    %v5367 = vpop.permute.xlu0 %5366
    %5368 = vrot.lane.b32.xlu0 %v4195, 1
    %v5369 = vpop.permute.xlu0 %5368
    %5370 = vrot.lane.b32.xlu0 %v4196, 1
    %v5371 = vpop.permute.xlu0 %5370
    %5372 = vrot.lane.b32.xlu0 %v4197, 1
    %v5373 = vpop.permute.xlu0 %5372
    %v5374 = vsel %vm1489, %v5371, %v5373
    %v5375 = vsel %vm1489, %v5369, %v5371
    %v5376 = vsel %vm1489, %v5367, %v5369
    %v5377 = vsel %vm1489, %v5373, %v5367
    %s5378 = sld [smem:[#allocation2 + $0x17]]
    %v5379 = vstv %s5378
    %v5380 = vmul.f32 %v5377, %v5379
    %v5381 = vmul.f32 %v5376, %v5379
    %v5382 = vmul.f32 %v5375, %v5379
    %v5383 = vmul.f32 %v5374, %v5379
    %5384 = vrot.lane.b32.xlu0 %v4208, 1
    %v5385 = vpop.permute.xlu0 %5384
    %5386 = vrot.lane.b32.xlu0 %v4219, 1
    %v5387 = vpop.permute.xlu0 %5386
    %5388 = vrot.lane.b32.xlu0 %v4230, 1
    %v5389 = vpop.permute.xlu0 %5388
    %5390 = vrot.lane.b32.xlu0 %v4241, 1
    %v5391 = vpop.permute.xlu0 %5390
    %v5392 = vsel %vm1489, %v5389, %v5391
    %v5393 = vsel %vm1489, %v5387, %v5389
    %v5394 = vsel %vm1489, %v5385, %v5387
    %v5395 = vsel %vm1489, %v5391, %v5385
    %s5396 = sld [smem:[#allocation2 + $0x97]]
    %v5397 = vstv %s5396
    %v5398 = vmul.f32 %v5395, %v5397
    %v5399 = vmul.f32 %v5394, %v5397
    %v5400 = vmul.f32 %v5393, %v5397
    %v5401 = vmul.f32 %v5392, %v5397
    %v5402 = vadd.f32 %v5380, %v5398
    %v5403 = vadd.f32 %v5381, %v5399
    %v5404 = vadd.f32 %v5382, %v5400
    %v5405 = vadd.f32 %v5383, %v5401
    %v5406 = vsel %vm101, %v5402, 0.0
    %v5407 = vsel %vm102, %v5403, 0.0
    %v5408 = vsel %vm103, %v5404, 0.0
    %v5409 = vsel %vm104, %v5405, 0.0
    %v5410 = vadd.f32 %v5362, %v5406
    %v5411 = vadd.f32 %v5363, %v5407
    %v5412 = vadd.f32 %v5364, %v5408
    %v5413 = vadd.f32 %v5365, %v5409
    %s5414 = sld [smem:[#allocation2 + $0x18]]
    %v5415 = vstv %s5414
    %v5416 = vmul.f32 %v4194, %v5415
    %v5417 = vmul.f32 %v4195, %v5415
    %v5418 = vmul.f32 %v4196, %v5415
    %v5419 = vmul.f32 %v4197, %v5415
    %s5420 = sld [smem:[#allocation2 + $0x98]]
    %v5421 = vstv %s5420
    %v5422 = vmul.f32 %v4208, %v5421
    %v5423 = vmul.f32 %v4219, %v5421
    %v5424 = vmul.f32 %v4230, %v5421
    %v5425 = vmul.f32 %v4241, %v5421
    %v5426 = vadd.f32 %v5416, %v5422
    %v5427 = vadd.f32 %v5417, %v5423
    %v5428 = vadd.f32 %v5418, %v5424
    %v5429 = vadd.f32 %v5419, %v5425
    %v5430 = vadd.f32 %v5410, %v5426
    %v5431 = vadd.f32 %v5411, %v5427
    %v5432 = vadd.f32 %v5412, %v5428
    %v5433 = vadd.f32 %v5413, %v5429
    %5434 = vrot.lane.b32.xlu0 %v4194, 127
    %v5435 = vpop.permute.xlu0 %5434
    %5436 = vrot.lane.b32.xlu0 %v4195, 127
    %v5437 = vpop.permute.xlu0 %5436
    %5438 = vrot.lane.b32.xlu0 %v4196, 127
    %v5439 = vpop.permute.xlu0 %5438
    %5440 = vrot.lane.b32.xlu0 %v4197, 127
    %v5441 = vpop.permute.xlu0 %5440
    %v5442 = vsel %vm1578, %v5439, %v5441
    %v5443 = vsel %vm1578, %v5437, %v5439
    %v5444 = vsel %vm1578, %v5435, %v5437
    %v5445 = vsel %vm1578, %v5441, %v5435
    %s5446 = sld [smem:[#allocation2 + $0x19]]
    %v5447 = vstv %s5446
    %v5448 = vmul.f32 %v5444, %v5447
    %v5449 = vmul.f32 %v5443, %v5447
    %v5450 = vmul.f32 %v5442, %v5447
    %v5451 = vmul.f32 %v5445, %v5447
    %5452 = vrot.lane.b32.xlu0 %v4208, 127
    %v5453 = vpop.permute.xlu0 %5452
    %5454 = vrot.lane.b32.xlu0 %v4219, 127
    %v5455 = vpop.permute.xlu0 %5454
    %5456 = vrot.lane.b32.xlu0 %v4230, 127
    %v5457 = vpop.permute.xlu0 %5456
    %5458 = vrot.lane.b32.xlu0 %v4241, 127
    %v5459 = vpop.permute.xlu0 %5458
    %v5460 = vsel %vm1578, %v5457, %v5459
    %v5461 = vsel %vm1578, %v5455, %v5457
    %v5462 = vsel %vm1578, %v5453, %v5455
    %v5463 = vsel %vm1578, %v5459, %v5453
    %s5464 = sld [smem:[#allocation2 + $0x99]]
    %v5465 = vstv %s5464
    %v5466 = vmul.f32 %v5462, %v5465
    %v5467 = vmul.f32 %v5461, %v5465
    %v5468 = vmul.f32 %v5460, %v5465
    %v5469 = vmul.f32 %v5463, %v5465
    %v5470 = vadd.f32 %v5448, %v5466
    %v5471 = vadd.f32 %v5449, %v5467
    %v5472 = vadd.f32 %v5450, %v5468
    %v5473 = vadd.f32 %v5451, %v5469
    %v5474 = vsel %vm109, %v5470, 0.0
    %v5475 = vsel %vm110, %v5471, 0.0
    %v5476 = vsel %vm111, %v5472, 0.0
    %v5477 = vsel %vm112, %v5473, 0.0
    %v5478 = vadd.f32 %v5430, %v5474
    %v5479 = vadd.f32 %v5431, %v5475
    %v5480 = vadd.f32 %v5432, %v5476
    %v5481 = vadd.f32 %v5433, %v5477
    %5482 = vrot.lane.b32.xlu0 %v4194, 126
    %v5483 = vpop.permute.xlu0 %5482
    %5484 = vrot.lane.b32.xlu0 %v4195, 126
    %v5485 = vpop.permute.xlu0 %5484
    %5486 = vrot.lane.b32.xlu0 %v4196, 126
    %v5487 = vpop.permute.xlu0 %5486
    %5488 = vrot.lane.b32.xlu0 %v4197, 126
    %v5489 = vpop.permute.xlu0 %5488
    %vm5490 = vcmp.lt.s32.totalorder %v65, 126
    %v5491 = vsel %vm5490, %v5487, %v5489
    %v5492 = vsel %vm5490, %v5485, %v5487
    %v5493 = vsel %vm5490, %v5483, %v5485
    %v5494 = vsel %vm5490, %v5489, %v5483
    %s5495 = sld [smem:[#allocation2 + $0x1a]]
    %v5496 = vstv %s5495
    %v5497 = vmul.f32 %v5493, %v5496
    %v5498 = vmul.f32 %v5492, %v5496
    %v5499 = vmul.f32 %v5491, %v5496
    %v5500 = vmul.f32 %v5494, %v5496
    %5501 = vrot.lane.b32.xlu0 %v4208, 126
    %v5502 = vpop.permute.xlu0 %5501
    %5503 = vrot.lane.b32.xlu0 %v4219, 126
    %v5504 = vpop.permute.xlu0 %5503
    %5505 = vrot.lane.b32.xlu0 %v4230, 126
    %v5506 = vpop.permute.xlu0 %5505
    %5507 = vrot.lane.b32.xlu0 %v4241, 126
    %v5508 = vpop.permute.xlu0 %5507
    %v5509 = vsel %vm5490, %v5506, %v5508
    %v5510 = vsel %vm5490, %v5504, %v5506
    %v5511 = vsel %vm5490, %v5502, %v5504
    %v5512 = vsel %vm5490, %v5508, %v5502
    %s5513 = sld [smem:[#allocation2 + $0x9a]]
    %v5514 = vstv %s5513
    %v5515 = vmul.f32 %v5511, %v5514
    %v5516 = vmul.f32 %v5510, %v5514
    %v5517 = vmul.f32 %v5509, %v5514
    %v5518 = vmul.f32 %v5512, %v5514
    %v5519 = vadd.f32 %v5497, %v5515
    %v5520 = vadd.f32 %v5498, %v5516
    %v5521 = vadd.f32 %v5499, %v5517
    %v5522 = vadd.f32 %v5500, %v5518
    %v5523 = vsel %vm117, %v5519, 0.0
    %v5524 = vsel %vm118, %v5520, 0.0
    %v5525 = vsel %vm119, %v5521, 0.0
    %v5526 = vsel %vm120, %v5522, 0.0
    %v5527 = vadd.f32 %v5478, %v5523
    %v5528 = vadd.f32 %v5479, %v5524
    %v5529 = vadd.f32 %v5480, %v5525
    %v5530 = vadd.f32 %v5481, %v5526
    %5531 = vrot.lane.b32.xlu0 %v4194, 125
    %v5532 = vpop.permute.xlu0 %5531
    %5533 = vrot.lane.b32.xlu0 %v4195, 125
    %v5534 = vpop.permute.xlu0 %5533
    %5535 = vrot.lane.b32.xlu0 %v4196, 125
    %v5536 = vpop.permute.xlu0 %5535
    %5537 = vrot.lane.b32.xlu0 %v4197, 125
    %v5538 = vpop.permute.xlu0 %5537
    %vm5539 = vcmp.lt.s32.totalorder %v65, 125
    %v5540 = vsel %vm5539, %v5536, %v5538
    %v5541 = vsel %vm5539, %v5534, %v5536
    %v5542 = vsel %vm5539, %v5532, %v5534
    %v5543 = vsel %vm5539, %v5538, %v5532
    %s5544 = sld [smem:[#allocation2 + $0x1b]]
    %v5545 = vstv %s5544
    %v5546 = vmul.f32 %v5542, %v5545
    %v5547 = vmul.f32 %v5541, %v5545
    %v5548 = vmul.f32 %v5540, %v5545
    %v5549 = vmul.f32 %v5543, %v5545
    %5550 = vrot.lane.b32.xlu0 %v4208, 125
    %v5551 = vpop.permute.xlu0 %5550
    %5552 = vrot.lane.b32.xlu0 %v4219, 125
    %v5553 = vpop.permute.xlu0 %5552
    %5554 = vrot.lane.b32.xlu0 %v4230, 125
    %v5555 = vpop.permute.xlu0 %5554
    %5556 = vrot.lane.b32.xlu0 %v4241, 125
    %v5557 = vpop.permute.xlu0 %5556
    %v5558 = vsel %vm5539, %v5555, %v5557
    %v5559 = vsel %vm5539, %v5553, %v5555
    %v5560 = vsel %vm5539, %v5551, %v5553
    %v5561 = vsel %vm5539, %v5557, %v5551
    %s5562 = sld [smem:[#allocation2 + $0x9b]]
    %v5563 = vstv %s5562
    %v5564 = vmul.f32 %v5560, %v5563
    %v5565 = vmul.f32 %v5559, %v5563
    %v5566 = vmul.f32 %v5558, %v5563
    %v5567 = vmul.f32 %v5561, %v5563
    %v5568 = vadd.f32 %v5546, %v5564
    %v5569 = vadd.f32 %v5547, %v5565
    %v5570 = vadd.f32 %v5548, %v5566
    %v5571 = vadd.f32 %v5549, %v5567
    %v5572 = vsel %vm125, %v5568, 0.0
    %v5573 = vsel %vm126, %v5569, 0.0
    %v5574 = vsel %vm127, %v5570, 0.0
    %v5575 = vsel %vm128, %v5571, 0.0
    %v5576 = vadd.f32 %v5527, %v5572
    %v5577 = vadd.f32 %v5528, %v5573
    %v5578 = vadd.f32 %v5529, %v5574
    %v5579 = vadd.f32 %v5530, %v5575
    %5580 = vrot.lane.b32.xlu0 %v4194, 115
    %v5581 = vpop.permute.xlu0 %5580
    %5582 = vrot.lane.b32.xlu0 %v4195, 115
    %v5583 = vpop.permute.xlu0 %5582
    %5584 = vrot.lane.b32.xlu0 %v4196, 115
    %v5585 = vpop.permute.xlu0 %5584
    %5586 = vrot.lane.b32.xlu0 %v4197, 115
    %v5587 = vpop.permute.xlu0 %5586
    %vm5588 = vcmp.lt.s32.totalorder %v65, 115
    %v5589 = vsel %vm5588, %v5585, %v5587
    %v5590 = vsel %vm5588, %v5583, %v5585
    %v5591 = vsel %vm5588, %v5581, %v5583
    %v5592 = vsel %vm5588, %v5587, %v5581
    %s5593 = sld [smem:[#allocation2 + $0x1c]]
    %v5594 = vstv %s5593
    %v5595 = vmul.f32 %v5591, %v5594
    %v5596 = vmul.f32 %v5590, %v5594
    %v5597 = vmul.f32 %v5589, %v5594
    %v5598 = vmul.f32 %v5592, %v5594
    %5599 = vrot.lane.b32.xlu0 %v4208, 115
    %v5600 = vpop.permute.xlu0 %5599
    %5601 = vrot.lane.b32.xlu0 %v4219, 115
    %v5602 = vpop.permute.xlu0 %5601
    %5603 = vrot.lane.b32.xlu0 %v4230, 115
    %v5604 = vpop.permute.xlu0 %5603
    %5605 = vrot.lane.b32.xlu0 %v4241, 115
    %v5606 = vpop.permute.xlu0 %5605
    %v5607 = vsel %vm5588, %v5604, %v5606
    %v5608 = vsel %vm5588, %v5602, %v5604
    %v5609 = vsel %vm5588, %v5600, %v5602
    %v5610 = vsel %vm5588, %v5606, %v5600
    %s5611 = sld [smem:[#allocation2 + $0x9c]]
    %v5612 = vstv %s5611
    %v5613 = vmul.f32 %v5609, %v5612
    %v5614 = vmul.f32 %v5608, %v5612
    %v5615 = vmul.f32 %v5607, %v5612
    %v5616 = vmul.f32 %v5610, %v5612
    %v5617 = vadd.f32 %v5595, %v5613
    %v5618 = vadd.f32 %v5596, %v5614
    %v5619 = vadd.f32 %v5597, %v5615
    %v5620 = vadd.f32 %v5598, %v5616
    %v5621 = vsel %vm193, %v5617, 0.0
    %v5622 = vsel %vm194, %v5618, 0.0
    %v5623 = vsel %vm195, %v5619, 0.0
    %v5624 = vsel %vm196, %v5620, 0.0
    %v5625 = vadd.f32 %v5576, %v5621
    %v5626 = vadd.f32 %v5577, %v5622
    %v5627 = vadd.f32 %v5578, %v5623
    %v5628 = vadd.f32 %v5579, %v5624
    %5629 = vrot.lane.b32.xlu0 %v4194, 114
    %v5630 = vpop.permute.xlu0 %5629
    %5631 = vrot.lane.b32.xlu0 %v4195, 114
    %v5632 = vpop.permute.xlu0 %5631
    %5633 = vrot.lane.b32.xlu0 %v4196, 114
    %v5634 = vpop.permute.xlu0 %5633
    %5635 = vrot.lane.b32.xlu0 %v4197, 114
    %v5636 = vpop.permute.xlu0 %5635
    %vm5637 = vcmp.lt.s32.totalorder %v65, 114
    %v5638 = vsel %vm5637, %v5634, %v5636
    %v5639 = vsel %vm5637, %v5632, %v5634
    %v5640 = vsel %vm5637, %v5630, %v5632
    %v5641 = vsel %vm5637, %v5636, %v5630
    %s5642 = sld [smem:[#allocation2 + $0x1d]]
    %v5643 = vstv %s5642
    %v5644 = vmul.f32 %v5640, %v5643
    %v5645 = vmul.f32 %v5639, %v5643
    %v5646 = vmul.f32 %v5638, %v5643
    %v5647 = vmul.f32 %v5641, %v5643
    %5648 = vrot.lane.b32.xlu0 %v4208, 114
    %v5649 = vpop.permute.xlu0 %5648
    %5650 = vrot.lane.b32.xlu0 %v4219, 114
    %v5651 = vpop.permute.xlu0 %5650
    %5652 = vrot.lane.b32.xlu0 %v4230, 114
    %v5653 = vpop.permute.xlu0 %5652
    %5654 = vrot.lane.b32.xlu0 %v4241, 114
    %v5655 = vpop.permute.xlu0 %5654
    %v5656 = vsel %vm5637, %v5653, %v5655
    %v5657 = vsel %vm5637, %v5651, %v5653
    %v5658 = vsel %vm5637, %v5649, %v5651
    %v5659 = vsel %vm5637, %v5655, %v5649
    %s5660 = sld [smem:[#allocation2 + $0x9d]]
    %v5661 = vstv %s5660
    %v5662 = vmul.f32 %v5658, %v5661
    %v5663 = vmul.f32 %v5657, %v5661
    %v5664 = vmul.f32 %v5656, %v5661
    %v5665 = vmul.f32 %v5659, %v5661
    %v5666 = vadd.f32 %v5644, %v5662
    %v5667 = vadd.f32 %v5645, %v5663
    %v5668 = vadd.f32 %v5646, %v5664
    %v5669 = vadd.f32 %v5647, %v5665
    %v5670 = vsel %vm197, %v5666, 0.0
    %v5671 = vsel %vm198, %v5667, 0.0
    %v5672 = vsel %vm199, %v5668, 0.0
    %v5673 = vsel %vm200, %v5669, 0.0
    %v5674 = vadd.f32 %v5625, %v5670
    %v5675 = vadd.f32 %v5626, %v5671
    %v5676 = vadd.f32 %v5627, %v5672
    %v5677 = vadd.f32 %v5628, %v5673
    %5678 = vrot.lane.b32.xlu0 %v4194, 113
    %v5679 = vpop.permute.xlu0 %5678
    %5680 = vrot.lane.b32.xlu0 %v4195, 113
    %v5681 = vpop.permute.xlu0 %5680
    %5682 = vrot.lane.b32.xlu0 %v4196, 113
    %v5683 = vpop.permute.xlu0 %5682
    %5684 = vrot.lane.b32.xlu0 %v4197, 113
    %v5685 = vpop.permute.xlu0 %5684
    %v5686 = vsel %vm1643, %v5683, %v5685
    %v5687 = vsel %vm1643, %v5681, %v5683
    %v5688 = vsel %vm1643, %v5679, %v5681
    %v5689 = vsel %vm1643, %v5685, %v5679
    %s5690 = sld [smem:[#allocation2 + $0x1e]]
    %v5691 = vstv %s5690
    %v5692 = vmul.f32 %v5688, %v5691
    %v5693 = vmul.f32 %v5687, %v5691
    %v5694 = vmul.f32 %v5686, %v5691
    %v5695 = vmul.f32 %v5689, %v5691
    %5696 = vrot.lane.b32.xlu0 %v4208, 113
    %v5697 = vpop.permute.xlu0 %5696
    %5698 = vrot.lane.b32.xlu0 %v4219, 113
    %v5699 = vpop.permute.xlu0 %5698
    %5700 = vrot.lane.b32.xlu0 %v4230, 113
    %v5701 = vpop.permute.xlu0 %5700
    %5702 = vrot.lane.b32.xlu0 %v4241, 113
    %v5703 = vpop.permute.xlu0 %5702
    %v5704 = vsel %vm1643, %v5701, %v5703
    %v5705 = vsel %vm1643, %v5699, %v5701
    %v5706 = vsel %vm1643, %v5697, %v5699
    %v5707 = vsel %vm1643, %v5703, %v5697
    %s5708 = sld [smem:[#allocation2 + $0x9e]]
    %v5709 = vstv %s5708
    %v5710 = vmul.f32 %v5706, %v5709
    %v5711 = vmul.f32 %v5705, %v5709
    %v5712 = vmul.f32 %v5704, %v5709
    %v5713 = vmul.f32 %v5707, %v5709
    %v5714 = vadd.f32 %v5692, %v5710
    %v5715 = vadd.f32 %v5693, %v5711
    %v5716 = vadd.f32 %v5694, %v5712
    %v5717 = vadd.f32 %v5695, %v5713
    %v5718 = vsel %vm201, %v5714, 0.0
    %v5719 = vsel %vm202, %v5715, 0.0
    %v5720 = vsel %vm203, %v5716, 0.0
    %v5721 = vsel %vm204, %v5717, 0.0
    %v5722 = vadd.f32 %v5674, %v5718
    %v5723 = vadd.f32 %v5675, %v5719
    %v5724 = vadd.f32 %v5676, %v5720
    %v5725 = vadd.f32 %v5677, %v5721
    %5726 = vrot.lane.b32.xlu0 %v4194, 112
    %v5727 = vpop.permute.xlu0 %5726
    %5728 = vrot.lane.b32.xlu0 %v4195, 112
    %v5729 = vpop.permute.xlu0 %5728
    %5730 = vrot.lane.b32.xlu0 %v4196, 112
    %v5731 = vpop.permute.xlu0 %5730
    %5732 = vrot.lane.b32.xlu0 %v4197, 112
    %v5733 = vpop.permute.xlu0 %5732
    %v5734 = vsel %vm1708, %v5731, %v5733
    %v5735 = vsel %vm1708, %v5729, %v5731
    %v5736 = vsel %vm1708, %v5727, %v5729
    %v5737 = vsel %vm1708, %v5733, %v5727
    %s5738 = sld [smem:[#allocation2 + $0x1f]]
    %v5739 = vstv %s5738
    %v5740 = vmul.f32 %v5736, %v5739
    %v5741 = vmul.f32 %v5735, %v5739
    %v5742 = vmul.f32 %v5734, %v5739
    %v5743 = vmul.f32 %v5737, %v5739
    %5744 = vrot.lane.b32.xlu0 %v4208, 112
    %v5745 = vpop.permute.xlu0 %5744
    %5746 = vrot.lane.b32.xlu0 %v4219, 112
    %v5747 = vpop.permute.xlu0 %5746
    %5748 = vrot.lane.b32.xlu0 %v4230, 112
    %v5749 = vpop.permute.xlu0 %5748
    %5750 = vrot.lane.b32.xlu0 %v4241, 112
    %v5751 = vpop.permute.xlu0 %5750
    %v5752 = vsel %vm1708, %v5749, %v5751
    %v5753 = vsel %vm1708, %v5747, %v5749
    %v5754 = vsel %vm1708, %v5745, %v5747
    %v5755 = vsel %vm1708, %v5751, %v5745
    %s5756 = sld [smem:[#allocation2 + $0x9f]]
    %v5757 = vstv %s5756
    %v5758 = vmul.f32 %v5754, %v5757
    %v5759 = vmul.f32 %v5753, %v5757
    %v5760 = vmul.f32 %v5752, %v5757
    %v5761 = vmul.f32 %v5755, %v5757
    %v5762 = vadd.f32 %v5740, %v5758
    %v5763 = vadd.f32 %v5741, %v5759
    %v5764 = vadd.f32 %v5742, %v5760
    %v5765 = vadd.f32 %v5743, %v5761
    %v5766 = vsel %vm189, %v5762, 0.0
    %v5767 = vsel %vm190, %v5763, 0.0
    %v5768 = vsel %vm191, %v5764, 0.0
    %v5769 = vsel %vm192, %v5765, 0.0
    %v5770 = vadd.f32 %v5722, %v5766
    %v5771 = vadd.f32 %v5723, %v5767
    %v5772 = vadd.f32 %v5724, %v5768
    %v5773 = vadd.f32 %v5725, %v5769
    %5774 = vrot.lane.b32.xlu0 %v4194, 111
    %v5775 = vpop.permute.xlu0 %5774
    %5776 = vrot.lane.b32.xlu0 %v4195, 111
    %v5777 = vpop.permute.xlu0 %5776
    %5778 = vrot.lane.b32.xlu0 %v4196, 111
    %v5779 = vpop.permute.xlu0 %5778
    %5780 = vrot.lane.b32.xlu0 %v4197, 111
    %v5781 = vpop.permute.xlu0 %5780
    %v5782 = vsel %vm1773, %v5779, %v5781
    %v5783 = vsel %vm1773, %v5777, %v5779
    %v5784 = vsel %vm1773, %v5775, %v5777
    %v5785 = vsel %vm1773, %v5781, %v5775
    %s5786 = sld [smem:[#allocation2 + $0x20]]
    %v5787 = vstv %s5786
    %v5788 = vmul.f32 %v5784, %v5787
    %v5789 = vmul.f32 %v5783, %v5787
    %v5790 = vmul.f32 %v5782, %v5787
    %v5791 = vmul.f32 %v5785, %v5787
    %5792 = vrot.lane.b32.xlu0 %v4208, 111
    %v5793 = vpop.permute.xlu0 %5792
    %5794 = vrot.lane.b32.xlu0 %v4219, 111
    %v5795 = vpop.permute.xlu0 %5794
    %5796 = vrot.lane.b32.xlu0 %v4230, 111
    %v5797 = vpop.permute.xlu0 %5796
    %5798 = vrot.lane.b32.xlu0 %v4241, 111
    %v5799 = vpop.permute.xlu0 %5798
    %v5800 = vsel %vm1773, %v5797, %v5799
    %v5801 = vsel %vm1773, %v5795, %v5797
    %v5802 = vsel %vm1773, %v5793, %v5795
    %v5803 = vsel %vm1773, %v5799, %v5793
    %s5804 = sld [smem:[#allocation2 + $0xa0]]
    %v5805 = vstv %s5804
    %v5806 = vmul.f32 %v5802, %v5805
    %v5807 = vmul.f32 %v5801, %v5805
    %v5808 = vmul.f32 %v5800, %v5805
    %v5809 = vmul.f32 %v5803, %v5805
    %v5810 = vadd.f32 %v5788, %v5806
    %v5811 = vadd.f32 %v5789, %v5807
    %v5812 = vadd.f32 %v5790, %v5808
    %v5813 = vadd.f32 %v5791, %v5809
    %v5814 = vsel %vm205, %v5810, 0.0
    %v5815 = vsel %vm206, %v5811, 0.0
    %v5816 = vsel %vm207, %v5812, 0.0
    %v5817 = vsel %vm208, %v5813, 0.0
    %v5818 = vadd.f32 %v5770, %v5814
    %v5819 = vadd.f32 %v5771, %v5815
    %v5820 = vadd.f32 %v5772, %v5816
    %v5821 = vadd.f32 %v5773, %v5817
    %5822 = vrot.lane.b32.xlu0 %v4194, 110
    %v5823 = vpop.permute.xlu0 %5822
    %5824 = vrot.lane.b32.xlu0 %v4195, 110
    %v5825 = vpop.permute.xlu0 %5824
    %5826 = vrot.lane.b32.xlu0 %v4196, 110
    %v5827 = vpop.permute.xlu0 %5826
    %5828 = vrot.lane.b32.xlu0 %v4197, 110
    %v5829 = vpop.permute.xlu0 %5828
    %vm5830 = vcmp.lt.s32.totalorder %v65, 110
    %v5831 = vsel %vm5830, %v5827, %v5829
    %v5832 = vsel %vm5830, %v5825, %v5827
    %v5833 = vsel %vm5830, %v5823, %v5825
    %v5834 = vsel %vm5830, %v5829, %v5823
    %s5835 = sld [smem:[#allocation2 + $0x21]]
    %v5836 = vstv %s5835
    %v5837 = vmul.f32 %v5833, %v5836
    %v5838 = vmul.f32 %v5832, %v5836
    %v5839 = vmul.f32 %v5831, %v5836
    %v5840 = vmul.f32 %v5834, %v5836
    %5841 = vrot.lane.b32.xlu0 %v4208, 110
    %v5842 = vpop.permute.xlu0 %5841
    %5843 = vrot.lane.b32.xlu0 %v4219, 110
    %v5844 = vpop.permute.xlu0 %5843
    %5845 = vrot.lane.b32.xlu0 %v4230, 110
    %v5846 = vpop.permute.xlu0 %5845
    %5847 = vrot.lane.b32.xlu0 %v4241, 110
    %v5848 = vpop.permute.xlu0 %5847
    %v5849 = vsel %vm5830, %v5846, %v5848
    %v5850 = vsel %vm5830, %v5844, %v5846
    %v5851 = vsel %vm5830, %v5842, %v5844
    %v5852 = vsel %vm5830, %v5848, %v5842
    %s5853 = sld [smem:[#allocation2 + $0xa1]]
    %v5854 = vstv %s5853
    %v5855 = vmul.f32 %v5851, %v5854
    %v5856 = vmul.f32 %v5850, %v5854
    %v5857 = vmul.f32 %v5849, %v5854
    %v5858 = vmul.f32 %v5852, %v5854
    %v5859 = vadd.f32 %v5837, %v5855
    %v5860 = vadd.f32 %v5838, %v5856
    %v5861 = vadd.f32 %v5839, %v5857
    %v5862 = vadd.f32 %v5840, %v5858
    %v5863 = vsel %vm209, %v5859, 0.0
    %v5864 = vsel %vm210, %v5860, 0.0
    %v5865 = vsel %vm211, %v5861, 0.0
    %v5866 = vsel %vm212, %v5862, 0.0
    %v5867 = vadd.f32 %v5818, %v5863
    %v5868 = vadd.f32 %v5819, %v5864
    %v5869 = vadd.f32 %v5820, %v5865
    %v5870 = vadd.f32 %v5821, %v5866
    %5871 = vrot.lane.b32.xlu0 %v4194, 109
    %v5872 = vpop.permute.xlu0 %5871
    %5873 = vrot.lane.b32.xlu0 %v4195, 109
    %v5874 = vpop.permute.xlu0 %5873
    %5875 = vrot.lane.b32.xlu0 %v4196, 109
    %v5876 = vpop.permute.xlu0 %5875
    %5877 = vrot.lane.b32.xlu0 %v4197, 109
    %v5878 = vpop.permute.xlu0 %5877
    %vm5879 = vcmp.lt.s32.totalorder %v65, 109
    %v5880 = vsel %vm5879, %v5876, %v5878
    %v5881 = vsel %vm5879, %v5874, %v5876
    %v5882 = vsel %vm5879, %v5872, %v5874
    %v5883 = vsel %vm5879, %v5878, %v5872
    %s5884 = sld [smem:[#allocation2 + $0x22]]
    %v5885 = vstv %s5884
    %v5886 = vmul.f32 %v5882, %v5885
    %v5887 = vmul.f32 %v5881, %v5885
    %v5888 = vmul.f32 %v5880, %v5885
    %v5889 = vmul.f32 %v5883, %v5885
    %5890 = vrot.lane.b32.xlu0 %v4208, 109
    %v5891 = vpop.permute.xlu0 %5890
    %5892 = vrot.lane.b32.xlu0 %v4219, 109
    %v5893 = vpop.permute.xlu0 %5892
    %5894 = vrot.lane.b32.xlu0 %v4230, 109
    %v5895 = vpop.permute.xlu0 %5894
    %5896 = vrot.lane.b32.xlu0 %v4241, 109
    %v5897 = vpop.permute.xlu0 %5896
    %v5898 = vsel %vm5879, %v5895, %v5897
    %v5899 = vsel %vm5879, %v5893, %v5895
    %v5900 = vsel %vm5879, %v5891, %v5893
    %v5901 = vsel %vm5879, %v5897, %v5891
    %s5902 = sld [smem:[#allocation2 + $0xa2]]
    %v5903 = vstv %s5902
    %v5904 = vmul.f32 %v5900, %v5903
    %v5905 = vmul.f32 %v5899, %v5903
    %v5906 = vmul.f32 %v5898, %v5903
    %v5907 = vmul.f32 %v5901, %v5903
    %v5908 = vadd.f32 %v5886, %v5904
    %v5909 = vadd.f32 %v5887, %v5905
    %v5910 = vadd.f32 %v5888, %v5906
    %v5911 = vadd.f32 %v5889, %v5907
    %v5912 = vsel %vm213, %v5908, 0.0
    %v5913 = vsel %vm214, %v5909, 0.0
    %v5914 = vsel %vm215, %v5910, 0.0
    %v5915 = vsel %vm216, %v5911, 0.0
    %v5916 = vadd.f32 %v5867, %v5912
    %v5917 = vadd.f32 %v5868, %v5913
    %v5918 = vadd.f32 %v5869, %v5914
    %v5919 = vadd.f32 %v5870, %v5915
    %5920 = vrot.lane.b32.xlu0 %v4194, 99
    %v5921 = vpop.permute.xlu0 %5920
    %5922 = vrot.lane.b32.xlu0 %v4195, 99
    %v5923 = vpop.permute.xlu0 %5922
    %5924 = vrot.lane.b32.xlu0 %v4196, 99
    %v5925 = vpop.permute.xlu0 %5924
    %5926 = vrot.lane.b32.xlu0 %v4197, 99
    %v5927 = vpop.permute.xlu0 %5926
    %vm5928 = vcmp.lt.s32.totalorder %v65, 99
    %v5929 = vsel %vm5928, %v5925, %v5927
    %v5930 = vsel %vm5928, %v5923, %v5925
    %v5931 = vsel %vm5928, %v5921, %v5923
    %v5932 = vsel %vm5928, %v5927, %v5921
    %s5933 = sld [smem:[#allocation2 + $0x23]]
    %v5934 = vstv %s5933
    %v5935 = vmul.f32 %v5931, %v5934
    %v5936 = vmul.f32 %v5930, %v5934
    %v5937 = vmul.f32 %v5929, %v5934
    %v5938 = vmul.f32 %v5932, %v5934
    %5939 = vrot.lane.b32.xlu0 %v4208, 99
    %v5940 = vpop.permute.xlu0 %5939
    %5941 = vrot.lane.b32.xlu0 %v4219, 99
    %v5942 = vpop.permute.xlu0 %5941
    %5943 = vrot.lane.b32.xlu0 %v4230, 99
    %v5944 = vpop.permute.xlu0 %5943
    %5945 = vrot.lane.b32.xlu0 %v4241, 99
    %v5946 = vpop.permute.xlu0 %5945
    %v5947 = vsel %vm5928, %v5944, %v5946
    %v5948 = vsel %vm5928, %v5942, %v5944
    %v5949 = vsel %vm5928, %v5940, %v5942
    %v5950 = vsel %vm5928, %v5946, %v5940
    %s5951 = sld [smem:[#allocation2 + $0xa3]]
    %v5952 = vstv %s5951
    %v5953 = vmul.f32 %v5949, %v5952
    %v5954 = vmul.f32 %v5948, %v5952
    %v5955 = vmul.f32 %v5947, %v5952
    %v5956 = vmul.f32 %v5950, %v5952
    %v5957 = vadd.f32 %v5935, %v5953
    %v5958 = vadd.f32 %v5936, %v5954
    %v5959 = vadd.f32 %v5937, %v5955
    %v5960 = vadd.f32 %v5938, %v5956
    %v5961 = vsel %vm221, %v5957, 0.0
    %v5962 = vsel %vm222, %v5958, 0.0
    %v5963 = vsel %vm223, %v5959, 0.0
    %v5964 = vsel %vm224, %v5960, 0.0
    %v5965 = vadd.f32 %v5916, %v5961
    %v5966 = vadd.f32 %v5917, %v5962
    %v5967 = vadd.f32 %v5918, %v5963
    %v5968 = vadd.f32 %v5919, %v5964
    %5969 = vrot.lane.b32.xlu0 %v4194, 98
    %v5970 = vpop.permute.xlu0 %5969
    %5971 = vrot.lane.b32.xlu0 %v4195, 98
    %v5972 = vpop.permute.xlu0 %5971
    %5973 = vrot.lane.b32.xlu0 %v4196, 98
    %v5974 = vpop.permute.xlu0 %5973
    %5975 = vrot.lane.b32.xlu0 %v4197, 98
    %v5976 = vpop.permute.xlu0 %5975
    %vm5977 = vcmp.lt.s32.totalorder %v65, 98
    %v5978 = vsel %vm5977, %v5974, %v5976
    %v5979 = vsel %vm5977, %v5972, %v5974
    %v5980 = vsel %vm5977, %v5970, %v5972
    %v5981 = vsel %vm5977, %v5976, %v5970
    %s5982 = sld [smem:[#allocation2 + $0x24]]
    %v5983 = vstv %s5982
    %v5984 = vmul.f32 %v5980, %v5983
    %v5985 = vmul.f32 %v5979, %v5983
    %v5986 = vmul.f32 %v5978, %v5983
    %v5987 = vmul.f32 %v5981, %v5983
    %5988 = vrot.lane.b32.xlu0 %v4208, 98
    %v5989 = vpop.permute.xlu0 %5988
    %5990 = vrot.lane.b32.xlu0 %v4219, 98
    %v5991 = vpop.permute.xlu0 %5990
    %5992 = vrot.lane.b32.xlu0 %v4230, 98
    %v5993 = vpop.permute.xlu0 %5992
    %5994 = vrot.lane.b32.xlu0 %v4241, 98
    %v5995 = vpop.permute.xlu0 %5994
    %v5996 = vsel %vm5977, %v5993, %v5995
    %v5997 = vsel %vm5977, %v5991, %v5993
    %v5998 = vsel %vm5977, %v5989, %v5991
    %v5999 = vsel %vm5977, %v5995, %v5989
    %s6000 = sld [smem:[#allocation2 + $0xa4]]
    %v6001 = vstv %s6000
    %v6002 = vmul.f32 %v5998, %v6001
    %v6003 = vmul.f32 %v5997, %v6001
    %v6004 = vmul.f32 %v5996, %v6001
    %v6005 = vmul.f32 %v5999, %v6001
    %v6006 = vadd.f32 %v5984, %v6002
    %v6007 = vadd.f32 %v5985, %v6003
    %v6008 = vadd.f32 %v5986, %v6004
    %v6009 = vadd.f32 %v5987, %v6005
    %v6010 = vsel %vm225, %v6006, 0.0
    %v6011 = vsel %vm226, %v6007, 0.0
    %v6012 = vsel %vm227, %v6008, 0.0
    %v6013 = vsel %vm228, %v6009, 0.0
    %v6014 = vadd.f32 %v5965, %v6010
    %v6015 = vadd.f32 %v5966, %v6011
    %v6016 = vadd.f32 %v5967, %v6012
    %v6017 = vadd.f32 %v5968, %v6013
    %6018 = vrot.lane.b32.xlu0 %v4194, 97
    %v6019 = vpop.permute.xlu0 %6018
    %6020 = vrot.lane.b32.xlu0 %v4195, 97
    %v6021 = vpop.permute.xlu0 %6020
    %6022 = vrot.lane.b32.xlu0 %v4196, 97
    %v6023 = vpop.permute.xlu0 %6022
    %6024 = vrot.lane.b32.xlu0 %v4197, 97
    %v6025 = vpop.permute.xlu0 %6024
    %vm6026 = vcmp.lt.s32.totalorder %v65, 97
    %v6027 = vsel %vm6026, %v6023, %v6025
    %v6028 = vsel %vm6026, %v6021, %v6023
    %v6029 = vsel %vm6026, %v6019, %v6021
    %v6030 = vsel %vm6026, %v6025, %v6019
    %s6031 = sld [smem:[#allocation2 + $0x25]]
    %v6032 = vstv %s6031
    %v6033 = vmul.f32 %v6029, %v6032
    %v6034 = vmul.f32 %v6028, %v6032
    %v6035 = vmul.f32 %v6027, %v6032
    %v6036 = vmul.f32 %v6030, %v6032
    %6037 = vrot.lane.b32.xlu0 %v4208, 97
    %v6038 = vpop.permute.xlu0 %6037
    %6039 = vrot.lane.b32.xlu0 %v4219, 97
    %v6040 = vpop.permute.xlu0 %6039
    %6041 = vrot.lane.b32.xlu0 %v4230, 97
    %v6042 = vpop.permute.xlu0 %6041
    %6043 = vrot.lane.b32.xlu0 %v4241, 97
    %v6044 = vpop.permute.xlu0 %6043
    %v6045 = vsel %vm6026, %v6042, %v6044
    %v6046 = vsel %vm6026, %v6040, %v6042
    %v6047 = vsel %vm6026, %v6038, %v6040
    %v6048 = vsel %vm6026, %v6044, %v6038
    %s6049 = sld [smem:[#allocation2 + $0xa5]]
    %v6050 = vstv %s6049
    %v6051 = vmul.f32 %v6047, %v6050
    %v6052 = vmul.f32 %v6046, %v6050
    %v6053 = vmul.f32 %v6045, %v6050
    %v6054 = vmul.f32 %v6048, %v6050
    %v6055 = vadd.f32 %v6033, %v6051
    %v6056 = vadd.f32 %v6034, %v6052
    %v6057 = vadd.f32 %v6035, %v6053
    %v6058 = vadd.f32 %v6036, %v6054
    %v6059 = vsel %vm229, %v6055, 0.0
    %v6060 = vsel %vm230, %v6056, 0.0
    %v6061 = vsel %vm231, %v6057, 0.0
    %v6062 = vsel %vm232, %v6058, 0.0
    %v6063 = vadd.f32 %v6014, %v6059
    %v6064 = vadd.f32 %v6015, %v6060
    %v6065 = vadd.f32 %v6016, %v6061
    %v6066 = vadd.f32 %v6017, %v6062
    %6067 = vrot.lane.b32.xlu0 %v4194, 96
    %v6068 = vpop.permute.xlu0 %6067
    %6069 = vrot.lane.b32.xlu0 %v4195, 96
    %v6070 = vpop.permute.xlu0 %6069
    %6071 = vrot.lane.b32.xlu0 %v4196, 96
    %v6072 = vpop.permute.xlu0 %6071
    %6073 = vrot.lane.b32.xlu0 %v4197, 96
    %v6074 = vpop.permute.xlu0 %6073
    %vm6075 = vcmp.lt.s32.totalorder %v65, 96
    %v6076 = vsel %vm6075, %v6072, %v6074
    %v6077 = vsel %vm6075, %v6070, %v6072
    %v6078 = vsel %vm6075, %v6068, %v6070
    %v6079 = vsel %vm6075, %v6074, %v6068
    %s6080 = sld [smem:[#allocation2 + $0x26]]
    %v6081 = vstv %s6080
    %v6082 = vmul.f32 %v6078, %v6081
    %v6083 = vmul.f32 %v6077, %v6081
    %v6084 = vmul.f32 %v6076, %v6081
    %v6085 = vmul.f32 %v6079, %v6081
    %6086 = vrot.lane.b32.xlu0 %v4208, 96
    %v6087 = vpop.permute.xlu0 %6086
    %6088 = vrot.lane.b32.xlu0 %v4219, 96
    %v6089 = vpop.permute.xlu0 %6088
    %6090 = vrot.lane.b32.xlu0 %v4230, 96
    %v6091 = vpop.permute.xlu0 %6090
    %6092 = vrot.lane.b32.xlu0 %v4241, 96
    %v6093 = vpop.permute.xlu0 %6092
    %v6094 = vsel %vm6075, %v6091, %v6093
    %v6095 = vsel %vm6075, %v6089, %v6091
    %v6096 = vsel %vm6075, %v6087, %v6089
    %v6097 = vsel %vm6075, %v6093, %v6087
    %s6098 = sld [smem:[#allocation2 + $0xa6]]
    %v6099 = vstv %s6098
    %v6100 = vmul.f32 %v6096, %v6099
    %v6101 = vmul.f32 %v6095, %v6099
    %v6102 = vmul.f32 %v6094, %v6099
    %v6103 = vmul.f32 %v6097, %v6099
    %v6104 = vadd.f32 %v6082, %v6100
    %v6105 = vadd.f32 %v6083, %v6101
    %v6106 = vadd.f32 %v6084, %v6102
    %v6107 = vadd.f32 %v6085, %v6103
    %v6108 = vsel %vm217, %v6104, 0.0
    %v6109 = vsel %vm218, %v6105, 0.0
    %v6110 = vsel %vm219, %v6106, 0.0
    %v6111 = vsel %vm220, %v6107, 0.0
    %v6112 = vadd.f32 %v6063, %v6108
    %v6113 = vadd.f32 %v6064, %v6109
    %v6114 = vadd.f32 %v6065, %v6110
    %v6115 = vadd.f32 %v6066, %v6111
    %6116 = vrot.lane.b32.xlu0 %v4194, 95
    %v6117 = vpop.permute.xlu0 %6116
    %6118 = vrot.lane.b32.xlu0 %v4195, 95
    %v6119 = vpop.permute.xlu0 %6118
    %6120 = vrot.lane.b32.xlu0 %v4196, 95
    %v6121 = vpop.permute.xlu0 %6120
    %6122 = vrot.lane.b32.xlu0 %v4197, 95
    %v6123 = vpop.permute.xlu0 %6122
    %vm6124 = vcmp.lt.s32.totalorder %v65, 95
    %v6125 = vsel %vm6124, %v6121, %v6123
    %v6126 = vsel %vm6124, %v6119, %v6121
    %v6127 = vsel %vm6124, %v6117, %v6119
    %v6128 = vsel %vm6124, %v6123, %v6117
    %s6129 = sld [smem:[#allocation2 + $0x27]]
    %v6130 = vstv %s6129
    %v6131 = vmul.f32 %v6127, %v6130
    %v6132 = vmul.f32 %v6126, %v6130
    %v6133 = vmul.f32 %v6125, %v6130
    %v6134 = vmul.f32 %v6128, %v6130
    %6135 = vrot.lane.b32.xlu0 %v4208, 95
    %v6136 = vpop.permute.xlu0 %6135
    %6137 = vrot.lane.b32.xlu0 %v4219, 95
    %v6138 = vpop.permute.xlu0 %6137
    %6139 = vrot.lane.b32.xlu0 %v4230, 95
    %v6140 = vpop.permute.xlu0 %6139
    %6141 = vrot.lane.b32.xlu0 %v4241, 95
    %v6142 = vpop.permute.xlu0 %6141
    %v6143 = vsel %vm6124, %v6140, %v6142
    %v6144 = vsel %vm6124, %v6138, %v6140
    %v6145 = vsel %vm6124, %v6136, %v6138
    %v6146 = vsel %vm6124, %v6142, %v6136
    %s6147 = sld [smem:[#allocation2 + $0xa7]]
    %v6148 = vstv %s6147
    %v6149 = vmul.f32 %v6145, %v6148
    %v6150 = vmul.f32 %v6144, %v6148
    %v6151 = vmul.f32 %v6143, %v6148
    %v6152 = vmul.f32 %v6146, %v6148
    %v6153 = vadd.f32 %v6131, %v6149
    %v6154 = vadd.f32 %v6132, %v6150
    %v6155 = vadd.f32 %v6133, %v6151
    %v6156 = vadd.f32 %v6134, %v6152
    %v6157 = vsel %vm233, %v6153, 0.0
    %v6158 = vsel %vm234, %v6154, 0.0
    %v6159 = vsel %vm235, %v6155, 0.0
    %v6160 = vsel %vm236, %v6156, 0.0
    %v6161 = vadd.f32 %v6112, %v6157
    %v6162 = vadd.f32 %v6113, %v6158
    %v6163 = vadd.f32 %v6114, %v6159
    %v6164 = vadd.f32 %v6115, %v6160
    %6165 = vrot.lane.b32.xlu0 %v4194, 94
    %v6166 = vpop.permute.xlu0 %6165
    %6167 = vrot.lane.b32.xlu0 %v4195, 94
    %v6168 = vpop.permute.xlu0 %6167
    %6169 = vrot.lane.b32.xlu0 %v4196, 94
    %v6170 = vpop.permute.xlu0 %6169
    %6171 = vrot.lane.b32.xlu0 %v4197, 94
    %v6172 = vpop.permute.xlu0 %6171
    %vm6173 = vcmp.lt.s32.totalorder %v65, 94
    %v6174 = vsel %vm6173, %v6170, %v6172
    %v6175 = vsel %vm6173, %v6168, %v6170
    %v6176 = vsel %vm6173, %v6166, %v6168
    %v6177 = vsel %vm6173, %v6172, %v6166
    %s6178 = sld [smem:[#allocation2 + $0x28]]
    %v6179 = vstv %s6178
    %v6180 = vmul.f32 %v6176, %v6179
    %v6181 = vmul.f32 %v6175, %v6179
    %v6182 = vmul.f32 %v6174, %v6179
    %v6183 = vmul.f32 %v6177, %v6179
    %6184 = vrot.lane.b32.xlu0 %v4208, 94
    %v6185 = vpop.permute.xlu0 %6184
    %6186 = vrot.lane.b32.xlu0 %v4219, 94
    %v6187 = vpop.permute.xlu0 %6186
    %6188 = vrot.lane.b32.xlu0 %v4230, 94
    %v6189 = vpop.permute.xlu0 %6188
    %6190 = vrot.lane.b32.xlu0 %v4241, 94
    %v6191 = vpop.permute.xlu0 %6190
    %v6192 = vsel %vm6173, %v6189, %v6191
    %v6193 = vsel %vm6173, %v6187, %v6189
    %v6194 = vsel %vm6173, %v6185, %v6187
    %v6195 = vsel %vm6173, %v6191, %v6185
    %s6196 = sld [smem:[#allocation2 + $0xa8]]
    %v6197 = vstv %s6196
    %v6198 = vmul.f32 %v6194, %v6197
    %v6199 = vmul.f32 %v6193, %v6197
    %v6200 = vmul.f32 %v6192, %v6197
    %v6201 = vmul.f32 %v6195, %v6197
    %v6202 = vadd.f32 %v6180, %v6198
    %v6203 = vadd.f32 %v6181, %v6199
    %v6204 = vadd.f32 %v6182, %v6200
    %v6205 = vadd.f32 %v6183, %v6201
    %v6206 = vsel %vm237, %v6202, 0.0
    %v6207 = vsel %vm238, %v6203, 0.0
    %v6208 = vsel %vm239, %v6204, 0.0
    %v6209 = vsel %vm240, %v6205, 0.0
    %v6210 = vadd.f32 %v6161, %v6206
    %v6211 = vadd.f32 %v6162, %v6207
    %v6212 = vadd.f32 %v6163, %v6208
    %v6213 = vadd.f32 %v6164, %v6209
    %6214 = vrot.lane.b32.xlu0 %v4194, 93
    %v6215 = vpop.permute.xlu0 %6214
    %6216 = vrot.lane.b32.xlu0 %v4195, 93
    %v6217 = vpop.permute.xlu0 %6216
    %6218 = vrot.lane.b32.xlu0 %v4196, 93
    %v6219 = vpop.permute.xlu0 %6218
    %6220 = vrot.lane.b32.xlu0 %v4197, 93
    %v6221 = vpop.permute.xlu0 %6220
    %vm6222 = vcmp.lt.s32.totalorder %v65, 93
    %v6223 = vsel %vm6222, %v6219, %v6221
    %v6224 = vsel %vm6222, %v6217, %v6219
    %v6225 = vsel %vm6222, %v6215, %v6217
    %v6226 = vsel %vm6222, %v6221, %v6215
    %s6227 = sld [smem:[#allocation2 + $0x29]]
    %v6228 = vstv %s6227
    %v6229 = vmul.f32 %v6225, %v6228
    %v6230 = vmul.f32 %v6224, %v6228
    %v6231 = vmul.f32 %v6223, %v6228
    %v6232 = vmul.f32 %v6226, %v6228
    %6233 = vrot.lane.b32.xlu0 %v4208, 93
    %v6234 = vpop.permute.xlu0 %6233
    %6235 = vrot.lane.b32.xlu0 %v4219, 93
    %v6236 = vpop.permute.xlu0 %6235
    %6237 = vrot.lane.b32.xlu0 %v4230, 93
    %v6238 = vpop.permute.xlu0 %6237
    %6239 = vrot.lane.b32.xlu0 %v4241, 93
    %v6240 = vpop.permute.xlu0 %6239
    %v6241 = vsel %vm6222, %v6238, %v6240
    %v6242 = vsel %vm6222, %v6236, %v6238
    %v6243 = vsel %vm6222, %v6234, %v6236
    %v6244 = vsel %vm6222, %v6240, %v6234
    %s6245 = sld [smem:[#allocation2 + $0xa9]]
    %v6246 = vstv %s6245
    %v6247 = vmul.f32 %v6243, %v6246
    %v6248 = vmul.f32 %v6242, %v6246
    %v6249 = vmul.f32 %v6241, %v6246
    %v6250 = vmul.f32 %v6244, %v6246
    %v6251 = vadd.f32 %v6229, %v6247
    %v6252 = vadd.f32 %v6230, %v6248
    %v6253 = vadd.f32 %v6231, %v6249
    %v6254 = vadd.f32 %v6232, %v6250
    %v6255 = vsel %vm241, %v6251, 0.0
    %v6256 = vsel %vm242, %v6252, 0.0
    %v6257 = vsel %vm243, %v6253, 0.0
    %v6258 = vsel %vm244, %v6254, 0.0
    %v6259 = vadd.f32 %v6210, %v6255
    %v6260 = vadd.f32 %v6211, %v6256
    %v6261 = vadd.f32 %v6212, %v6257
    %v6262 = vadd.f32 %v6213, %v6258
    %6263 = vrot.lane.b32.xlu0 %v4194, 83
    %v6264 = vpop.permute.xlu0 %6263
    %6265 = vrot.lane.b32.xlu0 %v4195, 83
    %v6266 = vpop.permute.xlu0 %6265
    %6267 = vrot.lane.b32.xlu0 %v4196, 83
    %v6268 = vpop.permute.xlu0 %6267
    %6269 = vrot.lane.b32.xlu0 %v4197, 83
    %v6270 = vpop.permute.xlu0 %6269
    %vm6271 = vcmp.lt.s32.totalorder %v65, 83
    %v6272 = vsel %vm6271, %v6268, %v6270
    %v6273 = vsel %vm6271, %v6266, %v6268
    %v6274 = vsel %vm6271, %v6264, %v6266
    %v6275 = vsel %vm6271, %v6270, %v6264
    %s6276 = sld [smem:[#allocation2 + $0x2a]]
    %v6277 = vstv %s6276
    %v6278 = vmul.f32 %v6274, %v6277
    %v6279 = vmul.f32 %v6273, %v6277
    %v6280 = vmul.f32 %v6272, %v6277
    %v6281 = vmul.f32 %v6275, %v6277
    %6282 = vrot.lane.b32.xlu0 %v4208, 83
    %v6283 = vpop.permute.xlu0 %6282
    %6284 = vrot.lane.b32.xlu0 %v4219, 83
    %v6285 = vpop.permute.xlu0 %6284
    %6286 = vrot.lane.b32.xlu0 %v4230, 83
    %v6287 = vpop.permute.xlu0 %6286
    %6288 = vrot.lane.b32.xlu0 %v4241, 83
    %v6289 = vpop.permute.xlu0 %6288
    %v6290 = vsel %vm6271, %v6287, %v6289
    %v6291 = vsel %vm6271, %v6285, %v6287
    %v6292 = vsel %vm6271, %v6283, %v6285
    %v6293 = vsel %vm6271, %v6289, %v6283
    %s6294 = sld [smem:[#allocation2 + $0xaa]]
    %v6295 = vstv %s6294
    %v6296 = vmul.f32 %v6292, %v6295
    %v6297 = vmul.f32 %v6291, %v6295
    %v6298 = vmul.f32 %v6290, %v6295
    %v6299 = vmul.f32 %v6293, %v6295
    %v6300 = vadd.f32 %v6278, %v6296
    %v6301 = vadd.f32 %v6279, %v6297
    %v6302 = vadd.f32 %v6280, %v6298
    %v6303 = vadd.f32 %v6281, %v6299
    %v6304 = vsel %vm249, %v6300, 0.0
    %v6305 = vsel %vm250, %v6301, 0.0
    %v6306 = vsel %vm251, %v6302, 0.0
    %v6307 = vsel %vm252, %v6303, 0.0
    %v6308 = vadd.f32 %v6259, %v6304
    %v6309 = vadd.f32 %v6260, %v6305
    %v6310 = vadd.f32 %v6261, %v6306
    %v6311 = vadd.f32 %v6262, %v6307
    %6312 = vrot.lane.b32.xlu0 %v4194, 82
    %v6313 = vpop.permute.xlu0 %6312
    %6314 = vrot.lane.b32.xlu0 %v4195, 82
    %v6315 = vpop.permute.xlu0 %6314
    %6316 = vrot.lane.b32.xlu0 %v4196, 82
    %v6317 = vpop.permute.xlu0 %6316
    %6318 = vrot.lane.b32.xlu0 %v4197, 82
    %v6319 = vpop.permute.xlu0 %6318
    %vm6320 = vcmp.lt.s32.totalorder %v65, 82
    %v6321 = vsel %vm6320, %v6317, %v6319
    %v6322 = vsel %vm6320, %v6315, %v6317
    %v6323 = vsel %vm6320, %v6313, %v6315
    %v6324 = vsel %vm6320, %v6319, %v6313
    %s6325 = sld [smem:[#allocation2 + $0x2b]]
    %v6326 = vstv %s6325
    %v6327 = vmul.f32 %v6323, %v6326
    %v6328 = vmul.f32 %v6322, %v6326
    %v6329 = vmul.f32 %v6321, %v6326
    %v6330 = vmul.f32 %v6324, %v6326
    %6331 = vrot.lane.b32.xlu0 %v4208, 82
    %v6332 = vpop.permute.xlu0 %6331
    %6333 = vrot.lane.b32.xlu0 %v4219, 82
    %v6334 = vpop.permute.xlu0 %6333
    %6335 = vrot.lane.b32.xlu0 %v4230, 82
    %v6336 = vpop.permute.xlu0 %6335
    %6337 = vrot.lane.b32.xlu0 %v4241, 82
    %v6338 = vpop.permute.xlu0 %6337
    %v6339 = vsel %vm6320, %v6336, %v6338
    %v6340 = vsel %vm6320, %v6334, %v6336
    %v6341 = vsel %vm6320, %v6332, %v6334
    %v6342 = vsel %vm6320, %v6338, %v6332
    %s6343 = sld [smem:[#allocation2 + $0xab]]
    %v6344 = vstv %s6343
    %v6345 = vmul.f32 %v6341, %v6344
    %v6346 = vmul.f32 %v6340, %v6344
    %v6347 = vmul.f32 %v6339, %v6344
    %v6348 = vmul.f32 %v6342, %v6344
    %v6349 = vadd.f32 %v6327, %v6345
    %v6350 = vadd.f32 %v6328, %v6346
    %v6351 = vadd.f32 %v6329, %v6347
    %v6352 = vadd.f32 %v6330, %v6348
    %v6353 = vsel %vm253, %v6349, 0.0
    %v6354 = vsel %vm254, %v6350, 0.0
    %v6355 = vsel %vm255, %v6351, 0.0
    %v6356 = vsel %vm256, %v6352, 0.0
    %v6357 = vadd.f32 %v6308, %v6353
    %v6358 = vadd.f32 %v6309, %v6354
    %v6359 = vadd.f32 %v6310, %v6355
    %v6360 = vadd.f32 %v6311, %v6356
    %6361 = vrot.lane.b32.xlu0 %v4194, 81
    %v6362 = vpop.permute.xlu0 %6361
    %6363 = vrot.lane.b32.xlu0 %v4195, 81
    %v6364 = vpop.permute.xlu0 %6363
    %6365 = vrot.lane.b32.xlu0 %v4196, 81
    %v6366 = vpop.permute.xlu0 %6365
    %6367 = vrot.lane.b32.xlu0 %v4197, 81
    %v6368 = vpop.permute.xlu0 %6367
    %vm6369 = vcmp.lt.s32.totalorder %v65, 81
    %v6370 = vsel %vm6369, %v6366, %v6368
    %v6371 = vsel %vm6369, %v6364, %v6366
    %v6372 = vsel %vm6369, %v6362, %v6364
    %v6373 = vsel %vm6369, %v6368, %v6362
    %s6374 = sld [smem:[#allocation2 + $0x2c]]
    %v6375 = vstv %s6374
    %v6376 = vmul.f32 %v6372, %v6375
    %v6377 = vmul.f32 %v6371, %v6375
    %v6378 = vmul.f32 %v6370, %v6375
    %v6379 = vmul.f32 %v6373, %v6375
    %6380 = vrot.lane.b32.xlu0 %v4208, 81
    %v6381 = vpop.permute.xlu0 %6380
    %6382 = vrot.lane.b32.xlu0 %v4219, 81
    %v6383 = vpop.permute.xlu0 %6382
    %6384 = vrot.lane.b32.xlu0 %v4230, 81
    %v6385 = vpop.permute.xlu0 %6384
    %6386 = vrot.lane.b32.xlu0 %v4241, 81
    %v6387 = vpop.permute.xlu0 %6386
    %v6388 = vsel %vm6369, %v6385, %v6387
    %v6389 = vsel %vm6369, %v6383, %v6385
    %v6390 = vsel %vm6369, %v6381, %v6383
    %v6391 = vsel %vm6369, %v6387, %v6381
    %s6392 = sld [smem:[#allocation2 + $0xac]]
    %v6393 = vstv %s6392
    %v6394 = vmul.f32 %v6390, %v6393
    %v6395 = vmul.f32 %v6389, %v6393
    %v6396 = vmul.f32 %v6388, %v6393
    %v6397 = vmul.f32 %v6391, %v6393
    %v6398 = vadd.f32 %v6376, %v6394
    %v6399 = vadd.f32 %v6377, %v6395
    %v6400 = vadd.f32 %v6378, %v6396
    %v6401 = vadd.f32 %v6379, %v6397
    %v6402 = vsel %vm257, %v6398, 0.0
    %v6403 = vsel %vm258, %v6399, 0.0
    %v6404 = vsel %vm259, %v6400, 0.0
    %v6405 = vsel %vm260, %v6401, 0.0
    %v6406 = vadd.f32 %v6357, %v6402
    %v6407 = vadd.f32 %v6358, %v6403
    %v6408 = vadd.f32 %v6359, %v6404
    %v6409 = vadd.f32 %v6360, %v6405
    %6410 = vrot.lane.b32.xlu0 %v4194, 80
    %v6411 = vpop.permute.xlu0 %6410
    %6412 = vrot.lane.b32.xlu0 %v4195, 80
    %v6413 = vpop.permute.xlu0 %6412
    %6414 = vrot.lane.b32.xlu0 %v4196, 80
    %v6415 = vpop.permute.xlu0 %6414
    %6416 = vrot.lane.b32.xlu0 %v4197, 80
    %v6417 = vpop.permute.xlu0 %6416
    %vm6418 = vcmp.lt.s32.totalorder %v65, 80
    %v6419 = vsel %vm6418, %v6415, %v6417
    %v6420 = vsel %vm6418, %v6413, %v6415
    %v6421 = vsel %vm6418, %v6411, %v6413
    %v6422 = vsel %vm6418, %v6417, %v6411
    %s6423 = sld [smem:[#allocation2 + $0x2d]]
    %v6424 = vstv %s6423
    %v6425 = vmul.f32 %v6421, %v6424
    %v6426 = vmul.f32 %v6420, %v6424
    %v6427 = vmul.f32 %v6419, %v6424
    %v6428 = vmul.f32 %v6422, %v6424
    %6429 = vrot.lane.b32.xlu0 %v4208, 80
    %v6430 = vpop.permute.xlu0 %6429
    %6431 = vrot.lane.b32.xlu0 %v4219, 80
    %v6432 = vpop.permute.xlu0 %6431
    %6433 = vrot.lane.b32.xlu0 %v4230, 80
    %v6434 = vpop.permute.xlu0 %6433
    %6435 = vrot.lane.b32.xlu0 %v4241, 80
    %v6436 = vpop.permute.xlu0 %6435
    %v6437 = vsel %vm6418, %v6434, %v6436
    %v6438 = vsel %vm6418, %v6432, %v6434
    %v6439 = vsel %vm6418, %v6430, %v6432
    %v6440 = vsel %vm6418, %v6436, %v6430
    %s6441 = sld [smem:[#allocation2 + $0xad]]
    %v6442 = vstv %s6441
    %v6443 = vmul.f32 %v6439, %v6442
    %v6444 = vmul.f32 %v6438, %v6442
    %v6445 = vmul.f32 %v6437, %v6442
    %v6446 = vmul.f32 %v6440, %v6442
    %v6447 = vadd.f32 %v6425, %v6443
    %v6448 = vadd.f32 %v6426, %v6444
    %v6449 = vadd.f32 %v6427, %v6445
    %v6450 = vadd.f32 %v6428, %v6446
    %v6451 = vsel %vm245, %v6447, 0.0
    %v6452 = vsel %vm246, %v6448, 0.0
    %v6453 = vsel %vm247, %v6449, 0.0
    %v6454 = vsel %vm248, %v6450, 0.0
    %v6455 = vadd.f32 %v6406, %v6451
    %v6456 = vadd.f32 %v6407, %v6452
    %v6457 = vadd.f32 %v6408, %v6453
    %v6458 = vadd.f32 %v6409, %v6454
    %6459 = vrot.lane.b32.xlu0 %v4194, 79
    %v6460 = vpop.permute.xlu0 %6459
    %6461 = vrot.lane.b32.xlu0 %v4195, 79
    %v6462 = vpop.permute.xlu0 %6461
    %6463 = vrot.lane.b32.xlu0 %v4196, 79
    %v6464 = vpop.permute.xlu0 %6463
    %6465 = vrot.lane.b32.xlu0 %v4197, 79
    %v6466 = vpop.permute.xlu0 %6465
    %vm6467 = vcmp.lt.s32.totalorder %v65, 79
    %v6468 = vsel %vm6467, %v6464, %v6466
    %v6469 = vsel %vm6467, %v6462, %v6464
    %v6470 = vsel %vm6467, %v6460, %v6462
    %v6471 = vsel %vm6467, %v6466, %v6460
    %s6472 = sld [smem:[#allocation2 + $0x2e]]
    %v6473 = vstv %s6472
    %v6474 = vmul.f32 %v6470, %v6473
    %v6475 = vmul.f32 %v6469, %v6473
    %v6476 = vmul.f32 %v6468, %v6473
    %v6477 = vmul.f32 %v6471, %v6473
    %6478 = vrot.lane.b32.xlu0 %v4208, 79
    %v6479 = vpop.permute.xlu0 %6478
    %6480 = vrot.lane.b32.xlu0 %v4219, 79
    %v6481 = vpop.permute.xlu0 %6480
    %6482 = vrot.lane.b32.xlu0 %v4230, 79
    %v6483 = vpop.permute.xlu0 %6482
    %6484 = vrot.lane.b32.xlu0 %v4241, 79
    %v6485 = vpop.permute.xlu0 %6484
    %v6486 = vsel %vm6467, %v6483, %v6485
    %v6487 = vsel %vm6467, %v6481, %v6483
    %v6488 = vsel %vm6467, %v6479, %v6481
    %v6489 = vsel %vm6467, %v6485, %v6479
    %s6490 = sld [smem:[#allocation2 + $0xae]]
    %v6491 = vstv %s6490
    %v6492 = vmul.f32 %v6488, %v6491
    %v6493 = vmul.f32 %v6487, %v6491
    %v6494 = vmul.f32 %v6486, %v6491
    %v6495 = vmul.f32 %v6489, %v6491
    %v6496 = vadd.f32 %v6474, %v6492
    %v6497 = vadd.f32 %v6475, %v6493
    %v6498 = vadd.f32 %v6476, %v6494
    %v6499 = vadd.f32 %v6477, %v6495
    %v6500 = vsel %vm261, %v6496, 0.0
    %v6501 = vsel %vm262, %v6497, 0.0
    %v6502 = vsel %vm263, %v6498, 0.0
    %v6503 = vsel %vm264, %v6499, 0.0
    %v6504 = vadd.f32 %v6455, %v6500
    %v6505 = vadd.f32 %v6456, %v6501
    %v6506 = vadd.f32 %v6457, %v6502
    %v6507 = vadd.f32 %v6458, %v6503
    %6508 = vrot.lane.b32.xlu0 %v4194, 78
    %v6509 = vpop.permute.xlu0 %6508
    %6510 = vrot.lane.b32.xlu0 %v4195, 78
    %v6511 = vpop.permute.xlu0 %6510
    %6512 = vrot.lane.b32.xlu0 %v4196, 78
    %v6513 = vpop.permute.xlu0 %6512
    %6514 = vrot.lane.b32.xlu0 %v4197, 78
    %v6515 = vpop.permute.xlu0 %6514
    %vm6516 = vcmp.lt.s32.totalorder %v65, 78
    %v6517 = vsel %vm6516, %v6513, %v6515
    %v6518 = vsel %vm6516, %v6511, %v6513
    %v6519 = vsel %vm6516, %v6509, %v6511
    %v6520 = vsel %vm6516, %v6515, %v6509
    %s6521 = sld [smem:[#allocation2 + $0x2f]]
    %v6522 = vstv %s6521
    %v6523 = vmul.f32 %v6519, %v6522
    %v6524 = vmul.f32 %v6518, %v6522
    %v6525 = vmul.f32 %v6517, %v6522
    %v6526 = vmul.f32 %v6520, %v6522
    %6527 = vrot.lane.b32.xlu0 %v4208, 78
    %v6528 = vpop.permute.xlu0 %6527
    %6529 = vrot.lane.b32.xlu0 %v4219, 78
    %v6530 = vpop.permute.xlu0 %6529
    %6531 = vrot.lane.b32.xlu0 %v4230, 78
    %v6532 = vpop.permute.xlu0 %6531
    %6533 = vrot.lane.b32.xlu0 %v4241, 78
    %v6534 = vpop.permute.xlu0 %6533
    %v6535 = vsel %vm6516, %v6532, %v6534
    %v6536 = vsel %vm6516, %v6530, %v6532
    %v6537 = vsel %vm6516, %v6528, %v6530
    %v6538 = vsel %vm6516, %v6534, %v6528
    %s6539 = sld [smem:[#allocation2 + $0xaf]]
    %v6540 = vstv %s6539
    %v6541 = vmul.f32 %v6537, %v6540
    %v6542 = vmul.f32 %v6536, %v6540
    %v6543 = vmul.f32 %v6535, %v6540
    %v6544 = vmul.f32 %v6538, %v6540
    %v6545 = vadd.f32 %v6523, %v6541
    %v6546 = vadd.f32 %v6524, %v6542
    %v6547 = vadd.f32 %v6525, %v6543
    %v6548 = vadd.f32 %v6526, %v6544
    %v6549 = vsel %vm265, %v6545, 0.0
    %v6550 = vsel %vm266, %v6546, 0.0
    %v6551 = vsel %vm267, %v6547, 0.0
    %v6552 = vsel %vm268, %v6548, 0.0
    %v6553 = vadd.f32 %v6504, %v6549
    %v6554 = vadd.f32 %v6505, %v6550
    %v6555 = vadd.f32 %v6506, %v6551
    %v6556 = vadd.f32 %v6507, %v6552
    %6557 = vrot.lane.b32.xlu0 %v4194, 77
    %v6558 = vpop.permute.xlu0 %6557
    %6559 = vrot.lane.b32.xlu0 %v4195, 77
    %v6560 = vpop.permute.xlu0 %6559
    %6561 = vrot.lane.b32.xlu0 %v4196, 77
    %v6562 = vpop.permute.xlu0 %6561
    %6563 = vrot.lane.b32.xlu0 %v4197, 77
    %v6564 = vpop.permute.xlu0 %6563
    %vm6565 = vcmp.lt.s32.totalorder %v65, 77
    %v6566 = vsel %vm6565, %v6562, %v6564
    %v6567 = vsel %vm6565, %v6560, %v6562
    %v6568 = vsel %vm6565, %v6558, %v6560
    %v6569 = vsel %vm6565, %v6564, %v6558
    %s6570 = sld [smem:[#allocation2 + $0x30]]
    %v6571 = vstv %s6570
    %v6572 = vmul.f32 %v6568, %v6571
    %v6573 = vmul.f32 %v6567, %v6571
    %v6574 = vmul.f32 %v6566, %v6571
    %v6575 = vmul.f32 %v6569, %v6571
    %6576 = vrot.lane.b32.xlu0 %v4208, 77
    %v6577 = vpop.permute.xlu0 %6576
    %6578 = vrot.lane.b32.xlu0 %v4219, 77
    %v6579 = vpop.permute.xlu0 %6578
    %6580 = vrot.lane.b32.xlu0 %v4230, 77
    %v6581 = vpop.permute.xlu0 %6580
    %6582 = vrot.lane.b32.xlu0 %v4241, 77
    %v6583 = vpop.permute.xlu0 %6582
    %v6584 = vsel %vm6565, %v6581, %v6583
    %v6585 = vsel %vm6565, %v6579, %v6581
    %v6586 = vsel %vm6565, %v6577, %v6579
    %v6587 = vsel %vm6565, %v6583, %v6577
    %s6588 = sld [smem:[#allocation2 + $0xb0]]
    %v6589 = vstv %s6588
    %v6590 = vmul.f32 %v6586, %v6589
    %v6591 = vmul.f32 %v6585, %v6589
    %v6592 = vmul.f32 %v6584, %v6589
    %v6593 = vmul.f32 %v6587, %v6589
    %v6594 = vadd.f32 %v6572, %v6590
    %v6595 = vadd.f32 %v6573, %v6591
    %v6596 = vadd.f32 %v6574, %v6592
    %v6597 = vadd.f32 %v6575, %v6593
    %v6598 = vsel %vm269, %v6594, 0.0
    %v6599 = vsel %vm270, %v6595, 0.0
    %v6600 = vsel %vm271, %v6596, 0.0
    %v6601 = vsel %vm272, %v6597, 0.0
    %v6602 = vadd.f32 %v6553, %v6598
    %v6603 = vadd.f32 %v6554, %v6599
    %v6604 = vadd.f32 %v6555, %v6600
    %v6605 = vadd.f32 %v6556, %v6601
    %v6606 = vxor.u32 %v6602, 2147483648
    %v6607 = vxor.u32 %v6603, 2147483648
    %v6608 = vxor.u32 %v6604, 2147483648
    %v6609 = vxor.u32 %v6605, 2147483648
    %v6610 = vmul.f32 %v6606, 1.442695
    %v6611 = vpow.pop %v6610
    %v6612 = vmul.f32 %v6607, 1.442695
    %v6613 = vpow.pop %v6612
    %v6614 = vmul.f32 %v6608, 1.442695
    %v6615 = vpow.pop %v6614
    %v6616 = vmul.f32 %v6609, 1.442695
    %v6617 = vpow.pop %v6616
    %v6618 = vadd.f32 %v6611, 1.0
    %v6619 = vadd.f32 %v6613, 1.0
    %v6620 = vadd.f32 %v6615, 1.0
    %v6621 = vadd.f32 %v6617, 1.0
    %v6622 = vrcp.pop %v6618
    %v6623 = vmul.f32 %v6618, %v6622
    %v6624 = vsub.f32 1.0, %v6623
    %v6625 = vmul.f32 %v6622, %v6624
    %v6626 = vadd.f32 %v6622, %v6625
    %vm6627 = vweird.f32 %v6618
    %vm6628 = vweird.f32 %v6622
    %vm6629 = vmor %vm6627, %vm6628
    %v6630 = vsel %vm6629, %v6622, %v6626
    %v6631 = vand.u32 2147483647, %v6618
    %vm6632 = vcmp.eq.f32.partialorder %v6631, 8.507059e+37
    %v6633 = vand.u32 %v6618, 2147483648
    %v6634 = vor.u32 1.1754944e-38, %v6633
    %v6635 = vsel %vm6632, %v6634, %v6630
    %v6636 = vmul.f32 1.0, %v6635
    %v6637 = vrcp.pop %v6619
    %v6638 = vmul.f32 %v6619, %v6637
    %v6639 = vsub.f32 1.0, %v6638
    %v6640 = vmul.f32 %v6637, %v6639
    %v6641 = vadd.f32 %v6637, %v6640
    %vm6642 = vweird.f32 %v6619
    %vm6643 = vweird.f32 %v6637
    %vm6644 = vmor %vm6642, %vm6643
    %v6645 = vsel %vm6644, %v6637, %v6641
    %v6646 = vand.u32 2147483647, %v6619
    %vm6647 = vcmp.eq.f32.partialorder %v6646, 8.507059e+37
    %v6648 = vand.u32 %v6619, 2147483648
    %v6649 = vor.u32 1.1754944e-38, %v6648
    %v6650 = vsel %vm6647, %v6649, %v6645
    %v6651 = vmul.f32 1.0, %v6650
    %v6652 = vrcp.pop %v6620
    %v6653 = vmul.f32 %v6620, %v6652
    %v6654 = vsub.f32 1.0, %v6653
    %v6655 = vmul.f32 %v6652, %v6654
    %v6656 = vadd.f32 %v6652, %v6655
    %vm6657 = vweird.f32 %v6620
    %vm6658 = vweird.f32 %v6652
    %vm6659 = vmor %vm6657, %vm6658
    %v6660 = vsel %vm6659, %v6652, %v6656
    %v6661 = vand.u32 2147483647, %v6620
    %vm6662 = vcmp.eq.f32.partialorder %v6661, 8.507059e+37
    %v6663 = vand.u32 %v6620, 2147483648
    %v6664 = vor.u32 1.1754944e-38, %v6663
    %v6665 = vsel %vm6662, %v6664, %v6660
    %v6666 = vmul.f32 1.0, %v6665
    %v6667 = vrcp.pop %v6621
    %v6668 = vmul.f32 %v6621, %v6667
    %v6669 = vsub.f32 1.0, %v6668
    %v6670 = vmul.f32 %v6667, %v6669
    %v6671 = vadd.f32 %v6667, %v6670
    %vm6672 = vweird.f32 %v6621
    %vm6673 = vweird.f32 %v6667
    %vm6674 = vmor %vm6672, %vm6673
    %v6675 = vsel %vm6674, %v6667, %v6671
    %v6676 = vand.u32 2147483647, %v6621
    %vm6677 = vcmp.eq.f32.partialorder %v6676, 8.507059e+37
    %v6678 = vand.u32 %v6621, 2147483648
    %v6679 = vor.u32 1.1754944e-38, %v6678
    %v6680 = vsel %vm6677, %v6679, %v6675
    %v6681 = vmul.f32 1.0, %v6680
    %v6682 = vperm.slane %v6636, 0
    %v6683 = vperm.slane %v6651, 0
    %v6684 = vperm.slane %v6666, 0
    %v6685 = vperm.slane %v6681, 0
    %v6686 = vmul.f32 %v4119, %v6682
    %v6687 = vmul.f32 %v4120, %v6683
    %v6688 = vmul.f32 %v4121, %v6684
    %v6689 = vmul.f32 %v4122, %v6685
    %v6690 = vmul.f32 %v4123, %v6682
    %v6691 = vmul.f32 %v4124, %v6683
    %v6692 = vmul.f32 %v4125, %v6684
    %v6693 = vmul.f32 %v4126, %v6685
    %v6694 = vmul.f32 %v4127, %v6682
    %v6695 = vmul.f32 %v4128, %v6683
    %v6696 = vmul.f32 %v4129, %v6684
    %v6697 = vmul.f32 %v4130, %v6685
    %v6698 = vmul.f32 %v4131, %v6682
    %v6699 = vmul.f32 %v4132, %v6683
    %v6700 = vmul.f32 %v4133, %v6684
    %v6701 = vmul.f32 %v4134, %v6685
    %v6702 = vmul.f32 %v4135, %v6682
    %v6703 = vmul.f32 %v4136, %v6683
    %v6704 = vmul.f32 %v4137, %v6684
    %v6705 = vmul.f32 %v4138, %v6685
    %v6706 = vmul.f32 %v4139, %v6682
    %v6707 = vmul.f32 %v4140, %v6683
    %v6708 = vmul.f32 %v4141, %v6684
    %v6709 = vmul.f32 %v4142, %v6685
    %v6710 = vld [vmem:[%s11] sm:$0xff]
    %v6712 = vsel %vm3756, %v6710, 0
    %6714 = vmatpush.msra.mxu0 0.0
    %6715 = vmatpush.msra.mxu0 0.0
    %6716 = vmatpush.msra.mxu0 0.0
    %6717 = vmatpush.msra.mxu0 0.0
    %6718 = vmatpush.msra.mxu0 0.0
    %6719 = vmatpush.msra.mxu0 0.0
    %6720 = vmatpush.msra.mxu0 0.0
    %6721 = vmatpush.msra.mxu0 0.0
    %6722 = vmatpush.msra.mxu0 0.0
    %6723 = vmatpush.msra.mxu0 0.0
    %6724 = vmatpush.msra.mxu0 %v6706
    %6725 = vmatpush.msra.mxu0 %v6702
    %6726 = vmatpush.msra.mxu0 %v6698
    %6727 = vmatpush.msra.mxu0 %v6694
    %6728 = vmatpush.msra.mxu0 %v6690
    %6729 = vmatpush.msra.mxu0 %v6686
    %6730 = vmatmul.f32.gmra.mxu0 %v6712
    %v6731 = vpop.f32.mrf.mxu0
    %v6732 = vadd.f32 0.0, %v6731
    %6733 = vdwg.mxu0
    %6734 = vmatpush.msra.mxu0 0.0
    %6735 = vmatpush.msra.mxu0 0.0
    %6736 = vmatpush.msra.mxu0 0.0
    %6737 = vmatpush.msra.mxu0 0.0
    %6738 = vmatpush.msra.mxu0 0.0
    %6739 = vmatpush.msra.mxu0 0.0
    %6740 = vmatpush.msra.mxu0 0.0
    %6741 = vmatpush.msra.mxu0 0.0
    %6742 = vmatpush.msra.mxu0 0.0
    %6743 = vmatpush.msra.mxu0 0.0
    %6744 = vmatpush.msra.mxu0 %v6707
    %6745 = vmatpush.msra.mxu0 %v6703
    %6746 = vmatpush.msra.mxu0 %v6699
    %6747 = vmatpush.msra.mxu0 %v6695
    %6748 = vmatpush.msra.mxu0 %v6691
    %6749 = vmatpush.msra.mxu0 %v6687
    %6750 = vmatmul.f32.gmra.mxu0 %v6712
    %v6751 = vpop.f32.mrf.mxu0
    %v6752 = vadd.f32 0.0, %v6751
    %6753 = vdwg.mxu0
    %6754 = vmatpush.msra.mxu0 0.0
    %6755 = vmatpush.msra.mxu0 0.0
    %6756 = vmatpush.msra.mxu0 0.0
    %6757 = vmatpush.msra.mxu0 0.0
    %6758 = vmatpush.msra.mxu0 0.0
    %6759 = vmatpush.msra.mxu0 0.0
    %6760 = vmatpush.msra.mxu0 0.0
    %6761 = vmatpush.msra.mxu0 0.0
    %6762 = vmatpush.msra.mxu0 0.0
    %6763 = vmatpush.msra.mxu0 0.0
    %6764 = vmatpush.msra.mxu0 %v6708
    %6765 = vmatpush.msra.mxu0 %v6704
    %6766 = vmatpush.msra.mxu0 %v6700
    %6767 = vmatpush.msra.mxu0 %v6696
    %6768 = vmatpush.msra.mxu0 %v6692
    %6769 = vmatpush.msra.mxu0 %v6688
    %6770 = vmatmul.f32.gmra.mxu0 %v6712
    %v6771 = vpop.f32.mrf.mxu0
    %v6772 = vadd.f32 0.0, %v6771
    %6773 = vdwg.mxu0
    %6774 = vmatpush.msra.mxu0 0.0
    %6775 = vmatpush.msra.mxu0 0.0
    %6776 = vmatpush.msra.mxu0 0.0
    %6777 = vmatpush.msra.mxu0 0.0
    %6778 = vmatpush.msra.mxu0 0.0
    %6779 = vmatpush.msra.mxu0 0.0
    %6780 = vmatpush.msra.mxu0 0.0
    %6781 = vmatpush.msra.mxu0 0.0
    %6782 = vmatpush.msra.mxu0 0.0
    %6783 = vmatpush.msra.mxu0 0.0
    %6784 = vmatpush.msra.mxu0 %v6709
    %6785 = vmatpush.msra.mxu0 %v6705
    %6786 = vmatpush.msra.mxu0 %v6701
    %6787 = vmatpush.msra.mxu0 %v6697
    %6788 = vmatpush.msra.mxu0 %v6693
    %6789 = vmatpush.msra.mxu0 %v6689
    %6790 = vmatmul.f32.gmra.mxu0 %v6712
    %v6791 = vpop.f32.mrf.mxu0
    %v6792 = vadd.f32 0.0, %v6791
    %6793 = vdwg.mxu0
    %v6794 = vld [vmem:[%s12] sm:$0xff]
    %v6795 = vld [vmem:[%s13] sm:$0xff]
    %v6796 = vadd.f32 %v6732, %v6752
    %v6797 = vadd.f32 %v6796, %v6772
    %v6798 = vadd.f32 %v6797, %v6792
    %6799 = vadd.xlane.f32.xlu0 %v6798
    %v6800 = vpop.xlane.xlu0 %6799
    %v6801 = vmul.f32 %v6800, 0.001953125
    %v6802 = vmul.f32 %v6732, %v6732
    %v6803 = vmul.f32 %v6752, %v6752
    %v6804 = vmul.f32 %v6772, %v6772
    %v6805 = vmul.f32 %v6792, %v6792
    %v6806 = vadd.f32 %v6802, %v6803
    %v6807 = vadd.f32 %v6806, %v6804
    %v6808 = vadd.f32 %v6807, %v6805
    %6809 = vadd.xlane.f32.xlu0 %v6808
    %v6810 = vpop.xlane.xlu0 %6809
    %v6811 = vmul.f32 %v6810, 0.001953125
    %v6812 = vmul.f32 %v6801, %v6801
    %v6813 = vsub.f32 %v6811, %v6812
    %v6814 = vmax.f32 %v6813, 0.0
    %v6815 = vsub.f32 %v6732, %v6801
    %v6816 = vsub.f32 %v6752, %v6801
    %v6817 = vsub.f32 %v6772, %v6801
    %v6818 = vsub.f32 %v6792, %v6801
    %v6819 = vadd.f32 %v6814, 1e-05
    %v6820 = vrsqrt.pop %v6819
    %v6821 = vmul.f32 %v6820, %v6819
    %v6822 = vmul.f32 %v6821, %v6820
    %v6823 = vmul.f32 0.5, %v6822
    %v6824 = vsub.f32 1.5, %v6823
    %v6825 = vmul.f32 %v6820, %v6824
    %vm6826 = vweird.f32 %v6819
    %vm6827 = vweird.f32 %v6820
    %vm6828 = vmor %vm6826, %vm6827
    %v6829 = vsel %vm6828, %v6820, %v6825
    %v6830 = vmul.f32 %v6815, %v6829
    %v6831 = vmul.f32 %v6816, %v6829
    %v6832 = vmul.f32 %v6817, %v6829
    %v6833 = vmul.f32 %v6818, %v6829
    %6835 = vset.pattern.permute.xlu0 0
    %6836 = vperm.xlu0 %6835, %v6794
    %v6837 = vpop.permute.xlu0 %6836
    %v6839 = vmul.f32 %v6830, %v6837
    %v6840 = vmul.f32 %v6831, %v6837
    %v6841 = vmul.f32 %v6832, %v6837
    %v6842 = vmul.f32 %v6833, %v6837
    %6844 = vset.pattern.permute.xlu0 0
    %6845 = vperm.xlu0 %6844, %v6795
    %v6846 = vpop.permute.xlu0 %6845
    %v6848 = vadd.f32 %v6839, %v6846
    %v6849 = vadd.f32 %v6840, %v6846
    %v6850 = vadd.f32 %v6841, %v6846
    %v6851 = vadd.f32 %v6842, %v6846
    %v6852 = vadd.f32 %v6848, %v279
    %v6853 = vadd.f32 %v6849, %v280
    %v6854 = vadd.f32 %v6850, %v281
    %v6855 = vadd.f32 %v6851, %v282
    %6856 = vst [vmem:[#allocation5] sm:$0xff] %v6852
    %6857 = vst [vmem:[#allocation5 + $0x8] sm:$0xff] %v6853
    %6858 = vst [vmem:[#allocation5 + $0x10] sm:$0xff] %v6854
    %6859 = vst [vmem:[#allocation5 + $0x18] sm:$0xff] %v6855
    // Predicated region
    $region66: #{tpu_custom_call.1} parent=1 // pred_check
      _
    $region67: #{tpu_custom_call.1} parent=1 // pred_check_branch
      %6861 = sbr.rel (0) target = $region69
    $region68: #{tpu_custom_call.1} parent=1 // pred_region
      %6863 = vsyncadd [#allocation3], 0
      %s6865 = sshll.u32 [#allocation5], 4
      %s6866 = int_to_ptr.vmem [resolvable:$true] %s6865
      %s6867 = sshll.u32 %s15, 4
      %s6868 = int_to_ptr.hbm [resolvable:$true] %s6867
      %6870 = dma.vmem_to_hbm [thread:$0]  %s6866, 512, %s6868, [#allocation3]
    $region69: #{tpu_custom_call.1} parent=1 // pred_fallthru
      _
    // Predicated region
    $region70: #{tpu_custom_call.1} parent=1 // pred_check
      _
    $region71: #{tpu_custom_call.1} parent=1 // pred_check_branch
      %6872 = sbr.rel (0) target = $region73
    $region72: #{tpu_custom_call.1} parent=1 // pred_region
      %6874 = dma.done [#allocation3], 512
    $region73: #{tpu_custom_call.1} parent=1 // pred_fallthru
      _
    %6875 = vsyncpa [#allocation3], 1
    %6876 = vsyncpa [#allocation4], 1

</llo_original>
